<compile_context>
chip_gen: v5e
topology: v5e:2x2
jax: 0.10.0
libtpu: 0.0.40
codegen_flags: <defaults>
</compile_context>

<pallas_src>
import functools

import jax
import jax.numpy as jnp
from jax.experimental import pallas as pl
from jax.experimental.pallas import tpu as pltpu

BN_EPS = 1e-5
LANE = 128
_FUSED_VMEM_BUDGET = 10 << 20   # fused path only when est. footprint stays under this
_TILE_VMEM_BUDGET = 12 << 20    # tiled path: double-buffered per-step tile budget


def _round_up(x, m):
    return (x + m - 1) // m * m


def _nbytes(a):
    return a.size * a.dtype.itemsize


# ----------------------------- parameter prep (one-time) -----------------------------

def prepare_params(params, matmul_dtype=jnp.bfloat16):
    """Pad narrow trailing layers to 128 lanes, cast weights to bf16, drop b1..b4.

    b1..b4 are exactly cancelled by the BatchNorm mean subtraction.  Padded gamma /
    weight columns are zero, so padded features stay exactly zero through the network.
    """
    (w1, b1, g1, be1, w2, b2, g2, be2, w3, b3, g3, be3,
     w4, b4, g4, be4, w5, b5) = params
    del b1, b2, b3, b4  # absorbed by BN (shift = beta - mean*scale)
    out_dim = w5.shape[1]
    l4p = _round_up(max(w4.shape[1], LANE), LANE)
    dop = _round_up(max(out_dim, LANE), LANE)
    pad_cols = lambda a, n: jnp.pad(a, ((0, 0), (0, n - a.shape[1])))
    w4p = pad_cols(w4, l4p)
    g4p, be4p = pad_cols(g4, l4p), pad_cols(be4, l4p)
    w5p = jnp.pad(w5, ((0, l4p - w5.shape[0]), (0, dop - w5.shape[1])))
    b5p = pad_cols(b5, dop)
    f32 = jnp.float32
    return dict(
        ws=tuple(w.astype(matmul_dtype) for w in (w1, w2, w3, w4p, w5p)),
        gs=(g1.astype(f32), g2.astype(f32), g3.astype(f32), g4p.astype(f32)),
        bes=(be1.astype(f32), be2.astype(f32), be3.astype(f32), be4p.astype(f32)),
        b5=b5p.astype(f32),
        out_dim=out_dim,
    )


# ----------------------------- fused single-call kernel ------------------------------

def _fused_mlp_kernel(x_ref, w1_ref, w2_ref, w3_ref, w4_ref, w5_ref,
                      g1_ref, be1_ref, g2_ref, be2_ref, g3_ref, be3_ref,
                      g4_ref, be4_ref, b5_ref, o_ref, *, inv_batch):
    """Whole network in one kernel: z_k -> full-batch BN stats -> relu -> next matmul."""

    def bn_relu(z, g_ref, be_ref):
        mean = jnp.sum(z, axis=0, keepdims=True) * inv_batch
        var = jnp.maximum(jnp.sum(z * z, axis=0, keepdims=True) * inv_batch
                          - mean * mean, 0.0)
        scale = g_ref[...] * jax.lax.rsqrt(var + BN_EPS)
        shift = be_ref[...] - mean * scale
        return jnp.maximum(z * scale + shift, 0.0)

    mm = w1_ref.dtype  # bf16 matmul operands, f32 MXU accumulation
    h = x_ref[...].astype(mm)
    z = jnp.dot(h, w1_ref[...], preferred_element_type=jnp.float32)
    h = bn_relu(z, g1_ref, be1_ref).astype(mm)
    z = jnp.dot(h, w2_ref[...], preferred_element_type=jnp.float32)
    h = bn_relu(z, g2_ref, be2_ref).astype(mm)
    z = jnp.dot(h, w3_ref[...], preferred_element_type=jnp.float32)
    h = bn_relu(z, g3_ref, be3_ref).astype(mm)
    z = jnp.dot(h, w4_ref[...], preferred_element_type=jnp.float32)
    h = bn_relu(z, g4_ref, be4_ref).astype(mm)
    o_ref[...] = (jnp.dot(h, w5_ref[...], preferred_element_type=jnp.float32)
                  + b5_ref[...]).astype(o_ref.dtype)


def _full_spec(a):
    # Full-extent block (block == array dims is always legal, any shape).
    return pl.BlockSpec(a.shape, lambda i: (0,) * a.ndim)


def _fused_forward(x, prep):
    w1, w2, w3, w4, w5 = prep["ws"]
    g1, g2, g3, g4 = prep["gs"]
    be1, be2, be3, be4 = prep["bes"]
    b5 = prep["b5"]
    B = x.shape[0]
    dop = w5.shape[1]

    args = (x, w1, w2, w3, w4, w5, g1, be1, g2, be2, g3, be3, g4, be4, b5)
    cost = pl.CostEstimate(
        flops=2 * B * sum(w.shape[0] * w.shape[1] for w in prep["ws"]),
        transcendentals=sum(g.shape[1] for g in prep["gs"]),
        bytes_accessed=sum(_nbytes(a) for a in args) + B * dop * 4)
    kernel = functools.partial(_fused_mlp_kernel, inv_batch=1.0 / B)
    return pl.pallas_call(
        kernel,
        grid=(1,),
        in_specs=[_full_spec(a) for a in args],
        out_specs=pl.BlockSpec((B, dop), lambda i: (0, 0)),
        out_shape=jax.ShapeDtypeStruct((B, dop), jnp.float32),
        compiler_params=pltpu.CompilerParams(dimension_semantics=("arbitrary",)),
        cost_estimate=cost,
    )(*args)


# ------------------------- batch-tiled fallback (very large B) -----------------------

def _linear_stats_kernel(x_ref, w_ref, z_ref, stats_ref):
    """z = x @ W (no bias; absorbed by BN).  Store z bf16, stats from f32 accumulator."""
    z = jnp.dot(x_ref[...].astype(w_ref.dtype), w_ref[...],
                preferred_element_type=jnp.float32)
    z_ref[...] = z.astype(z_ref.dtype)
    stats_ref[0, 0:1, :] = jnp.sum(z, axis=0, keepdims=True)
    stats_ref[0, 1:2, :] = jnp.sum(z * z, axis=0, keepdims=True)


def _fold_bn(stats_in_ref, g_ref, be_ref, inv_batch):
    """Reduce per-tile (sum, sumsq) across tiles and fold into BN scale/shift (f32)."""
    sums = jnp.sum(stats_in_ref[...], axis=0)                   # (2, K)
    mean = sums[0:1, :] * inv_batch
    var = jnp.maximum(sums[1:2, :] * inv_batch - mean * mean, 0.0)
    scale = g_ref[...] * jax.lax.rsqrt(var + BN_EPS)
    shift = be_ref[...] - mean * scale
    return scale, shift


def _bn_relu_linear_stats_kernel(stats_in_ref, g_ref, be_ref, z_ref, w_ref,
                                 zo_ref, stats_ref, *,
                                 true_batch, block_b, need_mask):
    """Fold prev-layer stats; h = relu(z*scale+shift); z_out = h @ W; emit stats."""
    scale, shift = _fold_bn(stats_in_ref, g_ref, be_ref, 1.0 / true_batch)
    h = jnp.maximum(z_ref[...].astype(jnp.float32) * scale + shift, 0.0)
    if need_mask:  # zero padded batch rows so they don't pollute next-layer stats
        row = (pl.program_id(0) * block_b
               + jax.lax.broadcasted_iota(jnp.int32, (block_b, 1), 0))
        h = jnp.where(row < true_batch, h, 0.0)
    z = jnp.dot(h.astype(w_ref.dtype), w_ref[...], preferred_element_type=jnp.float32)
    zo_ref[...] = z.astype(zo_ref.dtype)
    stats_ref[0, 0:1, :] = jnp.sum(z, axis=0, keepdims=True)
    stats_ref[0, 1:2, :] = jnp.sum(z * z, axis=0, keepdims=True)


def _bn_relu_linear_kernel(stats_in_ref, g_ref, be_ref, z_ref, w_ref, b_ref,
                           o_ref, *, true_batch):
    """Final layer: fold prev-layer stats; out = relu(bn(z)) @ W5 + b5."""
    scale, shift = _fold_bn(stats_in_ref, g_ref, be_ref, 1.0 / true_batch)
    h = jnp.maximum(z_ref[...].astype(jnp.float32) * scale + shift, 0.0)
    o_ref[...] = (jnp.dot(h.astype(w_ref.dtype), w_ref[...],
                          preferred_element_type=jnp.float32)
                  + b_ref[...]).astype(o_ref.dtype)


def _parallel_params():
    # Batch tiles carry no resident accumulator -> v7x megacore can shard them.
    return pltpu.CompilerParams(dimension_semantics=("parallel",))


def _lin_stats_call(x, w, block_b):
    Bp, K = x.shape
    N = w.shape[1]
    nb = Bp // block_b
    cost = pl.CostEstimate(
        flops=2 * Bp * K * N, transcendentals=0,
        bytes_accessed=_nbytes(x) + _nbytes(w) + Bp * N * 2 + nb * 2 * N * 4)
    return pl.pallas_call(
        _linear_stats_kernel,
        grid=(nb,),
        in_specs=[
            pl.BlockSpec((block_b, K), lambda i: (i, 0)),
            pl.BlockSpec((K, N), lambda i: (0, 0)),
        ],
        out_specs=(
            pl.BlockSpec((block_b, N), lambda i: (i, 0)),
            pl.BlockSpec((1, 2, N), lambda i: (i, 0, 0)),
        ),
        out_shape=(
            jax.ShapeDtypeStruct((Bp, N), jnp.bfloat16),
            jax.ShapeDtypeStruct((nb, 2, N), jnp.float32),
        ),
        compiler_params=_parallel_params(),
        cost_estimate=cost,
    )(x, w)


def _bn_lin_stats_call(stats_in, g, be, z, w, block_b, true_batch):
    Bp, K = z.shape
    N = w.shape[1]
    nb = Bp // block_b
    nbp = stats_in.shape[0]
    kernel = functools.partial(
        _bn_relu_linear_stats_kernel, true_batch=true_batch,
        block_b=block_b, need_mask=(Bp != true_batch))
    cost = pl.CostEstimate(
        flops=2 * Bp * K * N + 4 * Bp * K, transcendentals=K,
        bytes_accessed=_nbytes(stats_in) + _nbytes(g) + _nbytes(be)
        + _nbytes(z) + _nbytes(w) + Bp * N * 2 + nb * 2 * N * 4)
    return pl.pallas_call(
        kernel,
        grid=(nb,),
        in_specs=[
            pl.BlockSpec((nbp, 2, K), lambda i: (0, 0, 0)),   # fetched once, resident
            pl.BlockSpec((1, K), lambda i: (0, 0)),
            pl.BlockSpec((1, K), lambda i: (0, 0)),
            pl.BlockSpec((block_b, K), lambda i: (i, 0)),
            pl.BlockSpec((K, N), lambda i: (0, 0)),
        ],
        out_specs=(
            pl.BlockSpec((block_b, N), lambda i: (i, 0)),
            pl.BlockSpec((1, 2, N), lambda i: (i, 0, 0)),
        ),
        out_shape=(
            jax.ShapeDtypeStruct((Bp, N), jnp.bfloat16),
            jax.ShapeDtypeStruct((nb, 2, N), jnp.float32),
        ),
        compiler_params=_parallel_params(),
        cost_estimate=cost,
    )(stats_in, g, be, z, w)


def _bn_lin_call(stats_in, g, be, z, w, b, block_b, true_batch):
    Bp, K = z.shape
    N = w.shape[1]
    nb = Bp // block_b
    nbp = stats_in.shape[0]
    kernel = functools.partial(_bn_relu_linear_kernel, true_batch=true_batch)
    cost = pl.CostEstimate(
        flops=2 * Bp * K * N + 4 * Bp * K, transcendentals=K,
        bytes_accessed=_nbytes(stats_in) + _nbytes(g) + _nbytes(be)
        + _nbytes(z) + _nbytes(w) + _nbytes(b) + Bp * N * 4)
    return pl.pallas_call(
        kernel,
        grid=(nb,),
        in_specs=[
            pl.BlockSpec((nbp, 2, K), lambda i: (0, 0, 0)),
            pl.BlockSpec((1, K), lambda i: (0, 0)),
            pl.BlockSpec((1, K), lambda i: (0, 0)),
            pl.BlockSpec((block_b, K), lambda i: (i, 0)),
            pl.BlockSpec((K, N), lambda i: (0, 0)),
            pl.BlockSpec((1, N), lambda i: (0, 0)),
        ],
        out_specs=pl.BlockSpec((block_b, N), lambda i: (i, 0)),
        out_shape=jax.ShapeDtypeStruct((Bp, N), jnp.float32),
        compiler_params=_parallel_params(),
        cost_estimate=cost,
    )(stats_in, g, be, z, w, b)


# --------------------------------- path selection ------------------------------------

def _fused_vmem_estimate(B, prep):
    w1, w2, w3, w4, w5 = prep["ws"]
    act = 4 * B * (w1.shape[0]
                   + 2 * (w1.shape[1] + w2.shape[1] + w3.shape[1] + w4.shape[1])
                   + w5.shape[1])
    wts = sum(_nbytes(w) for w in prep["ws"])
    return act + wts


def _pick_block_b(B, prep):
    w1, w2, w3, w4, w5 = prep["ws"]
    # worst per-row bytes across layers (input tile + output tile, bf16 z / f32 x,out)
    per_row = max(4 * w1.shape[0] + 2 * w1.shape[1],
                  2 * (w1.shape[1] + w2.shape[1]),
                  2 * (w2.shape[1] + w3.shape[1]),
                  2 * (w3.shape[1] + w4.shape[1]),
                  2 * w4.shape[1] + 4 * w5.shape[1])
    cap = _round_up(B, 8)
    for cand in (1024, 512, 256, 128, 64, 32, 16, 8):
        if cand <= cap and 4 * cand * per_row <= _TILE_VMEM_BUDGET:
            return cand
    return 8


def mlp_head_forward(x, prep, *, block_b=None, force_tiled=False):
    """Training-mode MLP_head forward (dropout p=0 is the identity).

    `prep` comes from prepare_params(params) (do it once, reuse across calls).
    A single fused pallas_call is used whenever the whole batch fits comfortably
    in VMEM; otherwise a batch-tiled per-layer pipeline is used (bf16 inter-layer
    activations, in-kernel BN-stat folds, padded+masked batch).
    """
    x = x.astype(jnp.float32)
    B = x.shape[0]
    out_dim = prep["out_dim"]
    w1, w2, w3, w4, w5 = prep["ws"]
    g1, g2, g3, g4 = prep["gs"]
    be1, be2, be3, be4 = prep["bes"]
    b5 = prep["b5"]

    use_fused = (not force_tiled and block_b is None
                 and _fused_vmem_estimate(B, prep) <= _FUSED_VMEM_BUDGET)
    if use_fused:
        return _fused_forward(x, prep)[:, :out_dim]

    # ---- batch-tiled fallback ----
    if block_b is None:
        block_b = _pick_block_b(B, prep)
    Bp = _round_up(B, block_b)
    if Bp != B:
        # zero rows: with biases dropped they contribute exactly 0 to layer-1 stats;
        # deeper layers mask them out explicitly inside the kernels.
        x = jnp.pad(x, ((0, Bp - B), (0, 0)))

    z1, s1 = _lin_stats_call(x, w1, block_b)                      # fc1 (+ bn1 stats)
    z2, s2 = _bn_lin_stats_call(s1, g1, be1, z1, w2, block_b, B)  # bn1+relu -> fc2
    z3, s3 = _bn_lin_stats_call(s2, g2, be2, z2, w3, block_b, B)  # bn2+relu -> fc3
    z4, s4 = _bn_lin_stats_call(s3, g3, be3, z3, w4, block_b, B)  # bn3+relu -> fc4
    out = _bn_lin_call(s4, g4, be4, z4, w5, b5, block_b, B)       # bn4+relu -> fc5
    return out[:B, :out_dim]


# ------------------------------ params / reference -----------------------------------

def init_params(key, input_dim, output_dim, l1=512, l2=256, l3=128, l4=64):
    """Deterministic synthetic parameters. Linear weights stored as (in, out)."""
    dims = [input_dim, l1, l2, l3, l4, output_dim]
    params = []
    for i in range(len(dims) - 1):
        key, kw, kb, kg, kbe = jax.random.split(key, 5)
        fan_in, fan_out = dims[i], dims[i + 1]
        w = jax.random.normal(kw, (fan_in, fan_out), jnp.float32) * 0.02
        b = jax.random.normal(kb, (1, fan_out), jnp.float32) * 0.02
        params += [w, b]
        if i < len(dims) - 2:  # BatchNorm after fc1..fc4 only
            g = 1.0 + 0.1 * jax.random.normal(kg, (1, fan_out), jnp.float32)
            be = 0.1 * jax.random.normal(kbe, (1, fan_out), jnp.float32)
            params += [g, be]
    return tuple(params)


def _reference_forward(x, params, matmul_dtype=jnp.float32):
    """Pure-JAX reference (PyTorch training-mode forward, dropout p=0, biases kept)."""
    (w1, b1, g1, be1, w2, b2, g2, be2, w3, b3, g3, be3,
     w4, b4, g4, be4, w5, b5) = params

    def lin(h, w, b):
        return jnp.dot(h.astype(matmul_dtype), w.astype(matmul_dtype),
                       preferred_element_type=jnp.float32) + b

    def bn_relu(h, g, be):
        mean = jnp.mean(h, axis=0, keepdims=True)
        var = jnp.mean((h - mean) ** 2, axis=0, keepdims=True)
        return jnp.maximum((h - mean) * jax.lax.rsqrt(var + BN_EPS) * g + be, 0.0)

    h = bn_relu(lin(x, w1, b1), g1, be1)
    h = bn_relu(lin(h, w2, b2), g2, be2)
    h = bn_relu(lin(h, w3, b3), g3, be3)
    h = bn_relu(lin(h, w4, b4), g4, be4)
    return lin(h, w5, b5)


if __name__ == "__main__":
    key = jax.random.PRNGKey(0)
    k_x, k_p = jax.random.split(key)

    # Feature dims are the module's defaults (32 -> 512 -> 256 -> 128 -> 64 -> 10);
    # batch 512 keeps BatchNorm statistics meaningful while the whole problem stays
    # tiny (the fused path keeps everything VMEM-resident).
    B, input_dim, output_dim = 512, 32, 10
    x = jax.random.normal(k_x, (B, input_dim), jnp.float32)
    params = init_params(k_p, input_dim, output_dim)
    prep = prepare_params(params)   # one-time: pad + bf16-cast weights, drop b1..b4

    ref_bf16 = _reference_forward(x, params, matmul_dtype=jnp.bfloat16)
    ref_f32 = _reference_forward(x, params, matmul_dtype=jnp.float32)

    # ---- primary: fully fused single pallas_call ----
    out = jax.block_until_ready(mlp_head_forward(x, prep))
    assert out.shape == (B, output_dim)
    assert jnp.allclose(out, ref_bf16, atol=1e-2, rtol=1e-2), \
        float(jnp.max(jnp.abs(out - ref_bf16)))
    assert jnp.allclose(out, ref_f32, atol=5e-2, rtol=5e-2)

    # ---- fallback: batch-tiled per-layer path (exercised with padding + masking) ----
    Bt = 300                         # awkward batch: pads to 384 with 128-row tiles
    xt = x[:Bt]
    out_t = jax.block_until_ready(
        mlp_head_forward(xt, prep, block_b=128, force_tiled=True))
    assert out_t.shape == (Bt, output_dim)
    ref_t = _reference_forward(xt, params, matmul_dtype=jnp.bfloat16)
    assert jnp.allclose(out_t, ref_t, atol=3e-2, rtol=3e-2), \
        float(jnp.max(jnp.abs(out_t - ref_t)))

    print("KERNEL_OK")
</pallas_src>

<mosaic_0001>
module attributes {stable_mosaic.version = 11 : i64} {
  func.func @_fused_mlp_kernel(%arg0: i32, %arg1: memref<512x32xf32, #tpu.memory_space<vmem>>, %arg2: memref<32x512xbf16, #tpu.memory_space<vmem>>, %arg3: memref<512x256xbf16, #tpu.memory_space<vmem>>, %arg4: memref<256x128xbf16, #tpu.memory_space<vmem>>, %arg5: memref<128x128xbf16, #tpu.memory_space<vmem>>, %arg6: memref<128x128xbf16, #tpu.memory_space<vmem>>, %arg7: memref<1x512xf32, #tpu.memory_space<vmem>>, %arg8: memref<1x512xf32, #tpu.memory_space<vmem>>, %arg9: memref<1x256xf32, #tpu.memory_space<vmem>>, %arg10: memref<1x256xf32, #tpu.memory_space<vmem>>, %arg11: memref<1x128xf32, #tpu.memory_space<vmem>>, %arg12: memref<1x128xf32, #tpu.memory_space<vmem>>, %arg13: memref<1x128xf32, #tpu.memory_space<vmem>>, %arg14: memref<1x128xf32, #tpu.memory_space<vmem>>, %arg15: memref<1x128xf32, #tpu.memory_space<vmem>>, %arg16: memref<512x128xf32, #tpu.memory_space<vmem>>) attributes {dimension_semantics = [#tpu.dimension_semantics<arbitrary>], iteration_bounds = array<i64: 1>, scalar_prefetch = 0 : i64, scratch_operands = 0 : i64, tpu.core_type = #tpu.core_type<tc>, window_params = [{pipeline_mode = #tpu.pipeline_mode<synchronous>, transform_indices = @transform_0, window_bounds = array<i64: 512, 32>}, {pipeline_mode = #tpu.pipeline_mode<synchronous>, transform_indices = @transform_1, window_bounds = array<i64: 32, 512>}, {pipeline_mode = #tpu.pipeline_mode<synchronous>, transform_indices = @transform_2, window_bounds = array<i64: 512, 256>}, {pipeline_mode = #tpu.pipeline_mode<synchronous>, transform_indices = @transform_3, window_bounds = array<i64: 256, 128>}, {pipeline_mode = #tpu.pipeline_mode<synchronous>, transform_indices = @transform_4, window_bounds = array<i64: 128, 128>}, {pipeline_mode = #tpu.pipeline_mode<synchronous>, transform_indices = @transform_5, window_bounds = array<i64: 128, 128>}, {pipeline_mode = #tpu.pipeline_mode<synchronous>, transform_indices = @transform_6, window_bounds = array<i64: 1, 512>}, {pipeline_mode = #tpu.pipeline_mode<synchronous>, transform_indices = @transform_7, window_bounds = array<i64: 1, 512>}, {pipeline_mode = #tpu.pipeline_mode<synchronous>, transform_indices = @transform_8, window_bounds = array<i64: 1, 256>}, {pipeline_mode = #tpu.pipeline_mode<synchronous>, transform_indices = @transform_9, window_bounds = array<i64: 1, 256>}, {pipeline_mode = #tpu.pipeline_mode<synchronous>, transform_indices = @transform_10, window_bounds = array<i64: 1, 128>}, {pipeline_mode = #tpu.pipeline_mode<synchronous>, transform_indices = @transform_11, window_bounds = array<i64: 1, 128>}, {pipeline_mode = #tpu.pipeline_mode<synchronous>, transform_indices = @transform_12, window_bounds = array<i64: 1, 128>}, {pipeline_mode = #tpu.pipeline_mode<synchronous>, transform_indices = @transform_13, window_bounds = array<i64: 1, 128>}, {pipeline_mode = #tpu.pipeline_mode<synchronous>, transform_indices = @transform_14, window_bounds = array<i64: 1, 128>}, {pipeline_mode = #tpu.pipeline_mode<synchronous>, transform_indices = @transform_15, window_bounds = array<i64: 512, 128>}]} {
    %c0 = arith.constant 0 : index
    %c0_0 = arith.constant 0 : index
    %0 = vector.load %arg1[%c0, %c0_0] : memref<512x32xf32, #tpu.memory_space<vmem>>, vector<512x32xf32>
    %1 = arith.truncf %0 : vector<512x32xf32> to vector<512x32xbf16>
    %c0_1 = arith.constant 0 : index
    %c0_2 = arith.constant 0 : index
    %2 = vector.load %arg2[%c0_1, %c0_2] : memref<32x512xbf16, #tpu.memory_space<vmem>>, vector<32x512xbf16>
    %cst = arith.constant dense<0.000000e+00> : vector<512x512xf32>
    %3 = tpu.matmul %1, %2, %cst {dimension_numbers = #tpu.dot_dimension_numbers<[1], [0], [0], [1], [0, 0, 1, 1], [], []>} : vector<512x32xbf16>, vector<32x512xbf16>, vector<512x512xf32> -> vector<512x512xf32>
    %cst_3 = arith.constant dense<0.000000e+00> : vector<512xf32>
    %4 = vector.multi_reduction <add>, %3, %cst_3 [0] : vector<512x512xf32> to vector<512xf32>
    %5 = vector.shape_cast %4 : vector<512xf32> to vector<1x512xf32>
    %cst_4 = arith.constant 0.001953125 : f32
    %6 = vector.broadcast %cst_4 : f32 to vector<1x512xf32>
    %7 = arith.mulf %5, %6 : vector<1x512xf32>
    %8 = arith.mulf %3, %3 : vector<512x512xf32>
    %cst_5 = arith.constant dense<0.000000e+00> : vector<512xf32>
    %9 = vector.multi_reduction <add>, %8, %cst_5 [0] : vector<512x512xf32> to vector<512xf32>
    %10 = vector.shape_cast %9 : vector<512xf32> to vector<1x512xf32>
    %cst_6 = arith.constant 0.001953125 : f32
    %11 = vector.broadcast %cst_6 : f32 to vector<1x512xf32>
    %12 = arith.mulf %10, %11 : vector<1x512xf32>
    %13 = arith.mulf %7, %7 : vector<1x512xf32>
    %14 = arith.subf %12, %13 : vector<1x512xf32>
    %cst_7 = arith.constant 0.000000e+00 : f32
    %15 = vector.broadcast %cst_7 : f32 to vector<1x512xf32>
    %16 = arith.maximumf %14, %15 : vector<1x512xf32>
    %c0_8 = arith.constant 0 : index
    %c0_9 = arith.constant 0 : index
    %17 = vector.load %arg7[%c0_8, %c0_9] : memref<1x512xf32, #tpu.memory_space<vmem>>, vector<1x512xf32>
    %cst_10 = arith.constant 9.99999974E-6 : f32
    %18 = vector.broadcast %cst_10 : f32 to vector<1x512xf32>
    %19 = arith.addf %16, %18 : vector<1x512xf32>
    %20 = math.rsqrt %19 : vector<1x512xf32>
    %21 = arith.mulf %17, %20 : vector<1x512xf32>
    %c0_11 = arith.constant 0 : index
    %c0_12 = arith.constant 0 : index
    %22 = vector.load %arg8[%c0_11, %c0_12] : memref<1x512xf32, #tpu.memory_space<vmem>>, vector<1x512xf32>
    %23 = arith.mulf %7, %21 : vector<1x512xf32>
    %24 = arith.subf %22, %23 : vector<1x512xf32>
    %25 = vector.broadcast %21 : vector<1x512xf32> to vector<512x512xf32>
    %26 = arith.mulf %3, %25 : vector<512x512xf32>
    %27 = vector.broadcast %24 : vector<1x512xf32> to vector<512x512xf32>
    %28 = arith.addf %26, %27 : vector<512x512xf32>
    %cst_13 = arith.constant 0.000000e+00 : f32
    %29 = vector.broadcast %cst_13 : f32 to vector<512x512xf32>
    %30 = arith.maximumf %28, %29 : vector<512x512xf32>
    %31 = arith.truncf %30 : vector<512x512xf32> to vector<512x512xbf16>
    %c0_14 = arith.constant 0 : index
    %c0_15 = arith.constant 0 : index
    %32 = vector.load %arg3[%c0_14, %c0_15] : memref<512x256xbf16, #tpu.memory_space<vmem>>, vector<512x256xbf16>
    %cst_16 = arith.constant dense<0.000000e+00> : vector<512x256xf32>
    %33 = tpu.matmul %31, %32, %cst_16 {dimension_numbers = #tpu.dot_dimension_numbers<[1], [0], [0], [1], [0, 0, 1, 1], [], []>} : vector<512x512xbf16>, vector<512x256xbf16>, vector<512x256xf32> -> vector<512x256xf32>
    %cst_17 = arith.constant dense<0.000000e+00> : vector<256xf32>
    %34 = vector.multi_reduction <add>, %33, %cst_17 [0] : vector<512x256xf32> to vector<256xf32>
    %35 = vector.shape_cast %34 : vector<256xf32> to vector<1x256xf32>
    %cst_18 = arith.constant 0.001953125 : f32
    %36 = vector.broadcast %cst_18 : f32 to vector<1x256xf32>
    %37 = arith.mulf %35, %36 : vector<1x256xf32>
    %38 = arith.mulf %33, %33 : vector<512x256xf32>
    %cst_19 = arith.constant dense<0.000000e+00> : vector<256xf32>
    %39 = vector.multi_reduction <add>, %38, %cst_19 [0] : vector<512x256xf32> to vector<256xf32>
    %40 = vector.shape_cast %39 : vector<256xf32> to vector<1x256xf32>
    %cst_20 = arith.constant 0.001953125 : f32
    %41 = vector.broadcast %cst_20 : f32 to vector<1x256xf32>
    %42 = arith.mulf %40, %41 : vector<1x256xf32>
    %43 = arith.mulf %37, %37 : vector<1x256xf32>
    %44 = arith.subf %42, %43 : vector<1x256xf32>
    %cst_21 = arith.constant 0.000000e+00 : f32
    %45 = vector.broadcast %cst_21 : f32 to vector<1x256xf32>
    %46 = arith.maximumf %44, %45 : vector<1x256xf32>
    %c0_22 = arith.constant 0 : index
    %c0_23 = arith.constant 0 : index
    %47 = vector.load %arg9[%c0_22, %c0_23] : memref<1x256xf32, #tpu.memory_space<vmem>>, vector<1x256xf32>
    %cst_24 = arith.constant 9.99999974E-6 : f32
    %48 = vector.broadcast %cst_24 : f32 to vector<1x256xf32>
    %49 = arith.addf %46, %48 : vector<1x256xf32>
    %50 = math.rsqrt %49 : vector<1x256xf32>
    %51 = arith.mulf %47, %50 : vector<1x256xf32>
    %c0_25 = arith.constant 0 : index
    %c0_26 = arith.constant 0 : index
    %52 = vector.load %arg10[%c0_25, %c0_26] : memref<1x256xf32, #tpu.memory_space<vmem>>, vector<1x256xf32>
    %53 = arith.mulf %37, %51 : vector<1x256xf32>
    %54 = arith.subf %52, %53 : vector<1x256xf32>
    %55 = vector.broadcast %51 : vector<1x256xf32> to vector<512x256xf32>
    %56 = arith.mulf %33, %55 : vector<512x256xf32>
    %57 = vector.broadcast %54 : vector<1x256xf32> to vector<512x256xf32>
    %58 = arith.addf %56, %57 : vector<512x256xf32>
    %cst_27 = arith.constant 0.000000e+00 : f32
    %59 = vector.broadcast %cst_27 : f32 to vector<512x256xf32>
    %60 = arith.maximumf %58, %59 : vector<512x256xf32>
    %61 = arith.truncf %60 : vector<512x256xf32> to vector<512x256xbf16>
    %c0_28 = arith.constant 0 : index
    %c0_29 = arith.constant 0 : index
    %62 = vector.load %arg4[%c0_28, %c0_29] : memref<256x128xbf16, #tpu.memory_space<vmem>>, vector<256x128xbf16>
    %cst_30 = arith.constant dense<0.000000e+00> : vector<512x128xf32>
    %63 = tpu.matmul %61, %62, %cst_30 {dimension_numbers = #tpu.dot_dimension_numbers<[1], [0], [0], [1], [0, 0, 1, 1], [], []>} : vector<512x256xbf16>, vector<256x128xbf16>, vector<512x128xf32> -> vector<512x128xf32>
    %cst_31 = arith.constant dense<0.000000e+00> : vector<128xf32>
    %64 = vector.multi_reduction <add>, %63, %cst_31 [0] : vector<512x128xf32> to vector<128xf32>
    %65 = vector.shape_cast %64 : vector<128xf32> to vector<1x128xf32>
    %cst_32 = arith.constant 0.001953125 : f32
    %66 = vector.broadcast %cst_32 : f32 to vector<1x128xf32>
    %67 = arith.mulf %65, %66 : vector<1x128xf32>
    %68 = arith.mulf %63, %63 : vector<512x128xf32>
    %cst_33 = arith.constant dense<0.000000e+00> : vector<128xf32>
    %69 = vector.multi_reduction <add>, %68, %cst_33 [0] : vector<512x128xf32> to vector<128xf32>
    %70 = vector.shape_cast %69 : vector<128xf32> to vector<1x128xf32>
    %cst_34 = arith.constant 0.001953125 : f32
    %71 = vector.broadcast %cst_34 : f32 to vector<1x128xf32>
    %72 = arith.mulf %70, %71 : vector<1x128xf32>
    %73 = arith.mulf %67, %67 : vector<1x128xf32>
    %74 = arith.subf %72, %73 : vector<1x128xf32>
    %cst_35 = arith.constant 0.000000e+00 : f32
    %75 = vector.broadcast %cst_35 : f32 to vector<1x128xf32>
    %76 = arith.maximumf %74, %75 : vector<1x128xf32>
    %c0_36 = arith.constant 0 : index
    %c0_37 = arith.constant 0 : index
    %77 = vector.load %arg11[%c0_36, %c0_37] : memref<1x128xf32, #tpu.memory_space<vmem>>, vector<1x128xf32>
    %cst_38 = arith.constant 9.99999974E-6 : f32
    %78 = vector.broadcast %cst_38 : f32 to vector<1x128xf32>
    %79 = arith.addf %76, %78 : vector<1x128xf32>
    %80 = math.rsqrt %79 : vector<1x128xf32>
    %81 = arith.mulf %77, %80 : vector<1x128xf32>
    %c0_39 = arith.constant 0 : index
    %c0_40 = arith.constant 0 : index
    %82 = vector.load %arg12[%c0_39, %c0_40] : memref<1x128xf32, #tpu.memory_space<vmem>>, vector<1x128xf32>
    %83 = arith.mulf %67, %81 : vector<1x128xf32>
    %84 = arith.subf %82, %83 : vector<1x128xf32>
    %85 = vector.broadcast %81 : vector<1x128xf32> to vector<512x128xf32>
    %86 = arith.mulf %63, %85 : vector<512x128xf32>
    %87 = vector.broadcast %84 : vector<1x128xf32> to vector<512x128xf32>
    %88 = arith.addf %86, %87 : vector<512x128xf32>
    %cst_41 = arith.constant 0.000000e+00 : f32
    %89 = vector.broadcast %cst_41 : f32 to vector<512x128xf32>
    %90 = arith.maximumf %88, %89 : vector<512x128xf32>
    %91 = arith.truncf %90 : vector<512x128xf32> to vector<512x128xbf16>
    %c0_42 = arith.constant 0 : index
    %c0_43 = arith.constant 0 : index
    %92 = vector.load %arg5[%c0_42, %c0_43] : memref<128x128xbf16, #tpu.memory_space<vmem>>, vector<128x128xbf16>
    %cst_44 = arith.constant dense<0.000000e+00> : vector<512x128xf32>
    %93 = tpu.matmul %91, %92, %cst_44 {dimension_numbers = #tpu.dot_dimension_numbers<[1], [0], [0], [1], [0, 0, 1, 1], [], []>} : vector<512x128xbf16>, vector<128x128xbf16>, vector<512x128xf32> -> vector<512x128xf32>
    %cst_45 = arith.constant dense<0.000000e+00> : vector<128xf32>
    %94 = vector.multi_reduction <add>, %93, %cst_45 [0] : vector<512x128xf32> to vector<128xf32>
    %95 = vector.shape_cast %94 : vector<128xf32> to vector<1x128xf32>
    %cst_46 = arith.constant 0.001953125 : f32
    %96 = vector.broadcast %cst_46 : f32 to vector<1x128xf32>
    %97 = arith.mulf %95, %96 : vector<1x128xf32>
    %98 = arith.mulf %93, %93 : vector<512x128xf32>
    %cst_47 = arith.constant dense<0.000000e+00> : vector<128xf32>
    %99 = vector.multi_reduction <add>, %98, %cst_47 [0] : vector<512x128xf32> to vector<128xf32>
    %100 = vector.shape_cast %99 : vector<128xf32> to vector<1x128xf32>
    %cst_48 = arith.constant 0.001953125 : f32
    %101 = vector.broadcast %cst_48 : f32 to vector<1x128xf32>
    %102 = arith.mulf %100, %101 : vector<1x128xf32>
    %103 = arith.mulf %97, %97 : vector<1x128xf32>
    %104 = arith.subf %102, %103 : vector<1x128xf32>
    %cst_49 = arith.constant 0.000000e+00 : f32
    %105 = vector.broadcast %cst_49 : f32 to vector<1x128xf32>
    %106 = arith.maximumf %104, %105 : vector<1x128xf32>
    %c0_50 = arith.constant 0 : index
    %c0_51 = arith.constant 0 : index
    %107 = vector.load %arg13[%c0_50, %c0_51] : memref<1x128xf32, #tpu.memory_space<vmem>>, vector<1x128xf32>
    %cst_52 = arith.constant 9.99999974E-6 : f32
    %108 = vector.broadcast %cst_52 : f32 to vector<1x128xf32>
    %109 = arith.addf %106, %108 : vector<1x128xf32>
    %110 = math.rsqrt %109 : vector<1x128xf32>
    %111 = arith.mulf %107, %110 : vector<1x128xf32>
    %c0_53 = arith.constant 0 : index
    %c0_54 = arith.constant 0 : index
    %112 = vector.load %arg14[%c0_53, %c0_54] : memref<1x128xf32, #tpu.memory_space<vmem>>, vector<1x128xf32>
    %113 = arith.mulf %97, %111 : vector<1x128xf32>
    %114 = arith.subf %112, %113 : vector<1x128xf32>
    %115 = vector.broadcast %111 : vector<1x128xf32> to vector<512x128xf32>
    %116 = arith.mulf %93, %115 : vector<512x128xf32>
    %117 = vector.broadcast %114 : vector<1x128xf32> to vector<512x128xf32>
    %118 = arith.addf %116, %117 : vector<512x128xf32>
    %cst_55 = arith.constant 0.000000e+00 : f32
    %119 = vector.broadcast %cst_55 : f32 to vector<512x128xf32>
    %120 = arith.maximumf %118, %119 : vector<512x128xf32>
    %121 = arith.truncf %120 : vector<512x128xf32> to vector<512x128xbf16>
    %c0_56 = arith.constant 0 : index
    %c0_57 = arith.constant 0 : index
    %122 = vector.load %arg6[%c0_56, %c0_57] : memref<128x128xbf16, #tpu.memory_space<vmem>>, vector<128x128xbf16>
    %cst_58 = arith.constant dense<0.000000e+00> : vector<512x128xf32>
    %123 = tpu.matmul %121, %122, %cst_58 {dimension_numbers = #tpu.dot_dimension_numbers<[1], [0], [0], [1], [0, 0, 1, 1], [], []>} : vector<512x128xbf16>, vector<128x128xbf16>, vector<512x128xf32> -> vector<512x128xf32>
    %c0_59 = arith.constant 0 : index
    %c0_60 = arith.constant 0 : index
    %124 = vector.load %arg15[%c0_59, %c0_60] : memref<1x128xf32, #tpu.memory_space<vmem>>, vector<1x128xf32>
    %125 = vector.broadcast %124 : vector<1x128xf32> to vector<512x128xf32>
    %126 = arith.addf %123, %125 : vector<512x128xf32>
    %c0_61 = arith.constant 0 : index
    %c0_62 = arith.constant 0 : index
    %127 = vector.load %arg16[%c0_61, %c0_62] : memref<512x128xf32, #tpu.memory_space<vmem>>, vector<512x128xf32>
    tpu.vector_store %arg16[%c0_61, %c0_62], %126 {strides = array<i32>} : memref<512x128xf32, #tpu.memory_space<vmem>>, vector<512x128xf32>,
    return
  }
  func.func @transform_0(%arg0: i32) -> (i32, i32) {
    %c0_i32 = arith.constant 0 : i32
    %c0_i32_0 = arith.constant 0 : i32
    %c0_i32_1 = arith.constant 0 : i32
    return %c0_i32, %c0_i32_0 : i32, i32
  }
  func.func @transform_1(%arg0: i32) -> (i32, i32) {
    %c0_i32 = arith.constant 0 : i32
    %c0_i32_0 = arith.constant 0 : i32
    %c0_i32_1 = arith.constant 0 : i32
    return %c0_i32, %c0_i32_0 : i32, i32
  }
  func.func @transform_2(%arg0: i32) -> (i32, i32) {
    %c0_i32 = arith.constant 0 : i32
    %c0_i32_0 = arith.constant 0 : i32
    %c0_i32_1 = arith.constant 0 : i32
    return %c0_i32, %c0_i32_0 : i32, i32
  }
  func.func @transform_3(%arg0: i32) -> (i32, i32) {
    %c0_i32 = arith.constant 0 : i32
    %c0_i32_0 = arith.constant 0 : i32
    %c0_i32_1 = arith.constant 0 : i32
    return %c0_i32, %c0_i32_0 : i32, i32
  }
  func.func @transform_4(%arg0: i32) -> (i32, i32) {
    %c0_i32 = arith.constant 0 : i32
    %c0_i32_0 = arith.constant 0 : i32
    %c0_i32_1 = arith.constant 0 : i32
    return %c0_i32, %c0_i32_0 : i32, i32
  }
  func.func @transform_5(%arg0: i32) -> (i32, i32) {
    %c0_i32 = arith.constant 0 : i32
    %c0_i32_0 = arith.constant 0 : i32
    %c0_i32_1 = arith.constant 0 : i32
    return %c0_i32, %c0_i32_0 : i32, i32
  }
  func.func @transform_6(%arg0: i32) -> (i32, i32) {
    %c0_i32 = arith.constant 0 : i32
    %c0_i32_0 = arith.constant 0 : i32
    %c0_i32_1 = arith.constant 0 : i32
    return %c0_i32, %c0_i32_0 : i32, i32
  }
  func.func @transform_7(%arg0: i32) -> (i32, i32) {
    %c0_i32 = arith.constant 0 : i32
    %c0_i32_0 = arith.constant 0 : i32
    %c0_i32_1 = arith.constant 0 : i32
    return %c0_i32, %c0_i32_0 : i32, i32
  }
  func.func @transform_8(%arg0: i32) -> (i32, i32) {
    %c0_i32 = arith.constant 0 : i32
    %c0_i32_0 = arith.constant 0 : i32
    %c0_i32_1 = arith.constant 0 : i32
    return %c0_i32, %c0_i32_0 : i32, i32
  }
  func.func @transform_9(%arg0: i32) -> (i32, i32) {
    %c0_i32 = arith.constant 0 : i32
    %c0_i32_0 = arith.constant 0 : i32
    %c0_i32_1 = arith.constant 0 : i32
    return %c0_i32, %c0_i32_0 : i32, i32
  }
  func.func @transform_10(%arg0: i32) -> (i32, i32) {
    %c0_i32 = arith.constant 0 : i32
    %c0_i32_0 = arith.constant 0 : i32
    %c0_i32_1 = arith.constant 0 : i32
    return %c0_i32, %c0_i32_0 : i32, i32
  }
  func.func @transform_11(%arg0: i32) -> (i32, i32) {
    %c0_i32 = arith.constant 0 : i32
    %c0_i32_0 = arith.constant 0 : i32
    %c0_i32_1 = arith.constant 0 : i32
    return %c0_i32, %c0_i32_0 : i32, i32
  }
  func.func @transform_12(%arg0: i32) -> (i32, i32) {
    %c0_i32 = arith.constant 0 : i32
    %c0_i32_0 = arith.constant 0 : i32
    %c0_i32_1 = arith.constant 0 : i32
    return %c0_i32, %c0_i32_0 : i32, i32
  }
  func.func @transform_13(%arg0: i32) -> (i32, i32) {
    %c0_i32 = arith.constant 0 : i32
    %c0_i32_0 = arith.constant 0 : i32
    %c0_i32_1 = arith.constant 0 : i32
    return %c0_i32, %c0_i32_0 : i32, i32
  }
  func.func @transform_14(%arg0: i32) -> (i32, i32) {
    %c0_i32 = arith.constant 0 : i32
    %c0_i32_0 = arith.constant 0 : i32
    %c0_i32_1 = arith.constant 0 : i32
    return %c0_i32, %c0_i32_0 : i32, i32
  }
  func.func @transform_15(%arg0: i32) -> (i32, i32) {
    %c0_i32 = arith.constant 0 : i32
    %c0_i32_0 = arith.constant 0 : i32
    %c0_i32_1 = arith.constant 0 : i32
    return %c0_i32, %c0_i32_0 : i32, i32
  }
}

</mosaic_0001>

<llo_original>
// kernel: tpu_custom_call.1
$region0: #{tpu_custom_call.1}
  #allocation0 [shape = 'u32[]', space=smem, size = 0x4, offset = 0x4, fixed_abs, tag = 'smem constant byte address 0x4 - core index']
  #allocation1 [shape = 'u32[72,128]{1,0:T(1,128)}', space=vmem, size = 0x9000, scoped, tag = 'internal scratch']
  %s0 = inlined_call_operand.vmem [shape: f32[512,32], index: 0, kind: input, shape index: {}]
  %s1 = inlined_call_operand.hbm [shape: bf16[32,512], index: 1, kind: input, shape index: {}]
  %s2 = inlined_call_operand.vmem [shape: bf16[512,256], index: 2, kind: input, shape index: {}]
  %s3 = inlined_call_operand.vmem [shape: bf16[256,128], index: 3, kind: input, shape index: {}]
  %s4 = inlined_call_operand.hbm [shape: bf16[128,128], index: 4, kind: input, shape index: {}]
  %s5 = inlined_call_operand.hbm [shape: bf16[128,128], index: 5, kind: input, shape index: {}]
  %s6 = inlined_call_operand.hbm [shape: f32[1,512], index: 6, kind: input, shape index: {}]
  %s7 = inlined_call_operand.vmem [shape: f32[1,512], index: 7, kind: input, shape index: {}]
  %s8 = inlined_call_operand.vmem [shape: f32[1,256], index: 8, kind: input, shape index: {}]
  %s9 = inlined_call_operand.hbm [shape: f32[1,256], index: 9, kind: input, shape index: {}]
  %s10 = inlined_call_operand.hbm [shape: f32[1,128], index: 10, kind: input, shape index: {}]
  %s11 = inlined_call_operand.hbm [shape: f32[1,128], index: 11, kind: input, shape index: {}]
  %s12 = inlined_call_operand.hbm [shape: f32[1,128], index: 12, kind: input, shape index: {}]
  %s13 = inlined_call_operand.hbm [shape: f32[1,128], index: 13, kind: input, shape index: {}]
  %s14 = inlined_call_operand.vmem [shape: f32[1,128], index: 14, kind: input, shape index: {}]
  %s15 = inlined_call_operand.hbm [shape: f32[512,128], index: 15, kind: output, shape index: {}]
  %s16 = sld [smem:[#allocation0]]
  $region106: #{tpu_custom_call.1} parent=0
    _
  %s18 = ssub.s32 1, %s16
  %s19 = scalar_select 0, %s18, %s16
  $region1: #{tpu_custom_call.1} parent=0
    #allocation2 [shape = 'u8[32768]{0}', space=vmem, size = 0x8000, scoped, tag = 'input window, operand 1, single buffered']
    #allocation3 [shape = 's32[1]{0}', space=sflag, size = 0x4, scoped, tag = 'scoped memory for tpu_custom_call.1']
    #allocation4 [shape = 's32[1]{0}', space=sflag, size = 0x4, scoped, tag = 'scoped memory for tpu_custom_call.1']
    #allocation5 [shape = 'u8[32768]{0}', space=vmem, size = 0x8000, scoped, tag = 'input window, operand 4, single buffered']
    #allocation6 [shape = 's32[1]{0}', space=sflag, size = 0x4, scoped, tag = 'scoped memory for tpu_custom_call.1']
    #allocation7 [shape = 'u8[32768]{0}', space=vmem, size = 0x8000, scoped, tag = 'input window, operand 5, single buffered']
    #allocation8 [shape = 'u8[2048]{0}', space=vmem, size = 0x800, scoped, tag = 'input window, operand 6, single buffered']
    #allocation9 [shape = 's32[1]{0}', space=sflag, size = 0x4, scoped, tag = 'scoped memory for tpu_custom_call.1']
    #allocation10 [shape = 'u8[1024]{0}', space=vmem, size = 0x400, scoped, tag = 'input window, operand 9, single buffered']
    #allocation11 [shape = 'u8[512]{0}', space=vmem, size = 0x400, scoped, tag = 'input window, operand 10, single buffered']
    #allocation12 [shape = 's32[1]{0}', space=sflag, size = 0x4, scoped, tag = 'scoped memory for tpu_custom_call.1']
    #allocation13 [shape = 'u8[512]{0}', space=vmem, size = 0x400, scoped, tag = 'input window, operand 11, single buffered']
    #allocation14 [shape = 'u8[512]{0}', space=vmem, size = 0x400, scoped, tag = 'input window, operand 12, single buffered']
    #allocation15 [shape = 's32[1]{0}', space=sflag, size = 0x4, scoped, tag = 'scoped memory for tpu_custom_call.1']
    #allocation16 [shape = 'u8[512]{0}', space=vmem, size = 0x400, scoped, tag = 'input window, operand 13, single buffered']
    #allocation17 [shape = 'u8[262144]{0}', space=vmem, size = 0x40000, scoped, tag = 'output window, operand 0, single buffered']
    %20 = vsyncpa [#allocation3], 0
    %21 = vsyncpa [#allocation6], 0
    %22 = vsyncpa [#allocation9], 0
    %23 = vsyncpa [#allocation12], 0
    %24 = vsyncpa [#allocation15], 0
    %25 = vsyncpa [#allocation4], 0
    // Predicated region
    $region2: #{tpu_custom_call.1} parent=1 // pred_check
      _
    $region3: #{tpu_custom_call.1} parent=1 // pred_check_branch
      %27 = sbr.rel (0) target = $region5
    $region4: #{tpu_custom_call.1} parent=1 // pred_region
      _
    $region5: #{tpu_custom_call.1} parent=1 // pred_fallthru
      _
    // Predicated region
    $region6: #{tpu_custom_call.1} parent=1 // pred_check
      _
    $region7: #{tpu_custom_call.1} parent=1 // pred_check_branch
      %29 = sbr.rel (0) target = $region9
    $region8: #{tpu_custom_call.1} parent=1 // pred_region
      %31 = vsyncadd [#allocation3], 0
      %s32 = sshll.u32 %s1, 4
      %s33 = int_to_ptr.hbm [resolvable:$true] %s32
      %s34 = sshll.u32 [#allocation2], 4
      %s35 = int_to_ptr.vmem [resolvable:$true] %s34
      %40 = dma.hbm_to_vmem [thread:$0]  %s33, 1024, %s35, [#allocation3], 256, 256, 16
    $region9: #{tpu_custom_call.1} parent=1 // pred_fallthru
      _
    // Predicated region
    $region10: #{tpu_custom_call.1} parent=1 // pred_check
      _
    $region11: #{tpu_custom_call.1} parent=1 // pred_check_branch
      %42 = sbr.rel (0) target = $region13
    $region12: #{tpu_custom_call.1} parent=1 // pred_region
      _
    $region13: #{tpu_custom_call.1} parent=1 // pred_fallthru
      _
    // Predicated region
    $region14: #{tpu_custom_call.1} parent=1 // pred_check
      _
    $region15: #{tpu_custom_call.1} parent=1 // pred_check_branch
      %44 = sbr.rel (0) target = $region17
    $region16: #{tpu_custom_call.1} parent=1 // pred_region
      _
    $region17: #{tpu_custom_call.1} parent=1 // pred_fallthru
      _
    // Predicated region
    $region18: #{tpu_custom_call.1} parent=1 // pred_check
      _
    $region19: #{tpu_custom_call.1} parent=1 // pred_check_branch
      %46 = sbr.rel (0) target = $region21
    $region20: #{tpu_custom_call.1} parent=1 // pred_region
      %48 = vsyncadd [#allocation6], 0
      %s49 = sshll.u32 %s4, 4
      %s50 = int_to_ptr.hbm [resolvable:$true] %s49
      %s51 = sshll.u32 [#allocation5], 4
      %s52 = int_to_ptr.vmem [resolvable:$true] %s51
      %57 = dma.hbm_to_vmem [thread:$0]  %s50, 1024, %s52, [#allocation6], 64, 64, 4
    $region21: #{tpu_custom_call.1} parent=1 // pred_fallthru
      _
    // Predicated region
    $region22: #{tpu_custom_call.1} parent=1 // pred_check
      _
    $region23: #{tpu_custom_call.1} parent=1 // pred_check_branch
      %59 = sbr.rel (0) target = $region25
    $region24: #{tpu_custom_call.1} parent=1 // pred_region
      %61 = vsyncadd [#allocation6], 0
      %s62 = sshll.u32 %s5, 4
      %s63 = int_to_ptr.hbm [resolvable:$true] %s62
      %s64 = sshll.u32 [#allocation7], 4
      %s65 = int_to_ptr.vmem [resolvable:$true] %s64
      %70 = dma.hbm_to_vmem [thread:$0]  %s63, 1024, %s65, [#allocation6], 64, 64, 4
    $region25: #{tpu_custom_call.1} parent=1 // pred_fallthru
      _
    // Predicated region
    $region26: #{tpu_custom_call.1} parent=1 // pred_check
      _
    $region27: #{tpu_custom_call.1} parent=1 // pred_check_branch
      %72 = sbr.rel (0) target = $region29
    $region28: #{tpu_custom_call.1} parent=1 // pred_region
      %74 = vsyncadd [#allocation9], 0
      %s76 = sshll.u32 %s6, 4
      %s77 = int_to_ptr.hbm [resolvable:$true] %s76
      %s78 = sshll.u32 [#allocation8], 4
      %s79 = int_to_ptr.vmem [resolvable:$true] %s78
      %81 = dma.hbm_to_vmem [thread:$0]  %s77, 64, %s79, [#allocation9]
    $region29: #{tpu_custom_call.1} parent=1 // pred_fallthru
      _
    // Predicated region
    $region30: #{tpu_custom_call.1} parent=1 // pred_check
      _
    $region31: #{tpu_custom_call.1} parent=1 // pred_check_branch
      %83 = sbr.rel (0) target = $region33
    $region32: #{tpu_custom_call.1} parent=1 // pred_region
      _
    $region33: #{tpu_custom_call.1} parent=1 // pred_fallthru
      _
    // Predicated region
    $region34: #{tpu_custom_call.1} parent=1 // pred_check
      _
    $region35: #{tpu_custom_call.1} parent=1 // pred_check_branch
      %85 = sbr.rel (0) target = $region37
    $region36: #{tpu_custom_call.1} parent=1 // pred_region
      _
    $region37: #{tpu_custom_call.1} parent=1 // pred_fallthru
      _
    // Predicated region
    $region38: #{tpu_custom_call.1} parent=1 // pred_check
      _
    $region39: #{tpu_custom_call.1} parent=1 // pred_check_branch
      %87 = sbr.rel (0) target = $region41
    $region40: #{tpu_custom_call.1} parent=1 // pred_region
      %89 = vsyncadd [#allocation9], 0
      %s91 = sshll.u32 %s9, 4
      %s92 = int_to_ptr.hbm [resolvable:$true] %s91
      %s93 = sshll.u32 [#allocation10], 4
      %s94 = int_to_ptr.vmem [resolvable:$true] %s93
      %96 = dma.hbm_to_vmem [thread:$0]  %s92, 32, %s94, [#allocation9]
    $region41: #{tpu_custom_call.1} parent=1 // pred_fallthru
      _
    // Predicated region
    $region42: #{tpu_custom_call.1} parent=1 // pred_check
      _
    $region43: #{tpu_custom_call.1} parent=1 // pred_check_branch
      %98 = sbr.rel (0) target = $region45
    $region44: #{tpu_custom_call.1} parent=1 // pred_region
      %100 = vsyncadd [#allocation12], 0
      %s102 = sshll.u32 %s10, 4
      %s103 = int_to_ptr.hbm [resolvable:$true] %s102
      %s104 = sshll.u32 [#allocation11], 4
      %s105 = int_to_ptr.vmem [resolvable:$true] %s104
      %107 = dma.hbm_to_vmem [thread:$0]  %s103, 16, %s105, [#allocation12]
    $region45: #{tpu_custom_call.1} parent=1 // pred_fallthru
      _
    // Predicated region
    $region46: #{tpu_custom_call.1} parent=1 // pred_check
      _
    $region47: #{tpu_custom_call.1} parent=1 // pred_check_branch
      %109 = sbr.rel (0) target = $region49
    $region48: #{tpu_custom_call.1} parent=1 // pred_region
      %111 = vsyncadd [#allocation12], 0
      %s113 = sshll.u32 %s11, 4
      %s114 = int_to_ptr.hbm [resolvable:$true] %s113
      %s115 = sshll.u32 [#allocation13], 4
      %s116 = int_to_ptr.vmem [resolvable:$true] %s115
      %118 = dma.hbm_to_vmem [thread:$0]  %s114, 16, %s116, [#allocation12]
    $region49: #{tpu_custom_call.1} parent=1 // pred_fallthru
      _
    // Predicated region
    $region50: #{tpu_custom_call.1} parent=1 // pred_check
      _
    $region51: #{tpu_custom_call.1} parent=1 // pred_check_branch
      %120 = sbr.rel (0) target = $region53
    $region52: #{tpu_custom_call.1} parent=1 // pred_region
      %122 = vsyncadd [#allocation15], 0
      %s124 = sshll.u32 %s12, 4
      %s125 = int_to_ptr.hbm [resolvable:$true] %s124
      %s126 = sshll.u32 [#allocation14], 4
      %s127 = int_to_ptr.vmem [resolvable:$true] %s126
      %129 = dma.hbm_to_vmem [thread:$0]  %s125, 16, %s127, [#allocation15]
    $region53: #{tpu_custom_call.1} parent=1 // pred_fallthru
      _
    // Predicated region
    $region54: #{tpu_custom_call.1} parent=1 // pred_check
      _
    $region55: #{tpu_custom_call.1} parent=1 // pred_check_branch
      %131 = sbr.rel (0) target = $region57
    $region56: #{tpu_custom_call.1} parent=1 // pred_region
      %133 = vsyncadd [#allocation15], 0
      %s135 = sshll.u32 %s13, 4
      %s136 = int_to_ptr.hbm [resolvable:$true] %s135
      %s137 = sshll.u32 [#allocation16], 4
      %s138 = int_to_ptr.vmem [resolvable:$true] %s137
      %140 = dma.hbm_to_vmem [thread:$0]  %s136, 16, %s138, [#allocation15]
    $region57: #{tpu_custom_call.1} parent=1 // pred_fallthru
      _
    // Predicated region
    $region58: #{tpu_custom_call.1} parent=1 // pred_check
      _
    $region59: #{tpu_custom_call.1} parent=1 // pred_check_branch
      %142 = sbr.rel (0) target = $region61
    $region60: #{tpu_custom_call.1} parent=1 // pred_region
      _
    $region61: #{tpu_custom_call.1} parent=1 // pred_fallthru
      _
    // Predicated region
    $region62: #{tpu_custom_call.1} parent=1 // pred_check
      _
    $region63: #{tpu_custom_call.1} parent=1 // pred_check_branch
      %144 = sbr.rel (0) target = $region65
    $region64: #{tpu_custom_call.1} parent=1 // pred_region
      %146 = dma.done [#allocation3], 1024
    $region65: #{tpu_custom_call.1} parent=1 // pred_fallthru
      _
    // Predicated region
    $region66: #{tpu_custom_call.1} parent=1 // pred_check
      _
    $region67: #{tpu_custom_call.1} parent=1 // pred_check_branch
      %148 = sbr.rel (0) target = $region69
    $region68: #{tpu_custom_call.1} parent=1 // pred_region
      %150 = dma.done [#allocation6], 1024
    $region69: #{tpu_custom_call.1} parent=1 // pred_fallthru
      _
    // Predicated region
    $region70: #{tpu_custom_call.1} parent=1 // pred_check
      _
    $region71: #{tpu_custom_call.1} parent=1 // pred_check_branch
      %152 = sbr.rel (0) target = $region73
    $region72: #{tpu_custom_call.1} parent=1 // pred_region
      %154 = dma.done [#allocation6], 1024
    $region73: #{tpu_custom_call.1} parent=1 // pred_fallthru
      _
    // Predicated region
    $region74: #{tpu_custom_call.1} parent=1 // pred_check
      _
    $region75: #{tpu_custom_call.1} parent=1 // pred_check_branch
      %156 = sbr.rel (0) target = $region77
    $region76: #{tpu_custom_call.1} parent=1 // pred_region
      %158 = dma.done [#allocation9], 64
    $region77: #{tpu_custom_call.1} parent=1 // pred_fallthru
      _
    // Predicated region
    $region78: #{tpu_custom_call.1} parent=1 // pred_check
      _
    $region79: #{tpu_custom_call.1} parent=1 // pred_check_branch
      %160 = sbr.rel (0) target = $region81
    $region80: #{tpu_custom_call.1} parent=1 // pred_region
      %162 = dma.done [#allocation9], 32
    $region81: #{tpu_custom_call.1} parent=1 // pred_fallthru
      _
    // Predicated region
    $region82: #{tpu_custom_call.1} parent=1 // pred_check
      _
    $region83: #{tpu_custom_call.1} parent=1 // pred_check_branch
      %164 = sbr.rel (0) target = $region85
    $region84: #{tpu_custom_call.1} parent=1 // pred_region
      %166 = dma.done [#allocation12], 16
    $region85: #{tpu_custom_call.1} parent=1 // pred_fallthru
      _
    // Predicated region
    $region86: #{tpu_custom_call.1} parent=1 // pred_check
      _
    $region87: #{tpu_custom_call.1} parent=1 // pred_check_branch
      %168 = sbr.rel (0) target = $region89
    $region88: #{tpu_custom_call.1} parent=1 // pred_region
      %170 = dma.done [#allocation12], 16
    $region89: #{tpu_custom_call.1} parent=1 // pred_fallthru
      _
    // Predicated region
    $region90: #{tpu_custom_call.1} parent=1 // pred_check
      _
    $region91: #{tpu_custom_call.1} parent=1 // pred_check_branch
      %172 = sbr.rel (0) target = $region93
    $region92: #{tpu_custom_call.1} parent=1 // pred_region
      %174 = dma.done [#allocation15], 16
    $region93: #{tpu_custom_call.1} parent=1 // pred_fallthru
      _
    // Predicated region
    $region94: #{tpu_custom_call.1} parent=1 // pred_check
      _
    $region95: #{tpu_custom_call.1} parent=1 // pred_check_branch
      %176 = sbr.rel (0) target = $region97
    $region96: #{tpu_custom_call.1} parent=1 // pred_region
      %178 = dma.done [#allocation15], 16
    $region97: #{tpu_custom_call.1} parent=1 // pred_fallthru
      _
    %v180 = vld [vmem:[%s0] sm:$0xff]
    %v181 = vld [vmem:[%s0 + $0x8] sm:$0xff]
    %v182 = vld [vmem:[%s0 + $0x10] sm:$0xff]
    %v183 = vld [vmem:[%s0 + $0x18] sm:$0xff]
    %v184 = vld [vmem:[%s0 + $0x20] sm:$0xff]
    %v185 = vld [vmem:[%s0 + $0x28] sm:$0xff]
    %v186 = vld [vmem:[%s0 + $0x30] sm:$0xff]
    %v187 = vld [vmem:[%s0 + $0x38] sm:$0xff]
    %v188 = vld [vmem:[%s0 + $0x40] sm:$0xff]
    %v189 = vld [vmem:[%s0 + $0x48] sm:$0xff]
    %v190 = vld [vmem:[%s0 + $0x50] sm:$0xff]
    %v191 = vld [vmem:[%s0 + $0x58] sm:$0xff]
    %v192 = vld [vmem:[%s0 + $0x60] sm:$0xff]
    %v193 = vld [vmem:[%s0 + $0x68] sm:$0xff]
    %v194 = vld [vmem:[%s0 + $0x70] sm:$0xff]
    %v195 = vld [vmem:[%s0 + $0x78] sm:$0xff]
    %v196 = vld [vmem:[%s0 + $0x80] sm:$0xff]
    %v197 = vld [vmem:[%s0 + $0x88] sm:$0xff]
    %v198 = vld [vmem:[%s0 + $0x90] sm:$0xff]
    %v199 = vld [vmem:[%s0 + $0x98] sm:$0xff]
    %v200 = vld [vmem:[%s0 + $0xa0] sm:$0xff]
    %v201 = vld [vmem:[%s0 + $0xa8] sm:$0xff]
    %v202 = vld [vmem:[%s0 + $0xb0] sm:$0xff]
    %v203 = vld [vmem:[%s0 + $0xb8] sm:$0xff]
    %v204 = vld [vmem:[%s0 + $0xc0] sm:$0xff]
    %v205 = vld [vmem:[%s0 + $0xc8] sm:$0xff]
    %v206 = vld [vmem:[%s0 + $0xd0] sm:$0xff]
    %v207 = vld [vmem:[%s0 + $0xd8] sm:$0xff]
    %v208 = vld [vmem:[%s0 + $0xe0] sm:$0xff]
    %v209 = vld [vmem:[%s0 + $0xe8] sm:$0xff]
    %v210 = vld [vmem:[%s0 + $0xf0] sm:$0xff]
    %v211 = vld [vmem:[%s0 + $0xf8] sm:$0xff]
    %v212 = vld [vmem:[%s0 + $0x100] sm:$0xff]
    %v213 = vld [vmem:[%s0 + $0x108] sm:$0xff]
    %v214 = vld [vmem:[%s0 + $0x110] sm:$0xff]
    %v215 = vld [vmem:[%s0 + $0x118] sm:$0xff]
    %v216 = vld [vmem:[%s0 + $0x120] sm:$0xff]
    %v217 = vld [vmem:[%s0 + $0x128] sm:$0xff]
    %v218 = vld [vmem:[%s0 + $0x130] sm:$0xff]
    %v219 = vld [vmem:[%s0 + $0x138] sm:$0xff]
    %v220 = vld [vmem:[%s0 + $0x140] sm:$0xff]
    %v221 = vld [vmem:[%s0 + $0x148] sm:$0xff]
    %v222 = vld [vmem:[%s0 + $0x150] sm:$0xff]
    %v223 = vld [vmem:[%s0 + $0x158] sm:$0xff]
    %v224 = vld [vmem:[%s0 + $0x160] sm:$0xff]
    %v225 = vld [vmem:[%s0 + $0x168] sm:$0xff]
    %v226 = vld [vmem:[%s0 + $0x170] sm:$0xff]
    %v227 = vld [vmem:[%s0 + $0x178] sm:$0xff]
    %v228 = vld [vmem:[%s0 + $0x180] sm:$0xff]
    %v229 = vld [vmem:[%s0 + $0x188] sm:$0xff]
    %v230 = vld [vmem:[%s0 + $0x190] sm:$0xff]
    %v231 = vld [vmem:[%s0 + $0x198] sm:$0xff]
    %v232 = vld [vmem:[%s0 + $0x1a0] sm:$0xff]
    %v233 = vld [vmem:[%s0 + $0x1a8] sm:$0xff]
    %v234 = vld [vmem:[%s0 + $0x1b0] sm:$0xff]
    %v235 = vld [vmem:[%s0 + $0x1b8] sm:$0xff]
    %v236 = vld [vmem:[%s0 + $0x1c0] sm:$0xff]
    %v237 = vld [vmem:[%s0 + $0x1c8] sm:$0xff]
    %v238 = vld [vmem:[%s0 + $0x1d0] sm:$0xff]
    %v239 = vld [vmem:[%s0 + $0x1d8] sm:$0xff]
    %v240 = vld [vmem:[%s0 + $0x1e0] sm:$0xff]
    %v241 = vld [vmem:[%s0 + $0x1e8] sm:$0xff]
    %v242 = vld [vmem:[%s0 + $0x1f0] sm:$0xff]
    %v243 = vld [vmem:[%s0 + $0x1f8] sm:$0xff]
    %v244 = vpack.c.bf16 %v181, %v180
    %v245 = vpack.c.bf16 %v183, %v182
    %v246 = vpack.c.bf16 %v185, %v184
    %v247 = vpack.c.bf16 %v187, %v186
    %v248 = vpack.c.bf16 %v189, %v188
    %v249 = vpack.c.bf16 %v191, %v190
    %v250 = vpack.c.bf16 %v193, %v192
    %v251 = vpack.c.bf16 %v195, %v194
    %v252 = vpack.c.bf16 %v197, %v196
    %v253 = vpack.c.bf16 %v199, %v198
    %v254 = vpack.c.bf16 %v201, %v200
    %v255 = vpack.c.bf16 %v203, %v202
    %v256 = vpack.c.bf16 %v205, %v204
    %v257 = vpack.c.bf16 %v207, %v206
    %v258 = vpack.c.bf16 %v209, %v208
    %v259 = vpack.c.bf16 %v211, %v210
    %v260 = vpack.c.bf16 %v213, %v212
    %v261 = vpack.c.bf16 %v215, %v214
    %v262 = vpack.c.bf16 %v217, %v216
    %v263 = vpack.c.bf16 %v219, %v218
    %v264 = vpack.c.bf16 %v221, %v220
    %v265 = vpack.c.bf16 %v223, %v222
    %v266 = vpack.c.bf16 %v225, %v224
    %v267 = vpack.c.bf16 %v227, %v226
    %v268 = vpack.c.bf16 %v229, %v228
    %v269 = vpack.c.bf16 %v231, %v230
    %v270 = vpack.c.bf16 %v233, %v232
    %v271 = vpack.c.bf16 %v235, %v234
    %v272 = vpack.c.bf16 %v237, %v236
    %v273 = vpack.c.bf16 %v239, %v238
    %v274 = vpack.c.bf16 %v241, %v240
    %v275 = vpack.c.bf16 %v243, %v242
    %v276 = vld [vmem:[#allocation2] sm:$0xff]
    %v277 = vld [vmem:[#allocation2 + $0x8] sm:$0xff]
    %v278 = vld [vmem:[#allocation2 + $0x10] sm:$0xff]
    %v279 = vld [vmem:[#allocation2 + $0x18] sm:$0xff]
    %v280 = vld [vmem:[#allocation2 + $0x20] sm:$0xff]
    %v281 = vld [vmem:[#allocation2 + $0x28] sm:$0xff]
    %v282 = vld [vmem:[#allocation2 + $0x30] sm:$0xff]
    %v283 = vld [vmem:[#allocation2 + $0x38] sm:$0xff]
    %v292 = vunpack.c.l.b16 %v276
    %v293 = vunpack.c.h.b16 %v276
    %v294 = vunpack.c.l.b16 %v277
    %v295 = vunpack.c.h.b16 %v277
    %v296 = vunpack.c.l.b16 %v278
    %v297 = vunpack.c.h.b16 %v278
    %v298 = vunpack.c.l.b16 %v279
    %v299 = vunpack.c.h.b16 %v279
    %v300 = vunpack.c.l.b16 %v280
    %v301 = vunpack.c.h.b16 %v280
    %v302 = vunpack.c.l.b16 %v281
    %v303 = vunpack.c.h.b16 %v281
    %v304 = vunpack.c.l.b16 %v282
    %v305 = vunpack.c.h.b16 %v282
    %v306 = vunpack.c.l.b16 %v283
    %v307 = vunpack.c.h.b16 %v283
    %v308 = vpack.c.b16 %v296, %v292
    %v309 = vpack.c.b16 %v297, %v293
    %v310 = vpack.c.b16 %v298, %v294
    %v311 = vpack.c.b16 %v299, %v295
    %v312 = vpack.c.b16 %v304, %v300
    %v313 = vpack.c.b16 %v305, %v301
    %v314 = vpack.c.b16 %v306, %v302
    %v315 = vpack.c.b16 %v307, %v303
    %vm324 = vcmask 261120
    %v326 = vsel %vm324, %v244, 0
    %v329 = vsel %vm324, %v245, 0
    %v332 = vsel %vm324, %v246, 0
    %v335 = vsel %vm324, %v247, 0
    %v338 = vsel %vm324, %v248, 0
    %v341 = vsel %vm324, %v249, 0
    %v344 = vsel %vm324, %v250, 0
    %v347 = vsel %vm324, %v251, 0
    %v350 = vsel %vm324, %v252, 0
    %v353 = vsel %vm324, %v253, 0
    %v356 = vsel %vm324, %v254, 0
    %v359 = vsel %vm324, %v255, 0
    %v362 = vsel %vm324, %v256, 0
    %v365 = vsel %vm324, %v257, 0
    %v368 = vsel %vm324, %v258, 0
    %v371 = vsel %vm324, %v259, 0
    %v374 = vsel %vm324, %v260, 0
    %v377 = vsel %vm324, %v261, 0
    %v380 = vsel %vm324, %v262, 0
    %v383 = vsel %vm324, %v263, 0
    %v386 = vsel %vm324, %v264, 0
    %v389 = vsel %vm324, %v265, 0
    %v392 = vsel %vm324, %v266, 0
    %v395 = vsel %vm324, %v267, 0
    %v398 = vsel %vm324, %v268, 0
    %v401 = vsel %vm324, %v269, 0
    %v404 = vsel %vm324, %v270, 0
    %v407 = vsel %vm324, %v271, 0
    %v410 = vsel %vm324, %v272, 0
    %v413 = vsel %vm324, %v273, 0
    %v416 = vsel %vm324, %v274, 0
    %v419 = vsel %vm324, %v275, 0
    %421 = vmatpush.bf16.msra.mxu0 0
    %422 = vmatpush.bf16.msra.mxu0 0
    %423 = vmatpush.bf16.msra.mxu0 0
    %424 = vmatpush.bf16.msra.mxu0 0
    %425 = vmatpush.bf16.msra.mxu0 0
    %426 = vmatpush.bf16.msra.mxu0 0
    %427 = vmatpush.bf16.msra.mxu0 %v312
    %428 = vmatpush.bf16.msra.mxu0 %v308
    %429 = vmatmul.bf16.gmra.mxu0 %v326
    %v430 = vpop.f32.mrf.mxu0
    %v431 = vadd.f32 0.0, %v430
    %v432 = vpop.f32.mrf.mxu0
    %v433 = vadd.f32 0.0, %v432
    %434 = vmatmul.bf16.gmra.mxu0 %v329
    %v435 = vpop.f32.mrf.mxu0
    %v436 = vadd.f32 0.0, %v435
    %v437 = vpop.f32.mrf.mxu0
    %v438 = vadd.f32 0.0, %v437
    %439 = vmatmul.bf16.gmra.mxu0 %v332
    %v440 = vpop.f32.mrf.mxu0
    %v441 = vadd.f32 0.0, %v440
    %v442 = vpop.f32.mrf.mxu0
    %v443 = vadd.f32 0.0, %v442
    %444 = vmatmul.bf16.gmra.mxu0 %v335
    %v445 = vpop.f32.mrf.mxu0
    %v446 = vadd.f32 0.0, %v445
    %v447 = vpop.f32.mrf.mxu0
    %v448 = vadd.f32 0.0, %v447
    %449 = vmatmul.bf16.gmra.mxu0 %v338
    %v450 = vpop.f32.mrf.mxu0
    %v451 = vadd.f32 0.0, %v450
    %v452 = vpop.f32.mrf.mxu0
    %v453 = vadd.f32 0.0, %v452
    %454 = vmatmul.bf16.gmra.mxu0 %v341
    %v455 = vpop.f32.mrf.mxu0
    %v456 = vadd.f32 0.0, %v455
    %v457 = vpop.f32.mrf.mxu0
    %v458 = vadd.f32 0.0, %v457
    %459 = vmatmul.bf16.gmra.mxu0 %v344
    %v460 = vpop.f32.mrf.mxu0
    %v461 = vadd.f32 0.0, %v460
    %v462 = vpop.f32.mrf.mxu0
    %v463 = vadd.f32 0.0, %v462
    %464 = vmatmul.bf16.gmra.mxu0 %v347
    %v465 = vpop.f32.mrf.mxu0
    %v466 = vadd.f32 0.0, %v465
    %v467 = vpop.f32.mrf.mxu0
    %v468 = vadd.f32 0.0, %v467
    %469 = vmatmul.bf16.gmra.mxu0 %v350
    %v470 = vpop.f32.mrf.mxu0
    %v471 = vadd.f32 0.0, %v470
    %v472 = vpop.f32.mrf.mxu0
    %v473 = vadd.f32 0.0, %v472
    %474 = vmatmul.bf16.gmra.mxu0 %v353
    %v475 = vpop.f32.mrf.mxu0
    %v476 = vadd.f32 0.0, %v475
    %v477 = vpop.f32.mrf.mxu0
    %v478 = vadd.f32 0.0, %v477
    %479 = vmatmul.bf16.gmra.mxu0 %v356
    %v480 = vpop.f32.mrf.mxu0
    %v481 = vadd.f32 0.0, %v480
    %v482 = vpop.f32.mrf.mxu0
    %v483 = vadd.f32 0.0, %v482
    %484 = vmatmul.bf16.gmra.mxu0 %v359
    %v485 = vpop.f32.mrf.mxu0
    %v486 = vadd.f32 0.0, %v485
    %v487 = vpop.f32.mrf.mxu0
    %v488 = vadd.f32 0.0, %v487
    %489 = vmatmul.bf16.gmra.mxu0 %v362
    %v490 = vpop.f32.mrf.mxu0
    %v491 = vadd.f32 0.0, %v490
    %v492 = vpop.f32.mrf.mxu0
    %v493 = vadd.f32 0.0, %v492
    %494 = vmatmul.bf16.gmra.mxu0 %v365
    %v495 = vpop.f32.mrf.mxu0
    %v496 = vadd.f32 0.0, %v495
    %v497 = vpop.f32.mrf.mxu0
    %v498 = vadd.f32 0.0, %v497
    %499 = vmatmul.bf16.gmra.mxu0 %v368
    %v500 = vpop.f32.mrf.mxu0
    %v501 = vadd.f32 0.0, %v500
    %v502 = vpop.f32.mrf.mxu0
    %v503 = vadd.f32 0.0, %v502
    %504 = vmatmul.bf16.gmra.mxu0 %v371
    %v505 = vpop.f32.mrf.mxu0
    %v506 = vadd.f32 0.0, %v505
    %v507 = vpop.f32.mrf.mxu0
    %v508 = vadd.f32 0.0, %v507
    %509 = vmatmul.bf16.gmra.mxu0 %v374
    %v510 = vpop.f32.mrf.mxu0
    %v511 = vadd.f32 0.0, %v510
    %v512 = vpop.f32.mrf.mxu0
    %v513 = vadd.f32 0.0, %v512
    %514 = vmatmul.bf16.gmra.mxu0 %v377
    %v515 = vpop.f32.mrf.mxu0
    %v516 = vadd.f32 0.0, %v515
    %v517 = vpop.f32.mrf.mxu0
    %v518 = vadd.f32 0.0, %v517
    %519 = vmatmul.bf16.gmra.mxu0 %v380
    %v520 = vpop.f32.mrf.mxu0
    %v521 = vadd.f32 0.0, %v520
    %v522 = vpop.f32.mrf.mxu0
    %v523 = vadd.f32 0.0, %v522
    %524 = vmatmul.bf16.gmra.mxu0 %v383
    %v525 = vpop.f32.mrf.mxu0
    %v526 = vadd.f32 0.0, %v525
    %v527 = vpop.f32.mrf.mxu0
    %v528 = vadd.f32 0.0, %v527
    %529 = vmatmul.bf16.gmra.mxu0 %v386
    %v530 = vpop.f32.mrf.mxu0
    %v531 = vadd.f32 0.0, %v530
    %v532 = vpop.f32.mrf.mxu0
    %v533 = vadd.f32 0.0, %v532
    %534 = vmatmul.bf16.gmra.mxu0 %v389
    %v535 = vpop.f32.mrf.mxu0
    %v536 = vadd.f32 0.0, %v535
    %v537 = vpop.f32.mrf.mxu0
    %v538 = vadd.f32 0.0, %v537
    %539 = vmatmul.bf16.gmra.mxu0 %v392
    %v540 = vpop.f32.mrf.mxu0
    %v541 = vadd.f32 0.0, %v540
    %v542 = vpop.f32.mrf.mxu0
    %v543 = vadd.f32 0.0, %v542
    %544 = vmatmul.bf16.gmra.mxu0 %v395
    %v545 = vpop.f32.mrf.mxu0
    %v546 = vadd.f32 0.0, %v545
    %v547 = vpop.f32.mrf.mxu0
    %v548 = vadd.f32 0.0, %v547
    %549 = vmatmul.bf16.gmra.mxu0 %v398
    %v550 = vpop.f32.mrf.mxu0
    %v551 = vadd.f32 0.0, %v550
    %v552 = vpop.f32.mrf.mxu0
    %v553 = vadd.f32 0.0, %v552
    %554 = vmatmul.bf16.gmra.mxu0 %v401
    %v555 = vpop.f32.mrf.mxu0
    %v556 = vadd.f32 0.0, %v555
    %v557 = vpop.f32.mrf.mxu0
    %v558 = vadd.f32 0.0, %v557
    %559 = vmatmul.bf16.gmra.mxu0 %v404
    %v560 = vpop.f32.mrf.mxu0
    %v561 = vadd.f32 0.0, %v560
    %v562 = vpop.f32.mrf.mxu0
    %v563 = vadd.f32 0.0, %v562
    %564 = vmatmul.bf16.gmra.mxu0 %v407
    %v565 = vpop.f32.mrf.mxu0
    %v566 = vadd.f32 0.0, %v565
    %v567 = vpop.f32.mrf.mxu0
    %v568 = vadd.f32 0.0, %v567
    %569 = vmatmul.bf16.gmra.mxu0 %v410
    %v570 = vpop.f32.mrf.mxu0
    %v571 = vadd.f32 0.0, %v570
    %v572 = vpop.f32.mrf.mxu0
    %v573 = vadd.f32 0.0, %v572
    %574 = vmatmul.bf16.gmra.mxu0 %v413
    %v575 = vpop.f32.mrf.mxu0
    %v576 = vadd.f32 0.0, %v575
    %v577 = vpop.f32.mrf.mxu0
    %v578 = vadd.f32 0.0, %v577
    %579 = vmatmul.bf16.gmra.mxu0 %v416
    %v580 = vpop.f32.mrf.mxu0
    %v581 = vadd.f32 0.0, %v580
    %v582 = vpop.f32.mrf.mxu0
    %v583 = vadd.f32 0.0, %v582
    %584 = vmatmul.bf16.gmra.mxu0 %v419
    %v585 = vpop.f32.mrf.mxu0
    %v586 = vadd.f32 0.0, %v585
    %v587 = vpop.f32.mrf.mxu0
    %v588 = vadd.f32 0.0, %v587
    %589 = vdwg.mxu0
    %590 = vmatpush.bf16.msra.mxu0 0
    %591 = vmatpush.bf16.msra.mxu0 0
    %592 = vmatpush.bf16.msra.mxu0 0
    %593 = vmatpush.bf16.msra.mxu0 0
    %594 = vmatpush.bf16.msra.mxu0 0
    %595 = vmatpush.bf16.msra.mxu0 0
    %596 = vmatpush.bf16.msra.mxu0 %v313
    %597 = vmatpush.bf16.msra.mxu0 %v309
    %598 = vmatmul.bf16.gmra.mxu0 %v326
    %v599 = vpop.f32.mrf.mxu0
    %v600 = vadd.f32 0.0, %v599
    %v601 = vpop.f32.mrf.mxu0
    %v602 = vadd.f32 0.0, %v601
    %603 = vmatmul.bf16.gmra.mxu0 %v329
    %v604 = vpop.f32.mrf.mxu0
    %v605 = vadd.f32 0.0, %v604
    %v606 = vpop.f32.mrf.mxu0
    %v607 = vadd.f32 0.0, %v606
    %608 = vmatmul.bf16.gmra.mxu0 %v332
    %v609 = vpop.f32.mrf.mxu0
    %v610 = vadd.f32 0.0, %v609
    %v611 = vpop.f32.mrf.mxu0
    %v612 = vadd.f32 0.0, %v611
    %613 = vmatmul.bf16.gmra.mxu0 %v335
    %v614 = vpop.f32.mrf.mxu0
    %v615 = vadd.f32 0.0, %v614
    %v616 = vpop.f32.mrf.mxu0
    %v617 = vadd.f32 0.0, %v616
    %618 = vmatmul.bf16.gmra.mxu0 %v338
    %v619 = vpop.f32.mrf.mxu0
    %v620 = vadd.f32 0.0, %v619
    %v621 = vpop.f32.mrf.mxu0
    %v622 = vadd.f32 0.0, %v621
    %623 = vmatmul.bf16.gmra.mxu0 %v341
    %v624 = vpop.f32.mrf.mxu0
    %v625 = vadd.f32 0.0, %v624
    %v626 = vpop.f32.mrf.mxu0
    %v627 = vadd.f32 0.0, %v626
    %628 = vmatmul.bf16.gmra.mxu0 %v344
    %v629 = vpop.f32.mrf.mxu0
    %v630 = vadd.f32 0.0, %v629
    %v631 = vpop.f32.mrf.mxu0
    %v632 = vadd.f32 0.0, %v631
    %633 = vmatmul.bf16.gmra.mxu0 %v347
    %v634 = vpop.f32.mrf.mxu0
    %v635 = vadd.f32 0.0, %v634
    %v636 = vpop.f32.mrf.mxu0
    %v637 = vadd.f32 0.0, %v636
    %638 = vmatmul.bf16.gmra.mxu0 %v350
    %v639 = vpop.f32.mrf.mxu0
    %v640 = vadd.f32 0.0, %v639
    %v641 = vpop.f32.mrf.mxu0
    %v642 = vadd.f32 0.0, %v641
    %643 = vmatmul.bf16.gmra.mxu0 %v353
    %v644 = vpop.f32.mrf.mxu0
    %v645 = vadd.f32 0.0, %v644
    %v646 = vpop.f32.mrf.mxu0
    %v647 = vadd.f32 0.0, %v646
    %648 = vmatmul.bf16.gmra.mxu0 %v356
    %v649 = vpop.f32.mrf.mxu0
    %v650 = vadd.f32 0.0, %v649
    %v651 = vpop.f32.mrf.mxu0
    %v652 = vadd.f32 0.0, %v651
    %653 = vmatmul.bf16.gmra.mxu0 %v359
    %v654 = vpop.f32.mrf.mxu0
    %v655 = vadd.f32 0.0, %v654
    %v656 = vpop.f32.mrf.mxu0
    %v657 = vadd.f32 0.0, %v656
    %658 = vmatmul.bf16.gmra.mxu0 %v362
    %v659 = vpop.f32.mrf.mxu0
    %v660 = vadd.f32 0.0, %v659
    %v661 = vpop.f32.mrf.mxu0
    %v662 = vadd.f32 0.0, %v661
    %663 = vmatmul.bf16.gmra.mxu0 %v365
    %v664 = vpop.f32.mrf.mxu0
    %v665 = vadd.f32 0.0, %v664
    %v666 = vpop.f32.mrf.mxu0
    %v667 = vadd.f32 0.0, %v666
    %668 = vmatmul.bf16.gmra.mxu0 %v368
    %v669 = vpop.f32.mrf.mxu0
    %v670 = vadd.f32 0.0, %v669
    %v671 = vpop.f32.mrf.mxu0
    %v672 = vadd.f32 0.0, %v671
    %673 = vmatmul.bf16.gmra.mxu0 %v371
    %v674 = vpop.f32.mrf.mxu0
    %v675 = vadd.f32 0.0, %v674
    %v676 = vpop.f32.mrf.mxu0
    %v677 = vadd.f32 0.0, %v676
    %678 = vmatmul.bf16.gmra.mxu0 %v374
    %v679 = vpop.f32.mrf.mxu0
    %v680 = vadd.f32 0.0, %v679
    %v681 = vpop.f32.mrf.mxu0
    %v682 = vadd.f32 0.0, %v681
    %683 = vmatmul.bf16.gmra.mxu0 %v377
    %v684 = vpop.f32.mrf.mxu0
    %v685 = vadd.f32 0.0, %v684
    %v686 = vpop.f32.mrf.mxu0
    %v687 = vadd.f32 0.0, %v686
    %688 = vmatmul.bf16.gmra.mxu0 %v380
    %v689 = vpop.f32.mrf.mxu0
    %v690 = vadd.f32 0.0, %v689
    %v691 = vpop.f32.mrf.mxu0
    %v692 = vadd.f32 0.0, %v691
    %693 = vmatmul.bf16.gmra.mxu0 %v383
    %v694 = vpop.f32.mrf.mxu0
    %v695 = vadd.f32 0.0, %v694
    %v696 = vpop.f32.mrf.mxu0
    %v697 = vadd.f32 0.0, %v696
    %698 = vmatmul.bf16.gmra.mxu0 %v386
    %v699 = vpop.f32.mrf.mxu0
    %v700 = vadd.f32 0.0, %v699
    %v701 = vpop.f32.mrf.mxu0
    %v702 = vadd.f32 0.0, %v701
    %703 = vmatmul.bf16.gmra.mxu0 %v389
    %v704 = vpop.f32.mrf.mxu0
    %v705 = vadd.f32 0.0, %v704
    %v706 = vpop.f32.mrf.mxu0
    %v707 = vadd.f32 0.0, %v706
    %708 = vmatmul.bf16.gmra.mxu0 %v392
    %v709 = vpop.f32.mrf.mxu0
    %v710 = vadd.f32 0.0, %v709
    %v711 = vpop.f32.mrf.mxu0
    %v712 = vadd.f32 0.0, %v711
    %713 = vmatmul.bf16.gmra.mxu0 %v395
    %v714 = vpop.f32.mrf.mxu0
    %v715 = vadd.f32 0.0, %v714
    %v716 = vpop.f32.mrf.mxu0
    %v717 = vadd.f32 0.0, %v716
    %718 = vmatmul.bf16.gmra.mxu0 %v398
    %v719 = vpop.f32.mrf.mxu0
    %v720 = vadd.f32 0.0, %v719
    %v721 = vpop.f32.mrf.mxu0
    %v722 = vadd.f32 0.0, %v721
    %723 = vmatmul.bf16.gmra.mxu0 %v401
    %v724 = vpop.f32.mrf.mxu0
    %v725 = vadd.f32 0.0, %v724
    %v726 = vpop.f32.mrf.mxu0
    %v727 = vadd.f32 0.0, %v726
    %728 = vmatmul.bf16.gmra.mxu0 %v404
    %v729 = vpop.f32.mrf.mxu0
    %v730 = vadd.f32 0.0, %v729
    %v731 = vpop.f32.mrf.mxu0
    %v732 = vadd.f32 0.0, %v731
    %733 = vmatmul.bf16.gmra.mxu0 %v407
    %v734 = vpop.f32.mrf.mxu0
    %v735 = vadd.f32 0.0, %v734
    %v736 = vpop.f32.mrf.mxu0
    %v737 = vadd.f32 0.0, %v736
    %738 = vmatmul.bf16.gmra.mxu0 %v410
    %v739 = vpop.f32.mrf.mxu0
    %v740 = vadd.f32 0.0, %v739
    %v741 = vpop.f32.mrf.mxu0
    %v742 = vadd.f32 0.0, %v741
    %743 = vmatmul.bf16.gmra.mxu0 %v413
    %v744 = vpop.f32.mrf.mxu0
    %v745 = vadd.f32 0.0, %v744
    %v746 = vpop.f32.mrf.mxu0
    %v747 = vadd.f32 0.0, %v746
    %748 = vmatmul.bf16.gmra.mxu0 %v416
    %v749 = vpop.f32.mrf.mxu0
    %v750 = vadd.f32 0.0, %v749
    %v751 = vpop.f32.mrf.mxu0
    %v752 = vadd.f32 0.0, %v751
    %753 = vmatmul.bf16.gmra.mxu0 %v419
    %v754 = vpop.f32.mrf.mxu0
    %v755 = vadd.f32 0.0, %v754
    %v756 = vpop.f32.mrf.mxu0
    %v757 = vadd.f32 0.0, %v756
    %758 = vdwg.mxu0
    %759 = vmatpush.bf16.msra.mxu0 0
    %760 = vmatpush.bf16.msra.mxu0 0
    %761 = vmatpush.bf16.msra.mxu0 0
    %762 = vmatpush.bf16.msra.mxu0 0
    %763 = vmatpush.bf16.msra.mxu0 0
    %764 = vmatpush.bf16.msra.mxu0 0
    %765 = vmatpush.bf16.msra.mxu0 %v314
    %766 = vmatpush.bf16.msra.mxu0 %v310
    %767 = vmatmul.bf16.gmra.mxu0 %v326
    %v768 = vpop.f32.mrf.mxu0
    %v769 = vadd.f32 0.0, %v768
    %v770 = vpop.f32.mrf.mxu0
    %v771 = vadd.f32 0.0, %v770
    %772 = vmatmul.bf16.gmra.mxu0 %v329
    %v773 = vpop.f32.mrf.mxu0
    %v774 = vadd.f32 0.0, %v773
    %v775 = vpop.f32.mrf.mxu0
    %v776 = vadd.f32 0.0, %v775
    %777 = vmatmul.bf16.gmra.mxu0 %v332
    %v778 = vpop.f32.mrf.mxu0
    %v779 = vadd.f32 0.0, %v778
    %v780 = vpop.f32.mrf.mxu0
    %v781 = vadd.f32 0.0, %v780
    %782 = vmatmul.bf16.gmra.mxu0 %v335
    %v783 = vpop.f32.mrf.mxu0
    %v784 = vadd.f32 0.0, %v783
    %v785 = vpop.f32.mrf.mxu0
    %v786 = vadd.f32 0.0, %v785
    %787 = vmatmul.bf16.gmra.mxu0 %v338
    %v788 = vpop.f32.mrf.mxu0
    %v789 = vadd.f32 0.0, %v788
    %v790 = vpop.f32.mrf.mxu0
    %v791 = vadd.f32 0.0, %v790
    %792 = vmatmul.bf16.gmra.mxu0 %v341
    %v793 = vpop.f32.mrf.mxu0
    %v794 = vadd.f32 0.0, %v793
    %v795 = vpop.f32.mrf.mxu0
    %v796 = vadd.f32 0.0, %v795
    %797 = vmatmul.bf16.gmra.mxu0 %v344
    %v798 = vpop.f32.mrf.mxu0
    %v799 = vadd.f32 0.0, %v798
    %v800 = vpop.f32.mrf.mxu0
    %v801 = vadd.f32 0.0, %v800
    %802 = vmatmul.bf16.gmra.mxu0 %v347
    %v803 = vpop.f32.mrf.mxu0
    %v804 = vadd.f32 0.0, %v803
    %v805 = vpop.f32.mrf.mxu0
    %v806 = vadd.f32 0.0, %v805
    %807 = vmatmul.bf16.gmra.mxu0 %v350
    %v808 = vpop.f32.mrf.mxu0
    %v809 = vadd.f32 0.0, %v808
    %v810 = vpop.f32.mrf.mxu0
    %v811 = vadd.f32 0.0, %v810
    %812 = vmatmul.bf16.gmra.mxu0 %v353
    %v813 = vpop.f32.mrf.mxu0
    %v814 = vadd.f32 0.0, %v813
    %v815 = vpop.f32.mrf.mxu0
    %v816 = vadd.f32 0.0, %v815
    %817 = vmatmul.bf16.gmra.mxu0 %v356
    %v818 = vpop.f32.mrf.mxu0
    %v819 = vadd.f32 0.0, %v818
    %v820 = vpop.f32.mrf.mxu0
    %v821 = vadd.f32 0.0, %v820
    %822 = vmatmul.bf16.gmra.mxu0 %v359
    %v823 = vpop.f32.mrf.mxu0
    %v824 = vadd.f32 0.0, %v823
    %v825 = vpop.f32.mrf.mxu0
    %v826 = vadd.f32 0.0, %v825
    %827 = vmatmul.bf16.gmra.mxu0 %v362
    %v828 = vpop.f32.mrf.mxu0
    %v829 = vadd.f32 0.0, %v828
    %v830 = vpop.f32.mrf.mxu0
    %v831 = vadd.f32 0.0, %v830
    %832 = vmatmul.bf16.gmra.mxu0 %v365
    %v833 = vpop.f32.mrf.mxu0
    %v834 = vadd.f32 0.0, %v833
    %v835 = vpop.f32.mrf.mxu0
    %v836 = vadd.f32 0.0, %v835
    %837 = vmatmul.bf16.gmra.mxu0 %v368
    %v838 = vpop.f32.mrf.mxu0
    %v839 = vadd.f32 0.0, %v838
    %v840 = vpop.f32.mrf.mxu0
    %v841 = vadd.f32 0.0, %v840
    %842 = vmatmul.bf16.gmra.mxu0 %v371
    %v843 = vpop.f32.mrf.mxu0
    %v844 = vadd.f32 0.0, %v843
    %v845 = vpop.f32.mrf.mxu0
    %v846 = vadd.f32 0.0, %v845
    %847 = vmatmul.bf16.gmra.mxu0 %v374
    %v848 = vpop.f32.mrf.mxu0
    %v849 = vadd.f32 0.0, %v848
    %v850 = vpop.f32.mrf.mxu0
    %v851 = vadd.f32 0.0, %v850
    %852 = vmatmul.bf16.gmra.mxu0 %v377
    %v853 = vpop.f32.mrf.mxu0
    %v854 = vadd.f32 0.0, %v853
    %v855 = vpop.f32.mrf.mxu0
    %v856 = vadd.f32 0.0, %v855
    %857 = vmatmul.bf16.gmra.mxu0 %v380
    %v858 = vpop.f32.mrf.mxu0
    %v859 = vadd.f32 0.0, %v858
    %v860 = vpop.f32.mrf.mxu0
    %v861 = vadd.f32 0.0, %v860
    %862 = vmatmul.bf16.gmra.mxu0 %v383
    %v863 = vpop.f32.mrf.mxu0
    %v864 = vadd.f32 0.0, %v863
    %v865 = vpop.f32.mrf.mxu0
    %v866 = vadd.f32 0.0, %v865
    %867 = vmatmul.bf16.gmra.mxu0 %v386
    %v868 = vpop.f32.mrf.mxu0
    %v869 = vadd.f32 0.0, %v868
    %v870 = vpop.f32.mrf.mxu0
    %v871 = vadd.f32 0.0, %v870
    %872 = vmatmul.bf16.gmra.mxu0 %v389
    %v873 = vpop.f32.mrf.mxu0
    %v874 = vadd.f32 0.0, %v873
    %v875 = vpop.f32.mrf.mxu0
    %v876 = vadd.f32 0.0, %v875
    %877 = vmatmul.bf16.gmra.mxu0 %v392
    %v878 = vpop.f32.mrf.mxu0
    %v879 = vadd.f32 0.0, %v878
    %v880 = vpop.f32.mrf.mxu0
    %v881 = vadd.f32 0.0, %v880
    %882 = vmatmul.bf16.gmra.mxu0 %v395
    %v883 = vpop.f32.mrf.mxu0
    %v884 = vadd.f32 0.0, %v883
    %v885 = vpop.f32.mrf.mxu0
    %v886 = vadd.f32 0.0, %v885
    %887 = vmatmul.bf16.gmra.mxu0 %v398
    %v888 = vpop.f32.mrf.mxu0
    %v889 = vadd.f32 0.0, %v888
    %v890 = vpop.f32.mrf.mxu0
    %v891 = vadd.f32 0.0, %v890
    %892 = vmatmul.bf16.gmra.mxu0 %v401
    %v893 = vpop.f32.mrf.mxu0
    %v894 = vadd.f32 0.0, %v893
    %v895 = vpop.f32.mrf.mxu0
    %v896 = vadd.f32 0.0, %v895
    %897 = vmatmul.bf16.gmra.mxu0 %v404
    %v898 = vpop.f32.mrf.mxu0
    %v899 = vadd.f32 0.0, %v898
    %v900 = vpop.f32.mrf.mxu0
    %v901 = vadd.f32 0.0, %v900
    %902 = vmatmul.bf16.gmra.mxu0 %v407
    %v903 = vpop.f32.mrf.mxu0
    %v904 = vadd.f32 0.0, %v903
    %v905 = vpop.f32.mrf.mxu0
    %v906 = vadd.f32 0.0, %v905
    %907 = vmatmul.bf16.gmra.mxu0 %v410
    %v908 = vpop.f32.mrf.mxu0
    %v909 = vadd.f32 0.0, %v908
    %v910 = vpop.f32.mrf.mxu0
    %v911 = vadd.f32 0.0, %v910
    %912 = vmatmul.bf16.gmra.mxu0 %v413
    %v913 = vpop.f32.mrf.mxu0
    %v914 = vadd.f32 0.0, %v913
    %v915 = vpop.f32.mrf.mxu0
    %v916 = vadd.f32 0.0, %v915
    %917 = vmatmul.bf16.gmra.mxu0 %v416
    %v918 = vpop.f32.mrf.mxu0
    %v919 = vadd.f32 0.0, %v918
    %v920 = vpop.f32.mrf.mxu0
    %v921 = vadd.f32 0.0, %v920
    %922 = vmatmul.bf16.gmra.mxu0 %v419
    %v923 = vpop.f32.mrf.mxu0
    %v924 = vadd.f32 0.0, %v923
    %v925 = vpop.f32.mrf.mxu0
    %v926 = vadd.f32 0.0, %v925
    %927 = vdwg.mxu0
    %928 = vmatpush.bf16.msra.mxu0 0
    %929 = vmatpush.bf16.msra.mxu0 0
    %930 = vmatpush.bf16.msra.mxu0 0
    %931 = vmatpush.bf16.msra.mxu0 0
    %932 = vmatpush.bf16.msra.mxu0 0
    %933 = vmatpush.bf16.msra.mxu0 0
    %934 = vmatpush.bf16.msra.mxu0 %v315
    %935 = vmatpush.bf16.msra.mxu0 %v311
    %936 = vmatmul.bf16.gmra.mxu0 %v326
    %v937 = vpop.f32.mrf.mxu0
    %v938 = vadd.f32 0.0, %v937
    %v939 = vpop.f32.mrf.mxu0
    %v940 = vadd.f32 0.0, %v939
    %941 = vmatmul.bf16.gmra.mxu0 %v329
    %v942 = vpop.f32.mrf.mxu0
    %v943 = vadd.f32 0.0, %v942
    %v944 = vpop.f32.mrf.mxu0
    %v945 = vadd.f32 0.0, %v944
    %946 = vmatmul.bf16.gmra.mxu0 %v332
    %v947 = vpop.f32.mrf.mxu0
    %v948 = vadd.f32 0.0, %v947
    %v949 = vpop.f32.mrf.mxu0
    %v950 = vadd.f32 0.0, %v949
    %951 = vmatmul.bf16.gmra.mxu0 %v335
    %v952 = vpop.f32.mrf.mxu0
    %v953 = vadd.f32 0.0, %v952
    %v954 = vpop.f32.mrf.mxu0
    %v955 = vadd.f32 0.0, %v954
    %956 = vmatmul.bf16.gmra.mxu0 %v338
    %v957 = vpop.f32.mrf.mxu0
    %v958 = vadd.f32 0.0, %v957
    %v959 = vpop.f32.mrf.mxu0
    %v960 = vadd.f32 0.0, %v959
    %961 = vmatmul.bf16.gmra.mxu0 %v341
    %v962 = vpop.f32.mrf.mxu0
    %v963 = vadd.f32 0.0, %v962
    %v964 = vpop.f32.mrf.mxu0
    %v965 = vadd.f32 0.0, %v964
    %966 = vmatmul.bf16.gmra.mxu0 %v344
    %v967 = vpop.f32.mrf.mxu0
    %v968 = vadd.f32 0.0, %v967
    %v969 = vpop.f32.mrf.mxu0
    %v970 = vadd.f32 0.0, %v969
    %971 = vmatmul.bf16.gmra.mxu0 %v347
    %v972 = vpop.f32.mrf.mxu0
    %v973 = vadd.f32 0.0, %v972
    %v974 = vpop.f32.mrf.mxu0
    %v975 = vadd.f32 0.0, %v974
    %976 = vmatmul.bf16.gmra.mxu0 %v350
    %v977 = vpop.f32.mrf.mxu0
    %v978 = vadd.f32 0.0, %v977
    %v979 = vpop.f32.mrf.mxu0
    %v980 = vadd.f32 0.0, %v979
    %981 = vmatmul.bf16.gmra.mxu0 %v353
    %v982 = vpop.f32.mrf.mxu0
    %v983 = vadd.f32 0.0, %v982
    %v984 = vpop.f32.mrf.mxu0
    %v985 = vadd.f32 0.0, %v984
    %986 = vmatmul.bf16.gmra.mxu0 %v356
    %v987 = vpop.f32.mrf.mxu0
    %v988 = vadd.f32 0.0, %v987
    %v989 = vpop.f32.mrf.mxu0
    %v990 = vadd.f32 0.0, %v989
    %991 = vmatmul.bf16.gmra.mxu0 %v359
    %v992 = vpop.f32.mrf.mxu0
    %v993 = vadd.f32 0.0, %v992
    %v994 = vpop.f32.mrf.mxu0
    %v995 = vadd.f32 0.0, %v994
    %996 = vmatmul.bf16.gmra.mxu0 %v362
    %v997 = vpop.f32.mrf.mxu0
    %v998 = vadd.f32 0.0, %v997
    %v999 = vpop.f32.mrf.mxu0
    %v1000 = vadd.f32 0.0, %v999
    %1001 = vmatmul.bf16.gmra.mxu0 %v365
    %v1002 = vpop.f32.mrf.mxu0
    %v1003 = vadd.f32 0.0, %v1002
    %v1004 = vpop.f32.mrf.mxu0
    %v1005 = vadd.f32 0.0, %v1004
    %1006 = vmatmul.bf16.gmra.mxu0 %v368
    %v1007 = vpop.f32.mrf.mxu0
    %v1008 = vadd.f32 0.0, %v1007
    %v1009 = vpop.f32.mrf.mxu0
    %v1010 = vadd.f32 0.0, %v1009
    %1011 = vmatmul.bf16.gmra.mxu0 %v371
    %v1012 = vpop.f32.mrf.mxu0
    %v1013 = vadd.f32 0.0, %v1012
    %v1014 = vpop.f32.mrf.mxu0
    %v1015 = vadd.f32 0.0, %v1014
    %1016 = vmatmul.bf16.gmra.mxu0 %v374
    %v1017 = vpop.f32.mrf.mxu0
    %v1018 = vadd.f32 0.0, %v1017
    %v1019 = vpop.f32.mrf.mxu0
    %v1020 = vadd.f32 0.0, %v1019
    %1021 = vmatmul.bf16.gmra.mxu0 %v377
    %v1022 = vpop.f32.mrf.mxu0
    %v1023 = vadd.f32 0.0, %v1022
    %v1024 = vpop.f32.mrf.mxu0
    %v1025 = vadd.f32 0.0, %v1024
    %1026 = vmatmul.bf16.gmra.mxu0 %v380
    %v1027 = vpop.f32.mrf.mxu0
    %v1028 = vadd.f32 0.0, %v1027
    %v1029 = vpop.f32.mrf.mxu0
    %v1030 = vadd.f32 0.0, %v1029
    %1031 = vmatmul.bf16.gmra.mxu0 %v383
    %v1032 = vpop.f32.mrf.mxu0
    %v1033 = vadd.f32 0.0, %v1032
    %v1034 = vpop.f32.mrf.mxu0
    %v1035 = vadd.f32 0.0, %v1034
    %1036 = vmatmul.bf16.gmra.mxu0 %v386
    %v1037 = vpop.f32.mrf.mxu0
    %v1038 = vadd.f32 0.0, %v1037
    %v1039 = vpop.f32.mrf.mxu0
    %v1040 = vadd.f32 0.0, %v1039
    %1041 = vmatmul.bf16.gmra.mxu0 %v389
    %v1042 = vpop.f32.mrf.mxu0
    %v1043 = vadd.f32 0.0, %v1042
    %v1044 = vpop.f32.mrf.mxu0
    %v1045 = vadd.f32 0.0, %v1044
    %1046 = vmatmul.bf16.gmra.mxu0 %v392
    %v1047 = vpop.f32.mrf.mxu0
    %v1048 = vadd.f32 0.0, %v1047
    %v1049 = vpop.f32.mrf.mxu0
    %v1050 = vadd.f32 0.0, %v1049
    %1051 = vmatmul.bf16.gmra.mxu0 %v395
    %v1052 = vpop.f32.mrf.mxu0
    %v1053 = vadd.f32 0.0, %v1052
    %v1054 = vpop.f32.mrf.mxu0
    %v1055 = vadd.f32 0.0, %v1054
    %1056 = vmatmul.bf16.gmra.mxu0 %v398
    %v1057 = vpop.f32.mrf.mxu0
    %v1058 = vadd.f32 0.0, %v1057
    %v1059 = vpop.f32.mrf.mxu0
    %v1060 = vadd.f32 0.0, %v1059
    %1061 = vmatmul.bf16.gmra.mxu0 %v401
    %v1062 = vpop.f32.mrf.mxu0
    %v1063 = vadd.f32 0.0, %v1062
    %v1064 = vpop.f32.mrf.mxu0
    %v1065 = vadd.f32 0.0, %v1064
    %1066 = vmatmul.bf16.gmra.mxu0 %v404
    %v1067 = vpop.f32.mrf.mxu0
    %v1068 = vadd.f32 0.0, %v1067
    %v1069 = vpop.f32.mrf.mxu0
    %v1070 = vadd.f32 0.0, %v1069
    %1071 = vmatmul.bf16.gmra.mxu0 %v407
    %v1072 = vpop.f32.mrf.mxu0
    %v1073 = vadd.f32 0.0, %v1072
    %v1074 = vpop.f32.mrf.mxu0
    %v1075 = vadd.f32 0.0, %v1074
    %1076 = vmatmul.bf16.gmra.mxu0 %v410
    %v1077 = vpop.f32.mrf.mxu0
    %v1078 = vadd.f32 0.0, %v1077
    %v1079 = vpop.f32.mrf.mxu0
    %v1080 = vadd.f32 0.0, %v1079
    %1081 = vmatmul.bf16.gmra.mxu0 %v413
    %v1082 = vpop.f32.mrf.mxu0
    %v1083 = vadd.f32 0.0, %v1082
    %v1084 = vpop.f32.mrf.mxu0
    %v1085 = vadd.f32 0.0, %v1084
    %1086 = vmatmul.bf16.gmra.mxu0 %v416
    %v1087 = vpop.f32.mrf.mxu0
    %v1088 = vadd.f32 0.0, %v1087
    %v1089 = vpop.f32.mrf.mxu0
    %v1090 = vadd.f32 0.0, %v1089
    %1091 = vmatmul.bf16.gmra.mxu0 %v419
    %v1092 = vpop.f32.mrf.mxu0
    %v1093 = vadd.f32 0.0, %v1092
    %v1094 = vpop.f32.mrf.mxu0
    %v1095 = vadd.f32 0.0, %v1094
    %1096 = vdwg.mxu0
    %v1097 = vadd.f32 %v431, %v433
    %v1098 = vadd.f32 %v1097, %v436
    %v1099 = vadd.f32 %v1098, %v438
    %v1100 = vadd.f32 %v1099, %v441
    %v1101 = vadd.f32 %v1100, %v443
    %v1102 = vadd.f32 %v1101, %v446
    %v1103 = vadd.f32 %v1102, %v448
    %v1104 = vadd.f32 %v1103, %v451
    %v1105 = vadd.f32 %v1104, %v453
    %v1106 = vadd.f32 %v1105, %v456
    %v1107 = vadd.f32 %v1106, %v458
    %v1108 = vadd.f32 %v1107, %v461
    %v1109 = vadd.f32 %v1108, %v463
    %v1110 = vadd.f32 %v1109, %v466
    %v1111 = vadd.f32 %v1110, %v468
    %v1112 = vadd.f32 %v1111, %v471
    %v1113 = vadd.f32 %v1112, %v473
    %v1114 = vadd.f32 %v1113, %v476
    %v1115 = vadd.f32 %v1114, %v478
    %v1116 = vadd.f32 %v1115, %v481
    %v1117 = vadd.f32 %v1116, %v483
    %v1118 = vadd.f32 %v1117, %v486
    %v1119 = vadd.f32 %v1118, %v488
    %v1120 = vadd.f32 %v1119, %v491
    %v1121 = vadd.f32 %v1120, %v493
    %v1122 = vadd.f32 %v1121, %v496
    %v1123 = vadd.f32 %v1122, %v498
    %v1124 = vadd.f32 %v1123, %v501
    %v1125 = vadd.f32 %v1124, %v503
    %v1126 = vadd.f32 %v1125, %v506
    %v1127 = vadd.f32 %v1126, %v508
    %v1128 = vadd.f32 %v1127, %v511
    %v1129 = vadd.f32 %v1128, %v513
    %v1130 = vadd.f32 %v1129, %v516
    %v1131 = vadd.f32 %v1130, %v518
    %v1132 = vadd.f32 %v1131, %v521
    %v1133 = vadd.f32 %v1132, %v523
    %v1134 = vadd.f32 %v1133, %v526
    %v1135 = vadd.f32 %v1134, %v528
    %v1136 = vadd.f32 %v1135, %v531
    %v1137 = vadd.f32 %v1136, %v533
    %v1138 = vadd.f32 %v1137, %v536
    %v1139 = vadd.f32 %v1138, %v538
    %v1140 = vadd.f32 %v1139, %v541
    %v1141 = vadd.f32 %v1140, %v543
    %v1142 = vadd.f32 %v1141, %v546
    %v1143 = vadd.f32 %v1142, %v548
    %v1144 = vadd.f32 %v1143, %v551
    %v1145 = vadd.f32 %v1144, %v553
    %v1146 = vadd.f32 %v1145, %v556
    %v1147 = vadd.f32 %v1146, %v558
    %v1148 = vadd.f32 %v1147, %v561
    %v1149 = vadd.f32 %v1148, %v563
    %v1150 = vadd.f32 %v1149, %v566
    %v1151 = vadd.f32 %v1150, %v568
    %v1152 = vadd.f32 %v1151, %v571
    %v1153 = vadd.f32 %v1152, %v573
    %v1154 = vadd.f32 %v1153, %v576
    %v1155 = vadd.f32 %v1154, %v578
    %v1156 = vadd.f32 %v1155, %v581
    %v1157 = vadd.f32 %v1156, %v583
    %v1158 = vadd.f32 %v1157, %v586
    %v1159 = vadd.f32 %v1158, %v588
    %v1160 = vrot.slane %v1159, 4
    %v1161 = vadd.f32 %v1159, %v1160
    %v1162 = vrot.slane %v1161, 2
    %v1163 = vadd.f32 %v1161, %v1162
    %v1164 = vrot.slane %v1163, 1
    %v1165 = vadd.f32 %v1163, %v1164
    %v1166 = vadd.f32 %v600, %v602
    %v1167 = vadd.f32 %v1166, %v605
    %v1168 = vadd.f32 %v1167, %v607
    %v1169 = vadd.f32 %v1168, %v610
    %v1170 = vadd.f32 %v1169, %v612
    %v1171 = vadd.f32 %v1170, %v615
    %v1172 = vadd.f32 %v1171, %v617
    %v1173 = vadd.f32 %v1172, %v620
    %v1174 = vadd.f32 %v1173, %v622
    %v1175 = vadd.f32 %v1174, %v625
    %v1176 = vadd.f32 %v1175, %v627
    %v1177 = vadd.f32 %v1176, %v630
    %v1178 = vadd.f32 %v1177, %v632
    %v1179 = vadd.f32 %v1178, %v635
    %v1180 = vadd.f32 %v1179, %v637
    %v1181 = vadd.f32 %v1180, %v640
    %v1182 = vadd.f32 %v1181, %v642
    %v1183 = vadd.f32 %v1182, %v645
    %v1184 = vadd.f32 %v1183, %v647
    %v1185 = vadd.f32 %v1184, %v650
    %v1186 = vadd.f32 %v1185, %v652
    %v1187 = vadd.f32 %v1186, %v655
    %v1188 = vadd.f32 %v1187, %v657
    %v1189 = vadd.f32 %v1188, %v660
    %v1190 = vadd.f32 %v1189, %v662
    %v1191 = vadd.f32 %v1190, %v665
    %v1192 = vadd.f32 %v1191, %v667
    %v1193 = vadd.f32 %v1192, %v670
    %v1194 = vadd.f32 %v1193, %v672
    %v1195 = vadd.f32 %v1194, %v675
    %v1196 = vadd.f32 %v1195, %v677
    %v1197 = vadd.f32 %v1196, %v680
    %v1198 = vadd.f32 %v1197, %v682
    %v1199 = vadd.f32 %v1198, %v685
    %v1200 = vadd.f32 %v1199, %v687
    %v1201 = vadd.f32 %v1200, %v690
    %v1202 = vadd.f32 %v1201, %v692
    %v1203 = vadd.f32 %v1202, %v695
    %v1204 = vadd.f32 %v1203, %v697
    %v1205 = vadd.f32 %v1204, %v700
    %v1206 = vadd.f32 %v1205, %v702
    %v1207 = vadd.f32 %v1206, %v705
    %v1208 = vadd.f32 %v1207, %v707
    %v1209 = vadd.f32 %v1208, %v710
    %v1210 = vadd.f32 %v1209, %v712
    %v1211 = vadd.f32 %v1210, %v715
    %v1212 = vadd.f32 %v1211, %v717
    %v1213 = vadd.f32 %v1212, %v720
    %v1214 = vadd.f32 %v1213, %v722
    %v1215 = vadd.f32 %v1214, %v725
    %v1216 = vadd.f32 %v1215, %v727
    %v1217 = vadd.f32 %v1216, %v730
    %v1218 = vadd.f32 %v1217, %v732
    %v1219 = vadd.f32 %v1218, %v735
    %v1220 = vadd.f32 %v1219, %v737
    %v1221 = vadd.f32 %v1220, %v740
    %v1222 = vadd.f32 %v1221, %v742
    %v1223 = vadd.f32 %v1222, %v745
    %v1224 = vadd.f32 %v1223, %v747
    %v1225 = vadd.f32 %v1224, %v750
    %v1226 = vadd.f32 %v1225, %v752
    %v1227 = vadd.f32 %v1226, %v755
    %v1228 = vadd.f32 %v1227, %v757
    %v1229 = vrot.slane %v1228, 4
    %v1230 = vadd.f32 %v1228, %v1229
    %v1231 = vrot.slane %v1230, 2
    %v1232 = vadd.f32 %v1230, %v1231
    %v1233 = vrot.slane %v1232, 1
    %v1234 = vadd.f32 %v1232, %v1233
    %v1235 = vadd.f32 %v769, %v771
    %v1236 = vadd.f32 %v1235, %v774
    %v1237 = vadd.f32 %v1236, %v776
    %v1238 = vadd.f32 %v1237, %v779
    %v1239 = vadd.f32 %v1238, %v781
    %v1240 = vadd.f32 %v1239, %v784
    %v1241 = vadd.f32 %v1240, %v786
    %v1242 = vadd.f32 %v1241, %v789
    %v1243 = vadd.f32 %v1242, %v791
    %v1244 = vadd.f32 %v1243, %v794
    %v1245 = vadd.f32 %v1244, %v796
    %v1246 = vadd.f32 %v1245, %v799
    %v1247 = vadd.f32 %v1246, %v801
    %v1248 = vadd.f32 %v1247, %v804
    %v1249 = vadd.f32 %v1248, %v806
    %v1250 = vadd.f32 %v1249, %v809
    %v1251 = vadd.f32 %v1250, %v811
    %v1252 = vadd.f32 %v1251, %v814
    %v1253 = vadd.f32 %v1252, %v816
    %v1254 = vadd.f32 %v1253, %v819
    %v1255 = vadd.f32 %v1254, %v821
    %v1256 = vadd.f32 %v1255, %v824
    %v1257 = vadd.f32 %v1256, %v826
    %v1258 = vadd.f32 %v1257, %v829
    %v1259 = vadd.f32 %v1258, %v831
    %v1260 = vadd.f32 %v1259, %v834
    %v1261 = vadd.f32 %v1260, %v836
    %v1262 = vadd.f32 %v1261, %v839
    %v1263 = vadd.f32 %v1262, %v841
    %v1264 = vadd.f32 %v1263, %v844
    %v1265 = vadd.f32 %v1264, %v846
    %v1266 = vadd.f32 %v1265, %v849
    %v1267 = vadd.f32 %v1266, %v851
    %v1268 = vadd.f32 %v1267, %v854
    %v1269 = vadd.f32 %v1268, %v856
    %v1270 = vadd.f32 %v1269, %v859
    %v1271 = vadd.f32 %v1270, %v861
    %v1272 = vadd.f32 %v1271, %v864
    %v1273 = vadd.f32 %v1272, %v866
    %v1274 = vadd.f32 %v1273, %v869
    %v1275 = vadd.f32 %v1274, %v871
    %v1276 = vadd.f32 %v1275, %v874
    %v1277 = vadd.f32 %v1276, %v876
    %v1278 = vadd.f32 %v1277, %v879
    %v1279 = vadd.f32 %v1278, %v881
    %v1280 = vadd.f32 %v1279, %v884
    %v1281 = vadd.f32 %v1280, %v886
    %v1282 = vadd.f32 %v1281, %v889
    %v1283 = vadd.f32 %v1282, %v891
    %v1284 = vadd.f32 %v1283, %v894
    %v1285 = vadd.f32 %v1284, %v896
    %v1286 = vadd.f32 %v1285, %v899
    %v1287 = vadd.f32 %v1286, %v901
    %v1288 = vadd.f32 %v1287, %v904
    %v1289 = vadd.f32 %v1288, %v906
    %v1290 = vadd.f32 %v1289, %v909
    %v1291 = vadd.f32 %v1290, %v911
    %v1292 = vadd.f32 %v1291, %v914
    %v1293 = vadd.f32 %v1292, %v916
    %v1294 = vadd.f32 %v1293, %v919
    %v1295 = vadd.f32 %v1294, %v921
    %v1296 = vadd.f32 %v1295, %v924
    %v1297 = vadd.f32 %v1296, %v926
    %v1298 = vrot.slane %v1297, 4
    %v1299 = vadd.f32 %v1297, %v1298
    %v1300 = vrot.slane %v1299, 2
    %v1301 = vadd.f32 %v1299, %v1300
    %v1302 = vrot.slane %v1301, 1
    %v1303 = vadd.f32 %v1301, %v1302
    %v1304 = vadd.f32 %v938, %v940
    %v1305 = vadd.f32 %v1304, %v943
    %v1306 = vadd.f32 %v1305, %v945
    %v1307 = vadd.f32 %v1306, %v948
    %v1308 = vadd.f32 %v1307, %v950
    %v1309 = vadd.f32 %v1308, %v953
    %v1310 = vadd.f32 %v1309, %v955
    %v1311 = vadd.f32 %v1310, %v958
    %v1312 = vadd.f32 %v1311, %v960
    %v1313 = vadd.f32 %v1312, %v963
    %v1314 = vadd.f32 %v1313, %v965
    %v1315 = vadd.f32 %v1314, %v968
    %v1316 = vadd.f32 %v1315, %v970
    %v1317 = vadd.f32 %v1316, %v973
    %v1318 = vadd.f32 %v1317, %v975
    %v1319 = vadd.f32 %v1318, %v978
    %v1320 = vadd.f32 %v1319, %v980
    %v1321 = vadd.f32 %v1320, %v983
    %v1322 = vadd.f32 %v1321, %v985
    %v1323 = vadd.f32 %v1322, %v988
    %v1324 = vadd.f32 %v1323, %v990
    %v1325 = vadd.f32 %v1324, %v993
    %v1326 = vadd.f32 %v1325, %v995
    %v1327 = vadd.f32 %v1326, %v998
    %v1328 = vadd.f32 %v1327, %v1000
    %v1329 = vadd.f32 %v1328, %v1003
    %v1330 = vadd.f32 %v1329, %v1005
    %v1331 = vadd.f32 %v1330, %v1008
    %v1332 = vadd.f32 %v1331, %v1010
    %v1333 = vadd.f32 %v1332, %v1013
    %v1334 = vadd.f32 %v1333, %v1015
    %v1335 = vadd.f32 %v1334, %v1018
    %v1336 = vadd.f32 %v1335, %v1020
    %v1337 = vadd.f32 %v1336, %v1023
    %v1338 = vadd.f32 %v1337, %v1025
    %v1339 = vadd.f32 %v1338, %v1028
    %v1340 = vadd.f32 %v1339, %v1030
    %v1341 = vadd.f32 %v1340, %v1033
    %v1342 = vadd.f32 %v1341, %v1035
    %v1343 = vadd.f32 %v1342, %v1038
    %v1344 = vadd.f32 %v1343, %v1040
    %v1345 = vadd.f32 %v1344, %v1043
    %v1346 = vadd.f32 %v1345, %v1045
    %v1347 = vadd.f32 %v1346, %v1048
    %v1348 = vadd.f32 %v1347, %v1050
    %v1349 = vadd.f32 %v1348, %v1053
    %v1350 = vadd.f32 %v1349, %v1055
    %v1351 = vadd.f32 %v1350, %v1058
    %v1352 = vadd.f32 %v1351, %v1060
    %v1353 = vadd.f32 %v1352, %v1063
    %v1354 = vadd.f32 %v1353, %v1065
    %v1355 = vadd.f32 %v1354, %v1068
    %v1356 = vadd.f32 %v1355, %v1070
    %v1357 = vadd.f32 %v1356, %v1073
    %v1358 = vadd.f32 %v1357, %v1075
    %v1359 = vadd.f32 %v1358, %v1078
    %v1360 = vadd.f32 %v1359, %v1080
    %v1361 = vadd.f32 %v1360, %v1083
    %v1362 = vadd.f32 %v1361, %v1085
    %v1363 = vadd.f32 %v1362, %v1088
    %v1364 = vadd.f32 %v1363, %v1090
    %v1365 = vadd.f32 %v1364, %v1093
    %v1366 = vadd.f32 %v1365, %v1095
    %v1367 = vrot.slane %v1366, 4
    %v1368 = vadd.f32 %v1366, %v1367
    %v1369 = vrot.slane %v1368, 2
    %v1370 = vadd.f32 %v1368, %v1369
    %v1371 = vrot.slane %v1370, 1
    %v1372 = vadd.f32 %v1370, %v1371
    %v1373 = vmul.f32 %v1165, 0.001953125
    %v1374 = vmul.f32 %v1234, 0.001953125
    %v1375 = vmul.f32 %v1303, 0.001953125
    %v1376 = vmul.f32 %v1372, 0.001953125
    %v1377 = vmul.f32 %v431, %v431
    %v1378 = vmul.f32 %v600, %v600
    %v1379 = vmul.f32 %v769, %v769
    %v1380 = vmul.f32 %v938, %v938
    %v1381 = vmul.f32 %v433, %v433
    %v1382 = vmul.f32 %v602, %v602
    %v1383 = vmul.f32 %v771, %v771
    %v1384 = vmul.f32 %v940, %v940
    %v1385 = vmul.f32 %v436, %v436
    %v1386 = vmul.f32 %v605, %v605
    %v1387 = vmul.f32 %v774, %v774
    %v1388 = vmul.f32 %v943, %v943
    %v1389 = vmul.f32 %v438, %v438
    %v1390 = vmul.f32 %v607, %v607
    %v1391 = vmul.f32 %v776, %v776
    %v1392 = vmul.f32 %v945, %v945
    %v1393 = vmul.f32 %v441, %v441
    %v1394 = vmul.f32 %v610, %v610
    %v1395 = vmul.f32 %v779, %v779
    %v1396 = vmul.f32 %v948, %v948
    %v1397 = vmul.f32 %v443, %v443
    %v1398 = vmul.f32 %v612, %v612
    %v1399 = vmul.f32 %v781, %v781
    %v1400 = vmul.f32 %v950, %v950
    %v1401 = vmul.f32 %v446, %v446
    %v1402 = vmul.f32 %v615, %v615
    %v1403 = vmul.f32 %v784, %v784
    %v1404 = vmul.f32 %v953, %v953
    %v1405 = vmul.f32 %v448, %v448
    %v1406 = vmul.f32 %v617, %v617
    %v1407 = vmul.f32 %v786, %v786
    %v1408 = vmul.f32 %v955, %v955
    %v1409 = vmul.f32 %v451, %v451
    %v1410 = vmul.f32 %v620, %v620
    %v1411 = vmul.f32 %v789, %v789
    %v1412 = vmul.f32 %v958, %v958
    %v1413 = vmul.f32 %v453, %v453
    %v1414 = vmul.f32 %v622, %v622
    %v1415 = vmul.f32 %v791, %v791
    %v1416 = vmul.f32 %v960, %v960
    %v1417 = vmul.f32 %v456, %v456
    %v1418 = vmul.f32 %v625, %v625
    %v1419 = vmul.f32 %v794, %v794
    %v1420 = vmul.f32 %v963, %v963
    %v1421 = vmul.f32 %v458, %v458
    %v1422 = vmul.f32 %v627, %v627
    %v1423 = vmul.f32 %v796, %v796
    %v1424 = vmul.f32 %v965, %v965
    %v1425 = vmul.f32 %v461, %v461
    %v1426 = vmul.f32 %v630, %v630
    %v1427 = vmul.f32 %v799, %v799
    %v1428 = vmul.f32 %v968, %v968
    %v1429 = vmul.f32 %v463, %v463
    %v1430 = vmul.f32 %v632, %v632
    %v1431 = vmul.f32 %v801, %v801
    %v1432 = vmul.f32 %v970, %v970
    %v1433 = vmul.f32 %v466, %v466
    %v1434 = vmul.f32 %v635, %v635
    %v1435 = vmul.f32 %v804, %v804
    %v1436 = vmul.f32 %v973, %v973
    %v1437 = vmul.f32 %v468, %v468
    %v1438 = vmul.f32 %v637, %v637
    %v1439 = vmul.f32 %v806, %v806
    %v1440 = vmul.f32 %v975, %v975
    %v1441 = vmul.f32 %v471, %v471
    %v1442 = vmul.f32 %v640, %v640
    %v1443 = vmul.f32 %v809, %v809
    %v1444 = vmul.f32 %v978, %v978
    %v1445 = vmul.f32 %v473, %v473
    %v1446 = vmul.f32 %v642, %v642
    %v1447 = vmul.f32 %v811, %v811
    %v1448 = vmul.f32 %v980, %v980
    %v1449 = vmul.f32 %v476, %v476
    %v1450 = vmul.f32 %v645, %v645
    %v1451 = vmul.f32 %v814, %v814
    %v1452 = vmul.f32 %v983, %v983
    %v1453 = vmul.f32 %v478, %v478
    %v1454 = vmul.f32 %v647, %v647
    %v1455 = vmul.f32 %v816, %v816
    %v1456 = vmul.f32 %v985, %v985
    %v1457 = vmul.f32 %v481, %v481
    %v1458 = vmul.f32 %v650, %v650
    %v1459 = vmul.f32 %v819, %v819
    %v1460 = vmul.f32 %v988, %v988
    %v1461 = vmul.f32 %v483, %v483
    %v1462 = vmul.f32 %v652, %v652
    %v1463 = vmul.f32 %v821, %v821
    %v1464 = vmul.f32 %v990, %v990
    %v1465 = vmul.f32 %v486, %v486
    %v1466 = vmul.f32 %v655, %v655
    %v1467 = vmul.f32 %v824, %v824
    %v1468 = vmul.f32 %v993, %v993
    %v1469 = vmul.f32 %v488, %v488
    %v1470 = vmul.f32 %v657, %v657
    %v1471 = vmul.f32 %v826, %v826
    %v1472 = vmul.f32 %v995, %v995
    %v1473 = vmul.f32 %v491, %v491
    %v1474 = vmul.f32 %v660, %v660
    %v1475 = vmul.f32 %v829, %v829
    %v1476 = vmul.f32 %v998, %v998
    %v1477 = vmul.f32 %v493, %v493
    %v1478 = vmul.f32 %v662, %v662
    %v1479 = vmul.f32 %v831, %v831
    %v1480 = vmul.f32 %v1000, %v1000
    %v1481 = vmul.f32 %v496, %v496
    %v1482 = vmul.f32 %v665, %v665
    %v1483 = vmul.f32 %v834, %v834
    %v1484 = vmul.f32 %v1003, %v1003
    %v1485 = vmul.f32 %v498, %v498
    %v1486 = vmul.f32 %v667, %v667
    %v1487 = vmul.f32 %v836, %v836
    %v1488 = vmul.f32 %v1005, %v1005
    %v1489 = vmul.f32 %v501, %v501
    %v1490 = vmul.f32 %v670, %v670
    %v1491 = vmul.f32 %v839, %v839
    %v1492 = vmul.f32 %v1008, %v1008
    %v1493 = vmul.f32 %v503, %v503
    %v1494 = vmul.f32 %v672, %v672
    %v1495 = vmul.f32 %v841, %v841
    %v1496 = vmul.f32 %v1010, %v1010
    %v1497 = vmul.f32 %v506, %v506
    %v1498 = vmul.f32 %v675, %v675
    %v1499 = vmul.f32 %v844, %v844
    %v1500 = vmul.f32 %v1013, %v1013
    %v1501 = vmul.f32 %v508, %v508
    %v1502 = vmul.f32 %v677, %v677
    %v1503 = vmul.f32 %v846, %v846
    %v1504 = vmul.f32 %v1015, %v1015
    %v1505 = vmul.f32 %v511, %v511
    %v1506 = vmul.f32 %v680, %v680
    %v1507 = vmul.f32 %v849, %v849
    %v1508 = vmul.f32 %v1018, %v1018
    %v1509 = vmul.f32 %v513, %v513
    %v1510 = vmul.f32 %v682, %v682
    %v1511 = vmul.f32 %v851, %v851
    %v1512 = vmul.f32 %v1020, %v1020
    %v1513 = vmul.f32 %v516, %v516
    %v1514 = vmul.f32 %v685, %v685
    %v1515 = vmul.f32 %v854, %v854
    %v1516 = vmul.f32 %v1023, %v1023
    %v1517 = vmul.f32 %v518, %v518
    %v1518 = vmul.f32 %v687, %v687
    %v1519 = vmul.f32 %v856, %v856
    %v1520 = vmul.f32 %v1025, %v1025
    %v1521 = vmul.f32 %v521, %v521
    %v1522 = vmul.f32 %v690, %v690
    %v1523 = vmul.f32 %v859, %v859
    %v1524 = vmul.f32 %v1028, %v1028
    %v1525 = vmul.f32 %v523, %v523
    %v1526 = vmul.f32 %v692, %v692
    %v1527 = vmul.f32 %v861, %v861
    %v1528 = vmul.f32 %v1030, %v1030
    %v1529 = vmul.f32 %v526, %v526
    %v1530 = vmul.f32 %v695, %v695
    %v1531 = vmul.f32 %v864, %v864
    %v1532 = vmul.f32 %v1033, %v1033
    %v1533 = vmul.f32 %v528, %v528
    %v1534 = vmul.f32 %v697, %v697
    %v1535 = vmul.f32 %v866, %v866
    %v1536 = vmul.f32 %v1035, %v1035
    %v1537 = vmul.f32 %v531, %v531
    %v1538 = vmul.f32 %v700, %v700
    %v1539 = vmul.f32 %v869, %v869
    %v1540 = vmul.f32 %v1038, %v1038
    %v1541 = vmul.f32 %v533, %v533
    %v1542 = vmul.f32 %v702, %v702
    %v1543 = vmul.f32 %v871, %v871
    %v1544 = vmul.f32 %v1040, %v1040
    %v1545 = vmul.f32 %v536, %v536
    %v1546 = vmul.f32 %v705, %v705
    %v1547 = vmul.f32 %v874, %v874
    %v1548 = vmul.f32 %v1043, %v1043
    %v1549 = vmul.f32 %v538, %v538
    %v1550 = vmul.f32 %v707, %v707
    %v1551 = vmul.f32 %v876, %v876
    %v1552 = vmul.f32 %v1045, %v1045
    %v1553 = vmul.f32 %v541, %v541
    %v1554 = vmul.f32 %v710, %v710
    %v1555 = vmul.f32 %v879, %v879
    %v1556 = vmul.f32 %v1048, %v1048
    %v1557 = vmul.f32 %v543, %v543
    %v1558 = vmul.f32 %v712, %v712
    %v1559 = vmul.f32 %v881, %v881
    %v1560 = vmul.f32 %v1050, %v1050
    %v1561 = vmul.f32 %v546, %v546
    %v1562 = vmul.f32 %v715, %v715
    %v1563 = vmul.f32 %v884, %v884
    %v1564 = vmul.f32 %v1053, %v1053
    %v1565 = vmul.f32 %v548, %v548
    %v1566 = vmul.f32 %v717, %v717
    %v1567 = vmul.f32 %v886, %v886
    %v1568 = vmul.f32 %v1055, %v1055
    %v1569 = vmul.f32 %v551, %v551
    %v1570 = vmul.f32 %v720, %v720
    %v1571 = vmul.f32 %v889, %v889
    %v1572 = vmul.f32 %v1058, %v1058
    %v1573 = vmul.f32 %v553, %v553
    %v1574 = vmul.f32 %v722, %v722
    %v1575 = vmul.f32 %v891, %v891
    %v1576 = vmul.f32 %v1060, %v1060
    %v1577 = vmul.f32 %v556, %v556
    %v1578 = vmul.f32 %v725, %v725
    %v1579 = vmul.f32 %v894, %v894
    %v1580 = vmul.f32 %v1063, %v1063
    %v1581 = vmul.f32 %v558, %v558
    %v1582 = vmul.f32 %v727, %v727
    %v1583 = vmul.f32 %v896, %v896
    %v1584 = vmul.f32 %v1065, %v1065
    %v1585 = vmul.f32 %v561, %v561
    %v1586 = vmul.f32 %v730, %v730
    %v1587 = vmul.f32 %v899, %v899
    %v1588 = vmul.f32 %v1068, %v1068
    %v1589 = vmul.f32 %v563, %v563
    %v1590 = vmul.f32 %v732, %v732
    %v1591 = vmul.f32 %v901, %v901
    %v1592 = vmul.f32 %v1070, %v1070
    %v1593 = vmul.f32 %v566, %v566
    %v1594 = vmul.f32 %v735, %v735
    %v1595 = vmul.f32 %v904, %v904
    %v1596 = vmul.f32 %v1073, %v1073
    %v1597 = vmul.f32 %v568, %v568
    %v1598 = vmul.f32 %v737, %v737
    %v1599 = vmul.f32 %v906, %v906
    %v1600 = vmul.f32 %v1075, %v1075
    %v1601 = vmul.f32 %v571, %v571
    %v1602 = vmul.f32 %v740, %v740
    %v1603 = vmul.f32 %v909, %v909
    %v1604 = vmul.f32 %v1078, %v1078
    %v1605 = vmul.f32 %v573, %v573
    %v1606 = vmul.f32 %v742, %v742
    %v1607 = vmul.f32 %v911, %v911
    %v1608 = vmul.f32 %v1080, %v1080
    %v1609 = vmul.f32 %v576, %v576
    %v1610 = vmul.f32 %v745, %v745
    %v1611 = vmul.f32 %v914, %v914
    %v1612 = vmul.f32 %v1083, %v1083
    %v1613 = vmul.f32 %v578, %v578
    %v1614 = vmul.f32 %v747, %v747
    %v1615 = vmul.f32 %v916, %v916
    %v1616 = vmul.f32 %v1085, %v1085
    %v1617 = vmul.f32 %v581, %v581
    %v1618 = vmul.f32 %v750, %v750
    %v1619 = vmul.f32 %v919, %v919
    %v1620 = vmul.f32 %v1088, %v1088
    %v1621 = vmul.f32 %v583, %v583
    %v1622 = vmul.f32 %v752, %v752
    %v1623 = vmul.f32 %v921, %v921
    %v1624 = vmul.f32 %v1090, %v1090
    %v1625 = vmul.f32 %v586, %v586
    %v1626 = vmul.f32 %v755, %v755
    %v1627 = vmul.f32 %v924, %v924
    %v1628 = vmul.f32 %v1093, %v1093
    %v1629 = vmul.f32 %v588, %v588
    %v1630 = vmul.f32 %v757, %v757
    %v1631 = vmul.f32 %v926, %v926
    %v1632 = vmul.f32 %v1095, %v1095
    %v1633 = vadd.f32 %v1377, %v1381
    %v1634 = vadd.f32 %v1633, %v1385
    %v1635 = vadd.f32 %v1634, %v1389
    %v1636 = vadd.f32 %v1635, %v1393
    %v1637 = vadd.f32 %v1636, %v1397
    %v1638 = vadd.f32 %v1637, %v1401
    %v1639 = vadd.f32 %v1638, %v1405
    %v1640 = vadd.f32 %v1639, %v1409
    %v1641 = vadd.f32 %v1640, %v1413
    %v1642 = vadd.f32 %v1641, %v1417
    %v1643 = vadd.f32 %v1642, %v1421
    %v1644 = vadd.f32 %v1643, %v1425
    %v1645 = vadd.f32 %v1644, %v1429
    %v1646 = vadd.f32 %v1645, %v1433
    %v1647 = vadd.f32 %v1646, %v1437
    %v1648 = vadd.f32 %v1647, %v1441
    %v1649 = vadd.f32 %v1648, %v1445
    %v1650 = vadd.f32 %v1649, %v1449
    %v1651 = vadd.f32 %v1650, %v1453
    %v1652 = vadd.f32 %v1651, %v1457
    %v1653 = vadd.f32 %v1652, %v1461
    %v1654 = vadd.f32 %v1653, %v1465
    %v1655 = vadd.f32 %v1654, %v1469
    %v1656 = vadd.f32 %v1655, %v1473
    %v1657 = vadd.f32 %v1656, %v1477
    %v1658 = vadd.f32 %v1657, %v1481
    %v1659 = vadd.f32 %v1658, %v1485
    %v1660 = vadd.f32 %v1659, %v1489
    %v1661 = vadd.f32 %v1660, %v1493
    %v1662 = vadd.f32 %v1661, %v1497
    %v1663 = vadd.f32 %v1662, %v1501
    %v1664 = vadd.f32 %v1663, %v1505
    %v1665 = vadd.f32 %v1664, %v1509
    %v1666 = vadd.f32 %v1665, %v1513
    %v1667 = vadd.f32 %v1666, %v1517
    %v1668 = vadd.f32 %v1667, %v1521
    %v1669 = vadd.f32 %v1668, %v1525
    %v1670 = vadd.f32 %v1669, %v1529
    %v1671 = vadd.f32 %v1670, %v1533
    %v1672 = vadd.f32 %v1671, %v1537
    %v1673 = vadd.f32 %v1672, %v1541
    %v1674 = vadd.f32 %v1673, %v1545
    %v1675 = vadd.f32 %v1674, %v1549
    %v1676 = vadd.f32 %v1675, %v1553
    %v1677 = vadd.f32 %v1676, %v1557
    %v1678 = vadd.f32 %v1677, %v1561
    %v1679 = vadd.f32 %v1678, %v1565
    %v1680 = vadd.f32 %v1679, %v1569
    %v1681 = vadd.f32 %v1680, %v1573
    %v1682 = vadd.f32 %v1681, %v1577
    %v1683 = vadd.f32 %v1682, %v1581
    %v1684 = vadd.f32 %v1683, %v1585
    %v1685 = vadd.f32 %v1684, %v1589
    %v1686 = vadd.f32 %v1685, %v1593
    %v1687 = vadd.f32 %v1686, %v1597
    %v1688 = vadd.f32 %v1687, %v1601
    %v1689 = vadd.f32 %v1688, %v1605
    %v1690 = vadd.f32 %v1689, %v1609
    %v1691 = vadd.f32 %v1690, %v1613
    %v1692 = vadd.f32 %v1691, %v1617
    %v1693 = vadd.f32 %v1692, %v1621
    %v1694 = vadd.f32 %v1693, %v1625
    %v1695 = vadd.f32 %v1694, %v1629
    %v1696 = vrot.slane %v1695, 4
    %v1697 = vadd.f32 %v1695, %v1696
    %v1698 = vrot.slane %v1697, 2
    %v1699 = vadd.f32 %v1697, %v1698
    %v1700 = vrot.slane %v1699, 1
    %v1701 = vadd.f32 %v1699, %v1700
    %v1702 = vadd.f32 %v1378, %v1382
    %v1703 = vadd.f32 %v1702, %v1386
    %v1704 = vadd.f32 %v1703, %v1390
    %v1705 = vadd.f32 %v1704, %v1394
    %v1706 = vadd.f32 %v1705, %v1398
    %v1707 = vadd.f32 %v1706, %v1402
    %v1708 = vadd.f32 %v1707, %v1406
    %v1709 = vadd.f32 %v1708, %v1410
    %v1710 = vadd.f32 %v1709, %v1414
    %v1711 = vadd.f32 %v1710, %v1418
    %v1712 = vadd.f32 %v1711, %v1422
    %v1713 = vadd.f32 %v1712, %v1426
    %v1714 = vadd.f32 %v1713, %v1430
    %v1715 = vadd.f32 %v1714, %v1434
    %v1716 = vadd.f32 %v1715, %v1438
    %v1717 = vadd.f32 %v1716, %v1442
    %v1718 = vadd.f32 %v1717, %v1446
    %v1719 = vadd.f32 %v1718, %v1450
    %v1720 = vadd.f32 %v1719, %v1454
    %v1721 = vadd.f32 %v1720, %v1458
    %v1722 = vadd.f32 %v1721, %v1462
    %v1723 = vadd.f32 %v1722, %v1466
    %v1724 = vadd.f32 %v1723, %v1470
    %v1725 = vadd.f32 %v1724, %v1474
    %v1726 = vadd.f32 %v1725, %v1478
    %v1727 = vadd.f32 %v1726, %v1482
    %v1728 = vadd.f32 %v1727, %v1486
    %v1729 = vadd.f32 %v1728, %v1490
    %v1730 = vadd.f32 %v1729, %v1494
    %v1731 = vadd.f32 %v1730, %v1498
    %v1732 = vadd.f32 %v1731, %v1502
    %v1733 = vadd.f32 %v1732, %v1506
    %v1734 = vadd.f32 %v1733, %v1510
    %v1735 = vadd.f32 %v1734, %v1514
    %v1736 = vadd.f32 %v1735, %v1518
    %v1737 = vadd.f32 %v1736, %v1522
    %v1738 = vadd.f32 %v1737, %v1526
    %v1739 = vadd.f32 %v1738, %v1530
    %v1740 = vadd.f32 %v1739, %v1534
    %v1741 = vadd.f32 %v1740, %v1538
    %v1742 = vadd.f32 %v1741, %v1542
    %v1743 = vadd.f32 %v1742, %v1546
    %v1744 = vadd.f32 %v1743, %v1550
    %v1745 = vadd.f32 %v1744, %v1554
    %v1746 = vadd.f32 %v1745, %v1558
    %v1747 = vadd.f32 %v1746, %v1562
    %v1748 = vadd.f32 %v1747, %v1566
    %v1749 = vadd.f32 %v1748, %v1570
    %v1750 = vadd.f32 %v1749, %v1574
    %v1751 = vadd.f32 %v1750, %v1578
    %v1752 = vadd.f32 %v1751, %v1582
    %v1753 = vadd.f32 %v1752, %v1586
    %v1754 = vadd.f32 %v1753, %v1590
    %v1755 = vadd.f32 %v1754, %v1594
    %v1756 = vadd.f32 %v1755, %v1598
    %v1757 = vadd.f32 %v1756, %v1602
    %v1758 = vadd.f32 %v1757, %v1606
    %v1759 = vadd.f32 %v1758, %v1610
    %v1760 = vadd.f32 %v1759, %v1614
    %v1761 = vadd.f32 %v1760, %v1618
    %v1762 = vadd.f32 %v1761, %v1622
    %v1763 = vadd.f32 %v1762, %v1626
    %v1764 = vadd.f32 %v1763, %v1630
    %v1765 = vrot.slane %v1764, 4
    %v1766 = vadd.f32 %v1764, %v1765
    %v1767 = vrot.slane %v1766, 2
    %v1768 = vadd.f32 %v1766, %v1767
    %v1769 = vrot.slane %v1768, 1
    %v1770 = vadd.f32 %v1768, %v1769
    %v1771 = vadd.f32 %v1379, %v1383
    %v1772 = vadd.f32 %v1771, %v1387
    %v1773 = vadd.f32 %v1772, %v1391
    %v1774 = vadd.f32 %v1773, %v1395
    %v1775 = vadd.f32 %v1774, %v1399
    %v1776 = vadd.f32 %v1775, %v1403
    %v1777 = vadd.f32 %v1776, %v1407
    %v1778 = vadd.f32 %v1777, %v1411
    %v1779 = vadd.f32 %v1778, %v1415
    %v1780 = vadd.f32 %v1779, %v1419
    %v1781 = vadd.f32 %v1780, %v1423
    %v1782 = vadd.f32 %v1781, %v1427
    %v1783 = vadd.f32 %v1782, %v1431
    %v1784 = vadd.f32 %v1783, %v1435
    %v1785 = vadd.f32 %v1784, %v1439
    %v1786 = vadd.f32 %v1785, %v1443
    %v1787 = vadd.f32 %v1786, %v1447
    %v1788 = vadd.f32 %v1787, %v1451
    %v1789 = vadd.f32 %v1788, %v1455
    %v1790 = vadd.f32 %v1789, %v1459
    %v1791 = vadd.f32 %v1790, %v1463
    %v1792 = vadd.f32 %v1791, %v1467
    %v1793 = vadd.f32 %v1792, %v1471
    %v1794 = vadd.f32 %v1793, %v1475
    %v1795 = vadd.f32 %v1794, %v1479
    %v1796 = vadd.f32 %v1795, %v1483
    %v1797 = vadd.f32 %v1796, %v1487
    %v1798 = vadd.f32 %v1797, %v1491
    %v1799 = vadd.f32 %v1798, %v1495
    %v1800 = vadd.f32 %v1799, %v1499
    %v1801 = vadd.f32 %v1800, %v1503
    %v1802 = vadd.f32 %v1801, %v1507
    %v1803 = vadd.f32 %v1802, %v1511
    %v1804 = vadd.f32 %v1803, %v1515
    %v1805 = vadd.f32 %v1804, %v1519
    %v1806 = vadd.f32 %v1805, %v1523
    %v1807 = vadd.f32 %v1806, %v1527
    %v1808 = vadd.f32 %v1807, %v1531
    %v1809 = vadd.f32 %v1808, %v1535
    %v1810 = vadd.f32 %v1809, %v1539
    %v1811 = vadd.f32 %v1810, %v1543
    %v1812 = vadd.f32 %v1811, %v1547
    %v1813 = vadd.f32 %v1812, %v1551
    %v1814 = vadd.f32 %v1813, %v1555
    %v1815 = vadd.f32 %v1814, %v1559
    %v1816 = vadd.f32 %v1815, %v1563
    %v1817 = vadd.f32 %v1816, %v1567
    %v1818 = vadd.f32 %v1817, %v1571
    %v1819 = vadd.f32 %v1818, %v1575
    %v1820 = vadd.f32 %v1819, %v1579
    %v1821 = vadd.f32 %v1820, %v1583
    %v1822 = vadd.f32 %v1821, %v1587
    %v1823 = vadd.f32 %v1822, %v1591
    %v1824 = vadd.f32 %v1823, %v1595
    %v1825 = vadd.f32 %v1824, %v1599
    %v1826 = vadd.f32 %v1825, %v1603
    %v1827 = vadd.f32 %v1826, %v1607
    %v1828 = vadd.f32 %v1827, %v1611
    %v1829 = vadd.f32 %v1828, %v1615
    %v1830 = vadd.f32 %v1829, %v1619
    %v1831 = vadd.f32 %v1830, %v1623
    %v1832 = vadd.f32 %v1831, %v1627
    %v1833 = vadd.f32 %v1832, %v1631
    %v1834 = vrot.slane %v1833, 4
    %v1835 = vadd.f32 %v1833, %v1834
    %v1836 = vrot.slane %v1835, 2
    %v1837 = vadd.f32 %v1835, %v1836
    %v1838 = vrot.slane %v1837, 1
    %v1839 = vadd.f32 %v1837, %v1838
    %v1840 = vadd.f32 %v1380, %v1384
    %v1841 = vadd.f32 %v1840, %v1388
    %v1842 = vadd.f32 %v1841, %v1392
    %v1843 = vadd.f32 %v1842, %v1396
    %v1844 = vadd.f32 %v1843, %v1400
    %v1845 = vadd.f32 %v1844, %v1404
    %v1846 = vadd.f32 %v1845, %v1408
    %v1847 = vadd.f32 %v1846, %v1412
    %v1848 = vadd.f32 %v1847, %v1416
    %v1849 = vadd.f32 %v1848, %v1420
    %v1850 = vadd.f32 %v1849, %v1424
    %v1851 = vadd.f32 %v1850, %v1428
    %v1852 = vadd.f32 %v1851, %v1432
    %v1853 = vadd.f32 %v1852, %v1436
    %v1854 = vadd.f32 %v1853, %v1440
    %v1855 = vadd.f32 %v1854, %v1444
    %v1856 = vadd.f32 %v1855, %v1448
    %v1857 = vadd.f32 %v1856, %v1452
    %v1858 = vadd.f32 %v1857, %v1456
    %v1859 = vadd.f32 %v1858, %v1460
    %v1860 = vadd.f32 %v1859, %v1464
    %v1861 = vadd.f32 %v1860, %v1468
    %v1862 = vadd.f32 %v1861, %v1472
    %v1863 = vadd.f32 %v1862, %v1476
    %v1864 = vadd.f32 %v1863, %v1480
    %v1865 = vadd.f32 %v1864, %v1484
    %v1866 = vadd.f32 %v1865, %v1488
    %v1867 = vadd.f32 %v1866, %v1492
    %v1868 = vadd.f32 %v1867, %v1496
    %v1869 = vadd.f32 %v1868, %v1500
    %v1870 = vadd.f32 %v1869, %v1504
    %v1871 = vadd.f32 %v1870, %v1508
    %v1872 = vadd.f32 %v1871, %v1512
    %v1873 = vadd.f32 %v1872, %v1516
    %v1874 = vadd.f32 %v1873, %v1520
    %v1875 = vadd.f32 %v1874, %v1524
    %v1876 = vadd.f32 %v1875, %v1528
    %v1877 = vadd.f32 %v1876, %v1532
    %v1878 = vadd.f32 %v1877, %v1536
    %v1879 = vadd.f32 %v1878, %v1540
    %v1880 = vadd.f32 %v1879, %v1544
    %v1881 = vadd.f32 %v1880, %v1548
    %v1882 = vadd.f32 %v1881, %v1552
    %v1883 = vadd.f32 %v1882, %v1556
    %v1884 = vadd.f32 %v1883, %v1560
    %v1885 = vadd.f32 %v1884, %v1564
    %v1886 = vadd.f32 %v1885, %v1568
    %v1887 = vadd.f32 %v1886, %v1572
    %v1888 = vadd.f32 %v1887, %v1576
    %v1889 = vadd.f32 %v1888, %v1580
    %v1890 = vadd.f32 %v1889, %v1584
    %v1891 = vadd.f32 %v1890, %v1588
    %v1892 = vadd.f32 %v1891, %v1592
    %v1893 = vadd.f32 %v1892, %v1596
    %v1894 = vadd.f32 %v1893, %v1600
    %v1895 = vadd.f32 %v1894, %v1604
    %v1896 = vadd.f32 %v1895, %v1608
    %v1897 = vadd.f32 %v1896, %v1612
    %v1898 = vadd.f32 %v1897, %v1616
    %v1899 = vadd.f32 %v1898, %v1620
    %v1900 = vadd.f32 %v1899, %v1624
    %v1901 = vadd.f32 %v1900, %v1628
    %v1902 = vadd.f32 %v1901, %v1632
    %v1903 = vrot.slane %v1902, 4
    %v1904 = vadd.f32 %v1902, %v1903
    %v1905 = vrot.slane %v1904, 2
    %v1906 = vadd.f32 %v1904, %v1905
    %v1907 = vrot.slane %v1906, 1
    %v1908 = vadd.f32 %v1906, %v1907
    %v1909 = vmul.f32 %v1701, 0.001953125
    %v1910 = vmul.f32 %v1770, 0.001953125
    %v1911 = vmul.f32 %v1839, 0.001953125
    %v1912 = vmul.f32 %v1908, 0.001953125
    %v1913 = vmul.f32 %v1373, %v1373
    %v1914 = vmul.f32 %v1374, %v1374
    %v1915 = vmul.f32 %v1375, %v1375
    %v1916 = vmul.f32 %v1376, %v1376
    %v1917 = vsub.f32 %v1909, %v1913
    %v1918 = vsub.f32 %v1910, %v1914
    %v1919 = vsub.f32 %v1911, %v1915
    %v1920 = vsub.f32 %v1912, %v1916
    %v1921 = vmax.f32 %v1917, 0.0
    %v1922 = vmax.f32 %v1918, 0.0
    %v1923 = vmax.f32 %v1919, 0.0
    %v1924 = vmax.f32 %v1920, 0.0
    %v1925 = vld [vmem:[#allocation8] sm:$0xf]
    %v1926 = vadd.f32 %v1921, 1e-05
    %v1927 = vadd.f32 %v1922, 1e-05
    %v1928 = vadd.f32 %v1923, 1e-05
    %v1929 = vadd.f32 %v1924, 1e-05
    %v1930 = vrsqrt.pop %v1926
    %v1931 = vmul.f32 %v1930, %v1926
    %v1932 = vmul.f32 %v1931, %v1930
    %v1933 = vmul.f32 0.5, %v1932
    %v1934 = vsub.f32 1.5, %v1933
    %v1935 = vmul.f32 %v1930, %v1934
    %vm1936 = vweird.f32 %v1926
    %vm1937 = vweird.f32 %v1930
    %vm1938 = vmor %vm1936, %vm1937
    %v1939 = vsel %vm1938, %v1930, %v1935
    %v1940 = vrsqrt.pop %v1927
    %v1941 = vmul.f32 %v1940, %v1927
    %v1942 = vmul.f32 %v1941, %v1940
    %v1943 = vmul.f32 0.5, %v1942
    %v1944 = vsub.f32 1.5, %v1943
    %v1945 = vmul.f32 %v1940, %v1944
    %vm1946 = vweird.f32 %v1927
    %vm1947 = vweird.f32 %v1940
    %vm1948 = vmor %vm1946, %vm1947
    %v1949 = vsel %vm1948, %v1940, %v1945
    %v1950 = vrsqrt.pop %v1928
    %v1951 = vmul.f32 %v1950, %v1928
    %v1952 = vmul.f32 %v1951, %v1950
    %v1953 = vmul.f32 0.5, %v1952
    %v1954 = vsub.f32 1.5, %v1953
    %v1955 = vmul.f32 %v1950, %v1954
    %vm1956 = vweird.f32 %v1928
    %vm1957 = vweird.f32 %v1950
    %vm1958 = vmor %vm1956, %vm1957
    %v1959 = vsel %vm1958, %v1950, %v1955
    %v1960 = vrsqrt.pop %v1929
    %v1961 = vmul.f32 %v1960, %v1929
    %v1962 = vmul.f32 %v1961, %v1960
    %v1963 = vmul.f32 0.5, %v1962
    %v1964 = vsub.f32 1.5, %v1963
    %v1965 = vmul.f32 %v1960, %v1964
    %vm1966 = vweird.f32 %v1929
    %vm1967 = vweird.f32 %v1960
    %vm1968 = vmor %vm1966, %vm1967
    %v1969 = vsel %vm1968, %v1960, %v1965
    %v1974 = vrot.slane %v1949, 7
    %v1975 = vrot.slane %v1959, 6
    %v1976 = vrot.slane %v1969, 5
    %vm1977 = vcmask 1040384
    %v1978 = vsel %vm1977, %v1939, %v1974
    %vm1979 = vcmask 1042434
    %v1980 = vsel %vm1979, %v1975, %v1976
    %vm1981 = vcmask 1041408
    %v1982 = vsel %vm1981, %v1978, %v1980
    %v1984 = vmul.f32 %v1925, %v1982
    %v1985 = vld [vmem:[%s7] sm:$0xf]
    %v1987 = vperm.slane %v1984, 0
    %v1988 = vperm.slane %v1984, 1
    %v1989 = vperm.slane %v1984, 2
    %v1990 = vperm.slane %v1984, 3
    %v1995 = vmul.f32 %v1373, %v1987
    %v1996 = vmul.f32 %v1374, %v1988
    %v1997 = vmul.f32 %v1375, %v1989
    %v1998 = vmul.f32 %v1376, %v1990
    %v2003 = vrot.slane %v1996, 7
    %v2004 = vrot.slane %v1997, 6
    %v2005 = vrot.slane %v1998, 5
    %v2006 = vsel %vm1977, %v1995, %v2003
    %v2007 = vsel %vm1979, %v2004, %v2005
    %v2008 = vsel %vm1981, %v2006, %v2007
    %v2010 = vsub.f32 %v1985, %v2008
    %v2011 = vmul.f32 %v431, %v1987
    %v2012 = vmul.f32 %v600, %v1988
    %v2013 = vmul.f32 %v769, %v1989
    %v2014 = vmul.f32 %v938, %v1990
    %v2015 = vmul.f32 %v433, %v1987
    %v2016 = vmul.f32 %v602, %v1988
    %v2017 = vmul.f32 %v771, %v1989
    %v2018 = vmul.f32 %v940, %v1990
    %v2019 = vmul.f32 %v436, %v1987
    %v2020 = vmul.f32 %v605, %v1988
    %v2021 = vmul.f32 %v774, %v1989
    %v2022 = vmul.f32 %v943, %v1990
    %v2023 = vmul.f32 %v438, %v1987
    %v2024 = vmul.f32 %v607, %v1988
    %v2025 = vmul.f32 %v776, %v1989
    %v2026 = vmul.f32 %v945, %v1990
    %v2027 = vmul.f32 %v441, %v1987
    %v2028 = vmul.f32 %v610, %v1988
    %v2029 = vmul.f32 %v779, %v1989
    %v2030 = vmul.f32 %v948, %v1990
    %v2031 = vmul.f32 %v443, %v1987
    %v2032 = vmul.f32 %v612, %v1988
    %v2033 = vmul.f32 %v781, %v1989
    %v2034 = vmul.f32 %v950, %v1990
    %v2035 = vmul.f32 %v446, %v1987
    %v2036 = vmul.f32 %v615, %v1988
    %v2037 = vmul.f32 %v784, %v1989
    %v2038 = vmul.f32 %v953, %v1990
    %v2039 = vmul.f32 %v448, %v1987
    %v2040 = vmul.f32 %v617, %v1988
    %v2041 = vmul.f32 %v786, %v1989
    %v2042 = vmul.f32 %v955, %v1990
    %v2043 = vmul.f32 %v451, %v1987
    %v2044 = vmul.f32 %v620, %v1988
    %v2045 = vmul.f32 %v789, %v1989
    %v2046 = vmul.f32 %v958, %v1990
    %v2047 = vmul.f32 %v453, %v1987
    %v2048 = vmul.f32 %v622, %v1988
    %v2049 = vmul.f32 %v791, %v1989
    %v2050 = vmul.f32 %v960, %v1990
    %v2051 = vmul.f32 %v456, %v1987
    %v2052 = vmul.f32 %v625, %v1988
    %v2053 = vmul.f32 %v794, %v1989
    %v2054 = vmul.f32 %v963, %v1990
    %v2055 = vmul.f32 %v458, %v1987
    %v2056 = vmul.f32 %v627, %v1988
    %v2057 = vmul.f32 %v796, %v1989
    %v2058 = vmul.f32 %v965, %v1990
    %v2059 = vmul.f32 %v461, %v1987
    %v2060 = vmul.f32 %v630, %v1988
    %v2061 = vmul.f32 %v799, %v1989
    %v2062 = vmul.f32 %v968, %v1990
    %v2063 = vmul.f32 %v463, %v1987
    %v2064 = vmul.f32 %v632, %v1988
    %v2065 = vmul.f32 %v801, %v1989
    %v2066 = vmul.f32 %v970, %v1990
    %v2067 = vmul.f32 %v466, %v1987
    %v2068 = vmul.f32 %v635, %v1988
    %v2069 = vmul.f32 %v804, %v1989
    %v2070 = vmul.f32 %v973, %v1990
    %v2071 = vmul.f32 %v468, %v1987
    %v2072 = vmul.f32 %v637, %v1988
    %v2073 = vmul.f32 %v806, %v1989
    %v2074 = vmul.f32 %v975, %v1990
    %v2075 = vmul.f32 %v471, %v1987
    %v2076 = vmul.f32 %v640, %v1988
    %v2077 = vmul.f32 %v809, %v1989
    %v2078 = vmul.f32 %v978, %v1990
    %v2079 = vmul.f32 %v473, %v1987
    %v2080 = vmul.f32 %v642, %v1988
    %v2081 = vmul.f32 %v811, %v1989
    %v2082 = vmul.f32 %v980, %v1990
    %v2083 = vmul.f32 %v476, %v1987
    %v2084 = vmul.f32 %v645, %v1988
    %v2085 = vmul.f32 %v814, %v1989
    %v2086 = vmul.f32 %v983, %v1990
    %v2087 = vmul.f32 %v478, %v1987
    %v2088 = vmul.f32 %v647, %v1988
    %v2089 = vmul.f32 %v816, %v1989
    %v2090 = vmul.f32 %v985, %v1990
    %v2091 = vmul.f32 %v481, %v1987
    %v2092 = vmul.f32 %v650, %v1988
    %v2093 = vmul.f32 %v819, %v1989
    %v2094 = vmul.f32 %v988, %v1990
    %v2095 = vmul.f32 %v483, %v1987
    %v2096 = vmul.f32 %v652, %v1988
    %v2097 = vmul.f32 %v821, %v1989
    %v2098 = vmul.f32 %v990, %v1990
    %v2099 = vmul.f32 %v486, %v1987
    %v2100 = vmul.f32 %v655, %v1988
    %v2101 = vmul.f32 %v824, %v1989
    %v2102 = vmul.f32 %v993, %v1990
    %v2103 = vmul.f32 %v488, %v1987
    %v2104 = vmul.f32 %v657, %v1988
    %v2105 = vmul.f32 %v826, %v1989
    %v2106 = vmul.f32 %v995, %v1990
    %v2107 = vmul.f32 %v491, %v1987
    %v2108 = vmul.f32 %v660, %v1988
    %v2109 = vmul.f32 %v829, %v1989
    %v2110 = vmul.f32 %v998, %v1990
    %v2111 = vmul.f32 %v493, %v1987
    %v2112 = vmul.f32 %v662, %v1988
    %v2113 = vmul.f32 %v831, %v1989
    %v2114 = vmul.f32 %v1000, %v1990
    %v2115 = vmul.f32 %v496, %v1987
    %v2116 = vmul.f32 %v665, %v1988
    %v2117 = vmul.f32 %v834, %v1989
    %v2118 = vmul.f32 %v1003, %v1990
    %v2119 = vmul.f32 %v498, %v1987
    %v2120 = vmul.f32 %v667, %v1988
    %v2121 = vmul.f32 %v836, %v1989
    %v2122 = vmul.f32 %v1005, %v1990
    %v2123 = vmul.f32 %v501, %v1987
    %v2124 = vmul.f32 %v670, %v1988
    %v2125 = vmul.f32 %v839, %v1989
    %v2126 = vmul.f32 %v1008, %v1990
    %v2127 = vmul.f32 %v503, %v1987
    %v2128 = vmul.f32 %v672, %v1988
    %v2129 = vmul.f32 %v841, %v1989
    %v2130 = vmul.f32 %v1010, %v1990
    %v2131 = vmul.f32 %v506, %v1987
    %v2132 = vmul.f32 %v675, %v1988
    %v2133 = vmul.f32 %v844, %v1989
    %v2134 = vmul.f32 %v1013, %v1990
    %v2135 = vmul.f32 %v508, %v1987
    %v2136 = vmul.f32 %v677, %v1988
    %v2137 = vmul.f32 %v846, %v1989
    %v2138 = vmul.f32 %v1015, %v1990
    %v2139 = vmul.f32 %v511, %v1987
    %v2140 = vmul.f32 %v680, %v1988
    %v2141 = vmul.f32 %v849, %v1989
    %v2142 = vmul.f32 %v1018, %v1990
    %v2143 = vmul.f32 %v513, %v1987
    %v2144 = vmul.f32 %v682, %v1988
    %v2145 = vmul.f32 %v851, %v1989
    %v2146 = vmul.f32 %v1020, %v1990
    %v2147 = vmul.f32 %v516, %v1987
    %v2148 = vmul.f32 %v685, %v1988
    %v2149 = vmul.f32 %v854, %v1989
    %v2150 = vmul.f32 %v1023, %v1990
    %v2151 = vmul.f32 %v518, %v1987
    %v2152 = vmul.f32 %v687, %v1988
    %v2153 = vmul.f32 %v856, %v1989
    %v2154 = vmul.f32 %v1025, %v1990
    %v2155 = vmul.f32 %v521, %v1987
    %v2156 = vmul.f32 %v690, %v1988
    %v2157 = vmul.f32 %v859, %v1989
    %v2158 = vmul.f32 %v1028, %v1990
    %v2159 = vmul.f32 %v523, %v1987
    %v2160 = vmul.f32 %v692, %v1988
    %v2161 = vmul.f32 %v861, %v1989
    %v2162 = vmul.f32 %v1030, %v1990
    %v2163 = vmul.f32 %v526, %v1987
    %v2164 = vmul.f32 %v695, %v1988
    %v2165 = vmul.f32 %v864, %v1989
    %v2166 = vmul.f32 %v1033, %v1990
    %v2167 = vmul.f32 %v528, %v1987
    %v2168 = vmul.f32 %v697, %v1988
    %v2169 = vmul.f32 %v866, %v1989
    %v2170 = vmul.f32 %v1035, %v1990
    %v2171 = vmul.f32 %v531, %v1987
    %v2172 = vmul.f32 %v700, %v1988
    %v2173 = vmul.f32 %v869, %v1989
    %v2174 = vmul.f32 %v1038, %v1990
    %v2175 = vmul.f32 %v533, %v1987
    %v2176 = vmul.f32 %v702, %v1988
    %v2177 = vmul.f32 %v871, %v1989
    %v2178 = vmul.f32 %v1040, %v1990
    %v2179 = vmul.f32 %v536, %v1987
    %v2180 = vmul.f32 %v705, %v1988
    %v2181 = vmul.f32 %v874, %v1989
    %v2182 = vmul.f32 %v1043, %v1990
    %v2183 = vmul.f32 %v538, %v1987
    %v2184 = vmul.f32 %v707, %v1988
    %v2185 = vmul.f32 %v876, %v1989
    %v2186 = vmul.f32 %v1045, %v1990
    %v2187 = vmul.f32 %v541, %v1987
    %v2188 = vmul.f32 %v710, %v1988
    %v2189 = vmul.f32 %v879, %v1989
    %v2190 = vmul.f32 %v1048, %v1990
    %v2191 = vmul.f32 %v543, %v1987
    %v2192 = vmul.f32 %v712, %v1988
    %v2193 = vmul.f32 %v881, %v1989
    %v2194 = vmul.f32 %v1050, %v1990
    %v2195 = vmul.f32 %v546, %v1987
    %v2196 = vmul.f32 %v715, %v1988
    %v2197 = vmul.f32 %v884, %v1989
    %v2198 = vmul.f32 %v1053, %v1990
    %v2199 = vmul.f32 %v548, %v1987
    %v2200 = vmul.f32 %v717, %v1988
    %v2201 = vmul.f32 %v886, %v1989
    %v2202 = vmul.f32 %v1055, %v1990
    %v2203 = vmul.f32 %v551, %v1987
    %v2204 = vmul.f32 %v720, %v1988
    %v2205 = vmul.f32 %v889, %v1989
    %v2206 = vmul.f32 %v1058, %v1990
    %v2207 = vmul.f32 %v553, %v1987
    %v2208 = vmul.f32 %v722, %v1988
    %v2209 = vmul.f32 %v891, %v1989
    %v2210 = vmul.f32 %v1060, %v1990
    %v2211 = vmul.f32 %v556, %v1987
    %v2212 = vmul.f32 %v725, %v1988
    %v2213 = vmul.f32 %v894, %v1989
    %v2214 = vmul.f32 %v1063, %v1990
    %v2215 = vmul.f32 %v558, %v1987
    %v2216 = vmul.f32 %v727, %v1988
    %v2217 = vmul.f32 %v896, %v1989
    %v2218 = vmul.f32 %v1065, %v1990
    %v2219 = vmul.f32 %v561, %v1987
    %v2220 = vmul.f32 %v730, %v1988
    %v2221 = vmul.f32 %v899, %v1989
    %v2222 = vmul.f32 %v1068, %v1990
    %v2223 = vmul.f32 %v563, %v1987
    %v2224 = vmul.f32 %v732, %v1988
    %v2225 = vmul.f32 %v901, %v1989
    %v2226 = vmul.f32 %v1070, %v1990
    %v2227 = vmul.f32 %v566, %v1987
    %v2228 = vmul.f32 %v735, %v1988
    %v2229 = vmul.f32 %v904, %v1989
    %v2230 = vmul.f32 %v1073, %v1990
    %v2231 = vmul.f32 %v568, %v1987
    %v2232 = vmul.f32 %v737, %v1988
    %v2233 = vmul.f32 %v906, %v1989
    %v2234 = vmul.f32 %v1075, %v1990
    %v2235 = vmul.f32 %v571, %v1987
    %v2236 = vmul.f32 %v740, %v1988
    %v2237 = vmul.f32 %v909, %v1989
    %v2238 = vmul.f32 %v1078, %v1990
    %v2239 = vmul.f32 %v573, %v1987
    %v2240 = vmul.f32 %v742, %v1988
    %v2241 = vmul.f32 %v911, %v1989
    %v2242 = vmul.f32 %v1080, %v1990
    %v2243 = vmul.f32 %v576, %v1987
    %v2244 = vmul.f32 %v745, %v1988
    %v2245 = vmul.f32 %v914, %v1989
    %v2246 = vmul.f32 %v1083, %v1990
    %v2247 = vmul.f32 %v578, %v1987
    %v2248 = vmul.f32 %v747, %v1988
    %v2249 = vmul.f32 %v916, %v1989
    %v2250 = vmul.f32 %v1085, %v1990
    %v2251 = vmul.f32 %v581, %v1987
    %v2252 = vmul.f32 %v750, %v1988
    %v2253 = vmul.f32 %v919, %v1989
    %v2254 = vmul.f32 %v1088, %v1990
    %v2255 = vmul.f32 %v583, %v1987
    %v2256 = vmul.f32 %v752, %v1988
    %v2257 = vmul.f32 %v921, %v1989
    %v2258 = vmul.f32 %v1090, %v1990
    %v2259 = vmul.f32 %v586, %v1987
    %v2260 = vmul.f32 %v755, %v1988
    %v2261 = vmul.f32 %v924, %v1989
    %v2262 = vmul.f32 %v1093, %v1990
    %v2263 = vmul.f32 %v588, %v1987
    %v2264 = vmul.f32 %v757, %v1988
    %v2265 = vmul.f32 %v926, %v1989
    %v2266 = vmul.f32 %v1095, %v1990
    %v2268 = vperm.slane %v2010, 0
    %v2269 = vperm.slane %v2010, 1
    %v2270 = vperm.slane %v2010, 2
    %v2271 = vperm.slane %v2010, 3
    %v2276 = vadd.f32 %v2011, %v2268
    %v2277 = vadd.f32 %v2012, %v2269
    %v2278 = vadd.f32 %v2013, %v2270
    %v2279 = vadd.f32 %v2014, %v2271
    %v2280 = vadd.f32 %v2015, %v2268
    %v2281 = vadd.f32 %v2016, %v2269
    %v2282 = vadd.f32 %v2017, %v2270
    %v2283 = vadd.f32 %v2018, %v2271
    %v2284 = vadd.f32 %v2019, %v2268
    %v2285 = vadd.f32 %v2020, %v2269
    %v2286 = vadd.f32 %v2021, %v2270
    %v2287 = vadd.f32 %v2022, %v2271
    %v2288 = vadd.f32 %v2023, %v2268
    %v2289 = vadd.f32 %v2024, %v2269
    %v2290 = vadd.f32 %v2025, %v2270
    %v2291 = vadd.f32 %v2026, %v2271
    %v2292 = vadd.f32 %v2027, %v2268
    %v2293 = vadd.f32 %v2028, %v2269
    %v2294 = vadd.f32 %v2029, %v2270
    %v2295 = vadd.f32 %v2030, %v2271
    %v2296 = vadd.f32 %v2031, %v2268
    %v2297 = vadd.f32 %v2032, %v2269
    %v2298 = vadd.f32 %v2033, %v2270
    %v2299 = vadd.f32 %v2034, %v2271
    %v2300 = vadd.f32 %v2035, %v2268
    %v2301 = vadd.f32 %v2036, %v2269
    %v2302 = vadd.f32 %v2037, %v2270
    %v2303 = vadd.f32 %v2038, %v2271
    %v2304 = vadd.f32 %v2039, %v2268
    %v2305 = vadd.f32 %v2040, %v2269
    %v2306 = vadd.f32 %v2041, %v2270
    %v2307 = vadd.f32 %v2042, %v2271
    %v2308 = vadd.f32 %v2043, %v2268
    %v2309 = vadd.f32 %v2044, %v2269
    %v2310 = vadd.f32 %v2045, %v2270
    %v2311 = vadd.f32 %v2046, %v2271
    %v2312 = vadd.f32 %v2047, %v2268
    %v2313 = vadd.f32 %v2048, %v2269
    %v2314 = vadd.f32 %v2049, %v2270
    %v2315 = vadd.f32 %v2050, %v2271
    %v2316 = vadd.f32 %v2051, %v2268
    %v2317 = vadd.f32 %v2052, %v2269
    %v2318 = vadd.f32 %v2053, %v2270
    %v2319 = vadd.f32 %v2054, %v2271
    %v2320 = vadd.f32 %v2055, %v2268
    %v2321 = vadd.f32 %v2056, %v2269
    %v2322 = vadd.f32 %v2057, %v2270
    %v2323 = vadd.f32 %v2058, %v2271
    %v2324 = vadd.f32 %v2059, %v2268
    %v2325 = vadd.f32 %v2060, %v2269
    %v2326 = vadd.f32 %v2061, %v2270
    %v2327 = vadd.f32 %v2062, %v2271
    %v2328 = vadd.f32 %v2063, %v2268
    %v2329 = vadd.f32 %v2064, %v2269
    %v2330 = vadd.f32 %v2065, %v2270
    %v2331 = vadd.f32 %v2066, %v2271
    %v2332 = vadd.f32 %v2067, %v2268
    %v2333 = vadd.f32 %v2068, %v2269
    %v2334 = vadd.f32 %v2069, %v2270
    %v2335 = vadd.f32 %v2070, %v2271
    %v2336 = vadd.f32 %v2071, %v2268
    %v2337 = vadd.f32 %v2072, %v2269
    %v2338 = vadd.f32 %v2073, %v2270
    %v2339 = vadd.f32 %v2074, %v2271
    %v2340 = vadd.f32 %v2075, %v2268
    %v2341 = vadd.f32 %v2076, %v2269
    %v2342 = vadd.f32 %v2077, %v2270
    %v2343 = vadd.f32 %v2078, %v2271
    %v2344 = vadd.f32 %v2079, %v2268
    %v2345 = vadd.f32 %v2080, %v2269
    %v2346 = vadd.f32 %v2081, %v2270
    %v2347 = vadd.f32 %v2082, %v2271
    %v2348 = vadd.f32 %v2083, %v2268
    %v2349 = vadd.f32 %v2084, %v2269
    %v2350 = vadd.f32 %v2085, %v2270
    %v2351 = vadd.f32 %v2086, %v2271
    %v2352 = vadd.f32 %v2087, %v2268
    %v2353 = vadd.f32 %v2088, %v2269
    %v2354 = vadd.f32 %v2089, %v2270
    %v2355 = vadd.f32 %v2090, %v2271
    %v2356 = vadd.f32 %v2091, %v2268
    %v2357 = vadd.f32 %v2092, %v2269
    %v2358 = vadd.f32 %v2093, %v2270
    %v2359 = vadd.f32 %v2094, %v2271
    %v2360 = vadd.f32 %v2095, %v2268
    %v2361 = vadd.f32 %v2096, %v2269
    %v2362 = vadd.f32 %v2097, %v2270
    %v2363 = vadd.f32 %v2098, %v2271
    %v2364 = vadd.f32 %v2099, %v2268
    %v2365 = vadd.f32 %v2100, %v2269
    %v2366 = vadd.f32 %v2101, %v2270
    %v2367 = vadd.f32 %v2102, %v2271
    %v2368 = vadd.f32 %v2103, %v2268
    %v2369 = vadd.f32 %v2104, %v2269
    %v2370 = vadd.f32 %v2105, %v2270
    %v2371 = vadd.f32 %v2106, %v2271
    %v2372 = vadd.f32 %v2107, %v2268
    %v2373 = vadd.f32 %v2108, %v2269
    %v2374 = vadd.f32 %v2109, %v2270
    %v2375 = vadd.f32 %v2110, %v2271
    %v2376 = vadd.f32 %v2111, %v2268
    %v2377 = vadd.f32 %v2112, %v2269
    %v2378 = vadd.f32 %v2113, %v2270
    %v2379 = vadd.f32 %v2114, %v2271
    %v2380 = vadd.f32 %v2115, %v2268
    %v2381 = vadd.f32 %v2116, %v2269
    %v2382 = vadd.f32 %v2117, %v2270
    %v2383 = vadd.f32 %v2118, %v2271
    %v2384 = vadd.f32 %v2119, %v2268
    %v2385 = vadd.f32 %v2120, %v2269
    %v2386 = vadd.f32 %v2121, %v2270
    %v2387 = vadd.f32 %v2122, %v2271
    %v2388 = vadd.f32 %v2123, %v2268
    %v2389 = vadd.f32 %v2124, %v2269
    %v2390 = vadd.f32 %v2125, %v2270
    %v2391 = vadd.f32 %v2126, %v2271
    %v2392 = vadd.f32 %v2127, %v2268
    %v2393 = vadd.f32 %v2128, %v2269
    %v2394 = vadd.f32 %v2129, %v2270
    %v2395 = vadd.f32 %v2130, %v2271
    %v2396 = vadd.f32 %v2131, %v2268
    %v2397 = vadd.f32 %v2132, %v2269
    %v2398 = vadd.f32 %v2133, %v2270
    %v2399 = vadd.f32 %v2134, %v2271
    %v2400 = vadd.f32 %v2135, %v2268
    %v2401 = vadd.f32 %v2136, %v2269
    %v2402 = vadd.f32 %v2137, %v2270
    %v2403 = vadd.f32 %v2138, %v2271
    %v2404 = vadd.f32 %v2139, %v2268
    %v2405 = vadd.f32 %v2140, %v2269
    %v2406 = vadd.f32 %v2141, %v2270
    %v2407 = vadd.f32 %v2142, %v2271
    %v2408 = vadd.f32 %v2143, %v2268
    %v2409 = vadd.f32 %v2144, %v2269
    %v2410 = vadd.f32 %v2145, %v2270
    %v2411 = vadd.f32 %v2146, %v2271
    %v2412 = vadd.f32 %v2147, %v2268
    %v2413 = vadd.f32 %v2148, %v2269
    %v2414 = vadd.f32 %v2149, %v2270
    %v2415 = vadd.f32 %v2150, %v2271
    %v2416 = vadd.f32 %v2151, %v2268
    %v2417 = vadd.f32 %v2152, %v2269
    %v2418 = vadd.f32 %v2153, %v2270
    %v2419 = vadd.f32 %v2154, %v2271
    %v2420 = vadd.f32 %v2155, %v2268
    %v2421 = vadd.f32 %v2156, %v2269
    %v2422 = vadd.f32 %v2157, %v2270
    %v2423 = vadd.f32 %v2158, %v2271
    %v2424 = vadd.f32 %v2159, %v2268
    %v2425 = vadd.f32 %v2160, %v2269
    %v2426 = vadd.f32 %v2161, %v2270
    %v2427 = vadd.f32 %v2162, %v2271
    %v2428 = vadd.f32 %v2163, %v2268
    %v2429 = vadd.f32 %v2164, %v2269
    %v2430 = vadd.f32 %v2165, %v2270
    %v2431 = vadd.f32 %v2166, %v2271
    %v2432 = vadd.f32 %v2167, %v2268
    %v2433 = vadd.f32 %v2168, %v2269
    %v2434 = vadd.f32 %v2169, %v2270
    %v2435 = vadd.f32 %v2170, %v2271
    %v2436 = vadd.f32 %v2171, %v2268
    %v2437 = vadd.f32 %v2172, %v2269
    %v2438 = vadd.f32 %v2173, %v2270
    %v2439 = vadd.f32 %v2174, %v2271
    %v2440 = vadd.f32 %v2175, %v2268
    %v2441 = vadd.f32 %v2176, %v2269
    %v2442 = vadd.f32 %v2177, %v2270
    %v2443 = vadd.f32 %v2178, %v2271
    %v2444 = vadd.f32 %v2179, %v2268
    %v2445 = vadd.f32 %v2180, %v2269
    %v2446 = vadd.f32 %v2181, %v2270
    %v2447 = vadd.f32 %v2182, %v2271
    %v2448 = vadd.f32 %v2183, %v2268
    %v2449 = vadd.f32 %v2184, %v2269
    %v2450 = vadd.f32 %v2185, %v2270
    %v2451 = vadd.f32 %v2186, %v2271
    %v2452 = vadd.f32 %v2187, %v2268
    %v2453 = vadd.f32 %v2188, %v2269
    %v2454 = vadd.f32 %v2189, %v2270
    %v2455 = vadd.f32 %v2190, %v2271
    %v2456 = vadd.f32 %v2191, %v2268
    %v2457 = vadd.f32 %v2192, %v2269
    %v2458 = vadd.f32 %v2193, %v2270
    %v2459 = vadd.f32 %v2194, %v2271
    %v2460 = vadd.f32 %v2195, %v2268
    %v2461 = vadd.f32 %v2196, %v2269
    %v2462 = vadd.f32 %v2197, %v2270
    %v2463 = vadd.f32 %v2198, %v2271
    %v2464 = vadd.f32 %v2199, %v2268
    %v2465 = vadd.f32 %v2200, %v2269
    %v2466 = vadd.f32 %v2201, %v2270
    %v2467 = vadd.f32 %v2202, %v2271
    %v2468 = vadd.f32 %v2203, %v2268
    %v2469 = vadd.f32 %v2204, %v2269
    %v2470 = vadd.f32 %v2205, %v2270
    %v2471 = vadd.f32 %v2206, %v2271
    %v2472 = vadd.f32 %v2207, %v2268
    %v2473 = vadd.f32 %v2208, %v2269
    %v2474 = vadd.f32 %v2209, %v2270
    %v2475 = vadd.f32 %v2210, %v2271
    %v2476 = vadd.f32 %v2211, %v2268
    %v2477 = vadd.f32 %v2212, %v2269
    %v2478 = vadd.f32 %v2213, %v2270
    %v2479 = vadd.f32 %v2214, %v2271
    %v2480 = vadd.f32 %v2215, %v2268
    %v2481 = vadd.f32 %v2216, %v2269
    %v2482 = vadd.f32 %v2217, %v2270
    %v2483 = vadd.f32 %v2218, %v2271
    %v2484 = vadd.f32 %v2219, %v2268
    %v2485 = vadd.f32 %v2220, %v2269
    %v2486 = vadd.f32 %v2221, %v2270
    %v2487 = vadd.f32 %v2222, %v2271
    %v2488 = vadd.f32 %v2223, %v2268
    %v2489 = vadd.f32 %v2224, %v2269
    %v2490 = vadd.f32 %v2225, %v2270
    %v2491 = vadd.f32 %v2226, %v2271
    %v2492 = vadd.f32 %v2227, %v2268
    %v2493 = vadd.f32 %v2228, %v2269
    %v2494 = vadd.f32 %v2229, %v2270
    %v2495 = vadd.f32 %v2230, %v2271
    %v2496 = vadd.f32 %v2231, %v2268
    %v2497 = vadd.f32 %v2232, %v2269
    %v2498 = vadd.f32 %v2233, %v2270
    %v2499 = vadd.f32 %v2234, %v2271
    %v2500 = vadd.f32 %v2235, %v2268
    %v2501 = vadd.f32 %v2236, %v2269
    %v2502 = vadd.f32 %v2237, %v2270
    %v2503 = vadd.f32 %v2238, %v2271
    %v2504 = vadd.f32 %v2239, %v2268
    %v2505 = vadd.f32 %v2240, %v2269
    %v2506 = vadd.f32 %v2241, %v2270
    %v2507 = vadd.f32 %v2242, %v2271
    %v2508 = vadd.f32 %v2243, %v2268
    %v2509 = vadd.f32 %v2244, %v2269
    %v2510 = vadd.f32 %v2245, %v2270
    %v2511 = vadd.f32 %v2246, %v2271
    %v2512 = vadd.f32 %v2247, %v2268
    %v2513 = vadd.f32 %v2248, %v2269
    %v2514 = vadd.f32 %v2249, %v2270
    %v2515 = vadd.f32 %v2250, %v2271
    %v2516 = vadd.f32 %v2251, %v2268
    %v2517 = vadd.f32 %v2252, %v2269
    %v2518 = vadd.f32 %v2253, %v2270
    %v2519 = vadd.f32 %v2254, %v2271
    %v2520 = vadd.f32 %v2255, %v2268
    %v2521 = vadd.f32 %v2256, %v2269
    %v2522 = vadd.f32 %v2257, %v2270
    %v2523 = vadd.f32 %v2258, %v2271
    %v2524 = vadd.f32 %v2259, %v2268
    %v2525 = vadd.f32 %v2260, %v2269
    %v2526 = vadd.f32 %v2261, %v2270
    %v2527 = vadd.f32 %v2262, %v2271
    %v2528 = vadd.f32 %v2263, %v2268
    %v2529 = vadd.f32 %v2264, %v2269
    %v2530 = vadd.f32 %v2265, %v2270
    %v2531 = vadd.f32 %v2266, %v2271
    %v2532 = vmax.f32 %v2276, 0.0
    %v2533 = vmax.f32 %v2277, 0.0
    %v2534 = vmax.f32 %v2278, 0.0
    %v2535 = vmax.f32 %v2279, 0.0
    %v2536 = vmax.f32 %v2280, 0.0
    %v2537 = vmax.f32 %v2281, 0.0
    %v2538 = vmax.f32 %v2282, 0.0
    %v2539 = vmax.f32 %v2283, 0.0
    %v2540 = vmax.f32 %v2284, 0.0
    %v2541 = vmax.f32 %v2285, 0.0
    %v2542 = vmax.f32 %v2286, 0.0
    %v2543 = vmax.f32 %v2287, 0.0
    %v2544 = vmax.f32 %v2288, 0.0
    %v2545 = vmax.f32 %v2289, 0.0
    %v2546 = vmax.f32 %v2290, 0.0
    %v2547 = vmax.f32 %v2291, 0.0
    %v2548 = vmax.f32 %v2292, 0.0
    %v2549 = vmax.f32 %v2293, 0.0
    %v2550 = vmax.f32 %v2294, 0.0
    %v2551 = vmax.f32 %v2295, 0.0
    %v2552 = vmax.f32 %v2296, 0.0
    %v2553 = vmax.f32 %v2297, 0.0
    %v2554 = vmax.f32 %v2298, 0.0
    %v2555 = vmax.f32 %v2299, 0.0
    %v2556 = vmax.f32 %v2300, 0.0
    %v2557 = vmax.f32 %v2301, 0.0
    %v2558 = vmax.f32 %v2302, 0.0
    %v2559 = vmax.f32 %v2303, 0.0
    %v2560 = vmax.f32 %v2304, 0.0
    %v2561 = vmax.f32 %v2305, 0.0
    %v2562 = vmax.f32 %v2306, 0.0
    %v2563 = vmax.f32 %v2307, 0.0
    %v2564 = vmax.f32 %v2308, 0.0
    %v2565 = vmax.f32 %v2309, 0.0
    %v2566 = vmax.f32 %v2310, 0.0
    %v2567 = vmax.f32 %v2311, 0.0
    %v2568 = vmax.f32 %v2312, 0.0
    %v2569 = vmax.f32 %v2313, 0.0
    %v2570 = vmax.f32 %v2314, 0.0
    %v2571 = vmax.f32 %v2315, 0.0
    %v2572 = vmax.f32 %v2316, 0.0
    %v2573 = vmax.f32 %v2317, 0.0
    %v2574 = vmax.f32 %v2318, 0.0
    %v2575 = vmax.f32 %v2319, 0.0
    %v2576 = vmax.f32 %v2320, 0.0
    %v2577 = vmax.f32 %v2321, 0.0
    %v2578 = vmax.f32 %v2322, 0.0
    %v2579 = vmax.f32 %v2323, 0.0
    %v2580 = vmax.f32 %v2324, 0.0
    %v2581 = vmax.f32 %v2325, 0.0
    %v2582 = vmax.f32 %v2326, 0.0
    %v2583 = vmax.f32 %v2327, 0.0
    %v2584 = vmax.f32 %v2328, 0.0
    %v2585 = vmax.f32 %v2329, 0.0
    %v2586 = vmax.f32 %v2330, 0.0
    %v2587 = vmax.f32 %v2331, 0.0
    %v2588 = vmax.f32 %v2332, 0.0
    %v2589 = vmax.f32 %v2333, 0.0
    %v2590 = vmax.f32 %v2334, 0.0
    %v2591 = vmax.f32 %v2335, 0.0
    %v2592 = vmax.f32 %v2336, 0.0
    %v2593 = vmax.f32 %v2337, 0.0
    %v2594 = vmax.f32 %v2338, 0.0
    %v2595 = vmax.f32 %v2339, 0.0
    %v2596 = vmax.f32 %v2340, 0.0
    %v2597 = vmax.f32 %v2341, 0.0
    %v2598 = vmax.f32 %v2342, 0.0
    %v2599 = vmax.f32 %v2343, 0.0
    %v2600 = vmax.f32 %v2344, 0.0
    %v2601 = vmax.f32 %v2345, 0.0
    %v2602 = vmax.f32 %v2346, 0.0
    %v2603 = vmax.f32 %v2347, 0.0
    %v2604 = vmax.f32 %v2348, 0.0
    %v2605 = vmax.f32 %v2349, 0.0
    %v2606 = vmax.f32 %v2350, 0.0
    %v2607 = vmax.f32 %v2351, 0.0
    %v2608 = vmax.f32 %v2352, 0.0
    %v2609 = vmax.f32 %v2353, 0.0
    %v2610 = vmax.f32 %v2354, 0.0
    %v2611 = vmax.f32 %v2355, 0.0
    %v2612 = vmax.f32 %v2356, 0.0
    %v2613 = vmax.f32 %v2357, 0.0
    %v2614 = vmax.f32 %v2358, 0.0
    %v2615 = vmax.f32 %v2359, 0.0
    %v2616 = vmax.f32 %v2360, 0.0
    %v2617 = vmax.f32 %v2361, 0.0
    %v2618 = vmax.f32 %v2362, 0.0
    %v2619 = vmax.f32 %v2363, 0.0
    %v2620 = vmax.f32 %v2364, 0.0
    %v2621 = vmax.f32 %v2365, 0.0
    %v2622 = vmax.f32 %v2366, 0.0
    %v2623 = vmax.f32 %v2367, 0.0
    %v2624 = vmax.f32 %v2368, 0.0
    %v2625 = vmax.f32 %v2369, 0.0
    %v2626 = vmax.f32 %v2370, 0.0
    %v2627 = vmax.f32 %v2371, 0.0
    %v2628 = vmax.f32 %v2372, 0.0
    %v2629 = vmax.f32 %v2373, 0.0
    %v2630 = vmax.f32 %v2374, 0.0
    %v2631 = vmax.f32 %v2375, 0.0
    %v2632 = vmax.f32 %v2376, 0.0
    %v2633 = vmax.f32 %v2377, 0.0
    %v2634 = vmax.f32 %v2378, 0.0
    %v2635 = vmax.f32 %v2379, 0.0
    %v2636 = vmax.f32 %v2380, 0.0
    %v2637 = vmax.f32 %v2381, 0.0
    %v2638 = vmax.f32 %v2382, 0.0
    %v2639 = vmax.f32 %v2383, 0.0
    %v2640 = vmax.f32 %v2384, 0.0
    %v2641 = vmax.f32 %v2385, 0.0
    %v2642 = vmax.f32 %v2386, 0.0
    %v2643 = vmax.f32 %v2387, 0.0
    %v2644 = vmax.f32 %v2388, 0.0
    %v2645 = vmax.f32 %v2389, 0.0
    %v2646 = vmax.f32 %v2390, 0.0
    %v2647 = vmax.f32 %v2391, 0.0
    %v2648 = vmax.f32 %v2392, 0.0
    %v2649 = vmax.f32 %v2393, 0.0
    %v2650 = vmax.f32 %v2394, 0.0
    %v2651 = vmax.f32 %v2395, 0.0
    %v2652 = vmax.f32 %v2396, 0.0
    %v2653 = vmax.f32 %v2397, 0.0
    %v2654 = vmax.f32 %v2398, 0.0
    %v2655 = vmax.f32 %v2399, 0.0
    %v2656 = vmax.f32 %v2400, 0.0
    %v2657 = vmax.f32 %v2401, 0.0
    %v2658 = vmax.f32 %v2402, 0.0
    %v2659 = vmax.f32 %v2403, 0.0
    %v2660 = vmax.f32 %v2404, 0.0
    %v2661 = vmax.f32 %v2405, 0.0
    %v2662 = vmax.f32 %v2406, 0.0
    %v2663 = vmax.f32 %v2407, 0.0
    %v2664 = vmax.f32 %v2408, 0.0
    %v2665 = vmax.f32 %v2409, 0.0
    %v2666 = vmax.f32 %v2410, 0.0
    %v2667 = vmax.f32 %v2411, 0.0
    %v2668 = vmax.f32 %v2412, 0.0
    %v2669 = vmax.f32 %v2413, 0.0
    %v2670 = vmax.f32 %v2414, 0.0
    %v2671 = vmax.f32 %v2415, 0.0
    %v2672 = vmax.f32 %v2416, 0.0
    %v2673 = vmax.f32 %v2417, 0.0
    %v2674 = vmax.f32 %v2418, 0.0
    %v2675 = vmax.f32 %v2419, 0.0
    %v2676 = vmax.f32 %v2420, 0.0
    %v2677 = vmax.f32 %v2421, 0.0
    %v2678 = vmax.f32 %v2422, 0.0
    %v2679 = vmax.f32 %v2423, 0.0
    %v2680 = vmax.f32 %v2424, 0.0
    %v2681 = vmax.f32 %v2425, 0.0
    %v2682 = vmax.f32 %v2426, 0.0
    %v2683 = vmax.f32 %v2427, 0.0
    %v2684 = vmax.f32 %v2428, 0.0
    %v2685 = vmax.f32 %v2429, 0.0
    %v2686 = vmax.f32 %v2430, 0.0
    %v2687 = vmax.f32 %v2431, 0.0
    %v2688 = vmax.f32 %v2432, 0.0
    %v2689 = vmax.f32 %v2433, 0.0
    %v2690 = vmax.f32 %v2434, 0.0
    %v2691 = vmax.f32 %v2435, 0.0
    %v2692 = vmax.f32 %v2436, 0.0
    %v2693 = vmax.f32 %v2437, 0.0
    %v2694 = vmax.f32 %v2438, 0.0
    %v2695 = vmax.f32 %v2439, 0.0
    %v2696 = vmax.f32 %v2440, 0.0
    %v2697 = vmax.f32 %v2441, 0.0
    %v2698 = vmax.f32 %v2442, 0.0
    %v2699 = vmax.f32 %v2443, 0.0
    %v2700 = vmax.f32 %v2444, 0.0
    %v2701 = vmax.f32 %v2445, 0.0
    %v2702 = vmax.f32 %v2446, 0.0
    %v2703 = vmax.f32 %v2447, 0.0
    %v2704 = vmax.f32 %v2448, 0.0
    %v2705 = vmax.f32 %v2449, 0.0
    %v2706 = vmax.f32 %v2450, 0.0
    %v2707 = vmax.f32 %v2451, 0.0
    %v2708 = vmax.f32 %v2452, 0.0
    %v2709 = vmax.f32 %v2453, 0.0
    %v2710 = vmax.f32 %v2454, 0.0
    %v2711 = vmax.f32 %v2455, 0.0
    %v2712 = vmax.f32 %v2456, 0.0
    %v2713 = vmax.f32 %v2457, 0.0
    %v2714 = vmax.f32 %v2458, 0.0
    %v2715 = vmax.f32 %v2459, 0.0
    %v2716 = vmax.f32 %v2460, 0.0
    %v2717 = vmax.f32 %v2461, 0.0
    %v2718 = vmax.f32 %v2462, 0.0
    %v2719 = vmax.f32 %v2463, 0.0
    %v2720 = vmax.f32 %v2464, 0.0
    %v2721 = vmax.f32 %v2465, 0.0
    %v2722 = vmax.f32 %v2466, 0.0
    %v2723 = vmax.f32 %v2467, 0.0
    %v2724 = vmax.f32 %v2468, 0.0
    %v2725 = vmax.f32 %v2469, 0.0
    %v2726 = vmax.f32 %v2470, 0.0
    %v2727 = vmax.f32 %v2471, 0.0
    %v2728 = vmax.f32 %v2472, 0.0
    %v2729 = vmax.f32 %v2473, 0.0
    %v2730 = vmax.f32 %v2474, 0.0
    %v2731 = vmax.f32 %v2475, 0.0
    %v2732 = vmax.f32 %v2476, 0.0
    %v2733 = vmax.f32 %v2477, 0.0
    %v2734 = vmax.f32 %v2478, 0.0
    %v2735 = vmax.f32 %v2479, 0.0
    %v2736 = vmax.f32 %v2480, 0.0
    %v2737 = vmax.f32 %v2481, 0.0
    %v2738 = vmax.f32 %v2482, 0.0
    %v2739 = vmax.f32 %v2483, 0.0
    %v2740 = vmax.f32 %v2484, 0.0
    %v2741 = vmax.f32 %v2485, 0.0
    %v2742 = vmax.f32 %v2486, 0.0
    %v2743 = vmax.f32 %v2487, 0.0
    %v2744 = vmax.f32 %v2488, 0.0
    %v2745 = vmax.f32 %v2489, 0.0
    %v2746 = vmax.f32 %v2490, 0.0
    %v2747 = vmax.f32 %v2491, 0.0
    %v2748 = vmax.f32 %v2492, 0.0
    %v2749 = vmax.f32 %v2493, 0.0
    %v2750 = vmax.f32 %v2494, 0.0
    %v2751 = vmax.f32 %v2495, 0.0
    %v2752 = vmax.f32 %v2496, 0.0
    %v2753 = vmax.f32 %v2497, 0.0
    %v2754 = vmax.f32 %v2498, 0.0
    %v2755 = vmax.f32 %v2499, 0.0
    %v2756 = vmax.f32 %v2500, 0.0
    %v2757 = vmax.f32 %v2501, 0.0
    %v2758 = vmax.f32 %v2502, 0.0
    %v2759 = vmax.f32 %v2503, 0.0
    %v2760 = vmax.f32 %v2504, 0.0
    %v2761 = vmax.f32 %v2505, 0.0
    %v2762 = vmax.f32 %v2506, 0.0
    %v2763 = vmax.f32 %v2507, 0.0
    %v2764 = vmax.f32 %v2508, 0.0
    %v2765 = vmax.f32 %v2509, 0.0
    %v2766 = vmax.f32 %v2510, 0.0
    %v2767 = vmax.f32 %v2511, 0.0
    %v2768 = vmax.f32 %v2512, 0.0
    %v2769 = vmax.f32 %v2513, 0.0
    %v2770 = vmax.f32 %v2514, 0.0
    %v2771 = vmax.f32 %v2515, 0.0
    %v2772 = vmax.f32 %v2516, 0.0
    %v2773 = vmax.f32 %v2517, 0.0
    %v2774 = vmax.f32 %v2518, 0.0
    %v2775 = vmax.f32 %v2519, 0.0
    %v2776 = vmax.f32 %v2520, 0.0
    %v2777 = vmax.f32 %v2521, 0.0
    %v2778 = vmax.f32 %v2522, 0.0
    %v2779 = vmax.f32 %v2523, 0.0
    %v2780 = vmax.f32 %v2524, 0.0
    %v2781 = vmax.f32 %v2525, 0.0
    %v2782 = vmax.f32 %v2526, 0.0
    %v2783 = vmax.f32 %v2527, 0.0
    %v2784 = vmax.f32 %v2528, 0.0
    %v2785 = vmax.f32 %v2529, 0.0
    %v2786 = vmax.f32 %v2530, 0.0
    %v2787 = vmax.f32 %v2531, 0.0
    %v2788 = vpack.c.bf16 %v2536, %v2532
    %v2789 = vpack.c.bf16 %v2537, %v2533
    %v2790 = vpack.c.bf16 %v2538, %v2534
    %v2791 = vpack.c.bf16 %v2539, %v2535
    %v2792 = vpack.c.bf16 %v2544, %v2540
    %v2793 = vpack.c.bf16 %v2545, %v2541
    %v2794 = vpack.c.bf16 %v2546, %v2542
    %v2795 = vpack.c.bf16 %v2547, %v2543
    %v2796 = vpack.c.bf16 %v2552, %v2548
    %v2797 = vpack.c.bf16 %v2553, %v2549
    %v2798 = vpack.c.bf16 %v2554, %v2550
    %v2799 = vpack.c.bf16 %v2555, %v2551
    %v2800 = vpack.c.bf16 %v2560, %v2556
    %v2801 = vpack.c.bf16 %v2561, %v2557
    %v2802 = vpack.c.bf16 %v2562, %v2558
    %v2803 = vpack.c.bf16 %v2563, %v2559
    %v2804 = vpack.c.bf16 %v2568, %v2564
    %v2805 = vpack.c.bf16 %v2569, %v2565
    %v2806 = vpack.c.bf16 %v2570, %v2566
    %v2807 = vpack.c.bf16 %v2571, %v2567
    %v2808 = vpack.c.bf16 %v2576, %v2572
    %v2809 = vpack.c.bf16 %v2577, %v2573
    %v2810 = vpack.c.bf16 %v2578, %v2574
    %v2811 = vpack.c.bf16 %v2579, %v2575
    %v2812 = vpack.c.bf16 %v2584, %v2580
    %v2813 = vpack.c.bf16 %v2585, %v2581
    %v2814 = vpack.c.bf16 %v2586, %v2582
    %v2815 = vpack.c.bf16 %v2587, %v2583
    %v2816 = vpack.c.bf16 %v2592, %v2588
    %v2817 = vpack.c.bf16 %v2593, %v2589
    %v2818 = vpack.c.bf16 %v2594, %v2590
    %v2819 = vpack.c.bf16 %v2595, %v2591
    %v2820 = vpack.c.bf16 %v2600, %v2596
    %v2821 = vpack.c.bf16 %v2601, %v2597
    %v2822 = vpack.c.bf16 %v2602, %v2598
    %v2823 = vpack.c.bf16 %v2603, %v2599
    %v2824 = vpack.c.bf16 %v2608, %v2604
    %v2825 = vpack.c.bf16 %v2609, %v2605
    %v2826 = vpack.c.bf16 %v2610, %v2606
    %v2827 = vpack.c.bf16 %v2611, %v2607
    %v2828 = vpack.c.bf16 %v2616, %v2612
    %v2829 = vpack.c.bf16 %v2617, %v2613
    %v2830 = vpack.c.bf16 %v2618, %v2614
    %v2831 = vpack.c.bf16 %v2619, %v2615
    %v2832 = vpack.c.bf16 %v2624, %v2620
    %v2833 = vpack.c.bf16 %v2625, %v2621
    %v2834 = vpack.c.bf16 %v2626, %v2622
    %v2835 = vpack.c.bf16 %v2627, %v2623
    %v2836 = vpack.c.bf16 %v2632, %v2628
    %v2837 = vpack.c.bf16 %v2633, %v2629
    %v2838 = vpack.c.bf16 %v2634, %v2630
    %v2839 = vpack.c.bf16 %v2635, %v2631
    %v2840 = vpack.c.bf16 %v2640, %v2636
    %v2841 = vpack.c.bf16 %v2641, %v2637
    %v2842 = vpack.c.bf16 %v2642, %v2638
    %v2843 = vpack.c.bf16 %v2643, %v2639
    %v2844 = vpack.c.bf16 %v2648, %v2644
    %v2845 = vpack.c.bf16 %v2649, %v2645
    %v2846 = vpack.c.bf16 %v2650, %v2646
    %v2847 = vpack.c.bf16 %v2651, %v2647
    %v2848 = vpack.c.bf16 %v2656, %v2652
    %v2849 = vpack.c.bf16 %v2657, %v2653
    %v2850 = vpack.c.bf16 %v2658, %v2654
    %v2851 = vpack.c.bf16 %v2659, %v2655
    %v2852 = vpack.c.bf16 %v2664, %v2660
    %v2853 = vpack.c.bf16 %v2665, %v2661
    %v2854 = vpack.c.bf16 %v2666, %v2662
    %v2855 = vpack.c.bf16 %v2667, %v2663
    %v2856 = vpack.c.bf16 %v2672, %v2668
    %v2857 = vpack.c.bf16 %v2673, %v2669
    %v2858 = vpack.c.bf16 %v2674, %v2670
    %v2859 = vpack.c.bf16 %v2675, %v2671
    %v2860 = vpack.c.bf16 %v2680, %v2676
    %v2861 = vpack.c.bf16 %v2681, %v2677
    %v2862 = vpack.c.bf16 %v2682, %v2678
    %v2863 = vpack.c.bf16 %v2683, %v2679
    %v2864 = vpack.c.bf16 %v2688, %v2684
    %v2865 = vpack.c.bf16 %v2689, %v2685
    %v2866 = vpack.c.bf16 %v2690, %v2686
    %v2867 = vpack.c.bf16 %v2691, %v2687
    %v2868 = vpack.c.bf16 %v2696, %v2692
    %v2869 = vpack.c.bf16 %v2697, %v2693
    %v2870 = vpack.c.bf16 %v2698, %v2694
    %v2871 = vpack.c.bf16 %v2699, %v2695
    %v2872 = vpack.c.bf16 %v2704, %v2700
    %v2873 = vpack.c.bf16 %v2705, %v2701
    %v2874 = vpack.c.bf16 %v2706, %v2702
    %v2875 = vpack.c.bf16 %v2707, %v2703
    %v2876 = vpack.c.bf16 %v2712, %v2708
    %v2877 = vpack.c.bf16 %v2713, %v2709
    %v2878 = vpack.c.bf16 %v2714, %v2710
    %v2879 = vpack.c.bf16 %v2715, %v2711
    %v2880 = vpack.c.bf16 %v2720, %v2716
    %v2881 = vpack.c.bf16 %v2721, %v2717
    %v2882 = vpack.c.bf16 %v2722, %v2718
    %v2883 = vpack.c.bf16 %v2723, %v2719
    %v2884 = vpack.c.bf16 %v2728, %v2724
    %v2885 = vpack.c.bf16 %v2729, %v2725
    %v2886 = vpack.c.bf16 %v2730, %v2726
    %v2887 = vpack.c.bf16 %v2731, %v2727
    %v2888 = vpack.c.bf16 %v2736, %v2732
    %v2889 = vpack.c.bf16 %v2737, %v2733
    %v2890 = vpack.c.bf16 %v2738, %v2734
    %v2891 = vpack.c.bf16 %v2739, %v2735
    %v2892 = vpack.c.bf16 %v2744, %v2740
    %v2893 = vpack.c.bf16 %v2745, %v2741
    %v2894 = vpack.c.bf16 %v2746, %v2742
    %v2895 = vpack.c.bf16 %v2747, %v2743
    %v2896 = vpack.c.bf16 %v2752, %v2748
    %v2897 = vpack.c.bf16 %v2753, %v2749
    %v2898 = vpack.c.bf16 %v2754, %v2750
    %v2899 = vpack.c.bf16 %v2755, %v2751
    %v2900 = vpack.c.bf16 %v2760, %v2756
    %v2901 = vpack.c.bf16 %v2761, %v2757
    %v2902 = vpack.c.bf16 %v2762, %v2758
    %v2903 = vpack.c.bf16 %v2763, %v2759
    %v2904 = vpack.c.bf16 %v2768, %v2764
    %v2905 = vpack.c.bf16 %v2769, %v2765
    %v2906 = vpack.c.bf16 %v2770, %v2766
    %v2907 = vpack.c.bf16 %v2771, %v2767
    %v2908 = vpack.c.bf16 %v2776, %v2772
    %v2909 = vpack.c.bf16 %v2777, %v2773
    %v2910 = vpack.c.bf16 %v2778, %v2774
    %v2911 = vpack.c.bf16 %v2779, %v2775
    %v2912 = vpack.c.bf16 %v2784, %v2780
    %v2913 = vpack.c.bf16 %v2785, %v2781
    %v2914 = vpack.c.bf16 %v2786, %v2782
    %v2915 = vpack.c.bf16 %v2787, %v2783
    %v2916 = vld [vmem:[%s2] sm:$0xff]
    %v2917 = vld [vmem:[%s2 + $0x8] sm:$0xff]
    %v2918 = vld [vmem:[%s2 + $0x10] sm:$0xff]
    %v2919 = vld [vmem:[%s2 + $0x18] sm:$0xff]
    %v2920 = vld [vmem:[%s2 + $0x20] sm:$0xff]
    %v2921 = vld [vmem:[%s2 + $0x28] sm:$0xff]
    %v2922 = vld [vmem:[%s2 + $0x30] sm:$0xff]
    %v2923 = vld [vmem:[%s2 + $0x38] sm:$0xff]
    %v2924 = vld [vmem:[%s2 + $0x40] sm:$0xff]
    %v2925 = vld [vmem:[%s2 + $0x48] sm:$0xff]
    %v2926 = vld [vmem:[%s2 + $0x50] sm:$0xff]
    %v2927 = vld [vmem:[%s2 + $0x58] sm:$0xff]
    %v2928 = vld [vmem:[%s2 + $0x60] sm:$0xff]
    %v2929 = vld [vmem:[%s2 + $0x68] sm:$0xff]
    %v2930 = vld [vmem:[%s2 + $0x70] sm:$0xff]
    %v2931 = vld [vmem:[%s2 + $0x78] sm:$0xff]
    %v2932 = vld [vmem:[%s2 + $0x80] sm:$0xff]
    %v2933 = vld [vmem:[%s2 + $0x88] sm:$0xff]
    %v2934 = vld [vmem:[%s2 + $0x90] sm:$0xff]
    %v2935 = vld [vmem:[%s2 + $0x98] sm:$0xff]
    %v2936 = vld [vmem:[%s2 + $0xa0] sm:$0xff]
    %v2937 = vld [vmem:[%s2 + $0xa8] sm:$0xff]
    %v2938 = vld [vmem:[%s2 + $0xb0] sm:$0xff]
    %v2939 = vld [vmem:[%s2 + $0xb8] sm:$0xff]
    %v2940 = vld [vmem:[%s2 + $0xc0] sm:$0xff]
    %v2941 = vld [vmem:[%s2 + $0xc8] sm:$0xff]
    %v2942 = vld [vmem:[%s2 + $0xd0] sm:$0xff]
    %v2943 = vld [vmem:[%s2 + $0xd8] sm:$0xff]
    %v2944 = vld [vmem:[%s2 + $0xe0] sm:$0xff]
    %v2945 = vld [vmem:[%s2 + $0xe8] sm:$0xff]
    %v2946 = vld [vmem:[%s2 + $0xf0] sm:$0xff]
    %v2947 = vld [vmem:[%s2 + $0xf8] sm:$0xff]
    %v2948 = vld [vmem:[%s2 + $0x100] sm:$0xff]
    %v2949 = vld [vmem:[%s2 + $0x108] sm:$0xff]
    %v2950 = vld [vmem:[%s2 + $0x110] sm:$0xff]
    %v2951 = vld [vmem:[%s2 + $0x118] sm:$0xff]
    %v2952 = vld [vmem:[%s2 + $0x120] sm:$0xff]
    %v2953 = vld [vmem:[%s2 + $0x128] sm:$0xff]
    %v2954 = vld [vmem:[%s2 + $0x130] sm:$0xff]
    %v2955 = vld [vmem:[%s2 + $0x138] sm:$0xff]
    %v2956 = vld [vmem:[%s2 + $0x140] sm:$0xff]
    %v2957 = vld [vmem:[%s2 + $0x148] sm:$0xff]
    %v2958 = vld [vmem:[%s2 + $0x150] sm:$0xff]
    %v2959 = vld [vmem:[%s2 + $0x158] sm:$0xff]
    %v2960 = vld [vmem:[%s2 + $0x160] sm:$0xff]
    %v2961 = vld [vmem:[%s2 + $0x168] sm:$0xff]
    %v2962 = vld [vmem:[%s2 + $0x170] sm:$0xff]
    %v2963 = vld [vmem:[%s2 + $0x178] sm:$0xff]
    %v2964 = vld [vmem:[%s2 + $0x180] sm:$0xff]
    %v2965 = vld [vmem:[%s2 + $0x188] sm:$0xff]
    %v2966 = vld [vmem:[%s2 + $0x190] sm:$0xff]
    %v2967 = vld [vmem:[%s2 + $0x198] sm:$0xff]
    %v2968 = vld [vmem:[%s2 + $0x1a0] sm:$0xff]
    %v2969 = vld [vmem:[%s2 + $0x1a8] sm:$0xff]
    %v2970 = vld [vmem:[%s2 + $0x1b0] sm:$0xff]
    %v2971 = vld [vmem:[%s2 + $0x1b8] sm:$0xff]
    %v2972 = vld [vmem:[%s2 + $0x1c0] sm:$0xff]
    %v2973 = vld [vmem:[%s2 + $0x1c8] sm:$0xff]
    %v2974 = vld [vmem:[%s2 + $0x1d0] sm:$0xff]
    %v2975 = vld [vmem:[%s2 + $0x1d8] sm:$0xff]
    %v2976 = vld [vmem:[%s2 + $0x1e0] sm:$0xff]
    %v2977 = vld [vmem:[%s2 + $0x1e8] sm:$0xff]
    %v2978 = vld [vmem:[%s2 + $0x1f0] sm:$0xff]
    %v2979 = vld [vmem:[%s2 + $0x1f8] sm:$0xff]
    %v3044 = vunpack.c.l.b16 %v2916
    %v3045 = vunpack.c.h.b16 %v2916
    %v3046 = vunpack.c.l.b16 %v2917
    %v3047 = vunpack.c.h.b16 %v2917
    %v3048 = vunpack.c.l.b16 %v2918
    %v3049 = vunpack.c.h.b16 %v2918
    %v3050 = vunpack.c.l.b16 %v2919
    %v3051 = vunpack.c.h.b16 %v2919
    %v3052 = vunpack.c.l.b16 %v2920
    %v3053 = vunpack.c.h.b16 %v2920
    %v3054 = vunpack.c.l.b16 %v2921
    %v3055 = vunpack.c.h.b16 %v2921
    %v3056 = vunpack.c.l.b16 %v2922
    %v3057 = vunpack.c.h.b16 %v2922
    %v3058 = vunpack.c.l.b16 %v2923
    %v3059 = vunpack.c.h.b16 %v2923
    %v3060 = vunpack.c.l.b16 %v2924
    %v3061 = vunpack.c.h.b16 %v2924
    %v3062 = vunpack.c.l.b16 %v2925
    %v3063 = vunpack.c.h.b16 %v2925
    %v3064 = vunpack.c.l.b16 %v2926
    %v3065 = vunpack.c.h.b16 %v2926
    %v3066 = vunpack.c.l.b16 %v2927
    %v3067 = vunpack.c.h.b16 %v2927
    %v3068 = vunpack.c.l.b16 %v2928
    %v3069 = vunpack.c.h.b16 %v2928
    %v3070 = vunpack.c.l.b16 %v2929
    %v3071 = vunpack.c.h.b16 %v2929
    %v3072 = vunpack.c.l.b16 %v2930
    %v3073 = vunpack.c.h.b16 %v2930
    %v3074 = vunpack.c.l.b16 %v2931
    %v3075 = vunpack.c.h.b16 %v2931
    %v3076 = vunpack.c.l.b16 %v2932
    %v3077 = vunpack.c.h.b16 %v2932
    %v3078 = vunpack.c.l.b16 %v2933
    %v3079 = vunpack.c.h.b16 %v2933
    %v3080 = vunpack.c.l.b16 %v2934
    %v3081 = vunpack.c.h.b16 %v2934
    %v3082 = vunpack.c.l.b16 %v2935
    %v3083 = vunpack.c.h.b16 %v2935
    %v3084 = vunpack.c.l.b16 %v2936
    %v3085 = vunpack.c.h.b16 %v2936
    %v3086 = vunpack.c.l.b16 %v2937
    %v3087 = vunpack.c.h.b16 %v2937
    %v3088 = vunpack.c.l.b16 %v2938
    %v3089 = vunpack.c.h.b16 %v2938
    %v3090 = vunpack.c.l.b16 %v2939
    %v3091 = vunpack.c.h.b16 %v2939
    %v3092 = vunpack.c.l.b16 %v2940
    %v3093 = vunpack.c.h.b16 %v2940
    %v3094 = vunpack.c.l.b16 %v2941
    %v3095 = vunpack.c.h.b16 %v2941
    %v3096 = vunpack.c.l.b16 %v2942
    %v3097 = vunpack.c.h.b16 %v2942
    %v3098 = vunpack.c.l.b16 %v2943
    %v3099 = vunpack.c.h.b16 %v2943
    %v3100 = vunpack.c.l.b16 %v2944
    %v3101 = vunpack.c.h.b16 %v2944
    %v3102 = vunpack.c.l.b16 %v2945
    %v3103 = vunpack.c.h.b16 %v2945
    %v3104 = vunpack.c.l.b16 %v2946
    %v3105 = vunpack.c.h.b16 %v2946
    %v3106 = vunpack.c.l.b16 %v2947
    %v3107 = vunpack.c.h.b16 %v2947
    %v3108 = vunpack.c.l.b16 %v2948
    %v3109 = vunpack.c.h.b16 %v2948
    %v3110 = vunpack.c.l.b16 %v2949
    %v3111 = vunpack.c.h.b16 %v2949
    %v3112 = vunpack.c.l.b16 %v2950
    %v3113 = vunpack.c.h.b16 %v2950
    %v3114 = vunpack.c.l.b16 %v2951
    %v3115 = vunpack.c.h.b16 %v2951
    %v3116 = vunpack.c.l.b16 %v2952
    %v3117 = vunpack.c.h.b16 %v2952
    %v3118 = vunpack.c.l.b16 %v2953
    %v3119 = vunpack.c.h.b16 %v2953
    %v3120 = vunpack.c.l.b16 %v2954
    %v3121 = vunpack.c.h.b16 %v2954
    %v3122 = vunpack.c.l.b16 %v2955
    %v3123 = vunpack.c.h.b16 %v2955
    %v3124 = vunpack.c.l.b16 %v2956
    %v3125 = vunpack.c.h.b16 %v2956
    %v3126 = vunpack.c.l.b16 %v2957
    %v3127 = vunpack.c.h.b16 %v2957
    %v3128 = vunpack.c.l.b16 %v2958
    %v3129 = vunpack.c.h.b16 %v2958
    %v3130 = vunpack.c.l.b16 %v2959
    %v3131 = vunpack.c.h.b16 %v2959
    %v3132 = vunpack.c.l.b16 %v2960
    %v3133 = vunpack.c.h.b16 %v2960
    %v3134 = vunpack.c.l.b16 %v2961
    %v3135 = vunpack.c.h.b16 %v2961
    %v3136 = vunpack.c.l.b16 %v2962
    %v3137 = vunpack.c.h.b16 %v2962
    %v3138 = vunpack.c.l.b16 %v2963
    %v3139 = vunpack.c.h.b16 %v2963
    %v3140 = vunpack.c.l.b16 %v2964
    %v3141 = vunpack.c.h.b16 %v2964
    %v3142 = vunpack.c.l.b16 %v2965
    %v3143 = vunpack.c.h.b16 %v2965
    %v3144 = vunpack.c.l.b16 %v2966
    %v3145 = vunpack.c.h.b16 %v2966
    %v3146 = vunpack.c.l.b16 %v2967
    %v3147 = vunpack.c.h.b16 %v2967
    %v3148 = vunpack.c.l.b16 %v2968
    %v3149 = vunpack.c.h.b16 %v2968
    %v3150 = vunpack.c.l.b16 %v2969
    %v3151 = vunpack.c.h.b16 %v2969
    %v3152 = vunpack.c.l.b16 %v2970
    %v3153 = vunpack.c.h.b16 %v2970
    %v3154 = vunpack.c.l.b16 %v2971
    %v3155 = vunpack.c.h.b16 %v2971
    %v3156 = vunpack.c.l.b16 %v2972
    %v3157 = vunpack.c.h.b16 %v2972
    %v3158 = vunpack.c.l.b16 %v2973
    %v3159 = vunpack.c.h.b16 %v2973
    %v3160 = vunpack.c.l.b16 %v2974
    %v3161 = vunpack.c.h.b16 %v2974
    %v3162 = vunpack.c.l.b16 %v2975
    %v3163 = vunpack.c.h.b16 %v2975
    %v3164 = vunpack.c.l.b16 %v2976
    %v3165 = vunpack.c.h.b16 %v2976
    %v3166 = vunpack.c.l.b16 %v2977
    %v3167 = vunpack.c.h.b16 %v2977
    %v3168 = vunpack.c.l.b16 %v2978
    %v3169 = vunpack.c.h.b16 %v2978
    %v3170 = vunpack.c.l.b16 %v2979
    %v3171 = vunpack.c.h.b16 %v2979
    %v3172 = vpack.c.b16 %v3046, %v3044
    %v3173 = vpack.c.b16 %v3047, %v3045
    %v3174 = vpack.c.b16 %v3050, %v3048
    %v3175 = vpack.c.b16 %v3051, %v3049
    %v3176 = vpack.c.b16 %v3054, %v3052
    %v3177 = vpack.c.b16 %v3055, %v3053
    %v3178 = vpack.c.b16 %v3058, %v3056
    %v3179 = vpack.c.b16 %v3059, %v3057
    %v3180 = vpack.c.b16 %v3062, %v3060
    %v3181 = vpack.c.b16 %v3063, %v3061
    %v3182 = vpack.c.b16 %v3066, %v3064
    %v3183 = vpack.c.b16 %v3067, %v3065
    %v3184 = vpack.c.b16 %v3070, %v3068
    %v3185 = vpack.c.b16 %v3071, %v3069
    %v3186 = vpack.c.b16 %v3074, %v3072
    %v3187 = vpack.c.b16 %v3075, %v3073
    %v3188 = vpack.c.b16 %v3078, %v3076
    %v3189 = vpack.c.b16 %v3079, %v3077
    %v3190 = vpack.c.b16 %v3082, %v3080
    %v3191 = vpack.c.b16 %v3083, %v3081
    %v3192 = vpack.c.b16 %v3086, %v3084
    %v3193 = vpack.c.b16 %v3087, %v3085
    %v3194 = vpack.c.b16 %v3090, %v3088
    %v3195 = vpack.c.b16 %v3091, %v3089
    %v3196 = vpack.c.b16 %v3094, %v3092
    %v3197 = vpack.c.b16 %v3095, %v3093
    %v3198 = vpack.c.b16 %v3098, %v3096
    %v3199 = vpack.c.b16 %v3099, %v3097
    %v3200 = vpack.c.b16 %v3102, %v3100
    %v3201 = vpack.c.b16 %v3103, %v3101
    %v3202 = vpack.c.b16 %v3106, %v3104
    %v3203 = vpack.c.b16 %v3107, %v3105
    %v3204 = vpack.c.b16 %v3110, %v3108
    %v3205 = vpack.c.b16 %v3111, %v3109
    %v3206 = vpack.c.b16 %v3114, %v3112
    %v3207 = vpack.c.b16 %v3115, %v3113
    %v3208 = vpack.c.b16 %v3118, %v3116
    %v3209 = vpack.c.b16 %v3119, %v3117
    %v3210 = vpack.c.b16 %v3122, %v3120
    %v3211 = vpack.c.b16 %v3123, %v3121
    %v3212 = vpack.c.b16 %v3126, %v3124
    %v3213 = vpack.c.b16 %v3127, %v3125
    %v3214 = vpack.c.b16 %v3130, %v3128
    %v3215 = vpack.c.b16 %v3131, %v3129
    %v3216 = vpack.c.b16 %v3134, %v3132
    %v3217 = vpack.c.b16 %v3135, %v3133
    %v3218 = vpack.c.b16 %v3138, %v3136
    %v3219 = vpack.c.b16 %v3139, %v3137
    %v3220 = vpack.c.b16 %v3142, %v3140
    %v3221 = vpack.c.b16 %v3143, %v3141
    %v3222 = vpack.c.b16 %v3146, %v3144
    %v3223 = vpack.c.b16 %v3147, %v3145
    %v3224 = vpack.c.b16 %v3150, %v3148
    %v3225 = vpack.c.b16 %v3151, %v3149
    %v3226 = vpack.c.b16 %v3154, %v3152
    %v3227 = vpack.c.b16 %v3155, %v3153
    %v3228 = vpack.c.b16 %v3158, %v3156
    %v3229 = vpack.c.b16 %v3159, %v3157
    %v3230 = vpack.c.b16 %v3162, %v3160
    %v3231 = vpack.c.b16 %v3163, %v3161
    %v3232 = vpack.c.b16 %v3166, %v3164
    %v3233 = vpack.c.b16 %v3167, %v3165
    %v3234 = vpack.c.b16 %v3170, %v3168
    %v3235 = vpack.c.b16 %v3171, %v3169
    %3300 = vmatpush.bf16.msra.mxu0 %v3186
    %3301 = vmatpush.bf16.msra.mxu0 %v3184
    %3302 = vmatpush.bf16.msra.mxu0 %v3182
    %3303 = vmatpush.bf16.msra.mxu0 %v3180
    %3304 = vmatpush.bf16.msra.mxu0 %v3178
    %3305 = vmatpush.bf16.msra.mxu0 %v3176
    %3306 = vmatpush.bf16.msra.mxu0 %v3174
    %3307 = vmatpush.bf16.msra.mxu0 %v3172
    %3308 = vmatmul.bf16.gmra.mxu0 %v2788
    %v3309 = vpop.f32.mrf.mxu0
    %v3310 = vadd.f32 0.0, %v3309
    %v3311 = vpop.f32.mrf.mxu0
    %v3312 = vadd.f32 0.0, %v3311
    %3313 = vmatmul.bf16.gmra.mxu0 %v2792
    %v3314 = vpop.f32.mrf.mxu0
    %v3315 = vadd.f32 0.0, %v3314
    %v3316 = vpop.f32.mrf.mxu0
    %v3317 = vadd.f32 0.0, %v3316
    %3318 = vmatmul.bf16.gmra.mxu0 %v2796
    %v3319 = vpop.f32.mrf.mxu0
    %v3320 = vadd.f32 0.0, %v3319
    %v3321 = vpop.f32.mrf.mxu0
    %v3322 = vadd.f32 0.0, %v3321
    %3323 = vmatmul.bf16.gmra.mxu0 %v2800
    %v3324 = vpop.f32.mrf.mxu0
    %v3325 = vadd.f32 0.0, %v3324
    %v3326 = vpop.f32.mrf.mxu0
    %v3327 = vadd.f32 0.0, %v3326
    %3328 = vmatmul.bf16.gmra.mxu0 %v2804
    %v3329 = vpop.f32.mrf.mxu0
    %v3330 = vadd.f32 0.0, %v3329
    %v3331 = vpop.f32.mrf.mxu0
    %v3332 = vadd.f32 0.0, %v3331
    %3333 = vmatmul.bf16.gmra.mxu0 %v2808
    %v3334 = vpop.f32.mrf.mxu0
    %v3335 = vadd.f32 0.0, %v3334
    %v3336 = vpop.f32.mrf.mxu0
    %v3337 = vadd.f32 0.0, %v3336
    %3338 = vmatmul.bf16.gmra.mxu0 %v2812
    %v3339 = vpop.f32.mrf.mxu0
    %v3340 = vadd.f32 0.0, %v3339
    %v3341 = vpop.f32.mrf.mxu0
    %v3342 = vadd.f32 0.0, %v3341
    %3343 = vmatmul.bf16.gmra.mxu0 %v2816
    %v3344 = vpop.f32.mrf.mxu0
    %v3345 = vadd.f32 0.0, %v3344
    %v3346 = vpop.f32.mrf.mxu0
    %v3347 = vadd.f32 0.0, %v3346
    %3348 = vmatmul.bf16.gmra.mxu0 %v2820
    %v3349 = vpop.f32.mrf.mxu0
    %v3350 = vadd.f32 0.0, %v3349
    %v3351 = vpop.f32.mrf.mxu0
    %v3352 = vadd.f32 0.0, %v3351
    %3353 = vmatmul.bf16.gmra.mxu0 %v2824
    %v3354 = vpop.f32.mrf.mxu0
    %v3355 = vadd.f32 0.0, %v3354
    %v3356 = vpop.f32.mrf.mxu0
    %v3357 = vadd.f32 0.0, %v3356
    %3358 = vmatmul.bf16.gmra.mxu0 %v2828
    %v3359 = vpop.f32.mrf.mxu0
    %v3360 = vadd.f32 0.0, %v3359
    %v3361 = vpop.f32.mrf.mxu0
    %v3362 = vadd.f32 0.0, %v3361
    %3363 = vmatmul.bf16.gmra.mxu0 %v2832
    %v3364 = vpop.f32.mrf.mxu0
    %v3365 = vadd.f32 0.0, %v3364
    %v3366 = vpop.f32.mrf.mxu0
    %v3367 = vadd.f32 0.0, %v3366
    %3368 = vmatmul.bf16.gmra.mxu0 %v2836
    %v3369 = vpop.f32.mrf.mxu0
    %v3370 = vadd.f32 0.0, %v3369
    %v3371 = vpop.f32.mrf.mxu0
    %v3372 = vadd.f32 0.0, %v3371
    %3373 = vmatmul.bf16.gmra.mxu0 %v2840
    %v3374 = vpop.f32.mrf.mxu0
    %v3375 = vadd.f32 0.0, %v3374
    %v3376 = vpop.f32.mrf.mxu0
    %v3377 = vadd.f32 0.0, %v3376
    %3378 = vmatmul.bf16.gmra.mxu0 %v2844
    %v3379 = vpop.f32.mrf.mxu0
    %v3380 = vadd.f32 0.0, %v3379
    %v3381 = vpop.f32.mrf.mxu0
    %v3382 = vadd.f32 0.0, %v3381
    %3383 = vmatmul.bf16.gmra.mxu0 %v2848
    %v3384 = vpop.f32.mrf.mxu0
    %v3385 = vadd.f32 0.0, %v3384
    %v3386 = vpop.f32.mrf.mxu0
    %v3387 = vadd.f32 0.0, %v3386
    %3388 = vmatmul.bf16.gmra.mxu0 %v2852
    %v3389 = vpop.f32.mrf.mxu0
    %v3390 = vadd.f32 0.0, %v3389
    %v3391 = vpop.f32.mrf.mxu0
    %v3392 = vadd.f32 0.0, %v3391
    %3393 = vmatmul.bf16.gmra.mxu0 %v2856
    %v3394 = vpop.f32.mrf.mxu0
    %v3395 = vadd.f32 0.0, %v3394
    %v3396 = vpop.f32.mrf.mxu0
    %v3397 = vadd.f32 0.0, %v3396
    %3398 = vmatmul.bf16.gmra.mxu0 %v2860
    %v3399 = vpop.f32.mrf.mxu0
    %v3400 = vadd.f32 0.0, %v3399
    %v3401 = vpop.f32.mrf.mxu0
    %v3402 = vadd.f32 0.0, %v3401
    %3403 = vmatmul.bf16.gmra.mxu0 %v2864
    %v3404 = vpop.f32.mrf.mxu0
    %v3405 = vadd.f32 0.0, %v3404
    %v3406 = vpop.f32.mrf.mxu0
    %v3407 = vadd.f32 0.0, %v3406
    %3408 = vmatmul.bf16.gmra.mxu0 %v2868
    %v3409 = vpop.f32.mrf.mxu0
    %v3410 = vadd.f32 0.0, %v3409
    %v3411 = vpop.f32.mrf.mxu0
    %v3412 = vadd.f32 0.0, %v3411
    %3413 = vmatmul.bf16.gmra.mxu0 %v2872
    %v3414 = vpop.f32.mrf.mxu0
    %v3415 = vadd.f32 0.0, %v3414
    %v3416 = vpop.f32.mrf.mxu0
    %v3417 = vadd.f32 0.0, %v3416
    %3418 = vmatmul.bf16.gmra.mxu0 %v2876
    %v3419 = vpop.f32.mrf.mxu0
    %v3420 = vadd.f32 0.0, %v3419
    %v3421 = vpop.f32.mrf.mxu0
    %v3422 = vadd.f32 0.0, %v3421
    %3423 = vmatmul.bf16.gmra.mxu0 %v2880
    %v3424 = vpop.f32.mrf.mxu0
    %v3425 = vadd.f32 0.0, %v3424
    %v3426 = vpop.f32.mrf.mxu0
    %v3427 = vadd.f32 0.0, %v3426
    %3428 = vmatmul.bf16.gmra.mxu0 %v2884
    %v3429 = vpop.f32.mrf.mxu0
    %v3430 = vadd.f32 0.0, %v3429
    %v3431 = vpop.f32.mrf.mxu0
    %v3432 = vadd.f32 0.0, %v3431
    %3433 = vmatmul.bf16.gmra.mxu0 %v2888
    %v3434 = vpop.f32.mrf.mxu0
    %v3435 = vadd.f32 0.0, %v3434
    %v3436 = vpop.f32.mrf.mxu0
    %v3437 = vadd.f32 0.0, %v3436
    %3438 = vmatmul.bf16.gmra.mxu0 %v2892
    %v3439 = vpop.f32.mrf.mxu0
    %v3440 = vadd.f32 0.0, %v3439
    %v3441 = vpop.f32.mrf.mxu0
    %v3442 = vadd.f32 0.0, %v3441
    %3443 = vmatmul.bf16.gmra.mxu0 %v2896
    %v3444 = vpop.f32.mrf.mxu0
    %v3445 = vadd.f32 0.0, %v3444
    %v3446 = vpop.f32.mrf.mxu0
    %v3447 = vadd.f32 0.0, %v3446
    %3448 = vmatmul.bf16.gmra.mxu0 %v2900
    %v3449 = vpop.f32.mrf.mxu0
    %v3450 = vadd.f32 0.0, %v3449
    %v3451 = vpop.f32.mrf.mxu0
    %v3452 = vadd.f32 0.0, %v3451
    %3453 = vmatmul.bf16.gmra.mxu0 %v2904
    %v3454 = vpop.f32.mrf.mxu0
    %v3455 = vadd.f32 0.0, %v3454
    %v3456 = vpop.f32.mrf.mxu0
    %v3457 = vadd.f32 0.0, %v3456
    %3458 = vmatmul.bf16.gmra.mxu0 %v2908
    %v3459 = vpop.f32.mrf.mxu0
    %v3460 = vadd.f32 0.0, %v3459
    %v3461 = vpop.f32.mrf.mxu0
    %v3462 = vadd.f32 0.0, %v3461
    %3463 = vmatmul.bf16.gmra.mxu0 %v2912
    %v3464 = vpop.f32.mrf.mxu0
    %v3465 = vadd.f32 0.0, %v3464
    %v3466 = vpop.f32.mrf.mxu0
    %v3467 = vadd.f32 0.0, %v3466
    %3468 = vdwg.mxu0
    %3469 = vmatpush.bf16.msra.mxu0 %v3202
    %3470 = vmatpush.bf16.msra.mxu0 %v3200
    %3471 = vmatpush.bf16.msra.mxu0 %v3198
    %3472 = vmatpush.bf16.msra.mxu0 %v3196
    %3473 = vmatpush.bf16.msra.mxu0 %v3194
    %3474 = vmatpush.bf16.msra.mxu0 %v3192
    %3475 = vmatpush.bf16.msra.mxu0 %v3190
    %3476 = vmatpush.bf16.msra.mxu0 %v3188
    %3477 = vmatmul.bf16.gmra.mxu0 %v2789
    %v3478 = vpop.f32.mrf.mxu0
    %v3479 = vadd.f32 %v3310, %v3478
    %v3480 = vpop.f32.mrf.mxu0
    %v3481 = vadd.f32 %v3312, %v3480
    %3482 = vmatmul.bf16.gmra.mxu0 %v2793
    %v3483 = vpop.f32.mrf.mxu0
    %v3484 = vadd.f32 %v3315, %v3483
    %v3485 = vpop.f32.mrf.mxu0
    %v3486 = vadd.f32 %v3317, %v3485
    %3487 = vmatmul.bf16.gmra.mxu0 %v2797
    %v3488 = vpop.f32.mrf.mxu0
    %v3489 = vadd.f32 %v3320, %v3488
    %v3490 = vpop.f32.mrf.mxu0
    %v3491 = vadd.f32 %v3322, %v3490
    %3492 = vmatmul.bf16.gmra.mxu0 %v2801
    %v3493 = vpop.f32.mrf.mxu0
    %v3494 = vadd.f32 %v3325, %v3493
    %v3495 = vpop.f32.mrf.mxu0
    %v3496 = vadd.f32 %v3327, %v3495
    %3497 = vmatmul.bf16.gmra.mxu0 %v2805
    %v3498 = vpop.f32.mrf.mxu0
    %v3499 = vadd.f32 %v3330, %v3498
    %v3500 = vpop.f32.mrf.mxu0
    %v3501 = vadd.f32 %v3332, %v3500
    %3502 = vmatmul.bf16.gmra.mxu0 %v2809
    %v3503 = vpop.f32.mrf.mxu0
    %v3504 = vadd.f32 %v3335, %v3503
    %v3505 = vpop.f32.mrf.mxu0
    %v3506 = vadd.f32 %v3337, %v3505
    %3507 = vmatmul.bf16.gmra.mxu0 %v2813
    %v3508 = vpop.f32.mrf.mxu0
    %v3509 = vadd.f32 %v3340, %v3508
    %v3510 = vpop.f32.mrf.mxu0
    %v3511 = vadd.f32 %v3342, %v3510
    %3512 = vmatmul.bf16.gmra.mxu0 %v2817
    %v3513 = vpop.f32.mrf.mxu0
    %v3514 = vadd.f32 %v3345, %v3513
    %v3515 = vpop.f32.mrf.mxu0
    %v3516 = vadd.f32 %v3347, %v3515
    %3517 = vmatmul.bf16.gmra.mxu0 %v2821
    %v3518 = vpop.f32.mrf.mxu0
    %v3519 = vadd.f32 %v3350, %v3518
    %v3520 = vpop.f32.mrf.mxu0
    %v3521 = vadd.f32 %v3352, %v3520
    %3522 = vmatmul.bf16.gmra.mxu0 %v2825
    %v3523 = vpop.f32.mrf.mxu0
    %v3524 = vadd.f32 %v3355, %v3523
    %v3525 = vpop.f32.mrf.mxu0
    %v3526 = vadd.f32 %v3357, %v3525
    %3527 = vmatmul.bf16.gmra.mxu0 %v2829
    %v3528 = vpop.f32.mrf.mxu0
    %v3529 = vadd.f32 %v3360, %v3528
    %v3530 = vpop.f32.mrf.mxu0
    %v3531 = vadd.f32 %v3362, %v3530
    %3532 = vmatmul.bf16.gmra.mxu0 %v2833
    %v3533 = vpop.f32.mrf.mxu0
    %v3534 = vadd.f32 %v3365, %v3533
    %v3535 = vpop.f32.mrf.mxu0
    %v3536 = vadd.f32 %v3367, %v3535
    %3537 = vmatmul.bf16.gmra.mxu0 %v2837
    %v3538 = vpop.f32.mrf.mxu0
    %v3539 = vadd.f32 %v3370, %v3538
    %v3540 = vpop.f32.mrf.mxu0
    %v3541 = vadd.f32 %v3372, %v3540
    %3542 = vmatmul.bf16.gmra.mxu0 %v2841
    %v3543 = vpop.f32.mrf.mxu0
    %v3544 = vadd.f32 %v3375, %v3543
    %v3545 = vpop.f32.mrf.mxu0
    %v3546 = vadd.f32 %v3377, %v3545
    %3547 = vmatmul.bf16.gmra.mxu0 %v2845
    %v3548 = vpop.f32.mrf.mxu0
    %v3549 = vadd.f32 %v3380, %v3548
    %v3550 = vpop.f32.mrf.mxu0
    %v3551 = vadd.f32 %v3382, %v3550
    %3552 = vmatmul.bf16.gmra.mxu0 %v2849
    %v3553 = vpop.f32.mrf.mxu0
    %v3554 = vadd.f32 %v3385, %v3553
    %v3555 = vpop.f32.mrf.mxu0
    %v3556 = vadd.f32 %v3387, %v3555
    %3557 = vmatmul.bf16.gmra.mxu0 %v2853
    %v3558 = vpop.f32.mrf.mxu0
    %v3559 = vadd.f32 %v3390, %v3558
    %v3560 = vpop.f32.mrf.mxu0
    %v3561 = vadd.f32 %v3392, %v3560
    %3562 = vmatmul.bf16.gmra.mxu0 %v2857
    %v3563 = vpop.f32.mrf.mxu0
    %v3564 = vadd.f32 %v3395, %v3563
    %v3565 = vpop.f32.mrf.mxu0
    %v3566 = vadd.f32 %v3397, %v3565
    %3567 = vmatmul.bf16.gmra.mxu0 %v2861
    %v3568 = vpop.f32.mrf.mxu0
    %v3569 = vadd.f32 %v3400, %v3568
    %v3570 = vpop.f32.mrf.mxu0
    %v3571 = vadd.f32 %v3402, %v3570
    %3572 = vmatmul.bf16.gmra.mxu0 %v2865
    %v3573 = vpop.f32.mrf.mxu0
    %v3574 = vadd.f32 %v3405, %v3573
    %v3575 = vpop.f32.mrf.mxu0
    %v3576 = vadd.f32 %v3407, %v3575
    %3577 = vmatmul.bf16.gmra.mxu0 %v2869
    %v3578 = vpop.f32.mrf.mxu0
    %v3579 = vadd.f32 %v3410, %v3578
    %v3580 = vpop.f32.mrf.mxu0
    %v3581 = vadd.f32 %v3412, %v3580
    %3582 = vmatmul.bf16.gmra.mxu0 %v2873
    %v3583 = vpop.f32.mrf.mxu0
    %v3584 = vadd.f32 %v3415, %v3583
    %v3585 = vpop.f32.mrf.mxu0
    %v3586 = vadd.f32 %v3417, %v3585
    %3587 = vmatmul.bf16.gmra.mxu0 %v2877
    %v3588 = vpop.f32.mrf.mxu0
    %v3589 = vadd.f32 %v3420, %v3588
    %v3590 = vpop.f32.mrf.mxu0
    %v3591 = vadd.f32 %v3422, %v3590
    %3592 = vmatmul.bf16.gmra.mxu0 %v2881
    %v3593 = vpop.f32.mrf.mxu0
    %v3594 = vadd.f32 %v3425, %v3593
    %v3595 = vpop.f32.mrf.mxu0
    %v3596 = vadd.f32 %v3427, %v3595
    %3597 = vmatmul.bf16.gmra.mxu0 %v2885
    %v3598 = vpop.f32.mrf.mxu0
    %v3599 = vadd.f32 %v3430, %v3598
    %v3600 = vpop.f32.mrf.mxu0
    %v3601 = vadd.f32 %v3432, %v3600
    %3602 = vmatmul.bf16.gmra.mxu0 %v2889
    %v3603 = vpop.f32.mrf.mxu0
    %v3604 = vadd.f32 %v3435, %v3603
    %v3605 = vpop.f32.mrf.mxu0
    %v3606 = vadd.f32 %v3437, %v3605
    %3607 = vmatmul.bf16.gmra.mxu0 %v2893
    %v3608 = vpop.f32.mrf.mxu0
    %v3609 = vadd.f32 %v3440, %v3608
    %v3610 = vpop.f32.mrf.mxu0
    %v3611 = vadd.f32 %v3442, %v3610
    %3612 = vmatmul.bf16.gmra.mxu0 %v2897
    %v3613 = vpop.f32.mrf.mxu0
    %v3614 = vadd.f32 %v3445, %v3613
    %v3615 = vpop.f32.mrf.mxu0
    %v3616 = vadd.f32 %v3447, %v3615
    %3617 = vmatmul.bf16.gmra.mxu0 %v2901
    %v3618 = vpop.f32.mrf.mxu0
    %v3619 = vadd.f32 %v3450, %v3618
    %v3620 = vpop.f32.mrf.mxu0
    %v3621 = vadd.f32 %v3452, %v3620
    %3622 = vmatmul.bf16.gmra.mxu0 %v2905
    %v3623 = vpop.f32.mrf.mxu0
    %v3624 = vadd.f32 %v3455, %v3623
    %v3625 = vpop.f32.mrf.mxu0
    %v3626 = vadd.f32 %v3457, %v3625
    %3627 = vmatmul.bf16.gmra.mxu0 %v2909
    %v3628 = vpop.f32.mrf.mxu0
    %v3629 = vadd.f32 %v3460, %v3628
    %v3630 = vpop.f32.mrf.mxu0
    %v3631 = vadd.f32 %v3462, %v3630
    %3632 = vmatmul.bf16.gmra.mxu0 %v2913
    %v3633 = vpop.f32.mrf.mxu0
    %v3634 = vadd.f32 %v3465, %v3633
    %v3635 = vpop.f32.mrf.mxu0
    %v3636 = vadd.f32 %v3467, %v3635
    %3637 = vdwg.mxu0
    %3638 = vmatpush.bf16.msra.mxu0 %v3218
    %3639 = vmatpush.bf16.msra.mxu0 %v3216
    %3640 = vmatpush.bf16.msra.mxu0 %v3214
    %3641 = vmatpush.bf16.msra.mxu0 %v3212
    %3642 = vmatpush.bf16.msra.mxu0 %v3210
    %3643 = vmatpush.bf16.msra.mxu0 %v3208
    %3644 = vmatpush.bf16.msra.mxu0 %v3206
    %3645 = vmatpush.bf16.msra.mxu0 %v3204
    %3646 = vmatmul.bf16.gmra.mxu0 %v2790
    %v3647 = vpop.f32.mrf.mxu0
    %v3648 = vadd.f32 %v3479, %v3647
    %v3649 = vpop.f32.mrf.mxu0
    %v3650 = vadd.f32 %v3481, %v3649
    %3651 = vmatmul.bf16.gmra.mxu0 %v2794
    %v3652 = vpop.f32.mrf.mxu0
    %v3653 = vadd.f32 %v3484, %v3652
    %v3654 = vpop.f32.mrf.mxu0
    %v3655 = vadd.f32 %v3486, %v3654
    %3656 = vmatmul.bf16.gmra.mxu0 %v2798
    %v3657 = vpop.f32.mrf.mxu0
    %v3658 = vadd.f32 %v3489, %v3657
    %v3659 = vpop.f32.mrf.mxu0
    %v3660 = vadd.f32 %v3491, %v3659
    %3661 = vmatmul.bf16.gmra.mxu0 %v2802
    %v3662 = vpop.f32.mrf.mxu0
    %v3663 = vadd.f32 %v3494, %v3662
    %v3664 = vpop.f32.mrf.mxu0
    %v3665 = vadd.f32 %v3496, %v3664
    %3666 = vmatmul.bf16.gmra.mxu0 %v2806
    %v3667 = vpop.f32.mrf.mxu0
    %v3668 = vadd.f32 %v3499, %v3667
    %v3669 = vpop.f32.mrf.mxu0
    %v3670 = vadd.f32 %v3501, %v3669
    %3671 = vmatmul.bf16.gmra.mxu0 %v2810
    %v3672 = vpop.f32.mrf.mxu0
    %v3673 = vadd.f32 %v3504, %v3672
    %v3674 = vpop.f32.mrf.mxu0
    %v3675 = vadd.f32 %v3506, %v3674
    %3676 = vmatmul.bf16.gmra.mxu0 %v2814
    %v3677 = vpop.f32.mrf.mxu0
    %v3678 = vadd.f32 %v3509, %v3677
    %v3679 = vpop.f32.mrf.mxu0
    %v3680 = vadd.f32 %v3511, %v3679
    %3681 = vmatmul.bf16.gmra.mxu0 %v2818
    %v3682 = vpop.f32.mrf.mxu0
    %v3683 = vadd.f32 %v3514, %v3682
    %v3684 = vpop.f32.mrf.mxu0
    %v3685 = vadd.f32 %v3516, %v3684
    %3686 = vmatmul.bf16.gmra.mxu0 %v2822
    %v3687 = vpop.f32.mrf.mxu0
    %v3688 = vadd.f32 %v3519, %v3687
    %v3689 = vpop.f32.mrf.mxu0
    %v3690 = vadd.f32 %v3521, %v3689
    %3691 = vmatmul.bf16.gmra.mxu0 %v2826
    %v3692 = vpop.f32.mrf.mxu0
    %v3693 = vadd.f32 %v3524, %v3692
    %v3694 = vpop.f32.mrf.mxu0
    %v3695 = vadd.f32 %v3526, %v3694
    %3696 = vmatmul.bf16.gmra.mxu0 %v2830
    %v3697 = vpop.f32.mrf.mxu0
    %v3698 = vadd.f32 %v3529, %v3697
    %v3699 = vpop.f32.mrf.mxu0
    %v3700 = vadd.f32 %v3531, %v3699
    %3701 = vmatmul.bf16.gmra.mxu0 %v2834
    %v3702 = vpop.f32.mrf.mxu0
    %v3703 = vadd.f32 %v3534, %v3702
    %v3704 = vpop.f32.mrf.mxu0
    %v3705 = vadd.f32 %v3536, %v3704
    %3706 = vmatmul.bf16.gmra.mxu0 %v2838
    %v3707 = vpop.f32.mrf.mxu0
    %v3708 = vadd.f32 %v3539, %v3707
    %v3709 = vpop.f32.mrf.mxu0
    %v3710 = vadd.f32 %v3541, %v3709
    %3711 = vmatmul.bf16.gmra.mxu0 %v2842
    %v3712 = vpop.f32.mrf.mxu0
    %v3713 = vadd.f32 %v3544, %v3712
    %v3714 = vpop.f32.mrf.mxu0
    %v3715 = vadd.f32 %v3546, %v3714
    %3716 = vmatmul.bf16.gmra.mxu0 %v2846
    %v3717 = vpop.f32.mrf.mxu0
    %v3718 = vadd.f32 %v3549, %v3717
    %v3719 = vpop.f32.mrf.mxu0
    %v3720 = vadd.f32 %v3551, %v3719
    %3721 = vmatmul.bf16.gmra.mxu0 %v2850
    %v3722 = vpop.f32.mrf.mxu0
    %v3723 = vadd.f32 %v3554, %v3722
    %v3724 = vpop.f32.mrf.mxu0
    %v3725 = vadd.f32 %v3556, %v3724
    %3726 = vmatmul.bf16.gmra.mxu0 %v2854
    %v3727 = vpop.f32.mrf.mxu0
    %v3728 = vadd.f32 %v3559, %v3727
    %v3729 = vpop.f32.mrf.mxu0
    %v3730 = vadd.f32 %v3561, %v3729
    %3731 = vmatmul.bf16.gmra.mxu0 %v2858
    %v3732 = vpop.f32.mrf.mxu0
    %v3733 = vadd.f32 %v3564, %v3732
    %v3734 = vpop.f32.mrf.mxu0
    %v3735 = vadd.f32 %v3566, %v3734
    %3736 = vmatmul.bf16.gmra.mxu0 %v2862
    %v3737 = vpop.f32.mrf.mxu0
    %v3738 = vadd.f32 %v3569, %v3737
    %v3739 = vpop.f32.mrf.mxu0
    %v3740 = vadd.f32 %v3571, %v3739
    %3741 = vmatmul.bf16.gmra.mxu0 %v2866
    %v3742 = vpop.f32.mrf.mxu0
    %v3743 = vadd.f32 %v3574, %v3742
    %v3744 = vpop.f32.mrf.mxu0
    %v3745 = vadd.f32 %v3576, %v3744
    %3746 = vmatmul.bf16.gmra.mxu0 %v2870
    %v3747 = vpop.f32.mrf.mxu0
    %v3748 = vadd.f32 %v3579, %v3747
    %v3749 = vpop.f32.mrf.mxu0
    %v3750 = vadd.f32 %v3581, %v3749
    %3751 = vmatmul.bf16.gmra.mxu0 %v2874
    %v3752 = vpop.f32.mrf.mxu0
    %v3753 = vadd.f32 %v3584, %v3752
    %v3754 = vpop.f32.mrf.mxu0
    %v3755 = vadd.f32 %v3586, %v3754
    %3756 = vmatmul.bf16.gmra.mxu0 %v2878
    %v3757 = vpop.f32.mrf.mxu0
    %v3758 = vadd.f32 %v3589, %v3757
    %v3759 = vpop.f32.mrf.mxu0
    %v3760 = vadd.f32 %v3591, %v3759
    %3761 = vmatmul.bf16.gmra.mxu0 %v2882
    %v3762 = vpop.f32.mrf.mxu0
    %v3763 = vadd.f32 %v3594, %v3762
    %v3764 = vpop.f32.mrf.mxu0
    %v3765 = vadd.f32 %v3596, %v3764
    %3766 = vmatmul.bf16.gmra.mxu0 %v2886
    %v3767 = vpop.f32.mrf.mxu0
    %v3768 = vadd.f32 %v3599, %v3767
    %v3769 = vpop.f32.mrf.mxu0
    %v3770 = vadd.f32 %v3601, %v3769
    %3771 = vmatmul.bf16.gmra.mxu0 %v2890
    %v3772 = vpop.f32.mrf.mxu0
    %v3773 = vadd.f32 %v3604, %v3772
    %v3774 = vpop.f32.mrf.mxu0
    %v3775 = vadd.f32 %v3606, %v3774
    %3776 = vmatmul.bf16.gmra.mxu0 %v2894
    %v3777 = vpop.f32.mrf.mxu0
    %v3778 = vadd.f32 %v3609, %v3777
    %v3779 = vpop.f32.mrf.mxu0
    %v3780 = vadd.f32 %v3611, %v3779
    %3781 = vmatmul.bf16.gmra.mxu0 %v2898
    %v3782 = vpop.f32.mrf.mxu0
    %v3783 = vadd.f32 %v3614, %v3782
    %v3784 = vpop.f32.mrf.mxu0
    %v3785 = vadd.f32 %v3616, %v3784
    %3786 = vmatmul.bf16.gmra.mxu0 %v2902
    %v3787 = vpop.f32.mrf.mxu0
    %v3788 = vadd.f32 %v3619, %v3787
    %v3789 = vpop.f32.mrf.mxu0
    %v3790 = vadd.f32 %v3621, %v3789
    %3791 = vmatmul.bf16.gmra.mxu0 %v2906
    %v3792 = vpop.f32.mrf.mxu0
    %v3793 = vadd.f32 %v3624, %v3792
    %v3794 = vpop.f32.mrf.mxu0
    %v3795 = vadd.f32 %v3626, %v3794
    %3796 = vmatmul.bf16.gmra.mxu0 %v2910
    %v3797 = vpop.f32.mrf.mxu0
    %v3798 = vadd.f32 %v3629, %v3797
    %v3799 = vpop.f32.mrf.mxu0
    %v3800 = vadd.f32 %v3631, %v3799
    %3801 = vmatmul.bf16.gmra.mxu0 %v2914
    %v3802 = vpop.f32.mrf.mxu0
    %v3803 = vadd.f32 %v3634, %v3802
    %v3804 = vpop.f32.mrf.mxu0
    %v3805 = vadd.f32 %v3636, %v3804
    %3806 = vdwg.mxu0
    %3807 = vmatpush.bf16.msra.mxu0 %v3234
    %3808 = vmatpush.bf16.msra.mxu0 %v3232
    %3809 = vmatpush.bf16.msra.mxu0 %v3230
    %3810 = vmatpush.bf16.msra.mxu0 %v3228
    %3811 = vmatpush.bf16.msra.mxu0 %v3226
    %3812 = vmatpush.bf16.msra.mxu0 %v3224
    %3813 = vmatpush.bf16.msra.mxu0 %v3222
    %3814 = vmatpush.bf16.msra.mxu0 %v3220
    %3815 = vmatmul.bf16.gmra.mxu0 %v2791
    %v3816 = vpop.f32.mrf.mxu0
    %v3817 = vadd.f32 %v3648, %v3816
    %v3818 = vpop.f32.mrf.mxu0
    %v3819 = vadd.f32 %v3650, %v3818
    %3820 = vmatmul.bf16.gmra.mxu0 %v2795
    %v3821 = vpop.f32.mrf.mxu0
    %v3822 = vadd.f32 %v3653, %v3821
    %v3823 = vpop.f32.mrf.mxu0
    %v3824 = vadd.f32 %v3655, %v3823
    %3825 = vmatmul.bf16.gmra.mxu0 %v2799
    %v3826 = vpop.f32.mrf.mxu0
    %v3827 = vadd.f32 %v3658, %v3826
    %v3828 = vpop.f32.mrf.mxu0
    %v3829 = vadd.f32 %v3660, %v3828
    %3830 = vmatmul.bf16.gmra.mxu0 %v2803
    %v3831 = vpop.f32.mrf.mxu0
    %v3832 = vadd.f32 %v3663, %v3831
    %v3833 = vpop.f32.mrf.mxu0
    %v3834 = vadd.f32 %v3665, %v3833
    %3835 = vmatmul.bf16.gmra.mxu0 %v2807
    %v3836 = vpop.f32.mrf.mxu0
    %v3837 = vadd.f32 %v3668, %v3836
    %v3838 = vpop.f32.mrf.mxu0
    %v3839 = vadd.f32 %v3670, %v3838
    %3840 = vmatmul.bf16.gmra.mxu0 %v2811
    %v3841 = vpop.f32.mrf.mxu0
    %v3842 = vadd.f32 %v3673, %v3841
    %v3843 = vpop.f32.mrf.mxu0
    %v3844 = vadd.f32 %v3675, %v3843
    %3845 = vmatmul.bf16.gmra.mxu0 %v2815
    %v3846 = vpop.f32.mrf.mxu0
    %v3847 = vadd.f32 %v3678, %v3846
    %v3848 = vpop.f32.mrf.mxu0
    %v3849 = vadd.f32 %v3680, %v3848
    %3850 = vmatmul.bf16.gmra.mxu0 %v2819
    %v3851 = vpop.f32.mrf.mxu0
    %v3852 = vadd.f32 %v3683, %v3851
    %v3853 = vpop.f32.mrf.mxu0
    %v3854 = vadd.f32 %v3685, %v3853
    %3855 = vmatmul.bf16.gmra.mxu0 %v2823
    %v3856 = vpop.f32.mrf.mxu0
    %v3857 = vadd.f32 %v3688, %v3856
    %v3858 = vpop.f32.mrf.mxu0
    %v3859 = vadd.f32 %v3690, %v3858
    %3860 = vmatmul.bf16.gmra.mxu0 %v2827
    %v3861 = vpop.f32.mrf.mxu0
    %v3862 = vadd.f32 %v3693, %v3861
    %v3863 = vpop.f32.mrf.mxu0
    %v3864 = vadd.f32 %v3695, %v3863
    %3865 = vmatmul.bf16.gmra.mxu0 %v2831
    %v3866 = vpop.f32.mrf.mxu0
    %v3867 = vadd.f32 %v3698, %v3866
    %v3868 = vpop.f32.mrf.mxu0
    %v3869 = vadd.f32 %v3700, %v3868
    %3870 = vmatmul.bf16.gmra.mxu0 %v2835
    %v3871 = vpop.f32.mrf.mxu0
    %v3872 = vadd.f32 %v3703, %v3871
    %v3873 = vpop.f32.mrf.mxu0
    %v3874 = vadd.f32 %v3705, %v3873
    %3875 = vmatmul.bf16.gmra.mxu0 %v2839
    %v3876 = vpop.f32.mrf.mxu0
    %v3877 = vadd.f32 %v3708, %v3876
    %v3878 = vpop.f32.mrf.mxu0
    %v3879 = vadd.f32 %v3710, %v3878
    %3880 = vmatmul.bf16.gmra.mxu0 %v2843
    %v3881 = vpop.f32.mrf.mxu0
    %v3882 = vadd.f32 %v3713, %v3881
    %v3883 = vpop.f32.mrf.mxu0
    %v3884 = vadd.f32 %v3715, %v3883
    %3885 = vmatmul.bf16.gmra.mxu0 %v2847
    %v3886 = vpop.f32.mrf.mxu0
    %v3887 = vadd.f32 %v3718, %v3886
    %v3888 = vpop.f32.mrf.mxu0
    %v3889 = vadd.f32 %v3720, %v3888
    %3890 = vmatmul.bf16.gmra.mxu0 %v2851
    %v3891 = vpop.f32.mrf.mxu0
    %v3892 = vadd.f32 %v3723, %v3891
    %v3893 = vpop.f32.mrf.mxu0
    %v3894 = vadd.f32 %v3725, %v3893
    %3895 = vmatmul.bf16.gmra.mxu0 %v2855
    %v3896 = vpop.f32.mrf.mxu0
    %v3897 = vadd.f32 %v3728, %v3896
    %v3898 = vpop.f32.mrf.mxu0
    %v3899 = vadd.f32 %v3730, %v3898
    %3900 = vmatmul.bf16.gmra.mxu0 %v2859
    %v3901 = vpop.f32.mrf.mxu0
    %v3902 = vadd.f32 %v3733, %v3901
    %v3903 = vpop.f32.mrf.mxu0
    %v3904 = vadd.f32 %v3735, %v3903
    %3905 = vmatmul.bf16.gmra.mxu0 %v2863
    %v3906 = vpop.f32.mrf.mxu0
    %v3907 = vadd.f32 %v3738, %v3906
    %v3908 = vpop.f32.mrf.mxu0
    %v3909 = vadd.f32 %v3740, %v3908
    %3910 = vmatmul.bf16.gmra.mxu0 %v2867
    %v3911 = vpop.f32.mrf.mxu0
    %v3912 = vadd.f32 %v3743, %v3911
    %v3913 = vpop.f32.mrf.mxu0
    %v3914 = vadd.f32 %v3745, %v3913
    %3915 = vmatmul.bf16.gmra.mxu0 %v2871
    %v3916 = vpop.f32.mrf.mxu0
    %v3917 = vadd.f32 %v3748, %v3916
    %v3918 = vpop.f32.mrf.mxu0
    %v3919 = vadd.f32 %v3750, %v3918
    %3920 = vmatmul.bf16.gmra.mxu0 %v2875
    %v3921 = vpop.f32.mrf.mxu0
    %v3922 = vadd.f32 %v3753, %v3921
    %v3923 = vpop.f32.mrf.mxu0
    %v3924 = vadd.f32 %v3755, %v3923
    %3925 = vmatmul.bf16.gmra.mxu0 %v2879
    %v3926 = vpop.f32.mrf.mxu0
    %v3927 = vadd.f32 %v3758, %v3926
    %v3928 = vpop.f32.mrf.mxu0
    %v3929 = vadd.f32 %v3760, %v3928
    %3930 = vmatmul.bf16.gmra.mxu0 %v2883
    %v3931 = vpop.f32.mrf.mxu0
    %v3932 = vadd.f32 %v3763, %v3931
    %v3933 = vpop.f32.mrf.mxu0
    %v3934 = vadd.f32 %v3765, %v3933
    %3935 = vmatmul.bf16.gmra.mxu0 %v2887
    %v3936 = vpop.f32.mrf.mxu0
    %v3937 = vadd.f32 %v3768, %v3936
    %v3938 = vpop.f32.mrf.mxu0
    %v3939 = vadd.f32 %v3770, %v3938
    %3940 = vmatmul.bf16.gmra.mxu0 %v2891
    %v3941 = vpop.f32.mrf.mxu0
    %v3942 = vadd.f32 %v3773, %v3941
    %v3943 = vpop.f32.mrf.mxu0
    %v3944 = vadd.f32 %v3775, %v3943
    %3945 = vmatmul.bf16.gmra.mxu0 %v2895
    %v3946 = vpop.f32.mrf.mxu0
    %v3947 = vadd.f32 %v3778, %v3946
    %v3948 = vpop.f32.mrf.mxu0
    %v3949 = vadd.f32 %v3780, %v3948
    %3950 = vmatmul.bf16.gmra.mxu0 %v2899
    %v3951 = vpop.f32.mrf.mxu0
    %v3952 = vadd.f32 %v3783, %v3951
    %v3953 = vpop.f32.mrf.mxu0
    %v3954 = vadd.f32 %v3785, %v3953
    %3955 = vmatmul.bf16.gmra.mxu0 %v2903
    %v3956 = vpop.f32.mrf.mxu0
    %v3957 = vadd.f32 %v3788, %v3956
    %v3958 = vpop.f32.mrf.mxu0
    %v3959 = vadd.f32 %v3790, %v3958
    %3960 = vmatmul.bf16.gmra.mxu0 %v2907
    %v3961 = vpop.f32.mrf.mxu0
    %v3962 = vadd.f32 %v3793, %v3961
    %v3963 = vpop.f32.mrf.mxu0
    %v3964 = vadd.f32 %v3795, %v3963
    %3965 = vmatmul.bf16.gmra.mxu0 %v2911
    %v3966 = vpop.f32.mrf.mxu0
    %v3967 = vadd.f32 %v3798, %v3966
    %v3968 = vpop.f32.mrf.mxu0
    %v3969 = vadd.f32 %v3800, %v3968
    %3970 = vmatmul.bf16.gmra.mxu0 %v2915
    %v3971 = vpop.f32.mrf.mxu0
    %v3972 = vadd.f32 %v3803, %v3971
    %v3973 = vpop.f32.mrf.mxu0
    %v3974 = vadd.f32 %v3805, %v3973
    %3975 = vdwg.mxu0
    %3976 = vmatpush.bf16.msra.mxu0 %v3187
    %3977 = vmatpush.bf16.msra.mxu0 %v3185
    %3978 = vmatpush.bf16.msra.mxu0 %v3183
    %3979 = vmatpush.bf16.msra.mxu0 %v3181
    %3980 = vmatpush.bf16.msra.mxu0 %v3179
    %3981 = vmatpush.bf16.msra.mxu0 %v3177
    %3982 = vmatpush.bf16.msra.mxu0 %v3175
    %3983 = vmatpush.bf16.msra.mxu0 %v3173
    %3984 = vmatmul.bf16.gmra.mxu0 %v2788
    %v3985 = vpop.f32.mrf.mxu0
    %v3986 = vadd.f32 0.0, %v3985
    %v3987 = vpop.f32.mrf.mxu0
    %v3988 = vadd.f32 0.0, %v3987
    %3989 = vmatmul.bf16.gmra.mxu0 %v2792
    %v3990 = vpop.f32.mrf.mxu0
    %v3991 = vadd.f32 0.0, %v3990
    %v3992 = vpop.f32.mrf.mxu0
    %v3993 = vadd.f32 0.0, %v3992
    %3994 = vmatmul.bf16.gmra.mxu0 %v2796
    %v3995 = vpop.f32.mrf.mxu0
    %v3996 = vadd.f32 0.0, %v3995
    %v3997 = vpop.f32.mrf.mxu0
    %v3998 = vadd.f32 0.0, %v3997
    %3999 = vmatmul.bf16.gmra.mxu0 %v2800
    %v4000 = vpop.f32.mrf.mxu0
    %v4001 = vadd.f32 0.0, %v4000
    %v4002 = vpop.f32.mrf.mxu0
    %v4003 = vadd.f32 0.0, %v4002
    %4004 = vmatmul.bf16.gmra.mxu0 %v2804
    %v4005 = vpop.f32.mrf.mxu0
    %v4006 = vadd.f32 0.0, %v4005
    %v4007 = vpop.f32.mrf.mxu0
    %v4008 = vadd.f32 0.0, %v4007
    %4009 = vmatmul.bf16.gmra.mxu0 %v2808
    %v4010 = vpop.f32.mrf.mxu0
    %v4011 = vadd.f32 0.0, %v4010
    %v4012 = vpop.f32.mrf.mxu0
    %v4013 = vadd.f32 0.0, %v4012
    %4014 = vmatmul.bf16.gmra.mxu0 %v2812
    %v4015 = vpop.f32.mrf.mxu0
    %v4016 = vadd.f32 0.0, %v4015
    %v4017 = vpop.f32.mrf.mxu0
    %v4018 = vadd.f32 0.0, %v4017
    %4019 = vmatmul.bf16.gmra.mxu0 %v2816
    %v4020 = vpop.f32.mrf.mxu0
    %v4021 = vadd.f32 0.0, %v4020
    %v4022 = vpop.f32.mrf.mxu0
    %v4023 = vadd.f32 0.0, %v4022
    %4024 = vmatmul.bf16.gmra.mxu0 %v2820
    %v4025 = vpop.f32.mrf.mxu0
    %v4026 = vadd.f32 0.0, %v4025
    %v4027 = vpop.f32.mrf.mxu0
    %v4028 = vadd.f32 0.0, %v4027
    %4029 = vmatmul.bf16.gmra.mxu0 %v2824
    %v4030 = vpop.f32.mrf.mxu0
    %v4031 = vadd.f32 0.0, %v4030
    %v4032 = vpop.f32.mrf.mxu0
    %v4033 = vadd.f32 0.0, %v4032
    %4034 = vmatmul.bf16.gmra.mxu0 %v2828
    %v4035 = vpop.f32.mrf.mxu0
    %v4036 = vadd.f32 0.0, %v4035
    %v4037 = vpop.f32.mrf.mxu0
    %v4038 = vadd.f32 0.0, %v4037
    %4039 = vmatmul.bf16.gmra.mxu0 %v2832
    %v4040 = vpop.f32.mrf.mxu0
    %v4041 = vadd.f32 0.0, %v4040
    %v4042 = vpop.f32.mrf.mxu0
    %v4043 = vadd.f32 0.0, %v4042
    %4044 = vmatmul.bf16.gmra.mxu0 %v2836
    %v4045 = vpop.f32.mrf.mxu0
    %v4046 = vadd.f32 0.0, %v4045
    %v4047 = vpop.f32.mrf.mxu0
    %v4048 = vadd.f32 0.0, %v4047
    %4049 = vmatmul.bf16.gmra.mxu0 %v2840
    %v4050 = vpop.f32.mrf.mxu0
    %v4051 = vadd.f32 0.0, %v4050
    %v4052 = vpop.f32.mrf.mxu0
    %v4053 = vadd.f32 0.0, %v4052
    %4054 = vmatmul.bf16.gmra.mxu0 %v2844
    %v4055 = vpop.f32.mrf.mxu0
    %v4056 = vadd.f32 0.0, %v4055
    %v4057 = vpop.f32.mrf.mxu0
    %v4058 = vadd.f32 0.0, %v4057
    %4059 = vmatmul.bf16.gmra.mxu0 %v2848
    %v4060 = vpop.f32.mrf.mxu0
    %v4061 = vadd.f32 0.0, %v4060
    %v4062 = vpop.f32.mrf.mxu0
    %v4063 = vadd.f32 0.0, %v4062
    %4064 = vmatmul.bf16.gmra.mxu0 %v2852
    %v4065 = vpop.f32.mrf.mxu0
    %v4066 = vadd.f32 0.0, %v4065
    %v4067 = vpop.f32.mrf.mxu0
    %v4068 = vadd.f32 0.0, %v4067
    %4069 = vmatmul.bf16.gmra.mxu0 %v2856
    %v4070 = vpop.f32.mrf.mxu0
    %v4071 = vadd.f32 0.0, %v4070
    %v4072 = vpop.f32.mrf.mxu0
    %v4073 = vadd.f32 0.0, %v4072
    %4074 = vmatmul.bf16.gmra.mxu0 %v2860
    %v4075 = vpop.f32.mrf.mxu0
    %v4076 = vadd.f32 0.0, %v4075
    %v4077 = vpop.f32.mrf.mxu0
    %v4078 = vadd.f32 0.0, %v4077
    %4079 = vmatmul.bf16.gmra.mxu0 %v2864
    %v4080 = vpop.f32.mrf.mxu0
    %v4081 = vadd.f32 0.0, %v4080
    %v4082 = vpop.f32.mrf.mxu0
    %v4083 = vadd.f32 0.0, %v4082
    %4084 = vmatmul.bf16.gmra.mxu0 %v2868
    %v4085 = vpop.f32.mrf.mxu0
    %v4086 = vadd.f32 0.0, %v4085
    %v4087 = vpop.f32.mrf.mxu0
    %v4088 = vadd.f32 0.0, %v4087
    %4089 = vmatmul.bf16.gmra.mxu0 %v2872
    %v4090 = vpop.f32.mrf.mxu0
    %v4091 = vadd.f32 0.0, %v4090
    %v4092 = vpop.f32.mrf.mxu0
    %v4093 = vadd.f32 0.0, %v4092
    %4094 = vmatmul.bf16.gmra.mxu0 %v2876
    %v4095 = vpop.f32.mrf.mxu0
    %v4096 = vadd.f32 0.0, %v4095
    %v4097 = vpop.f32.mrf.mxu0
    %v4098 = vadd.f32 0.0, %v4097
    %4099 = vmatmul.bf16.gmra.mxu0 %v2880
    %v4100 = vpop.f32.mrf.mxu0
    %v4101 = vadd.f32 0.0, %v4100
    %v4102 = vpop.f32.mrf.mxu0
    %v4103 = vadd.f32 0.0, %v4102
    %4104 = vmatmul.bf16.gmra.mxu0 %v2884
    %v4105 = vpop.f32.mrf.mxu0
    %v4106 = vadd.f32 0.0, %v4105
    %v4107 = vpop.f32.mrf.mxu0
    %v4108 = vadd.f32 0.0, %v4107
    %4109 = vmatmul.bf16.gmra.mxu0 %v2888
    %v4110 = vpop.f32.mrf.mxu0
    %v4111 = vadd.f32 0.0, %v4110
    %v4112 = vpop.f32.mrf.mxu0
    %v4113 = vadd.f32 0.0, %v4112
    %4114 = vmatmul.bf16.gmra.mxu0 %v2892
    %v4115 = vpop.f32.mrf.mxu0
    %v4116 = vadd.f32 0.0, %v4115
    %v4117 = vpop.f32.mrf.mxu0
    %v4118 = vadd.f32 0.0, %v4117
    %4119 = vmatmul.bf16.gmra.mxu0 %v2896
    %v4120 = vpop.f32.mrf.mxu0
    %v4121 = vadd.f32 0.0, %v4120
    %v4122 = vpop.f32.mrf.mxu0
    %v4123 = vadd.f32 0.0, %v4122
    %4124 = vmatmul.bf16.gmra.mxu0 %v2900
    %v4125 = vpop.f32.mrf.mxu0
    %v4126 = vadd.f32 0.0, %v4125
    %v4127 = vpop.f32.mrf.mxu0
    %v4128 = vadd.f32 0.0, %v4127
    %4129 = vmatmul.bf16.gmra.mxu0 %v2904
    %v4130 = vpop.f32.mrf.mxu0
    %v4131 = vadd.f32 0.0, %v4130
    %v4132 = vpop.f32.mrf.mxu0
    %v4133 = vadd.f32 0.0, %v4132
    %4134 = vmatmul.bf16.gmra.mxu0 %v2908
    %v4135 = vpop.f32.mrf.mxu0
    %v4136 = vadd.f32 0.0, %v4135
    %v4137 = vpop.f32.mrf.mxu0
    %v4138 = vadd.f32 0.0, %v4137
    %4139 = vmatmul.bf16.gmra.mxu0 %v2912
    %v4140 = vpop.f32.mrf.mxu0
    %v4141 = vadd.f32 0.0, %v4140
    %v4142 = vpop.f32.mrf.mxu0
    %v4143 = vadd.f32 0.0, %v4142
    %4144 = vdwg.mxu0
    %4145 = vmatpush.bf16.msra.mxu0 %v3203
    %4146 = vmatpush.bf16.msra.mxu0 %v3201
    %4147 = vmatpush.bf16.msra.mxu0 %v3199
    %4148 = vmatpush.bf16.msra.mxu0 %v3197
    %4149 = vmatpush.bf16.msra.mxu0 %v3195
    %4150 = vmatpush.bf16.msra.mxu0 %v3193
    %4151 = vmatpush.bf16.msra.mxu0 %v3191
    %4152 = vmatpush.bf16.msra.mxu0 %v3189
    %4153 = vmatmul.bf16.gmra.mxu0 %v2789
    %v4154 = vpop.f32.mrf.mxu0
    %v4155 = vadd.f32 %v3986, %v4154
    %v4156 = vpop.f32.mrf.mxu0
    %v4157 = vadd.f32 %v3988, %v4156
    %4158 = vmatmul.bf16.gmra.mxu0 %v2793
    %v4159 = vpop.f32.mrf.mxu0
    %v4160 = vadd.f32 %v3991, %v4159
    %v4161 = vpop.f32.mrf.mxu0
    %v4162 = vadd.f32 %v3993, %v4161
    %4163 = vmatmul.bf16.gmra.mxu0 %v2797
    %v4164 = vpop.f32.mrf.mxu0
    %v4165 = vadd.f32 %v3996, %v4164
    %v4166 = vpop.f32.mrf.mxu0
    %v4167 = vadd.f32 %v3998, %v4166
    %4168 = vmatmul.bf16.gmra.mxu0 %v2801
    %v4169 = vpop.f32.mrf.mxu0
    %v4170 = vadd.f32 %v4001, %v4169
    %v4171 = vpop.f32.mrf.mxu0
    %v4172 = vadd.f32 %v4003, %v4171
    %4173 = vmatmul.bf16.gmra.mxu0 %v2805
    %v4174 = vpop.f32.mrf.mxu0
    %v4175 = vadd.f32 %v4006, %v4174
    %v4176 = vpop.f32.mrf.mxu0
    %v4177 = vadd.f32 %v4008, %v4176
    %4178 = vmatmul.bf16.gmra.mxu0 %v2809
    %v4179 = vpop.f32.mrf.mxu0
    %v4180 = vadd.f32 %v4011, %v4179
    %v4181 = vpop.f32.mrf.mxu0
    %v4182 = vadd.f32 %v4013, %v4181
    %4183 = vmatmul.bf16.gmra.mxu0 %v2813
    %v4184 = vpop.f32.mrf.mxu0
    %v4185 = vadd.f32 %v4016, %v4184
    %v4186 = vpop.f32.mrf.mxu0
    %v4187 = vadd.f32 %v4018, %v4186
    %4188 = vmatmul.bf16.gmra.mxu0 %v2817
    %v4189 = vpop.f32.mrf.mxu0
    %v4190 = vadd.f32 %v4021, %v4189
    %v4191 = vpop.f32.mrf.mxu0
    %v4192 = vadd.f32 %v4023, %v4191
    %4193 = vmatmul.bf16.gmra.mxu0 %v2821
    %v4194 = vpop.f32.mrf.mxu0
    %v4195 = vadd.f32 %v4026, %v4194
    %v4196 = vpop.f32.mrf.mxu0
    %v4197 = vadd.f32 %v4028, %v4196
    %4198 = vmatmul.bf16.gmra.mxu0 %v2825
    %v4199 = vpop.f32.mrf.mxu0
    %v4200 = vadd.f32 %v4031, %v4199
    %v4201 = vpop.f32.mrf.mxu0
    %v4202 = vadd.f32 %v4033, %v4201
    %4203 = vmatmul.bf16.gmra.mxu0 %v2829
    %v4204 = vpop.f32.mrf.mxu0
    %v4205 = vadd.f32 %v4036, %v4204
    %v4206 = vpop.f32.mrf.mxu0
    %v4207 = vadd.f32 %v4038, %v4206
    %4208 = vmatmul.bf16.gmra.mxu0 %v2833
    %v4209 = vpop.f32.mrf.mxu0
    %v4210 = vadd.f32 %v4041, %v4209
    %v4211 = vpop.f32.mrf.mxu0
    %v4212 = vadd.f32 %v4043, %v4211
    %4213 = vmatmul.bf16.gmra.mxu0 %v2837
    %v4214 = vpop.f32.mrf.mxu0
    %v4215 = vadd.f32 %v4046, %v4214
    %v4216 = vpop.f32.mrf.mxu0
    %v4217 = vadd.f32 %v4048, %v4216
    %4218 = vmatmul.bf16.gmra.mxu0 %v2841
    %v4219 = vpop.f32.mrf.mxu0
    %v4220 = vadd.f32 %v4051, %v4219
    %v4221 = vpop.f32.mrf.mxu0
    %v4222 = vadd.f32 %v4053, %v4221
    %4223 = vmatmul.bf16.gmra.mxu0 %v2845
    %v4224 = vpop.f32.mrf.mxu0
    %v4225 = vadd.f32 %v4056, %v4224
    %v4226 = vpop.f32.mrf.mxu0
    %v4227 = vadd.f32 %v4058, %v4226
    %4228 = vmatmul.bf16.gmra.mxu0 %v2849
    %v4229 = vpop.f32.mrf.mxu0
    %v4230 = vadd.f32 %v4061, %v4229
    %v4231 = vpop.f32.mrf.mxu0
    %v4232 = vadd.f32 %v4063, %v4231
    %4233 = vmatmul.bf16.gmra.mxu0 %v2853
    %v4234 = vpop.f32.mrf.mxu0
    %v4235 = vadd.f32 %v4066, %v4234
    %v4236 = vpop.f32.mrf.mxu0
    %v4237 = vadd.f32 %v4068, %v4236
    %4238 = vmatmul.bf16.gmra.mxu0 %v2857
    %v4239 = vpop.f32.mrf.mxu0
    %v4240 = vadd.f32 %v4071, %v4239
    %v4241 = vpop.f32.mrf.mxu0
    %v4242 = vadd.f32 %v4073, %v4241
    %4243 = vmatmul.bf16.gmra.mxu0 %v2861
    %v4244 = vpop.f32.mrf.mxu0
    %v4245 = vadd.f32 %v4076, %v4244
    %v4246 = vpop.f32.mrf.mxu0
    %v4247 = vadd.f32 %v4078, %v4246
    %4248 = vmatmul.bf16.gmra.mxu0 %v2865
    %v4249 = vpop.f32.mrf.mxu0
    %v4250 = vadd.f32 %v4081, %v4249
    %v4251 = vpop.f32.mrf.mxu0
    %v4252 = vadd.f32 %v4083, %v4251
    %4253 = vmatmul.bf16.gmra.mxu0 %v2869
    %v4254 = vpop.f32.mrf.mxu0
    %v4255 = vadd.f32 %v4086, %v4254
    %v4256 = vpop.f32.mrf.mxu0
    %v4257 = vadd.f32 %v4088, %v4256
    %4258 = vmatmul.bf16.gmra.mxu0 %v2873
    %v4259 = vpop.f32.mrf.mxu0
    %v4260 = vadd.f32 %v4091, %v4259
    %v4261 = vpop.f32.mrf.mxu0
    %v4262 = vadd.f32 %v4093, %v4261
    %4263 = vmatmul.bf16.gmra.mxu0 %v2877
    %v4264 = vpop.f32.mrf.mxu0
    %v4265 = vadd.f32 %v4096, %v4264
    %v4266 = vpop.f32.mrf.mxu0
    %v4267 = vadd.f32 %v4098, %v4266
    %4268 = vmatmul.bf16.gmra.mxu0 %v2881
    %v4269 = vpop.f32.mrf.mxu0
    %v4270 = vadd.f32 %v4101, %v4269
    %v4271 = vpop.f32.mrf.mxu0
    %v4272 = vadd.f32 %v4103, %v4271
    %4273 = vmatmul.bf16.gmra.mxu0 %v2885
    %v4274 = vpop.f32.mrf.mxu0
    %v4275 = vadd.f32 %v4106, %v4274
    %v4276 = vpop.f32.mrf.mxu0
    %v4277 = vadd.f32 %v4108, %v4276
    %4278 = vmatmul.bf16.gmra.mxu0 %v2889
    %v4279 = vpop.f32.mrf.mxu0
    %v4280 = vadd.f32 %v4111, %v4279
    %v4281 = vpop.f32.mrf.mxu0
    %v4282 = vadd.f32 %v4113, %v4281
    %4283 = vmatmul.bf16.gmra.mxu0 %v2893
    %v4284 = vpop.f32.mrf.mxu0
    %v4285 = vadd.f32 %v4116, %v4284
    %v4286 = vpop.f32.mrf.mxu0
    %v4287 = vadd.f32 %v4118, %v4286
    %4288 = vmatmul.bf16.gmra.mxu0 %v2897
    %v4289 = vpop.f32.mrf.mxu0
    %v4290 = vadd.f32 %v4121, %v4289
    %v4291 = vpop.f32.mrf.mxu0
    %v4292 = vadd.f32 %v4123, %v4291
    %4293 = vmatmul.bf16.gmra.mxu0 %v2901
    %v4294 = vpop.f32.mrf.mxu0
    %v4295 = vadd.f32 %v4126, %v4294
    %v4296 = vpop.f32.mrf.mxu0
    %v4297 = vadd.f32 %v4128, %v4296
    %4298 = vmatmul.bf16.gmra.mxu0 %v2905
    %v4299 = vpop.f32.mrf.mxu0
    %v4300 = vadd.f32 %v4131, %v4299
    %v4301 = vpop.f32.mrf.mxu0
    %v4302 = vadd.f32 %v4133, %v4301
    %4303 = vmatmul.bf16.gmra.mxu0 %v2909
    %v4304 = vpop.f32.mrf.mxu0
    %v4305 = vadd.f32 %v4136, %v4304
    %v4306 = vpop.f32.mrf.mxu0
    %v4307 = vadd.f32 %v4138, %v4306
    %4308 = vmatmul.bf16.gmra.mxu0 %v2913
    %v4309 = vpop.f32.mrf.mxu0
    %v4310 = vadd.f32 %v4141, %v4309
    %v4311 = vpop.f32.mrf.mxu0
    %v4312 = vadd.f32 %v4143, %v4311
    %4313 = vdwg.mxu0
    %4314 = vmatpush.bf16.msra.mxu0 %v3219
    %4315 = vmatpush.bf16.msra.mxu0 %v3217
    %4316 = vmatpush.bf16.msra.mxu0 %v3215
    %4317 = vmatpush.bf16.msra.mxu0 %v3213
    %4318 = vmatpush.bf16.msra.mxu0 %v3211
    %4319 = vmatpush.bf16.msra.mxu0 %v3209
    %4320 = vmatpush.bf16.msra.mxu0 %v3207
    %4321 = vmatpush.bf16.msra.mxu0 %v3205
    %4322 = vmatmul.bf16.gmra.mxu0 %v2790
    %v4323 = vpop.f32.mrf.mxu0
    %v4324 = vadd.f32 %v4155, %v4323
    %v4325 = vpop.f32.mrf.mxu0
    %v4326 = vadd.f32 %v4157, %v4325
    %4327 = vmatmul.bf16.gmra.mxu0 %v2794
    %v4328 = vpop.f32.mrf.mxu0
    %v4329 = vadd.f32 %v4160, %v4328
    %v4330 = vpop.f32.mrf.mxu0
    %v4331 = vadd.f32 %v4162, %v4330
    %4332 = vmatmul.bf16.gmra.mxu0 %v2798
    %v4333 = vpop.f32.mrf.mxu0
    %v4334 = vadd.f32 %v4165, %v4333
    %v4335 = vpop.f32.mrf.mxu0
    %v4336 = vadd.f32 %v4167, %v4335
    %4337 = vmatmul.bf16.gmra.mxu0 %v2802
    %v4338 = vpop.f32.mrf.mxu0
    %v4339 = vadd.f32 %v4170, %v4338
    %v4340 = vpop.f32.mrf.mxu0
    %v4341 = vadd.f32 %v4172, %v4340
    %4342 = vmatmul.bf16.gmra.mxu0 %v2806
    %v4343 = vpop.f32.mrf.mxu0
    %v4344 = vadd.f32 %v4175, %v4343
    %v4345 = vpop.f32.mrf.mxu0
    %v4346 = vadd.f32 %v4177, %v4345
    %4347 = vmatmul.bf16.gmra.mxu0 %v2810
    %v4348 = vpop.f32.mrf.mxu0
    %v4349 = vadd.f32 %v4180, %v4348
    %v4350 = vpop.f32.mrf.mxu0
    %v4351 = vadd.f32 %v4182, %v4350
    %4352 = vmatmul.bf16.gmra.mxu0 %v2814
    %v4353 = vpop.f32.mrf.mxu0
    %v4354 = vadd.f32 %v4185, %v4353
    %v4355 = vpop.f32.mrf.mxu0
    %v4356 = vadd.f32 %v4187, %v4355
    %4357 = vmatmul.bf16.gmra.mxu0 %v2818
    %v4358 = vpop.f32.mrf.mxu0
    %v4359 = vadd.f32 %v4190, %v4358
    %v4360 = vpop.f32.mrf.mxu0
    %v4361 = vadd.f32 %v4192, %v4360
    %4362 = vmatmul.bf16.gmra.mxu0 %v2822
    %v4363 = vpop.f32.mrf.mxu0
    %v4364 = vadd.f32 %v4195, %v4363
    %v4365 = vpop.f32.mrf.mxu0
    %v4366 = vadd.f32 %v4197, %v4365
    %4367 = vmatmul.bf16.gmra.mxu0 %v2826
    %v4368 = vpop.f32.mrf.mxu0
    %v4369 = vadd.f32 %v4200, %v4368
    %v4370 = vpop.f32.mrf.mxu0
    %v4371 = vadd.f32 %v4202, %v4370
    %4372 = vmatmul.bf16.gmra.mxu0 %v2830
    %v4373 = vpop.f32.mrf.mxu0
    %v4374 = vadd.f32 %v4205, %v4373
    %v4375 = vpop.f32.mrf.mxu0
    %v4376 = vadd.f32 %v4207, %v4375
    %4377 = vmatmul.bf16.gmra.mxu0 %v2834
    %v4378 = vpop.f32.mrf.mxu0
    %v4379 = vadd.f32 %v4210, %v4378
    %v4380 = vpop.f32.mrf.mxu0
    %v4381 = vadd.f32 %v4212, %v4380
    %4382 = vmatmul.bf16.gmra.mxu0 %v2838
    %v4383 = vpop.f32.mrf.mxu0
    %v4384 = vadd.f32 %v4215, %v4383
    %v4385 = vpop.f32.mrf.mxu0
    %v4386 = vadd.f32 %v4217, %v4385
    %4387 = vmatmul.bf16.gmra.mxu0 %v2842
    %v4388 = vpop.f32.mrf.mxu0
    %v4389 = vadd.f32 %v4220, %v4388
    %v4390 = vpop.f32.mrf.mxu0
    %v4391 = vadd.f32 %v4222, %v4390
    %4392 = vmatmul.bf16.gmra.mxu0 %v2846
    %v4393 = vpop.f32.mrf.mxu0
    %v4394 = vadd.f32 %v4225, %v4393
    %v4395 = vpop.f32.mrf.mxu0
    %v4396 = vadd.f32 %v4227, %v4395
    %4397 = vmatmul.bf16.gmra.mxu0 %v2850
    %v4398 = vpop.f32.mrf.mxu0
    %v4399 = vadd.f32 %v4230, %v4398
    %v4400 = vpop.f32.mrf.mxu0
    %v4401 = vadd.f32 %v4232, %v4400
    %4402 = vmatmul.bf16.gmra.mxu0 %v2854
    %v4403 = vpop.f32.mrf.mxu0
    %v4404 = vadd.f32 %v4235, %v4403
    %v4405 = vpop.f32.mrf.mxu0
    %v4406 = vadd.f32 %v4237, %v4405
    %4407 = vmatmul.bf16.gmra.mxu0 %v2858
    %v4408 = vpop.f32.mrf.mxu0
    %v4409 = vadd.f32 %v4240, %v4408
    %v4410 = vpop.f32.mrf.mxu0
    %v4411 = vadd.f32 %v4242, %v4410
    %4412 = vmatmul.bf16.gmra.mxu0 %v2862
    %v4413 = vpop.f32.mrf.mxu0
    %v4414 = vadd.f32 %v4245, %v4413
    %v4415 = vpop.f32.mrf.mxu0
    %v4416 = vadd.f32 %v4247, %v4415
    %4417 = vmatmul.bf16.gmra.mxu0 %v2866
    %v4418 = vpop.f32.mrf.mxu0
    %v4419 = vadd.f32 %v4250, %v4418
    %v4420 = vpop.f32.mrf.mxu0
    %v4421 = vadd.f32 %v4252, %v4420
    %4422 = vmatmul.bf16.gmra.mxu0 %v2870
    %v4423 = vpop.f32.mrf.mxu0
    %v4424 = vadd.f32 %v4255, %v4423
    %v4425 = vpop.f32.mrf.mxu0
    %v4426 = vadd.f32 %v4257, %v4425
    %4427 = vmatmul.bf16.gmra.mxu0 %v2874
    %v4428 = vpop.f32.mrf.mxu0
    %v4429 = vadd.f32 %v4260, %v4428
    %v4430 = vpop.f32.mrf.mxu0
    %v4431 = vadd.f32 %v4262, %v4430
    %4432 = vmatmul.bf16.gmra.mxu0 %v2878
    %v4433 = vpop.f32.mrf.mxu0
    %v4434 = vadd.f32 %v4265, %v4433
    %v4435 = vpop.f32.mrf.mxu0
    %v4436 = vadd.f32 %v4267, %v4435
    %4437 = vmatmul.bf16.gmra.mxu0 %v2882
    %v4438 = vpop.f32.mrf.mxu0
    %v4439 = vadd.f32 %v4270, %v4438
    %v4440 = vpop.f32.mrf.mxu0
    %v4441 = vadd.f32 %v4272, %v4440
    %4442 = vmatmul.bf16.gmra.mxu0 %v2886
    %v4443 = vpop.f32.mrf.mxu0
    %v4444 = vadd.f32 %v4275, %v4443
    %v4445 = vpop.f32.mrf.mxu0
    %v4446 = vadd.f32 %v4277, %v4445
    %4447 = vmatmul.bf16.gmra.mxu0 %v2890
    %v4448 = vpop.f32.mrf.mxu0
    %v4449 = vadd.f32 %v4280, %v4448
    %v4450 = vpop.f32.mrf.mxu0
    %v4451 = vadd.f32 %v4282, %v4450
    %4452 = vmatmul.bf16.gmra.mxu0 %v2894
    %v4453 = vpop.f32.mrf.mxu0
    %v4454 = vadd.f32 %v4285, %v4453
    %v4455 = vpop.f32.mrf.mxu0
    %v4456 = vadd.f32 %v4287, %v4455
    %4457 = vmatmul.bf16.gmra.mxu0 %v2898
    %v4458 = vpop.f32.mrf.mxu0
    %v4459 = vadd.f32 %v4290, %v4458
    %v4460 = vpop.f32.mrf.mxu0
    %v4461 = vadd.f32 %v4292, %v4460
    %4462 = vmatmul.bf16.gmra.mxu0 %v2902
    %v4463 = vpop.f32.mrf.mxu0
    %v4464 = vadd.f32 %v4295, %v4463
    %v4465 = vpop.f32.mrf.mxu0
    %v4466 = vadd.f32 %v4297, %v4465
    %4467 = vmatmul.bf16.gmra.mxu0 %v2906
    %v4468 = vpop.f32.mrf.mxu0
    %v4469 = vadd.f32 %v4300, %v4468
    %v4470 = vpop.f32.mrf.mxu0
    %v4471 = vadd.f32 %v4302, %v4470
    %4472 = vmatmul.bf16.gmra.mxu0 %v2910
    %v4473 = vpop.f32.mrf.mxu0
    %v4474 = vadd.f32 %v4305, %v4473
    %v4475 = vpop.f32.mrf.mxu0
    %v4476 = vadd.f32 %v4307, %v4475
    %4477 = vmatmul.bf16.gmra.mxu0 %v2914
    %v4478 = vpop.f32.mrf.mxu0
    %v4479 = vadd.f32 %v4310, %v4478
    %v4480 = vpop.f32.mrf.mxu0
    %v4481 = vadd.f32 %v4312, %v4480
    %4482 = vdwg.mxu0
    %4483 = vmatpush.bf16.msra.mxu0 %v3235
    %4484 = vmatpush.bf16.msra.mxu0 %v3233
    %4485 = vmatpush.bf16.msra.mxu0 %v3231
    %4486 = vmatpush.bf16.msra.mxu0 %v3229
    %4487 = vmatpush.bf16.msra.mxu0 %v3227
    %4488 = vmatpush.bf16.msra.mxu0 %v3225
    %4489 = vmatpush.bf16.msra.mxu0 %v3223
    %4490 = vmatpush.bf16.msra.mxu0 %v3221
    %4491 = vmatmul.bf16.gmra.mxu0 %v2791
    %v4492 = vpop.f32.mrf.mxu0
    %v4493 = vadd.f32 %v4324, %v4492
    %v4494 = vpop.f32.mrf.mxu0
    %v4495 = vadd.f32 %v4326, %v4494
    %4496 = vmatmul.bf16.gmra.mxu0 %v2795
    %v4497 = vpop.f32.mrf.mxu0
    %v4498 = vadd.f32 %v4329, %v4497
    %v4499 = vpop.f32.mrf.mxu0
    %v4500 = vadd.f32 %v4331, %v4499
    %4501 = vmatmul.bf16.gmra.mxu0 %v2799
    %v4502 = vpop.f32.mrf.mxu0
    %v4503 = vadd.f32 %v4334, %v4502
    %v4504 = vpop.f32.mrf.mxu0
    %v4505 = vadd.f32 %v4336, %v4504
    %4506 = vmatmul.bf16.gmra.mxu0 %v2803
    %v4507 = vpop.f32.mrf.mxu0
    %v4508 = vadd.f32 %v4339, %v4507
    %v4509 = vpop.f32.mrf.mxu0
    %v4510 = vadd.f32 %v4341, %v4509
    %4511 = vmatmul.bf16.gmra.mxu0 %v2807
    %v4512 = vpop.f32.mrf.mxu0
    %v4513 = vadd.f32 %v4344, %v4512
    %v4514 = vpop.f32.mrf.mxu0
    %v4515 = vadd.f32 %v4346, %v4514
    %4516 = vmatmul.bf16.gmra.mxu0 %v2811
    %v4517 = vpop.f32.mrf.mxu0
    %v4518 = vadd.f32 %v4349, %v4517
    %v4519 = vpop.f32.mrf.mxu0
    %v4520 = vadd.f32 %v4351, %v4519
    %4521 = vmatmul.bf16.gmra.mxu0 %v2815
    %v4522 = vpop.f32.mrf.mxu0
    %v4523 = vadd.f32 %v4354, %v4522
    %v4524 = vpop.f32.mrf.mxu0
    %v4525 = vadd.f32 %v4356, %v4524
    %4526 = vmatmul.bf16.gmra.mxu0 %v2819
    %v4527 = vpop.f32.mrf.mxu0
    %v4528 = vadd.f32 %v4359, %v4527
    %v4529 = vpop.f32.mrf.mxu0
    %v4530 = vadd.f32 %v4361, %v4529
    %4531 = vmatmul.bf16.gmra.mxu0 %v2823
    %v4532 = vpop.f32.mrf.mxu0
    %v4533 = vadd.f32 %v4364, %v4532
    %v4534 = vpop.f32.mrf.mxu0
    %v4535 = vadd.f32 %v4366, %v4534
    %4536 = vmatmul.bf16.gmra.mxu0 %v2827
    %v4537 = vpop.f32.mrf.mxu0
    %v4538 = vadd.f32 %v4369, %v4537
    %v4539 = vpop.f32.mrf.mxu0
    %v4540 = vadd.f32 %v4371, %v4539
    %4541 = vmatmul.bf16.gmra.mxu0 %v2831
    %v4542 = vpop.f32.mrf.mxu0
    %v4543 = vadd.f32 %v4374, %v4542
    %v4544 = vpop.f32.mrf.mxu0
    %v4545 = vadd.f32 %v4376, %v4544
    %4546 = vmatmul.bf16.gmra.mxu0 %v2835
    %v4547 = vpop.f32.mrf.mxu0
    %v4548 = vadd.f32 %v4379, %v4547
    %v4549 = vpop.f32.mrf.mxu0
    %v4550 = vadd.f32 %v4381, %v4549
    %4551 = vmatmul.bf16.gmra.mxu0 %v2839
    %v4552 = vpop.f32.mrf.mxu0
    %v4553 = vadd.f32 %v4384, %v4552
    %v4554 = vpop.f32.mrf.mxu0
    %v4555 = vadd.f32 %v4386, %v4554
    %4556 = vmatmul.bf16.gmra.mxu0 %v2843
    %v4557 = vpop.f32.mrf.mxu0
    %v4558 = vadd.f32 %v4389, %v4557
    %v4559 = vpop.f32.mrf.mxu0
    %v4560 = vadd.f32 %v4391, %v4559
    %4561 = vmatmul.bf16.gmra.mxu0 %v2847
    %v4562 = vpop.f32.mrf.mxu0
    %v4563 = vadd.f32 %v4394, %v4562
    %v4564 = vpop.f32.mrf.mxu0
    %v4565 = vadd.f32 %v4396, %v4564
    %4566 = vmatmul.bf16.gmra.mxu0 %v2851
    %v4567 = vpop.f32.mrf.mxu0
    %v4568 = vadd.f32 %v4399, %v4567
    %v4569 = vpop.f32.mrf.mxu0
    %v4570 = vadd.f32 %v4401, %v4569
    %4571 = vmatmul.bf16.gmra.mxu0 %v2855
    %v4572 = vpop.f32.mrf.mxu0
    %v4573 = vadd.f32 %v4404, %v4572
    %v4574 = vpop.f32.mrf.mxu0
    %v4575 = vadd.f32 %v4406, %v4574
    %4576 = vmatmul.bf16.gmra.mxu0 %v2859
    %v4577 = vpop.f32.mrf.mxu0
    %v4578 = vadd.f32 %v4409, %v4577
    %v4579 = vpop.f32.mrf.mxu0
    %v4580 = vadd.f32 %v4411, %v4579
    %4581 = vmatmul.bf16.gmra.mxu0 %v2863
    %v4582 = vpop.f32.mrf.mxu0
    %v4583 = vadd.f32 %v4414, %v4582
    %v4584 = vpop.f32.mrf.mxu0
    %v4585 = vadd.f32 %v4416, %v4584
    %4586 = vmatmul.bf16.gmra.mxu0 %v2867
    %v4587 = vpop.f32.mrf.mxu0
    %v4588 = vadd.f32 %v4419, %v4587
    %v4589 = vpop.f32.mrf.mxu0
    %v4590 = vadd.f32 %v4421, %v4589
    %4591 = vmatmul.bf16.gmra.mxu0 %v2871
    %v4592 = vpop.f32.mrf.mxu0
    %v4593 = vadd.f32 %v4424, %v4592
    %v4594 = vpop.f32.mrf.mxu0
    %v4595 = vadd.f32 %v4426, %v4594
    %4596 = vmatmul.bf16.gmra.mxu0 %v2875
    %v4597 = vpop.f32.mrf.mxu0
    %v4598 = vadd.f32 %v4429, %v4597
    %v4599 = vpop.f32.mrf.mxu0
    %v4600 = vadd.f32 %v4431, %v4599
    %4601 = vmatmul.bf16.gmra.mxu0 %v2879
    %v4602 = vpop.f32.mrf.mxu0
    %v4603 = vadd.f32 %v4434, %v4602
    %v4604 = vpop.f32.mrf.mxu0
    %v4605 = vadd.f32 %v4436, %v4604
    %4606 = vmatmul.bf16.gmra.mxu0 %v2883
    %v4607 = vpop.f32.mrf.mxu0
    %v4608 = vadd.f32 %v4439, %v4607
    %v4609 = vpop.f32.mrf.mxu0
    %v4610 = vadd.f32 %v4441, %v4609
    %4611 = vmatmul.bf16.gmra.mxu0 %v2887
    %v4612 = vpop.f32.mrf.mxu0
    %v4613 = vadd.f32 %v4444, %v4612
    %v4614 = vpop.f32.mrf.mxu0
    %v4615 = vadd.f32 %v4446, %v4614
    %4616 = vmatmul.bf16.gmra.mxu0 %v2891
    %v4617 = vpop.f32.mrf.mxu0
    %v4618 = vadd.f32 %v4449, %v4617
    %v4619 = vpop.f32.mrf.mxu0
    %v4620 = vadd.f32 %v4451, %v4619
    %4621 = vmatmul.bf16.gmra.mxu0 %v2895
    %v4622 = vpop.f32.mrf.mxu0
    %v4623 = vadd.f32 %v4454, %v4622
    %v4624 = vpop.f32.mrf.mxu0
    %v4625 = vadd.f32 %v4456, %v4624
    %4626 = vmatmul.bf16.gmra.mxu0 %v2899
    %v4627 = vpop.f32.mrf.mxu0
    %v4628 = vadd.f32 %v4459, %v4627
    %v4629 = vpop.f32.mrf.mxu0
    %v4630 = vadd.f32 %v4461, %v4629
    %4631 = vmatmul.bf16.gmra.mxu0 %v2903
    %v4632 = vpop.f32.mrf.mxu0
    %v4633 = vadd.f32 %v4464, %v4632
    %v4634 = vpop.f32.mrf.mxu0
    %v4635 = vadd.f32 %v4466, %v4634
    %4636 = vmatmul.bf16.gmra.mxu0 %v2907
    %v4637 = vpop.f32.mrf.mxu0
    %v4638 = vadd.f32 %v4469, %v4637
    %v4639 = vpop.f32.mrf.mxu0
    %v4640 = vadd.f32 %v4471, %v4639
    %4641 = vmatmul.bf16.gmra.mxu0 %v2911
    %v4642 = vpop.f32.mrf.mxu0
    %v4643 = vadd.f32 %v4474, %v4642
    %v4644 = vpop.f32.mrf.mxu0
    %v4645 = vadd.f32 %v4476, %v4644
    %4646 = vmatmul.bf16.gmra.mxu0 %v2915
    %v4647 = vpop.f32.mrf.mxu0
    %v4648 = vadd.f32 %v4479, %v4647
    %v4649 = vpop.f32.mrf.mxu0
    %v4650 = vadd.f32 %v4481, %v4649
    %4651 = vdwg.mxu0
    %v4652 = vadd.f32 %v3817, %v3819
    %v4653 = vadd.f32 %v4652, %v3822
    %v4654 = vadd.f32 %v4653, %v3824
    %v4655 = vadd.f32 %v4654, %v3827
    %v4656 = vadd.f32 %v4655, %v3829
    %v4657 = vadd.f32 %v4656, %v3832
    %v4658 = vadd.f32 %v4657, %v3834
    %v4659 = vadd.f32 %v4658, %v3837
    %v4660 = vadd.f32 %v4659, %v3839
    %v4661 = vadd.f32 %v4660, %v3842
    %v4662 = vadd.f32 %v4661, %v3844
    %v4663 = vadd.f32 %v4662, %v3847
    %v4664 = vadd.f32 %v4663, %v3849
    %v4665 = vadd.f32 %v4664, %v3852
    %v4666 = vadd.f32 %v4665, %v3854
    %v4667 = vadd.f32 %v4666, %v3857
    %v4668 = vadd.f32 %v4667, %v3859
    %v4669 = vadd.f32 %v4668, %v3862
    %v4670 = vadd.f32 %v4669, %v3864
    %v4671 = vadd.f32 %v4670, %v3867
    %v4672 = vadd.f32 %v4671, %v3869
    %v4673 = vadd.f32 %v4672, %v3872
    %v4674 = vadd.f32 %v4673, %v3874
    %v4675 = vadd.f32 %v4674, %v3877
    %v4676 = vadd.f32 %v4675, %v3879
    %v4677 = vadd.f32 %v4676, %v3882
    %v4678 = vadd.f32 %v4677, %v3884
    %v4679 = vadd.f32 %v4678, %v3887
    %v4680 = vadd.f32 %v4679, %v3889
    %v4681 = vadd.f32 %v4680, %v3892
    %v4682 = vadd.f32 %v4681, %v3894
    %v4683 = vadd.f32 %v4682, %v3897
    %v4684 = vadd.f32 %v4683, %v3899
    %v4685 = vadd.f32 %v4684, %v3902
    %v4686 = vadd.f32 %v4685, %v3904
    %v4687 = vadd.f32 %v4686, %v3907
    %v4688 = vadd.f32 %v4687, %v3909
    %v4689 = vadd.f32 %v4688, %v3912
    %v4690 = vadd.f32 %v4689, %v3914
    %v4691 = vadd.f32 %v4690, %v3917
    %v4692 = vadd.f32 %v4691, %v3919
    %v4693 = vadd.f32 %v4692, %v3922
    %v4694 = vadd.f32 %v4693, %v3924
    %v4695 = vadd.f32 %v4694, %v3927
    %v4696 = vadd.f32 %v4695, %v3929
    %v4697 = vadd.f32 %v4696, %v3932
    %v4698 = vadd.f32 %v4697, %v3934
    %v4699 = vadd.f32 %v4698, %v3937
    %v4700 = vadd.f32 %v4699, %v3939
    %v4701 = vadd.f32 %v4700, %v3942
    %v4702 = vadd.f32 %v4701, %v3944
    %v4703 = vadd.f32 %v4702, %v3947
    %v4704 = vadd.f32 %v4703, %v3949
    %v4705 = vadd.f32 %v4704, %v3952
    %v4706 = vadd.f32 %v4705, %v3954
    %v4707 = vadd.f32 %v4706, %v3957
    %v4708 = vadd.f32 %v4707, %v3959
    %v4709 = vadd.f32 %v4708, %v3962
    %v4710 = vadd.f32 %v4709, %v3964
    %v4711 = vadd.f32 %v4710, %v3967
    %v4712 = vadd.f32 %v4711, %v3969
    %v4713 = vadd.f32 %v4712, %v3972
    %v4714 = vadd.f32 %v4713, %v3974
    %v4715 = vrot.slane %v4714, 4
    %v4716 = vadd.f32 %v4714, %v4715
    %v4717 = vrot.slane %v4716, 2
    %v4718 = vadd.f32 %v4716, %v4717
    %v4719 = vrot.slane %v4718, 1
    %v4720 = vadd.f32 %v4718, %v4719
    %v4721 = vadd.f32 %v4493, %v4495
    %v4722 = vadd.f32 %v4721, %v4498
    %v4723 = vadd.f32 %v4722, %v4500
    %v4724 = vadd.f32 %v4723, %v4503
    %v4725 = vadd.f32 %v4724, %v4505
    %v4726 = vadd.f32 %v4725, %v4508
    %v4727 = vadd.f32 %v4726, %v4510
    %v4728 = vadd.f32 %v4727, %v4513
    %v4729 = vadd.f32 %v4728, %v4515
    %v4730 = vadd.f32 %v4729, %v4518
    %v4731 = vadd.f32 %v4730, %v4520
    %v4732 = vadd.f32 %v4731, %v4523
    %v4733 = vadd.f32 %v4732, %v4525
    %v4734 = vadd.f32 %v4733, %v4528
    %v4735 = vadd.f32 %v4734, %v4530
    %v4736 = vadd.f32 %v4735, %v4533
    %v4737 = vadd.f32 %v4736, %v4535
    %v4738 = vadd.f32 %v4737, %v4538
    %v4739 = vadd.f32 %v4738, %v4540
    %v4740 = vadd.f32 %v4739, %v4543
    %v4741 = vadd.f32 %v4740, %v4545
    %v4742 = vadd.f32 %v4741, %v4548
    %v4743 = vadd.f32 %v4742, %v4550
    %v4744 = vadd.f32 %v4743, %v4553
    %v4745 = vadd.f32 %v4744, %v4555
    %v4746 = vadd.f32 %v4745, %v4558
    %v4747 = vadd.f32 %v4746, %v4560
    %v4748 = vadd.f32 %v4747, %v4563
    %v4749 = vadd.f32 %v4748, %v4565
    %v4750 = vadd.f32 %v4749, %v4568
    %v4751 = vadd.f32 %v4750, %v4570
    %v4752 = vadd.f32 %v4751, %v4573
    %v4753 = vadd.f32 %v4752, %v4575
    %v4754 = vadd.f32 %v4753, %v4578
    %v4755 = vadd.f32 %v4754, %v4580
    %v4756 = vadd.f32 %v4755, %v4583
    %v4757 = vadd.f32 %v4756, %v4585
    %v4758 = vadd.f32 %v4757, %v4588
    %v4759 = vadd.f32 %v4758, %v4590
    %v4760 = vadd.f32 %v4759, %v4593
    %v4761 = vadd.f32 %v4760, %v4595
    %v4762 = vadd.f32 %v4761, %v4598
    %v4763 = vadd.f32 %v4762, %v4600
    %v4764 = vadd.f32 %v4763, %v4603
    %v4765 = vadd.f32 %v4764, %v4605
    %v4766 = vadd.f32 %v4765, %v4608
    %v4767 = vadd.f32 %v4766, %v4610
    %v4768 = vadd.f32 %v4767, %v4613
    %v4769 = vadd.f32 %v4768, %v4615
    %v4770 = vadd.f32 %v4769, %v4618
    %v4771 = vadd.f32 %v4770, %v4620
    %v4772 = vadd.f32 %v4771, %v4623
    %v4773 = vadd.f32 %v4772, %v4625
    %v4774 = vadd.f32 %v4773, %v4628
    %v4775 = vadd.f32 %v4774, %v4630
    %v4776 = vadd.f32 %v4775, %v4633
    %v4777 = vadd.f32 %v4776, %v4635
    %v4778 = vadd.f32 %v4777, %v4638
    %v4779 = vadd.f32 %v4778, %v4640
    %v4780 = vadd.f32 %v4779, %v4643
    %v4781 = vadd.f32 %v4780, %v4645
    %v4782 = vadd.f32 %v4781, %v4648
    %v4783 = vadd.f32 %v4782, %v4650
    %v4784 = vrot.slane %v4783, 4
    %v4785 = vadd.f32 %v4783, %v4784
    %v4786 = vrot.slane %v4785, 2
    %v4787 = vadd.f32 %v4785, %v4786
    %v4788 = vrot.slane %v4787, 1
    %v4789 = vadd.f32 %v4787, %v4788
    %v4790 = vmul.f32 %v4720, 0.001953125
    %v4791 = vmul.f32 %v4789, 0.001953125
    %v4792 = vmul.f32 %v3817, %v3817
    %v4793 = vmul.f32 %v4493, %v4493
    %v4794 = vmul.f32 %v3819, %v3819
    %v4795 = vmul.f32 %v4495, %v4495
    %v4796 = vmul.f32 %v3822, %v3822
    %v4797 = vmul.f32 %v4498, %v4498
    %v4798 = vmul.f32 %v3824, %v3824
    %v4799 = vmul.f32 %v4500, %v4500
    %v4800 = vmul.f32 %v3827, %v3827
    %v4801 = vmul.f32 %v4503, %v4503
    %v4802 = vmul.f32 %v3829, %v3829
    %v4803 = vmul.f32 %v4505, %v4505
    %v4804 = vmul.f32 %v3832, %v3832
    %v4805 = vmul.f32 %v4508, %v4508
    %v4806 = vmul.f32 %v3834, %v3834
    %v4807 = vmul.f32 %v4510, %v4510
    %v4808 = vmul.f32 %v3837, %v3837
    %v4809 = vmul.f32 %v4513, %v4513
    %v4810 = vmul.f32 %v3839, %v3839
    %v4811 = vmul.f32 %v4515, %v4515
    %v4812 = vmul.f32 %v3842, %v3842
    %v4813 = vmul.f32 %v4518, %v4518
    %v4814 = vmul.f32 %v3844, %v3844
    %v4815 = vmul.f32 %v4520, %v4520
    %v4816 = vmul.f32 %v3847, %v3847
    %v4817 = vmul.f32 %v4523, %v4523
    %v4818 = vmul.f32 %v3849, %v3849
    %v4819 = vmul.f32 %v4525, %v4525
    %v4820 = vmul.f32 %v3852, %v3852
    %v4821 = vmul.f32 %v4528, %v4528
    %v4822 = vmul.f32 %v3854, %v3854
    %v4823 = vmul.f32 %v4530, %v4530
    %v4824 = vmul.f32 %v3857, %v3857
    %v4825 = vmul.f32 %v4533, %v4533
    %v4826 = vmul.f32 %v3859, %v3859
    %v4827 = vmul.f32 %v4535, %v4535
    %v4828 = vmul.f32 %v3862, %v3862
    %v4829 = vmul.f32 %v4538, %v4538
    %v4830 = vmul.f32 %v3864, %v3864
    %v4831 = vmul.f32 %v4540, %v4540
    %v4832 = vmul.f32 %v3867, %v3867
    %v4833 = vmul.f32 %v4543, %v4543
    %v4834 = vmul.f32 %v3869, %v3869
    %v4835 = vmul.f32 %v4545, %v4545
    %v4836 = vmul.f32 %v3872, %v3872
    %v4837 = vmul.f32 %v4548, %v4548
    %v4838 = vmul.f32 %v3874, %v3874
    %v4839 = vmul.f32 %v4550, %v4550
    %v4840 = vmul.f32 %v3877, %v3877
    %v4841 = vmul.f32 %v4553, %v4553
    %v4842 = vmul.f32 %v3879, %v3879
    %v4843 = vmul.f32 %v4555, %v4555
    %v4844 = vmul.f32 %v3882, %v3882
    %v4845 = vmul.f32 %v4558, %v4558
    %v4846 = vmul.f32 %v3884, %v3884
    %v4847 = vmul.f32 %v4560, %v4560
    %v4848 = vmul.f32 %v3887, %v3887
    %v4849 = vmul.f32 %v4563, %v4563
    %v4850 = vmul.f32 %v3889, %v3889
    %v4851 = vmul.f32 %v4565, %v4565
    %v4852 = vmul.f32 %v3892, %v3892
    %v4853 = vmul.f32 %v4568, %v4568
    %v4854 = vmul.f32 %v3894, %v3894
    %v4855 = vmul.f32 %v4570, %v4570
    %v4856 = vmul.f32 %v3897, %v3897
    %v4857 = vmul.f32 %v4573, %v4573
    %v4858 = vmul.f32 %v3899, %v3899
    %v4859 = vmul.f32 %v4575, %v4575
    %v4860 = vmul.f32 %v3902, %v3902
    %v4861 = vmul.f32 %v4578, %v4578
    %v4862 = vmul.f32 %v3904, %v3904
    %v4863 = vmul.f32 %v4580, %v4580
    %v4864 = vmul.f32 %v3907, %v3907
    %v4865 = vmul.f32 %v4583, %v4583
    %v4866 = vmul.f32 %v3909, %v3909
    %v4867 = vmul.f32 %v4585, %v4585
    %v4868 = vmul.f32 %v3912, %v3912
    %v4869 = vmul.f32 %v4588, %v4588
    %v4870 = vmul.f32 %v3914, %v3914
    %v4871 = vmul.f32 %v4590, %v4590
    %v4872 = vmul.f32 %v3917, %v3917
    %v4873 = vmul.f32 %v4593, %v4593
    %v4874 = vmul.f32 %v3919, %v3919
    %v4875 = vmul.f32 %v4595, %v4595
    %v4876 = vmul.f32 %v3922, %v3922
    %v4877 = vmul.f32 %v4598, %v4598
    %v4878 = vmul.f32 %v3924, %v3924
    %v4879 = vmul.f32 %v4600, %v4600
    %v4880 = vmul.f32 %v3927, %v3927
    %v4881 = vmul.f32 %v4603, %v4603
    %v4882 = vmul.f32 %v3929, %v3929
    %v4883 = vmul.f32 %v4605, %v4605
    %v4884 = vmul.f32 %v3932, %v3932
    %v4885 = vmul.f32 %v4608, %v4608
    %v4886 = vmul.f32 %v3934, %v3934
    %v4887 = vmul.f32 %v4610, %v4610
    %v4888 = vmul.f32 %v3937, %v3937
    %v4889 = vmul.f32 %v4613, %v4613
    %v4890 = vmul.f32 %v3939, %v3939
    %v4891 = vmul.f32 %v4615, %v4615
    %v4892 = vmul.f32 %v3942, %v3942
    %v4893 = vmul.f32 %v4618, %v4618
    %v4894 = vmul.f32 %v3944, %v3944
    %v4895 = vmul.f32 %v4620, %v4620
    %v4896 = vmul.f32 %v3947, %v3947
    %v4897 = vmul.f32 %v4623, %v4623
    %v4898 = vmul.f32 %v3949, %v3949
    %v4899 = vmul.f32 %v4625, %v4625
    %v4900 = vmul.f32 %v3952, %v3952
    %v4901 = vmul.f32 %v4628, %v4628
    %v4902 = vmul.f32 %v3954, %v3954
    %v4903 = vmul.f32 %v4630, %v4630
    %v4904 = vmul.f32 %v3957, %v3957
    %v4905 = vmul.f32 %v4633, %v4633
    %v4906 = vmul.f32 %v3959, %v3959
    %v4907 = vmul.f32 %v4635, %v4635
    %v4908 = vmul.f32 %v3962, %v3962
    %v4909 = vmul.f32 %v4638, %v4638
    %v4910 = vmul.f32 %v3964, %v3964
    %v4911 = vmul.f32 %v4640, %v4640
    %v4912 = vmul.f32 %v3967, %v3967
    %v4913 = vmul.f32 %v4643, %v4643
    %v4914 = vmul.f32 %v3969, %v3969
    %v4915 = vmul.f32 %v4645, %v4645
    %v4916 = vmul.f32 %v3972, %v3972
    %v4917 = vmul.f32 %v4648, %v4648
    %v4918 = vmul.f32 %v3974, %v3974
    %v4919 = vmul.f32 %v4650, %v4650
    %v4920 = vadd.f32 %v4792, %v4794
    %v4921 = vadd.f32 %v4920, %v4796
    %v4922 = vadd.f32 %v4921, %v4798
    %v4923 = vadd.f32 %v4922, %v4800
    %v4924 = vadd.f32 %v4923, %v4802
    %v4925 = vadd.f32 %v4924, %v4804
    %v4926 = vadd.f32 %v4925, %v4806
    %v4927 = vadd.f32 %v4926, %v4808
    %v4928 = vadd.f32 %v4927, %v4810
    %v4929 = vadd.f32 %v4928, %v4812
    %v4930 = vadd.f32 %v4929, %v4814
    %v4931 = vadd.f32 %v4930, %v4816
    %v4932 = vadd.f32 %v4931, %v4818
    %v4933 = vadd.f32 %v4932, %v4820
    %v4934 = vadd.f32 %v4933, %v4822
    %v4935 = vadd.f32 %v4934, %v4824
    %v4936 = vadd.f32 %v4935, %v4826
    %v4937 = vadd.f32 %v4936, %v4828
    %v4938 = vadd.f32 %v4937, %v4830
    %v4939 = vadd.f32 %v4938, %v4832
    %v4940 = vadd.f32 %v4939, %v4834
    %v4941 = vadd.f32 %v4940, %v4836
    %v4942 = vadd.f32 %v4941, %v4838
    %v4943 = vadd.f32 %v4942, %v4840
    %v4944 = vadd.f32 %v4943, %v4842
    %v4945 = vadd.f32 %v4944, %v4844
    %v4946 = vadd.f32 %v4945, %v4846
    %v4947 = vadd.f32 %v4946, %v4848
    %v4948 = vadd.f32 %v4947, %v4850
    %v4949 = vadd.f32 %v4948, %v4852
    %v4950 = vadd.f32 %v4949, %v4854
    %v4951 = vadd.f32 %v4950, %v4856
    %v4952 = vadd.f32 %v4951, %v4858
    %v4953 = vadd.f32 %v4952, %v4860
    %v4954 = vadd.f32 %v4953, %v4862
    %v4955 = vadd.f32 %v4954, %v4864
    %v4956 = vadd.f32 %v4955, %v4866
    %v4957 = vadd.f32 %v4956, %v4868
    %v4958 = vadd.f32 %v4957, %v4870
    %v4959 = vadd.f32 %v4958, %v4872
    %v4960 = vadd.f32 %v4959, %v4874
    %v4961 = vadd.f32 %v4960, %v4876
    %v4962 = vadd.f32 %v4961, %v4878
    %v4963 = vadd.f32 %v4962, %v4880
    %v4964 = vadd.f32 %v4963, %v4882
    %v4965 = vadd.f32 %v4964, %v4884
    %v4966 = vadd.f32 %v4965, %v4886
    %v4967 = vadd.f32 %v4966, %v4888
    %v4968 = vadd.f32 %v4967, %v4890
    %v4969 = vadd.f32 %v4968, %v4892
    %v4970 = vadd.f32 %v4969, %v4894
    %v4971 = vadd.f32 %v4970, %v4896
    %v4972 = vadd.f32 %v4971, %v4898
    %v4973 = vadd.f32 %v4972, %v4900
    %v4974 = vadd.f32 %v4973, %v4902
    %v4975 = vadd.f32 %v4974, %v4904
    %v4976 = vadd.f32 %v4975, %v4906
    %v4977 = vadd.f32 %v4976, %v4908
    %v4978 = vadd.f32 %v4977, %v4910
    %v4979 = vadd.f32 %v4978, %v4912
    %v4980 = vadd.f32 %v4979, %v4914
    %v4981 = vadd.f32 %v4980, %v4916
    %v4982 = vadd.f32 %v4981, %v4918
    %v4983 = vrot.slane %v4982, 4
    %v4984 = vadd.f32 %v4982, %v4983
    %v4985 = vrot.slane %v4984, 2
    %v4986 = vadd.f32 %v4984, %v4985
    %v4987 = vrot.slane %v4986, 1
    %v4988 = vadd.f32 %v4986, %v4987
    %v4989 = vadd.f32 %v4793, %v4795
    %v4990 = vadd.f32 %v4989, %v4797
    %v4991 = vadd.f32 %v4990, %v4799
    %v4992 = vadd.f32 %v4991, %v4801
    %v4993 = vadd.f32 %v4992, %v4803
    %v4994 = vadd.f32 %v4993, %v4805
    %v4995 = vadd.f32 %v4994, %v4807
    %v4996 = vadd.f32 %v4995, %v4809
    %v4997 = vadd.f32 %v4996, %v4811
    %v4998 = vadd.f32 %v4997, %v4813
    %v4999 = vadd.f32 %v4998, %v4815
    %v5000 = vadd.f32 %v4999, %v4817
    %v5001 = vadd.f32 %v5000, %v4819
    %v5002 = vadd.f32 %v5001, %v4821
    %v5003 = vadd.f32 %v5002, %v4823
    %v5004 = vadd.f32 %v5003, %v4825
    %v5005 = vadd.f32 %v5004, %v4827
    %v5006 = vadd.f32 %v5005, %v4829
    %v5007 = vadd.f32 %v5006, %v4831
    %v5008 = vadd.f32 %v5007, %v4833
    %v5009 = vadd.f32 %v5008, %v4835
    %v5010 = vadd.f32 %v5009, %v4837
    %v5011 = vadd.f32 %v5010, %v4839
    %v5012 = vadd.f32 %v5011, %v4841
    %v5013 = vadd.f32 %v5012, %v4843
    %v5014 = vadd.f32 %v5013, %v4845
    %v5015 = vadd.f32 %v5014, %v4847
    %v5016 = vadd.f32 %v5015, %v4849
    %v5017 = vadd.f32 %v5016, %v4851
    %v5018 = vadd.f32 %v5017, %v4853
    %v5019 = vadd.f32 %v5018, %v4855
    %v5020 = vadd.f32 %v5019, %v4857
    %v5021 = vadd.f32 %v5020, %v4859
    %v5022 = vadd.f32 %v5021, %v4861
    %v5023 = vadd.f32 %v5022, %v4863
    %v5024 = vadd.f32 %v5023, %v4865
    %v5025 = vadd.f32 %v5024, %v4867
    %v5026 = vadd.f32 %v5025, %v4869
    %v5027 = vadd.f32 %v5026, %v4871
    %v5028 = vadd.f32 %v5027, %v4873
    %v5029 = vadd.f32 %v5028, %v4875
    %v5030 = vadd.f32 %v5029, %v4877
    %v5031 = vadd.f32 %v5030, %v4879
    %v5032 = vadd.f32 %v5031, %v4881
    %v5033 = vadd.f32 %v5032, %v4883
    %v5034 = vadd.f32 %v5033, %v4885
    %v5035 = vadd.f32 %v5034, %v4887
    %v5036 = vadd.f32 %v5035, %v4889
    %v5037 = vadd.f32 %v5036, %v4891
    %v5038 = vadd.f32 %v5037, %v4893
    %v5039 = vadd.f32 %v5038, %v4895
    %v5040 = vadd.f32 %v5039, %v4897
    %v5041 = vadd.f32 %v5040, %v4899
    %v5042 = vadd.f32 %v5041, %v4901
    %v5043 = vadd.f32 %v5042, %v4903
    %v5044 = vadd.f32 %v5043, %v4905
    %v5045 = vadd.f32 %v5044, %v4907
    %v5046 = vadd.f32 %v5045, %v4909
    %v5047 = vadd.f32 %v5046, %v4911
    %v5048 = vadd.f32 %v5047, %v4913
    %v5049 = vadd.f32 %v5048, %v4915
    %v5050 = vadd.f32 %v5049, %v4917
    %v5051 = vadd.f32 %v5050, %v4919
    %v5052 = vrot.slane %v5051, 4
    %v5053 = vadd.f32 %v5051, %v5052
    %v5054 = vrot.slane %v5053, 2
    %v5055 = vadd.f32 %v5053, %v5054
    %v5056 = vrot.slane %v5055, 1
    %v5057 = vadd.f32 %v5055, %v5056
    %v5058 = vmul.f32 %v4988, 0.001953125
    %v5059 = vmul.f32 %v5057, 0.001953125
    %v5060 = vmul.f32 %v4790, %v4790
    %v5061 = vmul.f32 %v4791, %v4791
    %v5062 = vsub.f32 %v5058, %v5060
    %v5063 = vsub.f32 %v5059, %v5061
    %v5064 = vmax.f32 %v5062, 0.0
    %v5065 = vmax.f32 %v5063, 0.0
    %v5066 = vld [vmem:[%s8] sm:$0x3]
    %v5067 = vadd.f32 %v5064, 1e-05
    %v5068 = vadd.f32 %v5065, 1e-05
    %v5069 = vrsqrt.pop %v5067
    %v5070 = vmul.f32 %v5069, %v5067
    %v5071 = vmul.f32 %v5070, %v5069
    %v5072 = vmul.f32 0.5, %v5071
    %v5073 = vsub.f32 1.5, %v5072
    %v5074 = vmul.f32 %v5069, %v5073
    %vm5075 = vweird.f32 %v5067
    %vm5076 = vweird.f32 %v5069
    %vm5077 = vmor %vm5075, %vm5076
    %v5078 = vsel %vm5077, %v5069, %v5074
    %v5079 = vrsqrt.pop %v5068
    %v5080 = vmul.f32 %v5079, %v5068
    %v5081 = vmul.f32 %v5080, %v5079
    %v5082 = vmul.f32 0.5, %v5081
    %v5083 = vsub.f32 1.5, %v5082
    %v5084 = vmul.f32 %v5079, %v5083
    %vm5085 = vweird.f32 %v5068
    %vm5086 = vweird.f32 %v5079
    %vm5087 = vmor %vm5085, %vm5086
    %v5088 = vsel %vm5087, %v5079, %v5084
    %v5091 = vrot.slane %v5088, 7
    %v5092 = vsel %vm1977, %v5078, %v5091
    %v5094 = vmul.f32 %v5066, %v5092
    %v5095 = vld [vmem:[#allocation10] sm:$0x3]
    %v5097 = vperm.slane %v5094, 0
    %v5098 = vperm.slane %v5094, 1
    %v5101 = vmul.f32 %v4790, %v5097
    %v5102 = vmul.f32 %v4791, %v5098
    %v5105 = vrot.slane %v5102, 7
    %v5106 = vsel %vm1977, %v5101, %v5105
    %v5108 = vsub.f32 %v5095, %v5106
    %v5109 = vmul.f32 %v3817, %v5097
    %v5110 = vmul.f32 %v4493, %v5098
    %v5111 = vmul.f32 %v3819, %v5097
    %v5112 = vmul.f32 %v4495, %v5098
    %v5113 = vmul.f32 %v3822, %v5097
    %v5114 = vmul.f32 %v4498, %v5098
    %v5115 = vmul.f32 %v3824, %v5097
    %v5116 = vmul.f32 %v4500, %v5098
    %v5117 = vmul.f32 %v3827, %v5097
    %v5118 = vmul.f32 %v4503, %v5098
    %v5119 = vmul.f32 %v3829, %v5097
    %v5120 = vmul.f32 %v4505, %v5098
    %v5121 = vmul.f32 %v3832, %v5097
    %v5122 = vmul.f32 %v4508, %v5098
    %v5123 = vmul.f32 %v3834, %v5097
    %v5124 = vmul.f32 %v4510, %v5098
    %v5125 = vmul.f32 %v3837, %v5097
    %v5126 = vmul.f32 %v4513, %v5098
    %v5127 = vmul.f32 %v3839, %v5097
    %v5128 = vmul.f32 %v4515, %v5098
    %v5129 = vmul.f32 %v3842, %v5097
    %v5130 = vmul.f32 %v4518, %v5098
    %v5131 = vmul.f32 %v3844, %v5097
    %v5132 = vmul.f32 %v4520, %v5098
    %v5133 = vmul.f32 %v3847, %v5097
    %v5134 = vmul.f32 %v4523, %v5098
    %v5135 = vmul.f32 %v3849, %v5097
    %v5136 = vmul.f32 %v4525, %v5098
    %v5137 = vmul.f32 %v3852, %v5097
    %v5138 = vmul.f32 %v4528, %v5098
    %v5139 = vmul.f32 %v3854, %v5097
    %v5140 = vmul.f32 %v4530, %v5098
    %v5141 = vmul.f32 %v3857, %v5097
    %v5142 = vmul.f32 %v4533, %v5098
    %v5143 = vmul.f32 %v3859, %v5097
    %v5144 = vmul.f32 %v4535, %v5098
    %v5145 = vmul.f32 %v3862, %v5097
    %v5146 = vmul.f32 %v4538, %v5098
    %v5147 = vmul.f32 %v3864, %v5097
    %v5148 = vmul.f32 %v4540, %v5098
    %v5149 = vmul.f32 %v3867, %v5097
    %v5150 = vmul.f32 %v4543, %v5098
    %v5151 = vmul.f32 %v3869, %v5097
    %v5152 = vmul.f32 %v4545, %v5098
    %v5153 = vmul.f32 %v3872, %v5097
    %v5154 = vmul.f32 %v4548, %v5098
    %v5155 = vmul.f32 %v3874, %v5097
    %v5156 = vmul.f32 %v4550, %v5098
    %v5157 = vmul.f32 %v3877, %v5097
    %v5158 = vmul.f32 %v4553, %v5098
    %v5159 = vmul.f32 %v3879, %v5097
    %v5160 = vmul.f32 %v4555, %v5098
    %v5161 = vmul.f32 %v3882, %v5097
    %v5162 = vmul.f32 %v4558, %v5098
    %v5163 = vmul.f32 %v3884, %v5097
    %v5164 = vmul.f32 %v4560, %v5098
    %v5165 = vmul.f32 %v3887, %v5097
    %v5166 = vmul.f32 %v4563, %v5098
    %v5167 = vmul.f32 %v3889, %v5097
    %v5168 = vmul.f32 %v4565, %v5098
    %v5169 = vmul.f32 %v3892, %v5097
    %v5170 = vmul.f32 %v4568, %v5098
    %v5171 = vmul.f32 %v3894, %v5097
    %v5172 = vmul.f32 %v4570, %v5098
    %v5173 = vmul.f32 %v3897, %v5097
    %v5174 = vmul.f32 %v4573, %v5098
    %v5175 = vmul.f32 %v3899, %v5097
    %v5176 = vmul.f32 %v4575, %v5098
    %v5177 = vmul.f32 %v3902, %v5097
    %v5178 = vmul.f32 %v4578, %v5098
    %v5179 = vmul.f32 %v3904, %v5097
    %v5180 = vmul.f32 %v4580, %v5098
    %v5181 = vmul.f32 %v3907, %v5097
    %v5182 = vmul.f32 %v4583, %v5098
    %v5183 = vmul.f32 %v3909, %v5097
    %v5184 = vmul.f32 %v4585, %v5098
    %v5185 = vmul.f32 %v3912, %v5097
    %v5186 = vmul.f32 %v4588, %v5098
    %v5187 = vmul.f32 %v3914, %v5097
    %v5188 = vmul.f32 %v4590, %v5098
    %v5189 = vmul.f32 %v3917, %v5097
    %v5190 = vmul.f32 %v4593, %v5098
    %v5191 = vmul.f32 %v3919, %v5097
    %v5192 = vmul.f32 %v4595, %v5098
    %v5193 = vmul.f32 %v3922, %v5097
    %v5194 = vmul.f32 %v4598, %v5098
    %v5195 = vmul.f32 %v3924, %v5097
    %v5196 = vmul.f32 %v4600, %v5098
    %v5197 = vmul.f32 %v3927, %v5097
    %v5198 = vmul.f32 %v4603, %v5098
    %v5199 = vmul.f32 %v3929, %v5097
    %v5200 = vmul.f32 %v4605, %v5098
    %v5201 = vmul.f32 %v3932, %v5097
    %v5202 = vmul.f32 %v4608, %v5098
    %v5203 = vmul.f32 %v3934, %v5097
    %v5204 = vmul.f32 %v4610, %v5098
    %v5205 = vmul.f32 %v3937, %v5097
    %v5206 = vmul.f32 %v4613, %v5098
    %v5207 = vmul.f32 %v3939, %v5097
    %v5208 = vmul.f32 %v4615, %v5098
    %v5209 = vmul.f32 %v3942, %v5097
    %v5210 = vmul.f32 %v4618, %v5098
    %v5211 = vmul.f32 %v3944, %v5097
    %v5212 = vmul.f32 %v4620, %v5098
    %v5213 = vmul.f32 %v3947, %v5097
    %v5214 = vmul.f32 %v4623, %v5098
    %v5215 = vmul.f32 %v3949, %v5097
    %v5216 = vmul.f32 %v4625, %v5098
    %v5217 = vmul.f32 %v3952, %v5097
    %v5218 = vmul.f32 %v4628, %v5098
    %v5219 = vmul.f32 %v3954, %v5097
    %v5220 = vmul.f32 %v4630, %v5098
    %v5221 = vmul.f32 %v3957, %v5097
    %v5222 = vmul.f32 %v4633, %v5098
    %v5223 = vmul.f32 %v3959, %v5097
    %v5224 = vmul.f32 %v4635, %v5098
    %v5225 = vmul.f32 %v3962, %v5097
    %v5226 = vmul.f32 %v4638, %v5098
    %v5227 = vmul.f32 %v3964, %v5097
    %v5228 = vmul.f32 %v4640, %v5098
    %v5229 = vmul.f32 %v3967, %v5097
    %v5230 = vmul.f32 %v4643, %v5098
    %v5231 = vmul.f32 %v3969, %v5097
    %v5232 = vmul.f32 %v4645, %v5098
    %v5233 = vmul.f32 %v3972, %v5097
    %v5234 = vmul.f32 %v4648, %v5098
    %v5235 = vmul.f32 %v3974, %v5097
    %v5236 = vmul.f32 %v4650, %v5098
    %v5238 = vperm.slane %v5108, 0
    %v5239 = vperm.slane %v5108, 1
    %v5242 = vadd.f32 %v5109, %v5238
    %v5243 = vadd.f32 %v5110, %v5239
    %v5244 = vadd.f32 %v5111, %v5238
    %v5245 = vadd.f32 %v5112, %v5239
    %v5246 = vadd.f32 %v5113, %v5238
    %v5247 = vadd.f32 %v5114, %v5239
    %v5248 = vadd.f32 %v5115, %v5238
    %v5249 = vadd.f32 %v5116, %v5239
    %v5250 = vadd.f32 %v5117, %v5238
    %v5251 = vadd.f32 %v5118, %v5239
    %v5252 = vadd.f32 %v5119, %v5238
    %v5253 = vadd.f32 %v5120, %v5239
    %v5254 = vadd.f32 %v5121, %v5238
    %v5255 = vadd.f32 %v5122, %v5239
    %v5256 = vadd.f32 %v5123, %v5238
    %v5257 = vadd.f32 %v5124, %v5239
    %v5258 = vadd.f32 %v5125, %v5238
    %v5259 = vadd.f32 %v5126, %v5239
    %v5260 = vadd.f32 %v5127, %v5238
    %v5261 = vadd.f32 %v5128, %v5239
    %v5262 = vadd.f32 %v5129, %v5238
    %v5263 = vadd.f32 %v5130, %v5239
    %v5264 = vadd.f32 %v5131, %v5238
    %v5265 = vadd.f32 %v5132, %v5239
    %v5266 = vadd.f32 %v5133, %v5238
    %v5267 = vadd.f32 %v5134, %v5239
    %v5268 = vadd.f32 %v5135, %v5238
    %v5269 = vadd.f32 %v5136, %v5239
    %v5270 = vadd.f32 %v5137, %v5238
    %v5271 = vadd.f32 %v5138, %v5239
    %v5272 = vadd.f32 %v5139, %v5238
    %v5273 = vadd.f32 %v5140, %v5239
    %v5274 = vadd.f32 %v5141, %v5238
    %v5275 = vadd.f32 %v5142, %v5239
    %v5276 = vadd.f32 %v5143, %v5238
    %v5277 = vadd.f32 %v5144, %v5239
    %v5278 = vadd.f32 %v5145, %v5238
    %v5279 = vadd.f32 %v5146, %v5239
    %v5280 = vadd.f32 %v5147, %v5238
    %v5281 = vadd.f32 %v5148, %v5239
    %v5282 = vadd.f32 %v5149, %v5238
    %v5283 = vadd.f32 %v5150, %v5239
    %v5284 = vadd.f32 %v5151, %v5238
    %v5285 = vadd.f32 %v5152, %v5239
    %v5286 = vadd.f32 %v5153, %v5238
    %v5287 = vadd.f32 %v5154, %v5239
    %v5288 = vadd.f32 %v5155, %v5238
    %v5289 = vadd.f32 %v5156, %v5239
    %v5290 = vadd.f32 %v5157, %v5238
    %v5291 = vadd.f32 %v5158, %v5239
    %v5292 = vadd.f32 %v5159, %v5238
    %v5293 = vadd.f32 %v5160, %v5239
    %v5294 = vadd.f32 %v5161, %v5238
    %v5295 = vadd.f32 %v5162, %v5239
    %v5296 = vadd.f32 %v5163, %v5238
    %v5297 = vadd.f32 %v5164, %v5239
    %v5298 = vadd.f32 %v5165, %v5238
    %v5299 = vadd.f32 %v5166, %v5239
    %v5300 = vadd.f32 %v5167, %v5238
    %v5301 = vadd.f32 %v5168, %v5239
    %v5302 = vadd.f32 %v5169, %v5238
    %v5303 = vadd.f32 %v5170, %v5239
    %v5304 = vadd.f32 %v5171, %v5238
    %v5305 = vadd.f32 %v5172, %v5239
    %v5306 = vadd.f32 %v5173, %v5238
    %v5307 = vadd.f32 %v5174, %v5239
    %v5308 = vadd.f32 %v5175, %v5238
    %v5309 = vadd.f32 %v5176, %v5239
    %v5310 = vadd.f32 %v5177, %v5238
    %v5311 = vadd.f32 %v5178, %v5239
    %v5312 = vadd.f32 %v5179, %v5238
    %v5313 = vadd.f32 %v5180, %v5239
    %v5314 = vadd.f32 %v5181, %v5238
    %v5315 = vadd.f32 %v5182, %v5239
    %v5316 = vadd.f32 %v5183, %v5238
    %v5317 = vadd.f32 %v5184, %v5239
    %v5318 = vadd.f32 %v5185, %v5238
    %v5319 = vadd.f32 %v5186, %v5239
    %v5320 = vadd.f32 %v5187, %v5238
    %v5321 = vadd.f32 %v5188, %v5239
    %v5322 = vadd.f32 %v5189, %v5238
    %v5323 = vadd.f32 %v5190, %v5239
    %v5324 = vadd.f32 %v5191, %v5238
    %v5325 = vadd.f32 %v5192, %v5239
    %v5326 = vadd.f32 %v5193, %v5238
    %v5327 = vadd.f32 %v5194, %v5239
    %v5328 = vadd.f32 %v5195, %v5238
    %v5329 = vadd.f32 %v5196, %v5239
    %v5330 = vadd.f32 %v5197, %v5238
    %v5331 = vadd.f32 %v5198, %v5239
    %v5332 = vadd.f32 %v5199, %v5238
    %v5333 = vadd.f32 %v5200, %v5239
    %v5334 = vadd.f32 %v5201, %v5238
    %v5335 = vadd.f32 %v5202, %v5239
    %v5336 = vadd.f32 %v5203, %v5238
    %v5337 = vadd.f32 %v5204, %v5239
    %v5338 = vadd.f32 %v5205, %v5238
    %v5339 = vadd.f32 %v5206, %v5239
    %v5340 = vadd.f32 %v5207, %v5238
    %v5341 = vadd.f32 %v5208, %v5239
    %v5342 = vadd.f32 %v5209, %v5238
    %v5343 = vadd.f32 %v5210, %v5239
    %v5344 = vadd.f32 %v5211, %v5238
    %v5345 = vadd.f32 %v5212, %v5239
    %v5346 = vadd.f32 %v5213, %v5238
    %v5347 = vadd.f32 %v5214, %v5239
    %v5348 = vadd.f32 %v5215, %v5238
    %v5349 = vadd.f32 %v5216, %v5239
    %v5350 = vadd.f32 %v5217, %v5238
    %v5351 = vadd.f32 %v5218, %v5239
    %v5352 = vadd.f32 %v5219, %v5238
    %v5353 = vadd.f32 %v5220, %v5239
    %v5354 = vadd.f32 %v5221, %v5238
    %v5355 = vadd.f32 %v5222, %v5239
    %v5356 = vadd.f32 %v5223, %v5238
    %v5357 = vadd.f32 %v5224, %v5239
    %v5358 = vadd.f32 %v5225, %v5238
    %v5359 = vadd.f32 %v5226, %v5239
    %v5360 = vadd.f32 %v5227, %v5238
    %v5361 = vadd.f32 %v5228, %v5239
    %v5362 = vadd.f32 %v5229, %v5238
    %v5363 = vadd.f32 %v5230, %v5239
    %v5364 = vadd.f32 %v5231, %v5238
    %v5365 = vadd.f32 %v5232, %v5239
    %v5366 = vadd.f32 %v5233, %v5238
    %v5367 = vadd.f32 %v5234, %v5239
    %v5368 = vadd.f32 %v5235, %v5238
    %v5369 = vadd.f32 %v5236, %v5239
    %v5370 = vmax.f32 %v5242, 0.0
    %v5371 = vmax.f32 %v5243, 0.0
    %v5372 = vmax.f32 %v5244, 0.0
    %v5373 = vmax.f32 %v5245, 0.0
    %v5374 = vmax.f32 %v5246, 0.0
    %v5375 = vmax.f32 %v5247, 0.0
    %v5376 = vmax.f32 %v5248, 0.0
    %v5377 = vmax.f32 %v5249, 0.0
    %v5378 = vmax.f32 %v5250, 0.0
    %v5379 = vmax.f32 %v5251, 0.0
    %v5380 = vmax.f32 %v5252, 0.0
    %v5381 = vmax.f32 %v5253, 0.0
    %v5382 = vmax.f32 %v5254, 0.0
    %v5383 = vmax.f32 %v5255, 0.0
    %v5384 = vmax.f32 %v5256, 0.0
    %v5385 = vmax.f32 %v5257, 0.0
    %v5386 = vmax.f32 %v5258, 0.0
    %v5387 = vmax.f32 %v5259, 0.0
    %v5388 = vmax.f32 %v5260, 0.0
    %v5389 = vmax.f32 %v5261, 0.0
    %v5390 = vmax.f32 %v5262, 0.0
    %v5391 = vmax.f32 %v5263, 0.0
    %v5392 = vmax.f32 %v5264, 0.0
    %v5393 = vmax.f32 %v5265, 0.0
    %v5394 = vmax.f32 %v5266, 0.0
    %v5395 = vmax.f32 %v5267, 0.0
    %v5396 = vmax.f32 %v5268, 0.0
    %v5397 = vmax.f32 %v5269, 0.0
    %v5398 = vmax.f32 %v5270, 0.0
    %v5399 = vmax.f32 %v5271, 0.0
    %v5400 = vmax.f32 %v5272, 0.0
    %v5401 = vmax.f32 %v5273, 0.0
    %v5402 = vmax.f32 %v5274, 0.0
    %v5403 = vmax.f32 %v5275, 0.0
    %v5404 = vmax.f32 %v5276, 0.0
    %v5405 = vmax.f32 %v5277, 0.0
    %v5406 = vmax.f32 %v5278, 0.0
    %v5407 = vmax.f32 %v5279, 0.0
    %v5408 = vmax.f32 %v5280, 0.0
    %v5409 = vmax.f32 %v5281, 0.0
    %v5410 = vmax.f32 %v5282, 0.0
    %v5411 = vmax.f32 %v5283, 0.0
    %v5412 = vmax.f32 %v5284, 0.0
    %v5413 = vmax.f32 %v5285, 0.0
    %v5414 = vmax.f32 %v5286, 0.0
    %v5415 = vmax.f32 %v5287, 0.0
    %v5416 = vmax.f32 %v5288, 0.0
    %v5417 = vmax.f32 %v5289, 0.0
    %v5418 = vmax.f32 %v5290, 0.0
    %v5419 = vmax.f32 %v5291, 0.0
    %v5420 = vmax.f32 %v5292, 0.0
    %v5421 = vmax.f32 %v5293, 0.0
    %v5422 = vmax.f32 %v5294, 0.0
    %v5423 = vmax.f32 %v5295, 0.0
    %v5424 = vmax.f32 %v5296, 0.0
    %v5425 = vmax.f32 %v5297, 0.0
    %v5426 = vmax.f32 %v5298, 0.0
    %v5427 = vmax.f32 %v5299, 0.0
    %v5428 = vmax.f32 %v5300, 0.0
    %v5429 = vmax.f32 %v5301, 0.0
    %v5430 = vmax.f32 %v5302, 0.0
    %v5431 = vmax.f32 %v5303, 0.0
    %v5432 = vmax.f32 %v5304, 0.0
    %v5433 = vmax.f32 %v5305, 0.0
    %v5434 = vmax.f32 %v5306, 0.0
    %v5435 = vmax.f32 %v5307, 0.0
    %v5436 = vmax.f32 %v5308, 0.0
    %v5437 = vmax.f32 %v5309, 0.0
    %v5438 = vmax.f32 %v5310, 0.0
    %v5439 = vmax.f32 %v5311, 0.0
    %v5440 = vmax.f32 %v5312, 0.0
    %v5441 = vmax.f32 %v5313, 0.0
    %v5442 = vmax.f32 %v5314, 0.0
    %v5443 = vmax.f32 %v5315, 0.0
    %v5444 = vmax.f32 %v5316, 0.0
    %v5445 = vmax.f32 %v5317, 0.0
    %v5446 = vmax.f32 %v5318, 0.0
    %v5447 = vmax.f32 %v5319, 0.0
    %v5448 = vmax.f32 %v5320, 0.0
    %v5449 = vmax.f32 %v5321, 0.0
    %v5450 = vmax.f32 %v5322, 0.0
    %v5451 = vmax.f32 %v5323, 0.0
    %v5452 = vmax.f32 %v5324, 0.0
    %v5453 = vmax.f32 %v5325, 0.0
    %v5454 = vmax.f32 %v5326, 0.0
    %v5455 = vmax.f32 %v5327, 0.0
    %v5456 = vmax.f32 %v5328, 0.0
    %v5457 = vmax.f32 %v5329, 0.0
    %v5458 = vmax.f32 %v5330, 0.0
    %v5459 = vmax.f32 %v5331, 0.0
    %v5460 = vmax.f32 %v5332, 0.0
    %v5461 = vmax.f32 %v5333, 0.0
    %v5462 = vmax.f32 %v5334, 0.0
    %v5463 = vmax.f32 %v5335, 0.0
    %v5464 = vmax.f32 %v5336, 0.0
    %v5465 = vmax.f32 %v5337, 0.0
    %v5466 = vmax.f32 %v5338, 0.0
    %v5467 = vmax.f32 %v5339, 0.0
    %v5468 = vmax.f32 %v5340, 0.0
    %v5469 = vmax.f32 %v5341, 0.0
    %v5470 = vmax.f32 %v5342, 0.0
    %v5471 = vmax.f32 %v5343, 0.0
    %v5472 = vmax.f32 %v5344, 0.0
    %v5473 = vmax.f32 %v5345, 0.0
    %v5474 = vmax.f32 %v5346, 0.0
    %v5475 = vmax.f32 %v5347, 0.0
    %v5476 = vmax.f32 %v5348, 0.0
    %v5477 = vmax.f32 %v5349, 0.0
    %v5478 = vmax.f32 %v5350, 0.0
    %v5479 = vmax.f32 %v5351, 0.0
    %v5480 = vmax.f32 %v5352, 0.0
    %v5481 = vmax.f32 %v5353, 0.0
    %v5482 = vmax.f32 %v5354, 0.0
    %v5483 = vmax.f32 %v5355, 0.0
    %v5484 = vmax.f32 %v5356, 0.0
    %v5485 = vmax.f32 %v5357, 0.0
    %v5486 = vmax.f32 %v5358, 0.0
    %v5487 = vmax.f32 %v5359, 0.0
    %v5488 = vmax.f32 %v5360, 0.0
    %v5489 = vmax.f32 %v5361, 0.0
    %v5490 = vmax.f32 %v5362, 0.0
    %v5491 = vmax.f32 %v5363, 0.0
    %v5492 = vmax.f32 %v5364, 0.0
    %v5493 = vmax.f32 %v5365, 0.0
    %v5494 = vmax.f32 %v5366, 0.0
    %v5495 = vmax.f32 %v5367, 0.0
    %v5496 = vmax.f32 %v5368, 0.0
    %v5497 = vmax.f32 %v5369, 0.0
    %v5498 = vpack.c.bf16 %v5372, %v5370
    %v5499 = vpack.c.bf16 %v5373, %v5371
    %v5500 = vpack.c.bf16 %v5376, %v5374
    %v5501 = vpack.c.bf16 %v5377, %v5375
    %v5502 = vpack.c.bf16 %v5380, %v5378
    %v5503 = vpack.c.bf16 %v5381, %v5379
    %v5504 = vpack.c.bf16 %v5384, %v5382
    %v5505 = vpack.c.bf16 %v5385, %v5383
    %v5506 = vpack.c.bf16 %v5388, %v5386
    %v5507 = vpack.c.bf16 %v5389, %v5387
    %v5508 = vpack.c.bf16 %v5392, %v5390
    %v5509 = vpack.c.bf16 %v5393, %v5391
    %v5510 = vpack.c.bf16 %v5396, %v5394
    %v5511 = vpack.c.bf16 %v5397, %v5395
    %v5512 = vpack.c.bf16 %v5400, %v5398
    %v5513 = vpack.c.bf16 %v5401, %v5399
    %v5514 = vpack.c.bf16 %v5404, %v5402
    %v5515 = vpack.c.bf16 %v5405, %v5403
    %v5516 = vpack.c.bf16 %v5408, %v5406
    %v5517 = vpack.c.bf16 %v5409, %v5407
    %v5518 = vpack.c.bf16 %v5412, %v5410
    %v5519 = vpack.c.bf16 %v5413, %v5411
    %v5520 = vpack.c.bf16 %v5416, %v5414
    %v5521 = vpack.c.bf16 %v5417, %v5415
    %v5522 = vpack.c.bf16 %v5420, %v5418
    %v5523 = vpack.c.bf16 %v5421, %v5419
    %v5524 = vpack.c.bf16 %v5424, %v5422
    %v5525 = vpack.c.bf16 %v5425, %v5423
    %v5526 = vpack.c.bf16 %v5428, %v5426
    %v5527 = vpack.c.bf16 %v5429, %v5427
    %v5528 = vpack.c.bf16 %v5432, %v5430
    %v5529 = vpack.c.bf16 %v5433, %v5431
    %v5530 = vpack.c.bf16 %v5436, %v5434
    %v5531 = vpack.c.bf16 %v5437, %v5435
    %v5532 = vpack.c.bf16 %v5440, %v5438
    %v5533 = vpack.c.bf16 %v5441, %v5439
    %v5534 = vpack.c.bf16 %v5444, %v5442
    %v5535 = vpack.c.bf16 %v5445, %v5443
    %v5536 = vpack.c.bf16 %v5448, %v5446
    %v5537 = vpack.c.bf16 %v5449, %v5447
    %v5538 = vpack.c.bf16 %v5452, %v5450
    %v5539 = vpack.c.bf16 %v5453, %v5451
    %v5540 = vpack.c.bf16 %v5456, %v5454
    %v5541 = vpack.c.bf16 %v5457, %v5455
    %v5542 = vpack.c.bf16 %v5460, %v5458
    %v5543 = vpack.c.bf16 %v5461, %v5459
    %v5544 = vpack.c.bf16 %v5464, %v5462
    %v5545 = vpack.c.bf16 %v5465, %v5463
    %v5546 = vpack.c.bf16 %v5468, %v5466
    %v5547 = vpack.c.bf16 %v5469, %v5467
    %v5548 = vpack.c.bf16 %v5472, %v5470
    %v5549 = vpack.c.bf16 %v5473, %v5471
    %v5550 = vpack.c.bf16 %v5476, %v5474
    %v5551 = vpack.c.bf16 %v5477, %v5475
    %v5552 = vpack.c.bf16 %v5480, %v5478
    %v5553 = vpack.c.bf16 %v5481, %v5479
    %v5554 = vpack.c.bf16 %v5484, %v5482
    %v5555 = vpack.c.bf16 %v5485, %v5483
    %v5556 = vpack.c.bf16 %v5488, %v5486
    %v5557 = vpack.c.bf16 %v5489, %v5487
    %v5558 = vpack.c.bf16 %v5492, %v5490
    %v5559 = vpack.c.bf16 %v5493, %v5491
    %v5560 = vpack.c.bf16 %v5496, %v5494
    %v5561 = vpack.c.bf16 %v5497, %v5495
    %v5562 = vld [vmem:[%s3] sm:$0xf]
    %v5563 = vld [vmem:[%s3 + $0x4] sm:$0xf]
    %v5564 = vld [vmem:[%s3 + $0x8] sm:$0xf]
    %v5565 = vld [vmem:[%s3 + $0xc] sm:$0xf]
    %v5566 = vld [vmem:[%s3 + $0x10] sm:$0xf]
    %v5567 = vld [vmem:[%s3 + $0x14] sm:$0xf]
    %v5568 = vld [vmem:[%s3 + $0x18] sm:$0xf]
    %v5569 = vld [vmem:[%s3 + $0x1c] sm:$0xf]
    %v5570 = vld [vmem:[%s3 + $0x20] sm:$0xf]
    %v5571 = vld [vmem:[%s3 + $0x24] sm:$0xf]
    %v5572 = vld [vmem:[%s3 + $0x28] sm:$0xf]
    %v5573 = vld [vmem:[%s3 + $0x2c] sm:$0xf]
    %v5574 = vld [vmem:[%s3 + $0x30] sm:$0xf]
    %v5575 = vld [vmem:[%s3 + $0x34] sm:$0xf]
    %v5576 = vld [vmem:[%s3 + $0x38] sm:$0xf]
    %v5577 = vld [vmem:[%s3 + $0x3c] sm:$0xf]
    %v5578 = vld [vmem:[%s3 + $0x40] sm:$0xf]
    %v5579 = vld [vmem:[%s3 + $0x44] sm:$0xf]
    %v5580 = vld [vmem:[%s3 + $0x48] sm:$0xf]
    %v5581 = vld [vmem:[%s3 + $0x4c] sm:$0xf]
    %v5582 = vld [vmem:[%s3 + $0x50] sm:$0xf]
    %v5583 = vld [vmem:[%s3 + $0x54] sm:$0xf]
    %v5584 = vld [vmem:[%s3 + $0x58] sm:$0xf]
    %v5585 = vld [vmem:[%s3 + $0x5c] sm:$0xf]
    %v5586 = vld [vmem:[%s3 + $0x60] sm:$0xf]
    %v5587 = vld [vmem:[%s3 + $0x64] sm:$0xf]
    %v5588 = vld [vmem:[%s3 + $0x68] sm:$0xf]
    %v5589 = vld [vmem:[%s3 + $0x6c] sm:$0xf]
    %v5590 = vld [vmem:[%s3 + $0x70] sm:$0xf]
    %v5591 = vld [vmem:[%s3 + $0x74] sm:$0xf]
    %v5592 = vld [vmem:[%s3 + $0x78] sm:$0xf]
    %v5593 = vld [vmem:[%s3 + $0x7c] sm:$0xf]
    %v5626 = vunpack.c.l.b16 %v5562
    %v5627 = vunpack.c.l.b16 %v5563
    %v5628 = vunpack.c.l.b16 %v5564
    %v5629 = vunpack.c.l.b16 %v5565
    %v5630 = vunpack.c.l.b16 %v5566
    %v5631 = vunpack.c.l.b16 %v5567
    %v5632 = vunpack.c.l.b16 %v5568
    %v5633 = vunpack.c.l.b16 %v5569
    %v5634 = vunpack.c.l.b16 %v5570
    %v5635 = vunpack.c.l.b16 %v5571
    %v5636 = vunpack.c.l.b16 %v5572
    %v5637 = vunpack.c.l.b16 %v5573
    %v5638 = vunpack.c.l.b16 %v5574
    %v5639 = vunpack.c.l.b16 %v5575
    %v5640 = vunpack.c.l.b16 %v5576
    %v5641 = vunpack.c.l.b16 %v5577
    %v5642 = vunpack.c.l.b16 %v5578
    %v5643 = vunpack.c.l.b16 %v5579
    %v5644 = vunpack.c.l.b16 %v5580
    %v5645 = vunpack.c.l.b16 %v5581
    %v5646 = vunpack.c.l.b16 %v5582
    %v5647 = vunpack.c.l.b16 %v5583
    %v5648 = vunpack.c.l.b16 %v5584
    %v5649 = vunpack.c.l.b16 %v5585
    %v5650 = vunpack.c.l.b16 %v5586
    %v5651 = vunpack.c.l.b16 %v5587
    %v5652 = vunpack.c.l.b16 %v5588
    %v5653 = vunpack.c.l.b16 %v5589
    %v5654 = vunpack.c.l.b16 %v5590
    %v5655 = vunpack.c.l.b16 %v5591
    %v5656 = vunpack.c.l.b16 %v5592
    %v5657 = vunpack.c.l.b16 %v5593
    %v5658 = vpack.c.b16 %v5627, %v5626
    %v5659 = vpack.c.b16 %v5629, %v5628
    %v5660 = vpack.c.b16 %v5631, %v5630
    %v5661 = vpack.c.b16 %v5633, %v5632
    %v5662 = vpack.c.b16 %v5635, %v5634
    %v5663 = vpack.c.b16 %v5637, %v5636
    %v5664 = vpack.c.b16 %v5639, %v5638
    %v5665 = vpack.c.b16 %v5641, %v5640
    %v5666 = vpack.c.b16 %v5643, %v5642
    %v5667 = vpack.c.b16 %v5645, %v5644
    %v5668 = vpack.c.b16 %v5647, %v5646
    %v5669 = vpack.c.b16 %v5649, %v5648
    %v5670 = vpack.c.b16 %v5651, %v5650
    %v5671 = vpack.c.b16 %v5653, %v5652
    %v5672 = vpack.c.b16 %v5655, %v5654
    %v5673 = vpack.c.b16 %v5657, %v5656
    %5690 = vmatpush.bf16.msra.mxu0 %v5665
    %5691 = vmatpush.bf16.msra.mxu0 %v5664
    %5692 = vmatpush.bf16.msra.mxu0 %v5663
    %5693 = vmatpush.bf16.msra.mxu0 %v5662
    %5694 = vmatpush.bf16.msra.mxu0 %v5661
    %5695 = vmatpush.bf16.msra.mxu0 %v5660
    %5696 = vmatpush.bf16.msra.mxu0 %v5659
    %5697 = vmatpush.bf16.msra.mxu0 %v5658
    %5698 = vmatmul.bf16.gmra.mxu0 %v5498
    %v5699 = vpop.f32.mrf.mxu0
    %v5700 = vadd.f32 0.0, %v5699
    %v5701 = vpop.f32.mrf.mxu0
    %v5702 = vadd.f32 0.0, %v5701
    %5703 = vmatmul.bf16.gmra.mxu0 %v5500
    %v5704 = vpop.f32.mrf.mxu0
    %v5705 = vadd.f32 0.0, %v5704
    %v5706 = vpop.f32.mrf.mxu0
    %v5707 = vadd.f32 0.0, %v5706
    %5708 = vmatmul.bf16.gmra.mxu0 %v5502
    %v5709 = vpop.f32.mrf.mxu0
    %v5710 = vadd.f32 0.0, %v5709
    %v5711 = vpop.f32.mrf.mxu0
    %v5712 = vadd.f32 0.0, %v5711
    %5713 = vmatmul.bf16.gmra.mxu0 %v5504
    %v5714 = vpop.f32.mrf.mxu0
    %v5715 = vadd.f32 0.0, %v5714
    %v5716 = vpop.f32.mrf.mxu0
    %v5717 = vadd.f32 0.0, %v5716
    %5718 = vmatmul.bf16.gmra.mxu0 %v5506
    %v5719 = vpop.f32.mrf.mxu0
    %v5720 = vadd.f32 0.0, %v5719
    %v5721 = vpop.f32.mrf.mxu0
    %v5722 = vadd.f32 0.0, %v5721
    %5723 = vmatmul.bf16.gmra.mxu0 %v5508
    %v5724 = vpop.f32.mrf.mxu0
    %v5725 = vadd.f32 0.0, %v5724
    %v5726 = vpop.f32.mrf.mxu0
    %v5727 = vadd.f32 0.0, %v5726
    %5728 = vmatmul.bf16.gmra.mxu0 %v5510
    %v5729 = vpop.f32.mrf.mxu0
    %v5730 = vadd.f32 0.0, %v5729
    %v5731 = vpop.f32.mrf.mxu0
    %v5732 = vadd.f32 0.0, %v5731
    %5733 = vmatmul.bf16.gmra.mxu0 %v5512
    %v5734 = vpop.f32.mrf.mxu0
    %v5735 = vadd.f32 0.0, %v5734
    %v5736 = vpop.f32.mrf.mxu0
    %v5737 = vadd.f32 0.0, %v5736
    %5738 = vmatmul.bf16.gmra.mxu0 %v5514
    %v5739 = vpop.f32.mrf.mxu0
    %v5740 = vadd.f32 0.0, %v5739
    %v5741 = vpop.f32.mrf.mxu0
    %v5742 = vadd.f32 0.0, %v5741
    %5743 = vmatmul.bf16.gmra.mxu0 %v5516
    %v5744 = vpop.f32.mrf.mxu0
    %v5745 = vadd.f32 0.0, %v5744
    %v5746 = vpop.f32.mrf.mxu0
    %v5747 = vadd.f32 0.0, %v5746
    %5748 = vmatmul.bf16.gmra.mxu0 %v5518
    %v5749 = vpop.f32.mrf.mxu0
    %v5750 = vadd.f32 0.0, %v5749
    %v5751 = vpop.f32.mrf.mxu0
    %v5752 = vadd.f32 0.0, %v5751
    %5753 = vmatmul.bf16.gmra.mxu0 %v5520
    %v5754 = vpop.f32.mrf.mxu0
    %v5755 = vadd.f32 0.0, %v5754
    %v5756 = vpop.f32.mrf.mxu0
    %v5757 = vadd.f32 0.0, %v5756
    %5758 = vmatmul.bf16.gmra.mxu0 %v5522
    %v5759 = vpop.f32.mrf.mxu0
    %v5760 = vadd.f32 0.0, %v5759
    %v5761 = vpop.f32.mrf.mxu0
    %v5762 = vadd.f32 0.0, %v5761
    %5763 = vmatmul.bf16.gmra.mxu0 %v5524
    %v5764 = vpop.f32.mrf.mxu0
    %v5765 = vadd.f32 0.0, %v5764
    %v5766 = vpop.f32.mrf.mxu0
    %v5767 = vadd.f32 0.0, %v5766
    %5768 = vmatmul.bf16.gmra.mxu0 %v5526
    %v5769 = vpop.f32.mrf.mxu0
    %v5770 = vadd.f32 0.0, %v5769
    %v5771 = vpop.f32.mrf.mxu0
    %v5772 = vadd.f32 0.0, %v5771
    %5773 = vmatmul.bf16.gmra.mxu0 %v5528
    %v5774 = vpop.f32.mrf.mxu0
    %v5775 = vadd.f32 0.0, %v5774
    %v5776 = vpop.f32.mrf.mxu0
    %v5777 = vadd.f32 0.0, %v5776
    %5778 = vmatmul.bf16.gmra.mxu0 %v5530
    %v5779 = vpop.f32.mrf.mxu0
    %v5780 = vadd.f32 0.0, %v5779
    %v5781 = vpop.f32.mrf.mxu0
    %v5782 = vadd.f32 0.0, %v5781
    %5783 = vmatmul.bf16.gmra.mxu0 %v5532
    %v5784 = vpop.f32.mrf.mxu0
    %v5785 = vadd.f32 0.0, %v5784
    %v5786 = vpop.f32.mrf.mxu0
    %v5787 = vadd.f32 0.0, %v5786
    %5788 = vmatmul.bf16.gmra.mxu0 %v5534
    %v5789 = vpop.f32.mrf.mxu0
    %v5790 = vadd.f32 0.0, %v5789
    %v5791 = vpop.f32.mrf.mxu0
    %v5792 = vadd.f32 0.0, %v5791
    %5793 = vmatmul.bf16.gmra.mxu0 %v5536
    %v5794 = vpop.f32.mrf.mxu0
    %v5795 = vadd.f32 0.0, %v5794
    %v5796 = vpop.f32.mrf.mxu0
    %v5797 = vadd.f32 0.0, %v5796
    %5798 = vmatmul.bf16.gmra.mxu0 %v5538
    %v5799 = vpop.f32.mrf.mxu0
    %v5800 = vadd.f32 0.0, %v5799
    %v5801 = vpop.f32.mrf.mxu0
    %v5802 = vadd.f32 0.0, %v5801
    %5803 = vmatmul.bf16.gmra.mxu0 %v5540
    %v5804 = vpop.f32.mrf.mxu0
    %v5805 = vadd.f32 0.0, %v5804
    %v5806 = vpop.f32.mrf.mxu0
    %v5807 = vadd.f32 0.0, %v5806
    %5808 = vmatmul.bf16.gmra.mxu0 %v5542
    %v5809 = vpop.f32.mrf.mxu0
    %v5810 = vadd.f32 0.0, %v5809
    %v5811 = vpop.f32.mrf.mxu0
    %v5812 = vadd.f32 0.0, %v5811
    %5813 = vmatmul.bf16.gmra.mxu0 %v5544
    %v5814 = vpop.f32.mrf.mxu0
    %v5815 = vadd.f32 0.0, %v5814
    %v5816 = vpop.f32.mrf.mxu0
    %v5817 = vadd.f32 0.0, %v5816
    %5818 = vmatmul.bf16.gmra.mxu0 %v5546
    %v5819 = vpop.f32.mrf.mxu0
    %v5820 = vadd.f32 0.0, %v5819
    %v5821 = vpop.f32.mrf.mxu0
    %v5822 = vadd.f32 0.0, %v5821
    %5823 = vmatmul.bf16.gmra.mxu0 %v5548
    %v5824 = vpop.f32.mrf.mxu0
    %v5825 = vadd.f32 0.0, %v5824
    %v5826 = vpop.f32.mrf.mxu0
    %v5827 = vadd.f32 0.0, %v5826
    %5828 = vmatmul.bf16.gmra.mxu0 %v5550
    %v5829 = vpop.f32.mrf.mxu0
    %v5830 = vadd.f32 0.0, %v5829
    %v5831 = vpop.f32.mrf.mxu0
    %v5832 = vadd.f32 0.0, %v5831
    %5833 = vmatmul.bf16.gmra.mxu0 %v5552
    %v5834 = vpop.f32.mrf.mxu0
    %v5835 = vadd.f32 0.0, %v5834
    %v5836 = vpop.f32.mrf.mxu0
    %v5837 = vadd.f32 0.0, %v5836
    %5838 = vmatmul.bf16.gmra.mxu0 %v5554
    %v5839 = vpop.f32.mrf.mxu0
    %v5840 = vadd.f32 0.0, %v5839
    %v5841 = vpop.f32.mrf.mxu0
    %v5842 = vadd.f32 0.0, %v5841
    %5843 = vmatmul.bf16.gmra.mxu0 %v5556
    %v5844 = vpop.f32.mrf.mxu0
    %v5845 = vadd.f32 0.0, %v5844
    %v5846 = vpop.f32.mrf.mxu0
    %v5847 = vadd.f32 0.0, %v5846
    %5848 = vmatmul.bf16.gmra.mxu0 %v5558
    %v5849 = vpop.f32.mrf.mxu0
    %v5850 = vadd.f32 0.0, %v5849
    %v5851 = vpop.f32.mrf.mxu0
    %v5852 = vadd.f32 0.0, %v5851
    %5853 = vmatmul.bf16.gmra.mxu0 %v5560
    %v5854 = vpop.f32.mrf.mxu0
    %v5855 = vadd.f32 0.0, %v5854
    %v5856 = vpop.f32.mrf.mxu0
    %v5857 = vadd.f32 0.0, %v5856
    %5858 = vdwg.mxu0
    %5859 = vmatpush.bf16.msra.mxu0 %v5673
    %5860 = vmatpush.bf16.msra.mxu0 %v5672
    %5861 = vmatpush.bf16.msra.mxu0 %v5671
    %5862 = vmatpush.bf16.msra.mxu0 %v5670
    %5863 = vmatpush.bf16.msra.mxu0 %v5669
    %5864 = vmatpush.bf16.msra.mxu0 %v5668
    %5865 = vmatpush.bf16.msra.mxu0 %v5667
    %5866 = vmatpush.bf16.msra.mxu0 %v5666
    %5867 = vmatmul.bf16.gmra.mxu0 %v5499
    %v5868 = vpop.f32.mrf.mxu0
    %v5869 = vadd.f32 %v5700, %v5868
    %v5870 = vpop.f32.mrf.mxu0
    %v5871 = vadd.f32 %v5702, %v5870
    %5872 = vmatmul.bf16.gmra.mxu0 %v5501
    %v5873 = vpop.f32.mrf.mxu0
    %v5874 = vadd.f32 %v5705, %v5873
    %v5875 = vpop.f32.mrf.mxu0
    %v5876 = vadd.f32 %v5707, %v5875
    %5877 = vmatmul.bf16.gmra.mxu0 %v5503
    %v5878 = vpop.f32.mrf.mxu0
    %v5879 = vadd.f32 %v5710, %v5878
    %v5880 = vpop.f32.mrf.mxu0
    %v5881 = vadd.f32 %v5712, %v5880
    %5882 = vmatmul.bf16.gmra.mxu0 %v5505
    %v5883 = vpop.f32.mrf.mxu0
    %v5884 = vadd.f32 %v5715, %v5883
    %v5885 = vpop.f32.mrf.mxu0
    %v5886 = vadd.f32 %v5717, %v5885
    %5887 = vmatmul.bf16.gmra.mxu0 %v5507
    %v5888 = vpop.f32.mrf.mxu0
    %v5889 = vadd.f32 %v5720, %v5888
    %v5890 = vpop.f32.mrf.mxu0
    %v5891 = vadd.f32 %v5722, %v5890
    %5892 = vmatmul.bf16.gmra.mxu0 %v5509
    %v5893 = vpop.f32.mrf.mxu0
    %v5894 = vadd.f32 %v5725, %v5893
    %v5895 = vpop.f32.mrf.mxu0
    %v5896 = vadd.f32 %v5727, %v5895
    %5897 = vmatmul.bf16.gmra.mxu0 %v5511
    %v5898 = vpop.f32.mrf.mxu0
    %v5899 = vadd.f32 %v5730, %v5898
    %v5900 = vpop.f32.mrf.mxu0
    %v5901 = vadd.f32 %v5732, %v5900
    %5902 = vmatmul.bf16.gmra.mxu0 %v5513
    %v5903 = vpop.f32.mrf.mxu0
    %v5904 = vadd.f32 %v5735, %v5903
    %v5905 = vpop.f32.mrf.mxu0
    %v5906 = vadd.f32 %v5737, %v5905
    %5907 = vmatmul.bf16.gmra.mxu0 %v5515
    %v5908 = vpop.f32.mrf.mxu0
    %v5909 = vadd.f32 %v5740, %v5908
    %v5910 = vpop.f32.mrf.mxu0
    %v5911 = vadd.f32 %v5742, %v5910
    %5912 = vmatmul.bf16.gmra.mxu0 %v5517
    %v5913 = vpop.f32.mrf.mxu0
    %v5914 = vadd.f32 %v5745, %v5913
    %v5915 = vpop.f32.mrf.mxu0
    %v5916 = vadd.f32 %v5747, %v5915
    %5917 = vmatmul.bf16.gmra.mxu0 %v5519
    %v5918 = vpop.f32.mrf.mxu0
    %v5919 = vadd.f32 %v5750, %v5918
    %v5920 = vpop.f32.mrf.mxu0
    %v5921 = vadd.f32 %v5752, %v5920
    %5922 = vmatmul.bf16.gmra.mxu0 %v5521
    %v5923 = vpop.f32.mrf.mxu0
    %v5924 = vadd.f32 %v5755, %v5923
    %v5925 = vpop.f32.mrf.mxu0
    %v5926 = vadd.f32 %v5757, %v5925
    %5927 = vmatmul.bf16.gmra.mxu0 %v5523
    %v5928 = vpop.f32.mrf.mxu0
    %v5929 = vadd.f32 %v5760, %v5928
    %v5930 = vpop.f32.mrf.mxu0
    %v5931 = vadd.f32 %v5762, %v5930
    %5932 = vmatmul.bf16.gmra.mxu0 %v5525
    %v5933 = vpop.f32.mrf.mxu0
    %v5934 = vadd.f32 %v5765, %v5933
    %v5935 = vpop.f32.mrf.mxu0
    %v5936 = vadd.f32 %v5767, %v5935
    %5937 = vmatmul.bf16.gmra.mxu0 %v5527
    %v5938 = vpop.f32.mrf.mxu0
    %v5939 = vadd.f32 %v5770, %v5938
    %v5940 = vpop.f32.mrf.mxu0
    %v5941 = vadd.f32 %v5772, %v5940
    %5942 = vmatmul.bf16.gmra.mxu0 %v5529
    %v5943 = vpop.f32.mrf.mxu0
    %v5944 = vadd.f32 %v5775, %v5943
    %v5945 = vpop.f32.mrf.mxu0
    %v5946 = vadd.f32 %v5777, %v5945
    %5947 = vmatmul.bf16.gmra.mxu0 %v5531
    %v5948 = vpop.f32.mrf.mxu0
    %v5949 = vadd.f32 %v5780, %v5948
    %v5950 = vpop.f32.mrf.mxu0
    %v5951 = vadd.f32 %v5782, %v5950
    %5952 = vmatmul.bf16.gmra.mxu0 %v5533
    %v5953 = vpop.f32.mrf.mxu0
    %v5954 = vadd.f32 %v5785, %v5953
    %v5955 = vpop.f32.mrf.mxu0
    %v5956 = vadd.f32 %v5787, %v5955
    %5957 = vmatmul.bf16.gmra.mxu0 %v5535
    %v5958 = vpop.f32.mrf.mxu0
    %v5959 = vadd.f32 %v5790, %v5958
    %v5960 = vpop.f32.mrf.mxu0
    %v5961 = vadd.f32 %v5792, %v5960
    %5962 = vmatmul.bf16.gmra.mxu0 %v5537
    %v5963 = vpop.f32.mrf.mxu0
    %v5964 = vadd.f32 %v5795, %v5963
    %v5965 = vpop.f32.mrf.mxu0
    %v5966 = vadd.f32 %v5797, %v5965
    %5967 = vmatmul.bf16.gmra.mxu0 %v5539
    %v5968 = vpop.f32.mrf.mxu0
    %v5969 = vadd.f32 %v5800, %v5968
    %v5970 = vpop.f32.mrf.mxu0
    %v5971 = vadd.f32 %v5802, %v5970
    %5972 = vmatmul.bf16.gmra.mxu0 %v5541
    %v5973 = vpop.f32.mrf.mxu0
    %v5974 = vadd.f32 %v5805, %v5973
    %v5975 = vpop.f32.mrf.mxu0
    %v5976 = vadd.f32 %v5807, %v5975
    %5977 = vmatmul.bf16.gmra.mxu0 %v5543
    %v5978 = vpop.f32.mrf.mxu0
    %v5979 = vadd.f32 %v5810, %v5978
    %v5980 = vpop.f32.mrf.mxu0
    %v5981 = vadd.f32 %v5812, %v5980
    %5982 = vmatmul.bf16.gmra.mxu0 %v5545
    %v5983 = vpop.f32.mrf.mxu0
    %v5984 = vadd.f32 %v5815, %v5983
    %v5985 = vpop.f32.mrf.mxu0
    %v5986 = vadd.f32 %v5817, %v5985
    %5987 = vmatmul.bf16.gmra.mxu0 %v5547
    %v5988 = vpop.f32.mrf.mxu0
    %v5989 = vadd.f32 %v5820, %v5988
    %v5990 = vpop.f32.mrf.mxu0
    %v5991 = vadd.f32 %v5822, %v5990
    %5992 = vmatmul.bf16.gmra.mxu0 %v5549
    %v5993 = vpop.f32.mrf.mxu0
    %v5994 = vadd.f32 %v5825, %v5993
    %v5995 = vpop.f32.mrf.mxu0
    %v5996 = vadd.f32 %v5827, %v5995
    %5997 = vmatmul.bf16.gmra.mxu0 %v5551
    %v5998 = vpop.f32.mrf.mxu0
    %v5999 = vadd.f32 %v5830, %v5998
    %v6000 = vpop.f32.mrf.mxu0
    %v6001 = vadd.f32 %v5832, %v6000
    %6002 = vmatmul.bf16.gmra.mxu0 %v5553
    %v6003 = vpop.f32.mrf.mxu0
    %v6004 = vadd.f32 %v5835, %v6003
    %v6005 = vpop.f32.mrf.mxu0
    %v6006 = vadd.f32 %v5837, %v6005
    %6007 = vmatmul.bf16.gmra.mxu0 %v5555
    %v6008 = vpop.f32.mrf.mxu0
    %v6009 = vadd.f32 %v5840, %v6008
    %v6010 = vpop.f32.mrf.mxu0
    %v6011 = vadd.f32 %v5842, %v6010
    %6012 = vmatmul.bf16.gmra.mxu0 %v5557
    %v6013 = vpop.f32.mrf.mxu0
    %v6014 = vadd.f32 %v5845, %v6013
    %v6015 = vpop.f32.mrf.mxu0
    %v6016 = vadd.f32 %v5847, %v6015
    %6017 = vmatmul.bf16.gmra.mxu0 %v5559
    %v6018 = vpop.f32.mrf.mxu0
    %v6019 = vadd.f32 %v5850, %v6018
    %v6020 = vpop.f32.mrf.mxu0
    %v6021 = vadd.f32 %v5852, %v6020
    %6022 = vmatmul.bf16.gmra.mxu0 %v5561
    %v6023 = vpop.f32.mrf.mxu0
    %v6024 = vadd.f32 %v5855, %v6023
    %v6025 = vpop.f32.mrf.mxu0
    %v6026 = vadd.f32 %v5857, %v6025
    %6027 = vdwg.mxu0
    %v6028 = vadd.f32 %v5869, %v5871
    %v6029 = vadd.f32 %v6028, %v5874
    %v6030 = vadd.f32 %v6029, %v5876
    %v6031 = vadd.f32 %v6030, %v5879
    %v6032 = vadd.f32 %v6031, %v5881
    %v6033 = vadd.f32 %v6032, %v5884
    %v6034 = vadd.f32 %v6033, %v5886
    %v6035 = vadd.f32 %v6034, %v5889
    %v6036 = vadd.f32 %v6035, %v5891
    %v6037 = vadd.f32 %v6036, %v5894
    %v6038 = vadd.f32 %v6037, %v5896
    %v6039 = vadd.f32 %v6038, %v5899
    %v6040 = vadd.f32 %v6039, %v5901
    %v6041 = vadd.f32 %v6040, %v5904
    %v6042 = vadd.f32 %v6041, %v5906
    %v6043 = vadd.f32 %v6042, %v5909
    %v6044 = vadd.f32 %v6043, %v5911
    %v6045 = vadd.f32 %v6044, %v5914
    %v6046 = vadd.f32 %v6045, %v5916
    %v6047 = vadd.f32 %v6046, %v5919
    %v6048 = vadd.f32 %v6047, %v5921
    %v6049 = vadd.f32 %v6048, %v5924
    %v6050 = vadd.f32 %v6049, %v5926
    %v6051 = vadd.f32 %v6050, %v5929
    %v6052 = vadd.f32 %v6051, %v5931
    %v6053 = vadd.f32 %v6052, %v5934
    %v6054 = vadd.f32 %v6053, %v5936
    %v6055 = vadd.f32 %v6054, %v5939
    %v6056 = vadd.f32 %v6055, %v5941
    %v6057 = vadd.f32 %v6056, %v5944
    %v6058 = vadd.f32 %v6057, %v5946
    %v6059 = vadd.f32 %v6058, %v5949
    %v6060 = vadd.f32 %v6059, %v5951
    %v6061 = vadd.f32 %v6060, %v5954
    %v6062 = vadd.f32 %v6061, %v5956
    %v6063 = vadd.f32 %v6062, %v5959
    %v6064 = vadd.f32 %v6063, %v5961
    %v6065 = vadd.f32 %v6064, %v5964
    %v6066 = vadd.f32 %v6065, %v5966
    %v6067 = vadd.f32 %v6066, %v5969
    %v6068 = vadd.f32 %v6067, %v5971
    %v6069 = vadd.f32 %v6068, %v5974
    %v6070 = vadd.f32 %v6069, %v5976
    %v6071 = vadd.f32 %v6070, %v5979
    %v6072 = vadd.f32 %v6071, %v5981
    %v6073 = vadd.f32 %v6072, %v5984
    %v6074 = vadd.f32 %v6073, %v5986
    %v6075 = vadd.f32 %v6074, %v5989
    %v6076 = vadd.f32 %v6075, %v5991
    %v6077 = vadd.f32 %v6076, %v5994
    %v6078 = vadd.f32 %v6077, %v5996
    %v6079 = vadd.f32 %v6078, %v5999
    %v6080 = vadd.f32 %v6079, %v6001
    %v6081 = vadd.f32 %v6080, %v6004
    %v6082 = vadd.f32 %v6081, %v6006
    %v6083 = vadd.f32 %v6082, %v6009
    %v6084 = vadd.f32 %v6083, %v6011
    %v6085 = vadd.f32 %v6084, %v6014
    %v6086 = vadd.f32 %v6085, %v6016
    %v6087 = vadd.f32 %v6086, %v6019
    %v6088 = vadd.f32 %v6087, %v6021
    %v6089 = vadd.f32 %v6088, %v6024
    %v6090 = vadd.f32 %v6089, %v6026
    %v6091 = vrot.slane %v6090, 4
    %v6092 = vadd.f32 %v6090, %v6091
    %v6093 = vrot.slane %v6092, 2
    %v6094 = vadd.f32 %v6092, %v6093
    %v6095 = vrot.slane %v6094, 1
    %v6096 = vadd.f32 %v6094, %v6095
    %v6097 = vmul.f32 %v6096, 0.001953125
    %v6098 = vmul.f32 %v5869, %v5869
    %v6099 = vmul.f32 %v5871, %v5871
    %v6100 = vmul.f32 %v5874, %v5874
    %v6101 = vmul.f32 %v5876, %v5876
    %v6102 = vmul.f32 %v5879, %v5879
    %v6103 = vmul.f32 %v5881, %v5881
    %v6104 = vmul.f32 %v5884, %v5884
    %v6105 = vmul.f32 %v5886, %v5886
    %v6106 = vmul.f32 %v5889, %v5889
    %v6107 = vmul.f32 %v5891, %v5891
    %v6108 = vmul.f32 %v5894, %v5894
    %v6109 = vmul.f32 %v5896, %v5896
    %v6110 = vmul.f32 %v5899, %v5899
    %v6111 = vmul.f32 %v5901, %v5901
    %v6112 = vmul.f32 %v5904, %v5904
    %v6113 = vmul.f32 %v5906, %v5906
    %v6114 = vmul.f32 %v5909, %v5909
    %v6115 = vmul.f32 %v5911, %v5911
    %v6116 = vmul.f32 %v5914, %v5914
    %v6117 = vmul.f32 %v5916, %v5916
    %v6118 = vmul.f32 %v5919, %v5919
    %v6119 = vmul.f32 %v5921, %v5921
    %v6120 = vmul.f32 %v5924, %v5924
    %v6121 = vmul.f32 %v5926, %v5926
    %v6122 = vmul.f32 %v5929, %v5929
    %v6123 = vmul.f32 %v5931, %v5931
    %v6124 = vmul.f32 %v5934, %v5934
    %v6125 = vmul.f32 %v5936, %v5936
    %v6126 = vmul.f32 %v5939, %v5939
    %v6127 = vmul.f32 %v5941, %v5941
    %v6128 = vmul.f32 %v5944, %v5944
    %v6129 = vmul.f32 %v5946, %v5946
    %v6130 = vmul.f32 %v5949, %v5949
    %v6131 = vmul.f32 %v5951, %v5951
    %v6132 = vmul.f32 %v5954, %v5954
    %v6133 = vmul.f32 %v5956, %v5956
    %v6134 = vmul.f32 %v5959, %v5959
    %v6135 = vmul.f32 %v5961, %v5961
    %v6136 = vmul.f32 %v5964, %v5964
    %v6137 = vmul.f32 %v5966, %v5966
    %v6138 = vmul.f32 %v5969, %v5969
    %v6139 = vmul.f32 %v5971, %v5971
    %v6140 = vmul.f32 %v5974, %v5974
    %v6141 = vmul.f32 %v5976, %v5976
    %v6142 = vmul.f32 %v5979, %v5979
    %v6143 = vmul.f32 %v5981, %v5981
    %v6144 = vmul.f32 %v5984, %v5984
    %v6145 = vmul.f32 %v5986, %v5986
    %v6146 = vmul.f32 %v5989, %v5989
    %v6147 = vmul.f32 %v5991, %v5991
    %v6148 = vmul.f32 %v5994, %v5994
    %v6149 = vmul.f32 %v5996, %v5996
    %v6150 = vmul.f32 %v5999, %v5999
    %v6151 = vmul.f32 %v6001, %v6001
    %v6152 = vmul.f32 %v6004, %v6004
    %v6153 = vmul.f32 %v6006, %v6006
    %v6154 = vmul.f32 %v6009, %v6009
    %v6155 = vmul.f32 %v6011, %v6011
    %v6156 = vmul.f32 %v6014, %v6014
    %v6157 = vmul.f32 %v6016, %v6016
    %v6158 = vmul.f32 %v6019, %v6019
    %v6159 = vmul.f32 %v6021, %v6021
    %v6160 = vmul.f32 %v6024, %v6024
    %v6161 = vmul.f32 %v6026, %v6026
    %v6162 = vadd.f32 %v6098, %v6099
    %v6163 = vadd.f32 %v6162, %v6100
    %v6164 = vadd.f32 %v6163, %v6101
    %v6165 = vadd.f32 %v6164, %v6102
    %v6166 = vadd.f32 %v6165, %v6103
    %v6167 = vadd.f32 %v6166, %v6104
    %v6168 = vadd.f32 %v6167, %v6105
    %v6169 = vadd.f32 %v6168, %v6106
    %v6170 = vadd.f32 %v6169, %v6107
    %v6171 = vadd.f32 %v6170, %v6108
    %v6172 = vadd.f32 %v6171, %v6109
    %v6173 = vadd.f32 %v6172, %v6110
    %v6174 = vadd.f32 %v6173, %v6111
    %v6175 = vadd.f32 %v6174, %v6112
    %v6176 = vadd.f32 %v6175, %v6113
    %v6177 = vadd.f32 %v6176, %v6114
    %v6178 = vadd.f32 %v6177, %v6115
    %v6179 = vadd.f32 %v6178, %v6116
    %v6180 = vadd.f32 %v6179, %v6117
    %v6181 = vadd.f32 %v6180, %v6118
    %v6182 = vadd.f32 %v6181, %v6119
    %v6183 = vadd.f32 %v6182, %v6120
    %v6184 = vadd.f32 %v6183, %v6121
    %v6185 = vadd.f32 %v6184, %v6122
    %v6186 = vadd.f32 %v6185, %v6123
    %v6187 = vadd.f32 %v6186, %v6124
    %v6188 = vadd.f32 %v6187, %v6125
    %v6189 = vadd.f32 %v6188, %v6126
    %v6190 = vadd.f32 %v6189, %v6127
    %v6191 = vadd.f32 %v6190, %v6128
    %v6192 = vadd.f32 %v6191, %v6129
    %v6193 = vadd.f32 %v6192, %v6130
    %v6194 = vadd.f32 %v6193, %v6131
    %v6195 = vadd.f32 %v6194, %v6132
    %v6196 = vadd.f32 %v6195, %v6133
    %v6197 = vadd.f32 %v6196, %v6134
    %v6198 = vadd.f32 %v6197, %v6135
    %v6199 = vadd.f32 %v6198, %v6136
    %v6200 = vadd.f32 %v6199, %v6137
    %v6201 = vadd.f32 %v6200, %v6138
    %v6202 = vadd.f32 %v6201, %v6139
    %v6203 = vadd.f32 %v6202, %v6140
    %v6204 = vadd.f32 %v6203, %v6141
    %v6205 = vadd.f32 %v6204, %v6142
    %v6206 = vadd.f32 %v6205, %v6143
    %v6207 = vadd.f32 %v6206, %v6144
    %v6208 = vadd.f32 %v6207, %v6145
    %v6209 = vadd.f32 %v6208, %v6146
    %v6210 = vadd.f32 %v6209, %v6147
    %v6211 = vadd.f32 %v6210, %v6148
    %v6212 = vadd.f32 %v6211, %v6149
    %v6213 = vadd.f32 %v6212, %v6150
    %v6214 = vadd.f32 %v6213, %v6151
    %v6215 = vadd.f32 %v6214, %v6152
    %v6216 = vadd.f32 %v6215, %v6153
    %v6217 = vadd.f32 %v6216, %v6154
    %v6218 = vadd.f32 %v6217, %v6155
    %v6219 = vadd.f32 %v6218, %v6156
    %v6220 = vadd.f32 %v6219, %v6157
    %v6221 = vadd.f32 %v6220, %v6158
    %v6222 = vadd.f32 %v6221, %v6159
    %v6223 = vadd.f32 %v6222, %v6160
    %v6224 = vadd.f32 %v6223, %v6161
    %v6225 = vrot.slane %v6224, 4
    %v6226 = vadd.f32 %v6224, %v6225
    %v6227 = vrot.slane %v6226, 2
    %v6228 = vadd.f32 %v6226, %v6227
    %v6229 = vrot.slane %v6228, 1
    %v6230 = vadd.f32 %v6228, %v6229
    %v6231 = vmul.f32 %v6230, 0.001953125
    %v6232 = vmul.f32 %v6097, %v6097
    %v6233 = vsub.f32 %v6231, %v6232
    %v6234 = vmax.f32 %v6233, 0.0
    %v6235 = vld [vmem:[#allocation11] sm:$0x1]
    %v6236 = vadd.f32 %v6234, 1e-05
    %v6237 = vrsqrt.pop %v6236
    %v6238 = vmul.f32 %v6237, %v6236
    %v6239 = vmul.f32 %v6238, %v6237
    %v6240 = vmul.f32 0.5, %v6239
    %v6241 = vsub.f32 1.5, %v6240
    %v6242 = vmul.f32 %v6237, %v6241
    %vm6243 = vweird.f32 %v6236
    %vm6244 = vweird.f32 %v6237
    %vm6245 = vmor %vm6243, %vm6244
    %v6246 = vsel %vm6245, %v6237, %v6242
    %v6247 = vmul.f32 %v6235, %v6246
    %v6248 = vld [vmem:[#allocation13] sm:$0x1]
    %v6249 = vmul.f32 %v6097, %v6247
    %v6250 = vsub.f32 %v6248, %v6249
    %v6252 = vperm.slane %v6247, 0
    %v6254 = vmul.f32 %v5869, %v6252
    %v6255 = vmul.f32 %v5871, %v6252
    %v6256 = vmul.f32 %v5874, %v6252
    %v6257 = vmul.f32 %v5876, %v6252
    %v6258 = vmul.f32 %v5879, %v6252
    %v6259 = vmul.f32 %v5881, %v6252
    %v6260 = vmul.f32 %v5884, %v6252
    %v6261 = vmul.f32 %v5886, %v6252
    %v6262 = vmul.f32 %v5889, %v6252
    %v6263 = vmul.f32 %v5891, %v6252
    %v6264 = vmul.f32 %v5894, %v6252
    %v6265 = vmul.f32 %v5896, %v6252
    %v6266 = vmul.f32 %v5899, %v6252
    %v6267 = vmul.f32 %v5901, %v6252
    %v6268 = vmul.f32 %v5904, %v6252
    %v6269 = vmul.f32 %v5906, %v6252
    %v6270 = vmul.f32 %v5909, %v6252
    %v6271 = vmul.f32 %v5911, %v6252
    %v6272 = vmul.f32 %v5914, %v6252
    %v6273 = vmul.f32 %v5916, %v6252
    %v6274 = vmul.f32 %v5919, %v6252
    %v6275 = vmul.f32 %v5921, %v6252
    %v6276 = vmul.f32 %v5924, %v6252
    %v6277 = vmul.f32 %v5926, %v6252
    %v6278 = vmul.f32 %v5929, %v6252
    %v6279 = vmul.f32 %v5931, %v6252
    %v6280 = vmul.f32 %v5934, %v6252
    %v6281 = vmul.f32 %v5936, %v6252
    %v6282 = vmul.f32 %v5939, %v6252
    %v6283 = vmul.f32 %v5941, %v6252
    %v6284 = vmul.f32 %v5944, %v6252
    %v6285 = vmul.f32 %v5946, %v6252
    %v6286 = vmul.f32 %v5949, %v6252
    %v6287 = vmul.f32 %v5951, %v6252
    %v6288 = vmul.f32 %v5954, %v6252
    %v6289 = vmul.f32 %v5956, %v6252
    %v6290 = vmul.f32 %v5959, %v6252
    %v6291 = vmul.f32 %v5961, %v6252
    %v6292 = vmul.f32 %v5964, %v6252
    %v6293 = vmul.f32 %v5966, %v6252
    %v6294 = vmul.f32 %v5969, %v6252
    %v6295 = vmul.f32 %v5971, %v6252
    %v6296 = vmul.f32 %v5974, %v6252
    %v6297 = vmul.f32 %v5976, %v6252
    %v6298 = vmul.f32 %v5979, %v6252
    %v6299 = vmul.f32 %v5981, %v6252
    %v6300 = vmul.f32 %v5984, %v6252
    %v6301 = vmul.f32 %v5986, %v6252
    %v6302 = vmul.f32 %v5989, %v6252
    %v6303 = vmul.f32 %v5991, %v6252
    %v6304 = vmul.f32 %v5994, %v6252
    %v6305 = vmul.f32 %v5996, %v6252
    %v6306 = vmul.f32 %v5999, %v6252
    %v6307 = vmul.f32 %v6001, %v6252
    %v6308 = vmul.f32 %v6004, %v6252
    %v6309 = vmul.f32 %v6006, %v6252
    %v6310 = vmul.f32 %v6009, %v6252
    %v6311 = vmul.f32 %v6011, %v6252
    %v6312 = vmul.f32 %v6014, %v6252
    %v6313 = vmul.f32 %v6016, %v6252
    %v6314 = vmul.f32 %v6019, %v6252
    %v6315 = vmul.f32 %v6021, %v6252
    %v6316 = vmul.f32 %v6024, %v6252
    %v6317 = vmul.f32 %v6026, %v6252
    %v6319 = vperm.slane %v6250, 0
    %v6321 = vadd.f32 %v6254, %v6319
    %v6322 = vadd.f32 %v6255, %v6319
    %v6323 = vadd.f32 %v6256, %v6319
    %v6324 = vadd.f32 %v6257, %v6319
    %v6325 = vadd.f32 %v6258, %v6319
    %v6326 = vadd.f32 %v6259, %v6319
    %v6327 = vadd.f32 %v6260, %v6319
    %v6328 = vadd.f32 %v6261, %v6319
    %v6329 = vadd.f32 %v6262, %v6319
    %v6330 = vadd.f32 %v6263, %v6319
    %v6331 = vadd.f32 %v6264, %v6319
    %v6332 = vadd.f32 %v6265, %v6319
    %v6333 = vadd.f32 %v6266, %v6319
    %v6334 = vadd.f32 %v6267, %v6319
    %v6335 = vadd.f32 %v6268, %v6319
    %v6336 = vadd.f32 %v6269, %v6319
    %v6337 = vadd.f32 %v6270, %v6319
    %v6338 = vadd.f32 %v6271, %v6319
    %v6339 = vadd.f32 %v6272, %v6319
    %v6340 = vadd.f32 %v6273, %v6319
    %v6341 = vadd.f32 %v6274, %v6319
    %v6342 = vadd.f32 %v6275, %v6319
    %v6343 = vadd.f32 %v6276, %v6319
    %v6344 = vadd.f32 %v6277, %v6319
    %v6345 = vadd.f32 %v6278, %v6319
    %v6346 = vadd.f32 %v6279, %v6319
    %v6347 = vadd.f32 %v6280, %v6319
    %v6348 = vadd.f32 %v6281, %v6319
    %v6349 = vadd.f32 %v6282, %v6319
    %v6350 = vadd.f32 %v6283, %v6319
    %v6351 = vadd.f32 %v6284, %v6319
    %v6352 = vadd.f32 %v6285, %v6319
    %v6353 = vadd.f32 %v6286, %v6319
    %v6354 = vadd.f32 %v6287, %v6319
    %v6355 = vadd.f32 %v6288, %v6319
    %v6356 = vadd.f32 %v6289, %v6319
    %v6357 = vadd.f32 %v6290, %v6319
    %v6358 = vadd.f32 %v6291, %v6319
    %v6359 = vadd.f32 %v6292, %v6319
    %v6360 = vadd.f32 %v6293, %v6319
    %v6361 = vadd.f32 %v6294, %v6319
    %v6362 = vadd.f32 %v6295, %v6319
    %v6363 = vadd.f32 %v6296, %v6319
    %v6364 = vadd.f32 %v6297, %v6319
    %v6365 = vadd.f32 %v6298, %v6319
    %v6366 = vadd.f32 %v6299, %v6319
    %v6367 = vadd.f32 %v6300, %v6319
    %v6368 = vadd.f32 %v6301, %v6319
    %v6369 = vadd.f32 %v6302, %v6319
    %v6370 = vadd.f32 %v6303, %v6319
    %v6371 = vadd.f32 %v6304, %v6319
    %v6372 = vadd.f32 %v6305, %v6319
    %v6373 = vadd.f32 %v6306, %v6319
    %v6374 = vadd.f32 %v6307, %v6319
    %v6375 = vadd.f32 %v6308, %v6319
    %v6376 = vadd.f32 %v6309, %v6319
    %v6377 = vadd.f32 %v6310, %v6319
    %v6378 = vadd.f32 %v6311, %v6319
    %v6379 = vadd.f32 %v6312, %v6319
    %v6380 = vadd.f32 %v6313, %v6319
    %v6381 = vadd.f32 %v6314, %v6319
    %v6382 = vadd.f32 %v6315, %v6319
    %v6383 = vadd.f32 %v6316, %v6319
    %v6384 = vadd.f32 %v6317, %v6319
    %v6385 = vmax.f32 %v6321, 0.0
    %v6386 = vmax.f32 %v6322, 0.0
    %v6387 = vmax.f32 %v6323, 0.0
    %v6388 = vmax.f32 %v6324, 0.0
    %v6389 = vmax.f32 %v6325, 0.0
    %v6390 = vmax.f32 %v6326, 0.0
    %v6391 = vmax.f32 %v6327, 0.0
    %v6392 = vmax.f32 %v6328, 0.0
    %v6393 = vmax.f32 %v6329, 0.0
    %v6394 = vmax.f32 %v6330, 0.0
    %v6395 = vmax.f32 %v6331, 0.0
    %v6396 = vmax.f32 %v6332, 0.0
    %v6397 = vmax.f32 %v6333, 0.0
    %v6398 = vmax.f32 %v6334, 0.0
    %v6399 = vmax.f32 %v6335, 0.0
    %v6400 = vmax.f32 %v6336, 0.0
    %v6401 = vmax.f32 %v6337, 0.0
    %v6402 = vmax.f32 %v6338, 0.0
    %v6403 = vmax.f32 %v6339, 0.0
    %v6404 = vmax.f32 %v6340, 0.0
    %v6405 = vmax.f32 %v6341, 0.0
    %v6406 = vmax.f32 %v6342, 0.0
    %v6407 = vmax.f32 %v6343, 0.0
    %v6408 = vmax.f32 %v6344, 0.0
    %v6409 = vmax.f32 %v6345, 0.0
    %v6410 = vmax.f32 %v6346, 0.0
    %v6411 = vmax.f32 %v6347, 0.0
    %v6412 = vmax.f32 %v6348, 0.0
    %v6413 = vmax.f32 %v6349, 0.0
    %v6414 = vmax.f32 %v6350, 0.0
    %v6415 = vmax.f32 %v6351, 0.0
    %v6416 = vmax.f32 %v6352, 0.0
    %v6417 = vmax.f32 %v6353, 0.0
    %v6418 = vmax.f32 %v6354, 0.0
    %v6419 = vmax.f32 %v6355, 0.0
    %v6420 = vmax.f32 %v6356, 0.0
    %v6421 = vmax.f32 %v6357, 0.0
    %v6422 = vmax.f32 %v6358, 0.0
    %v6423 = vmax.f32 %v6359, 0.0
    %v6424 = vmax.f32 %v6360, 0.0
    %v6425 = vmax.f32 %v6361, 0.0
    %v6426 = vmax.f32 %v6362, 0.0
    %v6427 = vmax.f32 %v6363, 0.0
    %v6428 = vmax.f32 %v6364, 0.0
    %v6429 = vmax.f32 %v6365, 0.0
    %v6430 = vmax.f32 %v6366, 0.0
    %v6431 = vmax.f32 %v6367, 0.0
    %v6432 = vmax.f32 %v6368, 0.0
    %v6433 = vmax.f32 %v6369, 0.0
    %v6434 = vmax.f32 %v6370, 0.0
    %v6435 = vmax.f32 %v6371, 0.0
    %v6436 = vmax.f32 %v6372, 0.0
    %v6437 = vmax.f32 %v6373, 0.0
    %v6438 = vmax.f32 %v6374, 0.0
    %v6439 = vmax.f32 %v6375, 0.0
    %v6440 = vmax.f32 %v6376, 0.0
    %v6441 = vmax.f32 %v6377, 0.0
    %v6442 = vmax.f32 %v6378, 0.0
    %v6443 = vmax.f32 %v6379, 0.0
    %v6444 = vmax.f32 %v6380, 0.0
    %v6445 = vmax.f32 %v6381, 0.0
    %v6446 = vmax.f32 %v6382, 0.0
    %v6447 = vmax.f32 %v6383, 0.0
    %v6448 = vmax.f32 %v6384, 0.0
    %v6449 = vpack.c.bf16 %v6386, %v6385
    %v6450 = vpack.c.bf16 %v6388, %v6387
    %v6451 = vpack.c.bf16 %v6390, %v6389
    %v6452 = vpack.c.bf16 %v6392, %v6391
    %v6453 = vpack.c.bf16 %v6394, %v6393
    %v6454 = vpack.c.bf16 %v6396, %v6395
    %v6455 = vpack.c.bf16 %v6398, %v6397
    %v6456 = vpack.c.bf16 %v6400, %v6399
    %v6457 = vpack.c.bf16 %v6402, %v6401
    %v6458 = vpack.c.bf16 %v6404, %v6403
    %v6459 = vpack.c.bf16 %v6406, %v6405
    %v6460 = vpack.c.bf16 %v6408, %v6407
    %v6461 = vpack.c.bf16 %v6410, %v6409
    %v6462 = vpack.c.bf16 %v6412, %v6411
    %v6463 = vpack.c.bf16 %v6414, %v6413
    %v6464 = vpack.c.bf16 %v6416, %v6415
    %v6465 = vpack.c.bf16 %v6418, %v6417
    %v6466 = vpack.c.bf16 %v6420, %v6419
    %v6467 = vpack.c.bf16 %v6422, %v6421
    %v6468 = vpack.c.bf16 %v6424, %v6423
    %v6469 = vpack.c.bf16 %v6426, %v6425
    %v6470 = vpack.c.bf16 %v6428, %v6427
    %v6471 = vpack.c.bf16 %v6430, %v6429
    %v6472 = vpack.c.bf16 %v6432, %v6431
    %v6473 = vpack.c.bf16 %v6434, %v6433
    %v6474 = vpack.c.bf16 %v6436, %v6435
    %v6475 = vpack.c.bf16 %v6438, %v6437
    %v6476 = vpack.c.bf16 %v6440, %v6439
    %v6477 = vpack.c.bf16 %v6442, %v6441
    %v6478 = vpack.c.bf16 %v6444, %v6443
    %v6479 = vpack.c.bf16 %v6446, %v6445
    %v6480 = vpack.c.bf16 %v6448, %v6447
    %v6481 = vld [vmem:[#allocation5] sm:$0xf]
    %v6482 = vld [vmem:[#allocation5 + $0x4] sm:$0xf]
    %v6483 = vld [vmem:[#allocation5 + $0x8] sm:$0xf]
    %v6484 = vld [vmem:[#allocation5 + $0xc] sm:$0xf]
    %v6485 = vld [vmem:[#allocation5 + $0x10] sm:$0xf]
    %v6486 = vld [vmem:[#allocation5 + $0x14] sm:$0xf]
    %v6487 = vld [vmem:[#allocation5 + $0x18] sm:$0xf]
    %v6488 = vld [vmem:[#allocation5 + $0x1c] sm:$0xf]
    %v6489 = vld [vmem:[#allocation5 + $0x20] sm:$0xf]
    %v6490 = vld [vmem:[#allocation5 + $0x24] sm:$0xf]
    %v6491 = vld [vmem:[#allocation5 + $0x28] sm:$0xf]
    %v6492 = vld [vmem:[#allocation5 + $0x2c] sm:$0xf]
    %v6493 = vld [vmem:[#allocation5 + $0x30] sm:$0xf]
    %v6494 = vld [vmem:[#allocation5 + $0x34] sm:$0xf]
    %v6495 = vld [vmem:[#allocation5 + $0x38] sm:$0xf]
    %v6496 = vld [vmem:[#allocation5 + $0x3c] sm:$0xf]
    %v6513 = vunpack.c.l.b16 %v6481
    %v6514 = vunpack.c.l.b16 %v6482
    %v6515 = vunpack.c.l.b16 %v6483
    %v6516 = vunpack.c.l.b16 %v6484
    %v6517 = vunpack.c.l.b16 %v6485
    %v6518 = vunpack.c.l.b16 %v6486
    %v6519 = vunpack.c.l.b16 %v6487
    %v6520 = vunpack.c.l.b16 %v6488
    %v6521 = vunpack.c.l.b16 %v6489
    %v6522 = vunpack.c.l.b16 %v6490
    %v6523 = vunpack.c.l.b16 %v6491
    %v6524 = vunpack.c.l.b16 %v6492
    %v6525 = vunpack.c.l.b16 %v6493
    %v6526 = vunpack.c.l.b16 %v6494
    %v6527 = vunpack.c.l.b16 %v6495
    %v6528 = vunpack.c.l.b16 %v6496
    %v6529 = vpack.c.b16 %v6514, %v6513
    %v6530 = vpack.c.b16 %v6516, %v6515
    %v6531 = vpack.c.b16 %v6518, %v6517
    %v6532 = vpack.c.b16 %v6520, %v6519
    %v6533 = vpack.c.b16 %v6522, %v6521
    %v6534 = vpack.c.b16 %v6524, %v6523
    %v6535 = vpack.c.b16 %v6526, %v6525
    %v6536 = vpack.c.b16 %v6528, %v6527
    %6545 = vmatpush.bf16.msra.mxu0 %v6536
    %6546 = vmatpush.bf16.msra.mxu0 %v6535
    %6547 = vmatpush.bf16.msra.mxu0 %v6534
    %6548 = vmatpush.bf16.msra.mxu0 %v6533
    %6549 = vmatpush.bf16.msra.mxu0 %v6532
    %6550 = vmatpush.bf16.msra.mxu0 %v6531
    %6551 = vmatpush.bf16.msra.mxu0 %v6530
    %6552 = vmatpush.bf16.msra.mxu0 %v6529
    %6553 = vmatmul.bf16.gmra.mxu0 %v6449
    %v6554 = vpop.f32.mrf.mxu0
    %v6555 = vadd.f32 0.0, %v6554
    %v6556 = vpop.f32.mrf.mxu0
    %v6557 = vadd.f32 0.0, %v6556
    %6558 = vmatmul.bf16.gmra.mxu0 %v6450
    %v6559 = vpop.f32.mrf.mxu0
    %v6560 = vadd.f32 0.0, %v6559
    %v6561 = vpop.f32.mrf.mxu0
    %v6562 = vadd.f32 0.0, %v6561
    %6563 = vmatmul.bf16.gmra.mxu0 %v6451
    %v6564 = vpop.f32.mrf.mxu0
    %v6565 = vadd.f32 0.0, %v6564
    %v6566 = vpop.f32.mrf.mxu0
    %v6567 = vadd.f32 0.0, %v6566
    %6568 = vmatmul.bf16.gmra.mxu0 %v6452
    %v6569 = vpop.f32.mrf.mxu0
    %v6570 = vadd.f32 0.0, %v6569
    %v6571 = vpop.f32.mrf.mxu0
    %v6572 = vadd.f32 0.0, %v6571
    %6573 = vmatmul.bf16.gmra.mxu0 %v6453
    %v6574 = vpop.f32.mrf.mxu0
    %v6575 = vadd.f32 0.0, %v6574
    %v6576 = vpop.f32.mrf.mxu0
    %v6577 = vadd.f32 0.0, %v6576
    %6578 = vmatmul.bf16.gmra.mxu0 %v6454
    %v6579 = vpop.f32.mrf.mxu0
    %v6580 = vadd.f32 0.0, %v6579
    %v6581 = vpop.f32.mrf.mxu0
    %v6582 = vadd.f32 0.0, %v6581
    %6583 = vmatmul.bf16.gmra.mxu0 %v6455
    %v6584 = vpop.f32.mrf.mxu0
    %v6585 = vadd.f32 0.0, %v6584
    %v6586 = vpop.f32.mrf.mxu0
    %v6587 = vadd.f32 0.0, %v6586
    %6588 = vmatmul.bf16.gmra.mxu0 %v6456
    %v6589 = vpop.f32.mrf.mxu0
    %v6590 = vadd.f32 0.0, %v6589
    %v6591 = vpop.f32.mrf.mxu0
    %v6592 = vadd.f32 0.0, %v6591
    %6593 = vmatmul.bf16.gmra.mxu0 %v6457
    %v6594 = vpop.f32.mrf.mxu0
    %v6595 = vadd.f32 0.0, %v6594
    %v6596 = vpop.f32.mrf.mxu0
    %v6597 = vadd.f32 0.0, %v6596
    %6598 = vmatmul.bf16.gmra.mxu0 %v6458
    %v6599 = vpop.f32.mrf.mxu0
    %v6600 = vadd.f32 0.0, %v6599
    %v6601 = vpop.f32.mrf.mxu0
    %v6602 = vadd.f32 0.0, %v6601
    %6603 = vmatmul.bf16.gmra.mxu0 %v6459
    %v6604 = vpop.f32.mrf.mxu0
    %v6605 = vadd.f32 0.0, %v6604
    %v6606 = vpop.f32.mrf.mxu0
    %v6607 = vadd.f32 0.0, %v6606
    %6608 = vmatmul.bf16.gmra.mxu0 %v6460
    %v6609 = vpop.f32.mrf.mxu0
    %v6610 = vadd.f32 0.0, %v6609
    %v6611 = vpop.f32.mrf.mxu0
    %v6612 = vadd.f32 0.0, %v6611
    %6613 = vmatmul.bf16.gmra.mxu0 %v6461
    %v6614 = vpop.f32.mrf.mxu0
    %v6615 = vadd.f32 0.0, %v6614
    %v6616 = vpop.f32.mrf.mxu0
    %v6617 = vadd.f32 0.0, %v6616
    %6618 = vmatmul.bf16.gmra.mxu0 %v6462
    %v6619 = vpop.f32.mrf.mxu0
    %v6620 = vadd.f32 0.0, %v6619
    %v6621 = vpop.f32.mrf.mxu0
    %v6622 = vadd.f32 0.0, %v6621
    %6623 = vmatmul.bf16.gmra.mxu0 %v6463
    %v6624 = vpop.f32.mrf.mxu0
    %v6625 = vadd.f32 0.0, %v6624
    %v6626 = vpop.f32.mrf.mxu0
    %v6627 = vadd.f32 0.0, %v6626
    %6628 = vmatmul.bf16.gmra.mxu0 %v6464
    %v6629 = vpop.f32.mrf.mxu0
    %v6630 = vadd.f32 0.0, %v6629
    %v6631 = vpop.f32.mrf.mxu0
    %v6632 = vadd.f32 0.0, %v6631
    %6633 = vmatmul.bf16.gmra.mxu0 %v6465
    %v6634 = vpop.f32.mrf.mxu0
    %v6635 = vadd.f32 0.0, %v6634
    %v6636 = vpop.f32.mrf.mxu0
    %v6637 = vadd.f32 0.0, %v6636
    %6638 = vmatmul.bf16.gmra.mxu0 %v6466
    %v6639 = vpop.f32.mrf.mxu0
    %v6640 = vadd.f32 0.0, %v6639
    %v6641 = vpop.f32.mrf.mxu0
    %v6642 = vadd.f32 0.0, %v6641
    %6643 = vmatmul.bf16.gmra.mxu0 %v6467
    %v6644 = vpop.f32.mrf.mxu0
    %v6645 = vadd.f32 0.0, %v6644
    %v6646 = vpop.f32.mrf.mxu0
    %v6647 = vadd.f32 0.0, %v6646
    %6648 = vmatmul.bf16.gmra.mxu0 %v6468
    %v6649 = vpop.f32.mrf.mxu0
    %v6650 = vadd.f32 0.0, %v6649
    %v6651 = vpop.f32.mrf.mxu0
    %v6652 = vadd.f32 0.0, %v6651
    %6653 = vmatmul.bf16.gmra.mxu0 %v6469
    %v6654 = vpop.f32.mrf.mxu0
    %v6655 = vadd.f32 0.0, %v6654
    %v6656 = vpop.f32.mrf.mxu0
    %v6657 = vadd.f32 0.0, %v6656
    %6658 = vmatmul.bf16.gmra.mxu0 %v6470
    %v6659 = vpop.f32.mrf.mxu0
    %v6660 = vadd.f32 0.0, %v6659
    %v6661 = vpop.f32.mrf.mxu0
    %v6662 = vadd.f32 0.0, %v6661
    %6663 = vmatmul.bf16.gmra.mxu0 %v6471
    %v6664 = vpop.f32.mrf.mxu0
    %v6665 = vadd.f32 0.0, %v6664
    %v6666 = vpop.f32.mrf.mxu0
    %v6667 = vadd.f32 0.0, %v6666
    %6668 = vmatmul.bf16.gmra.mxu0 %v6472
    %v6669 = vpop.f32.mrf.mxu0
    %v6670 = vadd.f32 0.0, %v6669
    %v6671 = vpop.f32.mrf.mxu0
    %v6672 = vadd.f32 0.0, %v6671
    %6673 = vmatmul.bf16.gmra.mxu0 %v6473
    %v6674 = vpop.f32.mrf.mxu0
    %v6675 = vadd.f32 0.0, %v6674
    %v6676 = vpop.f32.mrf.mxu0
    %v6677 = vadd.f32 0.0, %v6676
    %6678 = vmatmul.bf16.gmra.mxu0 %v6474
    %v6679 = vpop.f32.mrf.mxu0
    %v6680 = vadd.f32 0.0, %v6679
    %v6681 = vpop.f32.mrf.mxu0
    %v6682 = vadd.f32 0.0, %v6681
    %6683 = vmatmul.bf16.gmra.mxu0 %v6475
    %v6684 = vpop.f32.mrf.mxu0
    %v6685 = vadd.f32 0.0, %v6684
    %v6686 = vpop.f32.mrf.mxu0
    %v6687 = vadd.f32 0.0, %v6686
    %6688 = vmatmul.bf16.gmra.mxu0 %v6476
    %v6689 = vpop.f32.mrf.mxu0
    %v6690 = vadd.f32 0.0, %v6689
    %v6691 = vpop.f32.mrf.mxu0
    %v6692 = vadd.f32 0.0, %v6691
    %6693 = vmatmul.bf16.gmra.mxu0 %v6477
    %v6694 = vpop.f32.mrf.mxu0
    %v6695 = vadd.f32 0.0, %v6694
    %v6696 = vpop.f32.mrf.mxu0
    %v6697 = vadd.f32 0.0, %v6696
    %6698 = vmatmul.bf16.gmra.mxu0 %v6478
    %v6699 = vpop.f32.mrf.mxu0
    %v6700 = vadd.f32 0.0, %v6699
    %v6701 = vpop.f32.mrf.mxu0
    %v6702 = vadd.f32 0.0, %v6701
    %6703 = vmatmul.bf16.gmra.mxu0 %v6479
    %v6704 = vpop.f32.mrf.mxu0
    %v6705 = vadd.f32 0.0, %v6704
    %v6706 = vpop.f32.mrf.mxu0
    %v6707 = vadd.f32 0.0, %v6706
    %6708 = vmatmul.bf16.gmra.mxu0 %v6480
    %v6709 = vpop.f32.mrf.mxu0
    %v6710 = vadd.f32 0.0, %v6709
    %v6711 = vpop.f32.mrf.mxu0
    %v6712 = vadd.f32 0.0, %v6711
    %6713 = vdwg.mxu0
    %v6714 = vadd.f32 %v6555, %v6557
    %v6715 = vadd.f32 %v6714, %v6560
    %v6716 = vadd.f32 %v6715, %v6562
    %v6717 = vadd.f32 %v6716, %v6565
    %v6718 = vadd.f32 %v6717, %v6567
    %v6719 = vadd.f32 %v6718, %v6570
    %v6720 = vadd.f32 %v6719, %v6572
    %v6721 = vadd.f32 %v6720, %v6575
    %v6722 = vadd.f32 %v6721, %v6577
    %v6723 = vadd.f32 %v6722, %v6580
    %v6724 = vadd.f32 %v6723, %v6582
    %v6725 = vadd.f32 %v6724, %v6585
    %v6726 = vadd.f32 %v6725, %v6587
    %v6727 = vadd.f32 %v6726, %v6590
    %v6728 = vadd.f32 %v6727, %v6592
    %v6729 = vadd.f32 %v6728, %v6595
    %v6730 = vadd.f32 %v6729, %v6597
    %v6731 = vadd.f32 %v6730, %v6600
    %v6732 = vadd.f32 %v6731, %v6602
    %v6733 = vadd.f32 %v6732, %v6605
    %v6734 = vadd.f32 %v6733, %v6607
    %v6735 = vadd.f32 %v6734, %v6610
    %v6736 = vadd.f32 %v6735, %v6612
    %v6737 = vadd.f32 %v6736, %v6615
    %v6738 = vadd.f32 %v6737, %v6617
    %v6739 = vadd.f32 %v6738, %v6620
    %v6740 = vadd.f32 %v6739, %v6622
    %v6741 = vadd.f32 %v6740, %v6625
    %v6742 = vadd.f32 %v6741, %v6627
    %v6743 = vadd.f32 %v6742, %v6630
    %v6744 = vadd.f32 %v6743, %v6632
    %v6745 = vadd.f32 %v6744, %v6635
    %v6746 = vadd.f32 %v6745, %v6637
    %v6747 = vadd.f32 %v6746, %v6640
    %v6748 = vadd.f32 %v6747, %v6642
    %v6749 = vadd.f32 %v6748, %v6645
    %v6750 = vadd.f32 %v6749, %v6647
    %v6751 = vadd.f32 %v6750, %v6650
    %v6752 = vadd.f32 %v6751, %v6652
    %v6753 = vadd.f32 %v6752, %v6655
    %v6754 = vadd.f32 %v6753, %v6657
    %v6755 = vadd.f32 %v6754, %v6660
    %v6756 = vadd.f32 %v6755, %v6662
    %v6757 = vadd.f32 %v6756, %v6665
    %v6758 = vadd.f32 %v6757, %v6667
    %v6759 = vadd.f32 %v6758, %v6670
    %v6760 = vadd.f32 %v6759, %v6672
    %v6761 = vadd.f32 %v6760, %v6675
    %v6762 = vadd.f32 %v6761, %v6677
    %v6763 = vadd.f32 %v6762, %v6680
    %v6764 = vadd.f32 %v6763, %v6682
    %v6765 = vadd.f32 %v6764, %v6685
    %v6766 = vadd.f32 %v6765, %v6687
    %v6767 = vadd.f32 %v6766, %v6690
    %v6768 = vadd.f32 %v6767, %v6692
    %v6769 = vadd.f32 %v6768, %v6695
    %v6770 = vadd.f32 %v6769, %v6697
    %v6771 = vadd.f32 %v6770, %v6700
    %v6772 = vadd.f32 %v6771, %v6702
    %v6773 = vadd.f32 %v6772, %v6705
    %v6774 = vadd.f32 %v6773, %v6707
    %v6775 = vadd.f32 %v6774, %v6710
    %v6776 = vadd.f32 %v6775, %v6712
    %v6777 = vrot.slane %v6776, 4
    %v6778 = vadd.f32 %v6776, %v6777
    %v6779 = vrot.slane %v6778, 2
    %v6780 = vadd.f32 %v6778, %v6779
    %v6781 = vrot.slane %v6780, 1
    %v6782 = vadd.f32 %v6780, %v6781
    %v6783 = vmul.f32 %v6782, 0.001953125
    %v6784 = vmul.f32 %v6555, %v6555
    %v6785 = vmul.f32 %v6557, %v6557
    %v6786 = vmul.f32 %v6560, %v6560
    %v6787 = vmul.f32 %v6562, %v6562
    %v6788 = vmul.f32 %v6565, %v6565
    %v6789 = vmul.f32 %v6567, %v6567
    %v6790 = vmul.f32 %v6570, %v6570
    %v6791 = vmul.f32 %v6572, %v6572
    %v6792 = vmul.f32 %v6575, %v6575
    %v6793 = vmul.f32 %v6577, %v6577
    %v6794 = vmul.f32 %v6580, %v6580
    %v6795 = vmul.f32 %v6582, %v6582
    %v6796 = vmul.f32 %v6585, %v6585
    %v6797 = vmul.f32 %v6587, %v6587
    %v6798 = vmul.f32 %v6590, %v6590
    %v6799 = vmul.f32 %v6592, %v6592
    %v6800 = vmul.f32 %v6595, %v6595
    %v6801 = vmul.f32 %v6597, %v6597
    %v6802 = vmul.f32 %v6600, %v6600
    %v6803 = vmul.f32 %v6602, %v6602
    %v6804 = vmul.f32 %v6605, %v6605
    %v6805 = vmul.f32 %v6607, %v6607
    %v6806 = vmul.f32 %v6610, %v6610
    %v6807 = vmul.f32 %v6612, %v6612
    %v6808 = vmul.f32 %v6615, %v6615
    %v6809 = vmul.f32 %v6617, %v6617
    %v6810 = vmul.f32 %v6620, %v6620
    %v6811 = vmul.f32 %v6622, %v6622
    %v6812 = vmul.f32 %v6625, %v6625
    %v6813 = vmul.f32 %v6627, %v6627
    %v6814 = vmul.f32 %v6630, %v6630
    %v6815 = vmul.f32 %v6632, %v6632
    %v6816 = vmul.f32 %v6635, %v6635
    %v6817 = vmul.f32 %v6637, %v6637
    %v6818 = vmul.f32 %v6640, %v6640
    %v6819 = vmul.f32 %v6642, %v6642
    %v6820 = vmul.f32 %v6645, %v6645
    %v6821 = vmul.f32 %v6647, %v6647
    %v6822 = vmul.f32 %v6650, %v6650
    %v6823 = vmul.f32 %v6652, %v6652
    %v6824 = vmul.f32 %v6655, %v6655
    %v6825 = vmul.f32 %v6657, %v6657
    %v6826 = vmul.f32 %v6660, %v6660
    %v6827 = vmul.f32 %v6662, %v6662
    %v6828 = vmul.f32 %v6665, %v6665
    %v6829 = vmul.f32 %v6667, %v6667
    %v6830 = vmul.f32 %v6670, %v6670
    %v6831 = vmul.f32 %v6672, %v6672
    %v6832 = vmul.f32 %v6675, %v6675
    %v6833 = vmul.f32 %v6677, %v6677
    %v6834 = vmul.f32 %v6680, %v6680
    %v6835 = vmul.f32 %v6682, %v6682
    %v6836 = vmul.f32 %v6685, %v6685
    %v6837 = vmul.f32 %v6687, %v6687
    %v6838 = vmul.f32 %v6690, %v6690
    %v6839 = vmul.f32 %v6692, %v6692
    %v6840 = vmul.f32 %v6695, %v6695
    %v6841 = vmul.f32 %v6697, %v6697
    %v6842 = vmul.f32 %v6700, %v6700
    %v6843 = vmul.f32 %v6702, %v6702
    %v6844 = vmul.f32 %v6705, %v6705
    %v6845 = vmul.f32 %v6707, %v6707
    %v6846 = vmul.f32 %v6710, %v6710
    %v6847 = vmul.f32 %v6712, %v6712
    %v6848 = vadd.f32 %v6784, %v6785
    %v6849 = vadd.f32 %v6848, %v6786
    %v6850 = vadd.f32 %v6849, %v6787
    %v6851 = vadd.f32 %v6850, %v6788
    %v6852 = vadd.f32 %v6851, %v6789
    %v6853 = vadd.f32 %v6852, %v6790
    %v6854 = vadd.f32 %v6853, %v6791
    %v6855 = vadd.f32 %v6854, %v6792
    %v6856 = vadd.f32 %v6855, %v6793
    %v6857 = vadd.f32 %v6856, %v6794
    %v6858 = vadd.f32 %v6857, %v6795
    %v6859 = vadd.f32 %v6858, %v6796
    %v6860 = vadd.f32 %v6859, %v6797
    %v6861 = vadd.f32 %v6860, %v6798
    %v6862 = vadd.f32 %v6861, %v6799
    %v6863 = vadd.f32 %v6862, %v6800
    %v6864 = vadd.f32 %v6863, %v6801
    %v6865 = vadd.f32 %v6864, %v6802
    %v6866 = vadd.f32 %v6865, %v6803
    %v6867 = vadd.f32 %v6866, %v6804
    %v6868 = vadd.f32 %v6867, %v6805
    %v6869 = vadd.f32 %v6868, %v6806
    %v6870 = vadd.f32 %v6869, %v6807
    %v6871 = vadd.f32 %v6870, %v6808
    %v6872 = vadd.f32 %v6871, %v6809
    %v6873 = vadd.f32 %v6872, %v6810
    %v6874 = vadd.f32 %v6873, %v6811
    %v6875 = vadd.f32 %v6874, %v6812
    %v6876 = vadd.f32 %v6875, %v6813
    %v6877 = vadd.f32 %v6876, %v6814
    %v6878 = vadd.f32 %v6877, %v6815
    %v6879 = vadd.f32 %v6878, %v6816
    %v6880 = vadd.f32 %v6879, %v6817
    %v6881 = vadd.f32 %v6880, %v6818
    %v6882 = vadd.f32 %v6881, %v6819
    %v6883 = vadd.f32 %v6882, %v6820
    %v6884 = vadd.f32 %v6883, %v6821
    %v6885 = vadd.f32 %v6884, %v6822
    %v6886 = vadd.f32 %v6885, %v6823
    %v6887 = vadd.f32 %v6886, %v6824
    %v6888 = vadd.f32 %v6887, %v6825
    %v6889 = vadd.f32 %v6888, %v6826
    %v6890 = vadd.f32 %v6889, %v6827
    %v6891 = vadd.f32 %v6890, %v6828
    %v6892 = vadd.f32 %v6891, %v6829
    %v6893 = vadd.f32 %v6892, %v6830
    %v6894 = vadd.f32 %v6893, %v6831
    %v6895 = vadd.f32 %v6894, %v6832
    %v6896 = vadd.f32 %v6895, %v6833
    %v6897 = vadd.f32 %v6896, %v6834
    %v6898 = vadd.f32 %v6897, %v6835
    %v6899 = vadd.f32 %v6898, %v6836
    %v6900 = vadd.f32 %v6899, %v6837
    %v6901 = vadd.f32 %v6900, %v6838
    %v6902 = vadd.f32 %v6901, %v6839
    %v6903 = vadd.f32 %v6902, %v6840
    %v6904 = vadd.f32 %v6903, %v6841
    %v6905 = vadd.f32 %v6904, %v6842
    %v6906 = vadd.f32 %v6905, %v6843
    %v6907 = vadd.f32 %v6906, %v6844
    %v6908 = vadd.f32 %v6907, %v6845
    %v6909 = vadd.f32 %v6908, %v6846
    %v6910 = vadd.f32 %v6909, %v6847
    %v6911 = vrot.slane %v6910, 4
    %v6912 = vadd.f32 %v6910, %v6911
    %v6913 = vrot.slane %v6912, 2
    %v6914 = vadd.f32 %v6912, %v6913
    %v6915 = vrot.slane %v6914, 1
    %v6916 = vadd.f32 %v6914, %v6915
    %v6917 = vmul.f32 %v6916, 0.001953125
    %v6918 = vmul.f32 %v6783, %v6783
    %v6919 = vsub.f32 %v6917, %v6918
    %v6920 = vmax.f32 %v6919, 0.0
    %v6921 = vld [vmem:[#allocation14] sm:$0x1]
    %v6922 = vadd.f32 %v6920, 1e-05
    %v6923 = vrsqrt.pop %v6922
    %v6924 = vmul.f32 %v6923, %v6922
    %v6925 = vmul.f32 %v6924, %v6923
    %v6926 = vmul.f32 0.5, %v6925
    %v6927 = vsub.f32 1.5, %v6926
    %v6928 = vmul.f32 %v6923, %v6927
    %vm6929 = vweird.f32 %v6922
    %vm6930 = vweird.f32 %v6923
    %vm6931 = vmor %vm6929, %vm6930
    %v6932 = vsel %vm6931, %v6923, %v6928
    %v6933 = vmul.f32 %v6921, %v6932
    %v6934 = vld [vmem:[#allocation16] sm:$0x1]
    %v6935 = vmul.f32 %v6783, %v6933
    %v6936 = vsub.f32 %v6934, %v6935
    %v6938 = vperm.slane %v6933, 0
    %v6940 = vmul.f32 %v6555, %v6938
    %v6941 = vmul.f32 %v6557, %v6938
    %v6942 = vmul.f32 %v6560, %v6938
    %v6943 = vmul.f32 %v6562, %v6938
    %v6944 = vmul.f32 %v6565, %v6938
    %v6945 = vmul.f32 %v6567, %v6938
    %v6946 = vmul.f32 %v6570, %v6938
    %v6947 = vmul.f32 %v6572, %v6938
    %v6948 = vmul.f32 %v6575, %v6938
    %v6949 = vmul.f32 %v6577, %v6938
    %v6950 = vmul.f32 %v6580, %v6938
    %v6951 = vmul.f32 %v6582, %v6938
    %v6952 = vmul.f32 %v6585, %v6938
    %v6953 = vmul.f32 %v6587, %v6938
    %v6954 = vmul.f32 %v6590, %v6938
    %v6955 = vmul.f32 %v6592, %v6938
    %v6956 = vmul.f32 %v6595, %v6938
    %v6957 = vmul.f32 %v6597, %v6938
    %v6958 = vmul.f32 %v6600, %v6938
    %v6959 = vmul.f32 %v6602, %v6938
    %v6960 = vmul.f32 %v6605, %v6938
    %v6961 = vmul.f32 %v6607, %v6938
    %v6962 = vmul.f32 %v6610, %v6938
    %v6963 = vmul.f32 %v6612, %v6938
    %v6964 = vmul.f32 %v6615, %v6938
    %v6965 = vmul.f32 %v6617, %v6938
    %v6966 = vmul.f32 %v6620, %v6938
    %v6967 = vmul.f32 %v6622, %v6938
    %v6968 = vmul.f32 %v6625, %v6938
    %v6969 = vmul.f32 %v6627, %v6938
    %v6970 = vmul.f32 %v6630, %v6938
    %v6971 = vmul.f32 %v6632, %v6938
    %v6972 = vmul.f32 %v6635, %v6938
    %v6973 = vmul.f32 %v6637, %v6938
    %v6974 = vmul.f32 %v6640, %v6938
    %v6975 = vmul.f32 %v6642, %v6938
    %v6976 = vmul.f32 %v6645, %v6938
    %v6977 = vmul.f32 %v6647, %v6938
    %v6978 = vmul.f32 %v6650, %v6938
    %v6979 = vmul.f32 %v6652, %v6938
    %v6980 = vmul.f32 %v6655, %v6938
    %v6981 = vmul.f32 %v6657, %v6938
    %v6982 = vmul.f32 %v6660, %v6938
    %v6983 = vmul.f32 %v6662, %v6938
    %v6984 = vmul.f32 %v6665, %v6938
    %v6985 = vmul.f32 %v6667, %v6938
    %v6986 = vmul.f32 %v6670, %v6938
    %v6987 = vmul.f32 %v6672, %v6938
    %v6988 = vmul.f32 %v6675, %v6938
    %v6989 = vmul.f32 %v6677, %v6938
    %v6990 = vmul.f32 %v6680, %v6938
    %v6991 = vmul.f32 %v6682, %v6938
    %v6992 = vmul.f32 %v6685, %v6938
    %v6993 = vmul.f32 %v6687, %v6938
    %v6994 = vmul.f32 %v6690, %v6938
    %v6995 = vmul.f32 %v6692, %v6938
    %v6996 = vmul.f32 %v6695, %v6938
    %v6997 = vmul.f32 %v6697, %v6938
    %v6998 = vmul.f32 %v6700, %v6938
    %v6999 = vmul.f32 %v6702, %v6938
    %v7000 = vmul.f32 %v6705, %v6938
    %v7001 = vmul.f32 %v6707, %v6938
    %v7002 = vmul.f32 %v6710, %v6938
    %v7003 = vmul.f32 %v6712, %v6938
    %v7005 = vperm.slane %v6936, 0
    %v7007 = vadd.f32 %v6940, %v7005
    %v7008 = vadd.f32 %v6941, %v7005
    %v7009 = vadd.f32 %v6942, %v7005
    %v7010 = vadd.f32 %v6943, %v7005
    %v7011 = vadd.f32 %v6944, %v7005
    %v7012 = vadd.f32 %v6945, %v7005
    %v7013 = vadd.f32 %v6946, %v7005
    %v7014 = vadd.f32 %v6947, %v7005
    %v7015 = vadd.f32 %v6948, %v7005
    %v7016 = vadd.f32 %v6949, %v7005
    %v7017 = vadd.f32 %v6950, %v7005
    %v7018 = vadd.f32 %v6951, %v7005
    %v7019 = vadd.f32 %v6952, %v7005
    %v7020 = vadd.f32 %v6953, %v7005
    %v7021 = vadd.f32 %v6954, %v7005
    %v7022 = vadd.f32 %v6955, %v7005
    %v7023 = vadd.f32 %v6956, %v7005
    %v7024 = vadd.f32 %v6957, %v7005
    %v7025 = vadd.f32 %v6958, %v7005
    %v7026 = vadd.f32 %v6959, %v7005
    %v7027 = vadd.f32 %v6960, %v7005
    %v7028 = vadd.f32 %v6961, %v7005
    %v7029 = vadd.f32 %v6962, %v7005
    %v7030 = vadd.f32 %v6963, %v7005
    %v7031 = vadd.f32 %v6964, %v7005
    %v7032 = vadd.f32 %v6965, %v7005
    %v7033 = vadd.f32 %v6966, %v7005
    %v7034 = vadd.f32 %v6967, %v7005
    %v7035 = vadd.f32 %v6968, %v7005
    %v7036 = vadd.f32 %v6969, %v7005
    %v7037 = vadd.f32 %v6970, %v7005
    %v7038 = vadd.f32 %v6971, %v7005
    %v7039 = vadd.f32 %v6972, %v7005
    %v7040 = vadd.f32 %v6973, %v7005
    %v7041 = vadd.f32 %v6974, %v7005
    %v7042 = vadd.f32 %v6975, %v7005
    %v7043 = vadd.f32 %v6976, %v7005
    %v7044 = vadd.f32 %v6977, %v7005
    %v7045 = vadd.f32 %v6978, %v7005
    %v7046 = vadd.f32 %v6979, %v7005
    %v7047 = vadd.f32 %v6980, %v7005
    %v7048 = vadd.f32 %v6981, %v7005
    %v7049 = vadd.f32 %v6982, %v7005
    %v7050 = vadd.f32 %v6983, %v7005
    %v7051 = vadd.f32 %v6984, %v7005
    %v7052 = vadd.f32 %v6985, %v7005
    %v7053 = vadd.f32 %v6986, %v7005
    %v7054 = vadd.f32 %v6987, %v7005
    %v7055 = vadd.f32 %v6988, %v7005
    %v7056 = vadd.f32 %v6989, %v7005
    %v7057 = vadd.f32 %v6990, %v7005
    %v7058 = vadd.f32 %v6991, %v7005
    %v7059 = vadd.f32 %v6992, %v7005
    %v7060 = vadd.f32 %v6993, %v7005
    %v7061 = vadd.f32 %v6994, %v7005
    %v7062 = vadd.f32 %v6995, %v7005
    %v7063 = vadd.f32 %v6996, %v7005
    %v7064 = vadd.f32 %v6997, %v7005
    %v7065 = vadd.f32 %v6998, %v7005
    %v7066 = vadd.f32 %v6999, %v7005
    %v7067 = vadd.f32 %v7000, %v7005
    %v7068 = vadd.f32 %v7001, %v7005
    %v7069 = vadd.f32 %v7002, %v7005
    %v7070 = vadd.f32 %v7003, %v7005
    %v7071 = vmax.f32 %v7007, 0.0
    %v7072 = vmax.f32 %v7008, 0.0
    %v7073 = vmax.f32 %v7009, 0.0
    %v7074 = vmax.f32 %v7010, 0.0
    %v7075 = vmax.f32 %v7011, 0.0
    %v7076 = vmax.f32 %v7012, 0.0
    %v7077 = vmax.f32 %v7013, 0.0
    %v7078 = vmax.f32 %v7014, 0.0
    %v7079 = vmax.f32 %v7015, 0.0
    %v7080 = vmax.f32 %v7016, 0.0
    %v7081 = vmax.f32 %v7017, 0.0
    %v7082 = vmax.f32 %v7018, 0.0
    %v7083 = vmax.f32 %v7019, 0.0
    %v7084 = vmax.f32 %v7020, 0.0
    %v7085 = vmax.f32 %v7021, 0.0
    %v7086 = vmax.f32 %v7022, 0.0
    %v7087 = vmax.f32 %v7023, 0.0
    %v7088 = vmax.f32 %v7024, 0.0
    %v7089 = vmax.f32 %v7025, 0.0
    %v7090 = vmax.f32 %v7026, 0.0
    %v7091 = vmax.f32 %v7027, 0.0
    %v7092 = vmax.f32 %v7028, 0.0
    %v7093 = vmax.f32 %v7029, 0.0
    %v7094 = vmax.f32 %v7030, 0.0
    %v7095 = vmax.f32 %v7031, 0.0
    %v7096 = vmax.f32 %v7032, 0.0
    %v7097 = vmax.f32 %v7033, 0.0
    %v7098 = vmax.f32 %v7034, 0.0
    %v7099 = vmax.f32 %v7035, 0.0
    %v7100 = vmax.f32 %v7036, 0.0
    %v7101 = vmax.f32 %v7037, 0.0
    %v7102 = vmax.f32 %v7038, 0.0
    %v7103 = vmax.f32 %v7039, 0.0
    %v7104 = vmax.f32 %v7040, 0.0
    %v7105 = vmax.f32 %v7041, 0.0
    %v7106 = vmax.f32 %v7042, 0.0
    %v7107 = vmax.f32 %v7043, 0.0
    %v7108 = vmax.f32 %v7044, 0.0
    %v7109 = vmax.f32 %v7045, 0.0
    %v7110 = vmax.f32 %v7046, 0.0
    %v7111 = vmax.f32 %v7047, 0.0
    %v7112 = vmax.f32 %v7048, 0.0
    %v7113 = vmax.f32 %v7049, 0.0
    %v7114 = vmax.f32 %v7050, 0.0
    %v7115 = vmax.f32 %v7051, 0.0
    %v7116 = vmax.f32 %v7052, 0.0
    %v7117 = vmax.f32 %v7053, 0.0
    %v7118 = vmax.f32 %v7054, 0.0
    %v7119 = vmax.f32 %v7055, 0.0
    %v7120 = vmax.f32 %v7056, 0.0
    %v7121 = vmax.f32 %v7057, 0.0
    %v7122 = vmax.f32 %v7058, 0.0
    %v7123 = vmax.f32 %v7059, 0.0
    %v7124 = vmax.f32 %v7060, 0.0
    %v7125 = vmax.f32 %v7061, 0.0
    %v7126 = vmax.f32 %v7062, 0.0
    %v7127 = vmax.f32 %v7063, 0.0
    %v7128 = vmax.f32 %v7064, 0.0
    %v7129 = vmax.f32 %v7065, 0.0
    %v7130 = vmax.f32 %v7066, 0.0
    %v7131 = vmax.f32 %v7067, 0.0
    %v7132 = vmax.f32 %v7068, 0.0
    %v7133 = vmax.f32 %v7069, 0.0
    %v7134 = vmax.f32 %v7070, 0.0
    %v7135 = vpack.c.bf16 %v7072, %v7071
    %v7136 = vpack.c.bf16 %v7074, %v7073
    %v7137 = vpack.c.bf16 %v7076, %v7075
    %v7138 = vpack.c.bf16 %v7078, %v7077
    %v7139 = vpack.c.bf16 %v7080, %v7079
    %v7140 = vpack.c.bf16 %v7082, %v7081
    %v7141 = vpack.c.bf16 %v7084, %v7083
    %v7142 = vpack.c.bf16 %v7086, %v7085
    %v7143 = vpack.c.bf16 %v7088, %v7087
    %v7144 = vpack.c.bf16 %v7090, %v7089
    %v7145 = vpack.c.bf16 %v7092, %v7091
    %v7146 = vpack.c.bf16 %v7094, %v7093
    %v7147 = vpack.c.bf16 %v7096, %v7095
    %v7148 = vpack.c.bf16 %v7098, %v7097
    %v7149 = vpack.c.bf16 %v7100, %v7099
    %v7150 = vpack.c.bf16 %v7102, %v7101
    %v7151 = vpack.c.bf16 %v7104, %v7103
    %v7152 = vpack.c.bf16 %v7106, %v7105
    %v7153 = vpack.c.bf16 %v7108, %v7107
    %v7154 = vpack.c.bf16 %v7110, %v7109
    %v7155 = vpack.c.bf16 %v7112, %v7111
    %v7156 = vpack.c.bf16 %v7114, %v7113
    %v7157 = vpack.c.bf16 %v7116, %v7115
    %v7158 = vpack.c.bf16 %v7118, %v7117
    %v7159 = vpack.c.bf16 %v7120, %v7119
    %v7160 = vpack.c.bf16 %v7122, %v7121
    %v7161 = vpack.c.bf16 %v7124, %v7123
    %v7162 = vpack.c.bf16 %v7126, %v7125
    %v7163 = vpack.c.bf16 %v7128, %v7127
    %v7164 = vpack.c.bf16 %v7130, %v7129
    %v7165 = vpack.c.bf16 %v7132, %v7131
    %v7166 = vpack.c.bf16 %v7134, %v7133
    %v7167 = vld [vmem:[#allocation7] sm:$0xf]
    %v7168 = vld [vmem:[#allocation7 + $0x4] sm:$0xf]
    %v7169 = vld [vmem:[#allocation7 + $0x8] sm:$0xf]
    %v7170 = vld [vmem:[#allocation7 + $0xc] sm:$0xf]
    %v7171 = vld [vmem:[#allocation7 + $0x10] sm:$0xf]
    %v7172 = vld [vmem:[#allocation7 + $0x14] sm:$0xf]
    %v7173 = vld [vmem:[#allocation7 + $0x18] sm:$0xf]
    %v7174 = vld [vmem:[#allocation7 + $0x1c] sm:$0xf]
    %v7175 = vld [vmem:[#allocation7 + $0x20] sm:$0xf]
    %v7176 = vld [vmem:[#allocation7 + $0x24] sm:$0xf]
    %v7177 = vld [vmem:[#allocation7 + $0x28] sm:$0xf]
    %v7178 = vld [vmem:[#allocation7 + $0x2c] sm:$0xf]
    %v7179 = vld [vmem:[#allocation7 + $0x30] sm:$0xf]
    %v7180 = vld [vmem:[#allocation7 + $0x34] sm:$0xf]
    %v7181 = vld [vmem:[#allocation7 + $0x38] sm:$0xf]
    %v7182 = vld [vmem:[#allocation7 + $0x3c] sm:$0xf]
    %v7183 = vld [vmem:[%s14] sm:$0x1]
    %v7185 = vperm.slane %v7183, 0
    %v7203 = vunpack.c.l.b16 %v7167
    %v7204 = vunpack.c.l.b16 %v7168
    %v7205 = vunpack.c.l.b16 %v7169
    %v7206 = vunpack.c.l.b16 %v7170
    %v7207 = vunpack.c.l.b16 %v7171
    %v7208 = vunpack.c.l.b16 %v7172
    %v7209 = vunpack.c.l.b16 %v7173
    %v7210 = vunpack.c.l.b16 %v7174
    %v7211 = vunpack.c.l.b16 %v7175
    %v7212 = vunpack.c.l.b16 %v7176
    %v7213 = vunpack.c.l.b16 %v7177
    %v7214 = vunpack.c.l.b16 %v7178
    %v7215 = vunpack.c.l.b16 %v7179
    %v7216 = vunpack.c.l.b16 %v7180
    %v7217 = vunpack.c.l.b16 %v7181
    %v7218 = vunpack.c.l.b16 %v7182
    %v7219 = vpack.c.b16 %v7204, %v7203
    %v7220 = vpack.c.b16 %v7206, %v7205
    %v7221 = vpack.c.b16 %v7208, %v7207
    %v7222 = vpack.c.b16 %v7210, %v7209
    %v7223 = vpack.c.b16 %v7212, %v7211
    %v7224 = vpack.c.b16 %v7214, %v7213
    %v7225 = vpack.c.b16 %v7216, %v7215
    %v7226 = vpack.c.b16 %v7218, %v7217
    %7235 = vmatpush.bf16.msra.mxu0 %v7226
    %7236 = vmatpush.bf16.msra.mxu0 %v7225
    %7237 = vmatpush.bf16.msra.mxu0 %v7224
    %7238 = vmatpush.bf16.msra.mxu0 %v7223
    %7239 = vmatpush.bf16.msra.mxu0 %v7222
    %7240 = vmatpush.bf16.msra.mxu0 %v7221
    %7241 = vmatpush.bf16.msra.mxu0 %v7220
    %7242 = vmatpush.bf16.msra.mxu0 %v7219
    %7243 = vmatmul.bf16.gmra.mxu0 %v7135
    %v7244 = vpop.f32.mrf.mxu0
    %v7245 = vadd.f32 %v7185, %v7244
    %v7246 = vpop.f32.mrf.mxu0
    %v7247 = vadd.f32 %v7185, %v7246
    %7248 = vmatmul.bf16.gmra.mxu0 %v7136
    %v7249 = vpop.f32.mrf.mxu0
    %v7250 = vadd.f32 %v7185, %v7249
    %v7251 = vpop.f32.mrf.mxu0
    %v7252 = vadd.f32 %v7185, %v7251
    %7253 = vmatmul.bf16.gmra.mxu0 %v7137
    %v7254 = vpop.f32.mrf.mxu0
    %v7255 = vadd.f32 %v7185, %v7254
    %v7256 = vpop.f32.mrf.mxu0
    %v7257 = vadd.f32 %v7185, %v7256
    %7258 = vmatmul.bf16.gmra.mxu0 %v7138
    %v7259 = vpop.f32.mrf.mxu0
    %v7260 = vadd.f32 %v7185, %v7259
    %v7261 = vpop.f32.mrf.mxu0
    %v7262 = vadd.f32 %v7185, %v7261
    %7263 = vmatmul.bf16.gmra.mxu0 %v7139
    %v7264 = vpop.f32.mrf.mxu0
    %v7265 = vadd.f32 %v7185, %v7264
    %v7266 = vpop.f32.mrf.mxu0
    %v7267 = vadd.f32 %v7185, %v7266
    %7268 = vmatmul.bf16.gmra.mxu0 %v7140
    %v7269 = vpop.f32.mrf.mxu0
    %v7270 = vadd.f32 %v7185, %v7269
    %v7271 = vpop.f32.mrf.mxu0
    %v7272 = vadd.f32 %v7185, %v7271
    %7273 = vmatmul.bf16.gmra.mxu0 %v7141
    %v7274 = vpop.f32.mrf.mxu0
    %v7275 = vadd.f32 %v7185, %v7274
    %v7276 = vpop.f32.mrf.mxu0
    %v7277 = vadd.f32 %v7185, %v7276
    %7278 = vmatmul.bf16.gmra.mxu0 %v7142
    %v7279 = vpop.f32.mrf.mxu0
    %v7280 = vadd.f32 %v7185, %v7279
    %v7281 = vpop.f32.mrf.mxu0
    %v7282 = vadd.f32 %v7185, %v7281
    %7283 = vmatmul.bf16.gmra.mxu0 %v7143
    %v7284 = vpop.f32.mrf.mxu0
    %v7285 = vadd.f32 %v7185, %v7284
    %v7286 = vpop.f32.mrf.mxu0
    %v7287 = vadd.f32 %v7185, %v7286
    %7288 = vmatmul.bf16.gmra.mxu0 %v7144
    %v7289 = vpop.f32.mrf.mxu0
    %v7290 = vadd.f32 %v7185, %v7289
    %v7291 = vpop.f32.mrf.mxu0
    %v7292 = vadd.f32 %v7185, %v7291
    %7293 = vmatmul.bf16.gmra.mxu0 %v7145
    %v7294 = vpop.f32.mrf.mxu0
    %v7295 = vadd.f32 %v7185, %v7294
    %v7296 = vpop.f32.mrf.mxu0
    %v7297 = vadd.f32 %v7185, %v7296
    %7298 = vmatmul.bf16.gmra.mxu0 %v7146
    %v7299 = vpop.f32.mrf.mxu0
    %v7300 = vadd.f32 %v7185, %v7299
    %v7301 = vpop.f32.mrf.mxu0
    %v7302 = vadd.f32 %v7185, %v7301
    %7303 = vmatmul.bf16.gmra.mxu0 %v7147
    %v7304 = vpop.f32.mrf.mxu0
    %v7305 = vadd.f32 %v7185, %v7304
    %v7306 = vpop.f32.mrf.mxu0
    %v7307 = vadd.f32 %v7185, %v7306
    %7308 = vmatmul.bf16.gmra.mxu0 %v7148
    %v7309 = vpop.f32.mrf.mxu0
    %v7310 = vadd.f32 %v7185, %v7309
    %v7311 = vpop.f32.mrf.mxu0
    %v7312 = vadd.f32 %v7185, %v7311
    %7313 = vmatmul.bf16.gmra.mxu0 %v7149
    %v7314 = vpop.f32.mrf.mxu0
    %v7315 = vadd.f32 %v7185, %v7314
    %v7316 = vpop.f32.mrf.mxu0
    %v7317 = vadd.f32 %v7185, %v7316
    %7318 = vmatmul.bf16.gmra.mxu0 %v7150
    %v7319 = vpop.f32.mrf.mxu0
    %v7320 = vadd.f32 %v7185, %v7319
    %v7321 = vpop.f32.mrf.mxu0
    %v7322 = vadd.f32 %v7185, %v7321
    %7323 = vmatmul.bf16.gmra.mxu0 %v7151
    %v7324 = vpop.f32.mrf.mxu0
    %v7325 = vadd.f32 %v7185, %v7324
    %v7326 = vpop.f32.mrf.mxu0
    %v7327 = vadd.f32 %v7185, %v7326
    %7328 = vmatmul.bf16.gmra.mxu0 %v7152
    %v7329 = vpop.f32.mrf.mxu0
    %v7330 = vadd.f32 %v7185, %v7329
    %v7331 = vpop.f32.mrf.mxu0
    %v7332 = vadd.f32 %v7185, %v7331
    %7333 = vmatmul.bf16.gmra.mxu0 %v7153
    %v7334 = vpop.f32.mrf.mxu0
    %v7335 = vadd.f32 %v7185, %v7334
    %v7336 = vpop.f32.mrf.mxu0
    %v7337 = vadd.f32 %v7185, %v7336
    %7338 = vmatmul.bf16.gmra.mxu0 %v7154
    %v7339 = vpop.f32.mrf.mxu0
    %v7340 = vadd.f32 %v7185, %v7339
    %v7341 = vpop.f32.mrf.mxu0
    %v7342 = vadd.f32 %v7185, %v7341
    %7343 = vmatmul.bf16.gmra.mxu0 %v7155
    %v7344 = vpop.f32.mrf.mxu0
    %v7345 = vadd.f32 %v7185, %v7344
    %v7346 = vpop.f32.mrf.mxu0
    %v7347 = vadd.f32 %v7185, %v7346
    %7348 = vmatmul.bf16.gmra.mxu0 %v7156
    %v7349 = vpop.f32.mrf.mxu0
    %v7350 = vadd.f32 %v7185, %v7349
    %v7351 = vpop.f32.mrf.mxu0
    %v7352 = vadd.f32 %v7185, %v7351
    %7353 = vmatmul.bf16.gmra.mxu0 %v7157
    %v7354 = vpop.f32.mrf.mxu0
    %v7355 = vadd.f32 %v7185, %v7354
    %v7356 = vpop.f32.mrf.mxu0
    %v7357 = vadd.f32 %v7185, %v7356
    %7358 = vmatmul.bf16.gmra.mxu0 %v7158
    %v7359 = vpop.f32.mrf.mxu0
    %v7360 = vadd.f32 %v7185, %v7359
    %v7361 = vpop.f32.mrf.mxu0
    %v7362 = vadd.f32 %v7185, %v7361
    %7363 = vmatmul.bf16.gmra.mxu0 %v7159
    %v7364 = vpop.f32.mrf.mxu0
    %v7365 = vadd.f32 %v7185, %v7364
    %v7366 = vpop.f32.mrf.mxu0
    %v7367 = vadd.f32 %v7185, %v7366
    %7368 = vmatmul.bf16.gmra.mxu0 %v7160
    %v7369 = vpop.f32.mrf.mxu0
    %v7370 = vadd.f32 %v7185, %v7369
    %v7371 = vpop.f32.mrf.mxu0
    %v7372 = vadd.f32 %v7185, %v7371
    %7373 = vmatmul.bf16.gmra.mxu0 %v7161
    %v7374 = vpop.f32.mrf.mxu0
    %v7375 = vadd.f32 %v7185, %v7374
    %v7376 = vpop.f32.mrf.mxu0
    %v7377 = vadd.f32 %v7185, %v7376
    %7378 = vmatmul.bf16.gmra.mxu0 %v7162
    %v7379 = vpop.f32.mrf.mxu0
    %v7380 = vadd.f32 %v7185, %v7379
    %v7381 = vpop.f32.mrf.mxu0
    %v7382 = vadd.f32 %v7185, %v7381
    %7383 = vmatmul.bf16.gmra.mxu0 %v7163
    %v7384 = vpop.f32.mrf.mxu0
    %v7385 = vadd.f32 %v7185, %v7384
    %v7386 = vpop.f32.mrf.mxu0
    %v7387 = vadd.f32 %v7185, %v7386
    %7388 = vmatmul.bf16.gmra.mxu0 %v7164
    %v7389 = vpop.f32.mrf.mxu0
    %v7390 = vadd.f32 %v7185, %v7389
    %v7391 = vpop.f32.mrf.mxu0
    %v7392 = vadd.f32 %v7185, %v7391
    %7393 = vmatmul.bf16.gmra.mxu0 %v7165
    %v7394 = vpop.f32.mrf.mxu0
    %v7395 = vadd.f32 %v7185, %v7394
    %v7396 = vpop.f32.mrf.mxu0
    %v7397 = vadd.f32 %v7185, %v7396
    %7398 = vmatmul.bf16.gmra.mxu0 %v7166
    %v7399 = vpop.f32.mrf.mxu0
    %v7400 = vadd.f32 %v7185, %v7399
    %v7401 = vpop.f32.mrf.mxu0
    %v7402 = vadd.f32 %v7185, %v7401
    %7403 = vdwg.mxu0
    %7404 = vst [vmem:[#allocation17] sm:$0xff] %v7245
    %7405 = vst [vmem:[#allocation17 + $0x8] sm:$0xff] %v7247
    %7406 = vst [vmem:[#allocation17 + $0x10] sm:$0xff] %v7250
    %7407 = vst [vmem:[#allocation17 + $0x18] sm:$0xff] %v7252
    %7408 = vst [vmem:[#allocation17 + $0x20] sm:$0xff] %v7255
    %7409 = vst [vmem:[#allocation17 + $0x28] sm:$0xff] %v7257
    %7410 = vst [vmem:[#allocation17 + $0x30] sm:$0xff] %v7260
    %7411 = vst [vmem:[#allocation17 + $0x38] sm:$0xff] %v7262
    %7412 = vst [vmem:[#allocation17 + $0x40] sm:$0xff] %v7265
    %7413 = vst [vmem:[#allocation17 + $0x48] sm:$0xff] %v7267
    %7414 = vst [vmem:[#allocation17 + $0x50] sm:$0xff] %v7270
    %7415 = vst [vmem:[#allocation17 + $0x58] sm:$0xff] %v7272
    %7416 = vst [vmem:[#allocation17 + $0x60] sm:$0xff] %v7275
    %7417 = vst [vmem:[#allocation17 + $0x68] sm:$0xff] %v7277
    %7418 = vst [vmem:[#allocation17 + $0x70] sm:$0xff] %v7280
    %7419 = vst [vmem:[#allocation17 + $0x78] sm:$0xff] %v7282
    %7420 = vst [vmem:[#allocation17 + $0x80] sm:$0xff] %v7285
    %7421 = vst [vmem:[#allocation17 + $0x88] sm:$0xff] %v7287
    %7422 = vst [vmem:[#allocation17 + $0x90] sm:$0xff] %v7290
    %7423 = vst [vmem:[#allocation17 + $0x98] sm:$0xff] %v7292
    %7424 = vst [vmem:[#allocation17 + $0xa0] sm:$0xff] %v7295
    %7425 = vst [vmem:[#allocation17 + $0xa8] sm:$0xff] %v7297
    %7426 = vst [vmem:[#allocation17 + $0xb0] sm:$0xff] %v7300
    %7427 = vst [vmem:[#allocation17 + $0xb8] sm:$0xff] %v7302
    %7428 = vst [vmem:[#allocation17 + $0xc0] sm:$0xff] %v7305
    %7429 = vst [vmem:[#allocation17 + $0xc8] sm:$0xff] %v7307
    %7430 = vst [vmem:[#allocation17 + $0xd0] sm:$0xff] %v7310
    %7431 = vst [vmem:[#allocation17 + $0xd8] sm:$0xff] %v7312
    %7432 = vst [vmem:[#allocation17 + $0xe0] sm:$0xff] %v7315
    %7433 = vst [vmem:[#allocation17 + $0xe8] sm:$0xff] %v7317
    %7434 = vst [vmem:[#allocation17 + $0xf0] sm:$0xff] %v7320
    %7435 = vst [vmem:[#allocation17 + $0xf8] sm:$0xff] %v7322
    %7436 = vst [vmem:[#allocation17 + $0x100] sm:$0xff] %v7325
    %7437 = vst [vmem:[#allocation17 + $0x108] sm:$0xff] %v7327
    %7438 = vst [vmem:[#allocation17 + $0x110] sm:$0xff] %v7330
    %7439 = vst [vmem:[#allocation17 + $0x118] sm:$0xff] %v7332
    %7440 = vst [vmem:[#allocation17 + $0x120] sm:$0xff] %v7335
    %7441 = vst [vmem:[#allocation17 + $0x128] sm:$0xff] %v7337
    %7442 = vst [vmem:[#allocation17 + $0x130] sm:$0xff] %v7340
    %7443 = vst [vmem:[#allocation17 + $0x138] sm:$0xff] %v7342
    %7444 = vst [vmem:[#allocation17 + $0x140] sm:$0xff] %v7345
    %7445 = vst [vmem:[#allocation17 + $0x148] sm:$0xff] %v7347
    %7446 = vst [vmem:[#allocation17 + $0x150] sm:$0xff] %v7350
    %7447 = vst [vmem:[#allocation17 + $0x158] sm:$0xff] %v7352
    %7448 = vst [vmem:[#allocation17 + $0x160] sm:$0xff] %v7355
    %7449 = vst [vmem:[#allocation17 + $0x168] sm:$0xff] %v7357
    %7450 = vst [vmem:[#allocation17 + $0x170] sm:$0xff] %v7360
    %7451 = vst [vmem:[#allocation17 + $0x178] sm:$0xff] %v7362
    %7452 = vst [vmem:[#allocation17 + $0x180] sm:$0xff] %v7365
    %7453 = vst [vmem:[#allocation17 + $0x188] sm:$0xff] %v7367
    %7454 = vst [vmem:[#allocation17 + $0x190] sm:$0xff] %v7370
    %7455 = vst [vmem:[#allocation17 + $0x198] sm:$0xff] %v7372
    %7456 = vst [vmem:[#allocation17 + $0x1a0] sm:$0xff] %v7375
    %7457 = vst [vmem:[#allocation17 + $0x1a8] sm:$0xff] %v7377
    %7458 = vst [vmem:[#allocation17 + $0x1b0] sm:$0xff] %v7380
    %7459 = vst [vmem:[#allocation17 + $0x1b8] sm:$0xff] %v7382
    %7460 = vst [vmem:[#allocation17 + $0x1c0] sm:$0xff] %v7385
    %7461 = vst [vmem:[#allocation17 + $0x1c8] sm:$0xff] %v7387
    %7462 = vst [vmem:[#allocation17 + $0x1d0] sm:$0xff] %v7390
    %7463 = vst [vmem:[#allocation17 + $0x1d8] sm:$0xff] %v7392
    %7464 = vst [vmem:[#allocation17 + $0x1e0] sm:$0xff] %v7395
    %7465 = vst [vmem:[#allocation17 + $0x1e8] sm:$0xff] %v7397
    %7466 = vst [vmem:[#allocation17 + $0x1f0] sm:$0xff] %v7400
    %7467 = vst [vmem:[#allocation17 + $0x1f8] sm:$0xff] %v7402
    // Predicated region
    $region98: #{tpu_custom_call.1} parent=1 // pred_check
      _
    $region99: #{tpu_custom_call.1} parent=1 // pred_check_branch
      %7469 = sbr.rel (0) target = $region101
    $region100: #{tpu_custom_call.1} parent=1 // pred_region
      %7471 = vsyncadd [#allocation4], 0
      %s7472 = sshll.u32 [#allocation17], 4
      %s7473 = int_to_ptr.vmem [resolvable:$true] %s7472
      %s7474 = sshll.u32 %s15, 4
      %s7475 = int_to_ptr.hbm [resolvable:$true] %s7474
      %7480 = dma.vmem_to_hbm [thread:$0]  %s7473, 8192, %s7475, [#allocation4], 128, 128, 8
    $region101: #{tpu_custom_call.1} parent=1 // pred_fallthru
      _
    // Predicated region
    $region102: #{tpu_custom_call.1} parent=1 // pred_check
      _
    $region103: #{tpu_custom_call.1} parent=1 // pred_check_branch
      %7482 = sbr.rel (0) target = $region105
    $region104: #{tpu_custom_call.1} parent=1 // pred_region
      %7484 = dma.done [#allocation4], 8192
    $region105: #{tpu_custom_call.1} parent=1 // pred_fallthru
      _
    %7485 = vsyncpa [#allocation3], 1
    %7486 = vsyncpa [#allocation6], 1
    %7487 = vsyncpa [#allocation9], 1
    %7488 = vsyncpa [#allocation12], 1
    %7489 = vsyncpa [#allocation15], 1
    %7490 = vsyncpa [#allocation4], 1

</llo_original>
